<compile_context>
chip_gen: v5e
topology: v5e:2x2
jax: 0.10.0
libtpu: 0.0.40
codegen_flags: <defaults>
</compile_context>

<pallas_src>
import functools
import math

import jax
import jax.numpy as jnp
from jax.experimental import pallas as pl


def _self_attention_kernel(x_ref, lnw_ref, lnb_ref, wqkv_ref, bqkv_ref,
                           wo_ref, bo_ref, o_ref, *, heads: int):
    """Single invocation: all batches processed on channel-major (C, S) tiles."""
    B = x_ref.shape[0]
    C = lnw_ref.shape[0]
    d = C // heads

    # Hoist parameter loads out of the (static, unrolled) batch loop.
    lnw = lnw_ref[...]        # (C, 1)
    lnb = lnb_ref[...]        # (C, 1)
    wqkv = wqkv_ref[...]      # (3C, C)  -- softmax scale already folded into Q rows
    bqkv = bqkv_ref[...]      # (3C, 1)
    wo = wo_ref[...]          # (C, C)
    bo = bo_ref[...]          # (C, 1)

    for b in range(B):                                    # B == 2, static unroll
        x = x_ref[b]                                      # (C, S) float32

        # ---- LayerNorm over channels (sublane axis), eps = 1e-5, affine ----
        mu = jnp.mean(x, axis=0, keepdims=True)           # (1, S)
        xc = x - mu
        var = jnp.mean(xc * xc, axis=0, keepdims=True)    # (1, S)
        xn = xc * jax.lax.rsqrt(var + 1e-5)
        xn = xn * lnw + lnb                               # (C, S)

        # ---- QKV projection: channel-major y = W @ x (no weight transpose) ----
        qkv = jnp.dot(wqkv, xn, preferred_element_type=jnp.float32) + bqkv  # (3C, S)
        q = qkv[0 * C:1 * C]                              # (C, S), pre-scaled
        k = qkv[1 * C:2 * C]                              # (C, S)
        v = qkv[2 * C:3 * C]                              # (C, S)

        # ---- Multi-head attention; head slices are sublane-aligned (d = 8). ----
        # NOTE(perf): at production sizes on v6e/v7x, cast the matmul operands
        # below to bfloat16 (keeping preferred_element_type=f32 and f32 softmax
        # math) for the fast MXU path. Kept f32 here: the toy shapes are
        # overhead-bound, not MXU-bound, and this preserves tight numerics.
        ctx_heads = []
        for h in range(heads):
            qh = q[h * d:(h + 1) * d]                     # (d, S) sublane slice
            kh = k[h * d:(h + 1) * d]                     # (d, S)
            vh = v[h * d:(h + 1) * d]                     # (d, S)
            # scores[i, j] = sum_d qh[d, i] * kh[d, j]
            s = jnp.dot(qh.T, kh, preferred_element_type=jnp.float32)   # (S, S)
            s = s - jnp.max(s, axis=-1, keepdims=True)
            p = jnp.exp(s)
            denom = jnp.sum(p, axis=-1, keepdims=True)                  # (S, 1)
            p = p * pl.reciprocal(denom, approx=True)
            # ctx[d, i] = sum_j vh[d, j] * p[i, j]   (A @ B^T form, no big transpose)
            ctx_heads.append(
                jnp.einsum("dk,qk->dq", vh, p, preferred_element_type=jnp.float32))
        ctx = jnp.concatenate(ctx_heads, axis=0)          # (C, S) sublane concat

        # ---- Output projection + residual (residual uses pre-LN x) ----
        out = jnp.dot(wo, ctx, preferred_element_type=jnp.float32) + bo  # (C, S)
        o_ref[b] = out + x


def self_attention_forward(x_nchw, params, *, heads: int):
    """x_nchw: (B, C, R, R) float32 -> (B, C, R, R) float32."""
    B, C, R, R2 = x_nchw.shape
    S = R * R2
    assert C % heads == 0

    lnw, lnb, wqkv, bqkv, wo, bo = params
    d = C // heads
    scale = 1.0 / math.sqrt(d)

    # Trace-time prep (free): fold the softmax scale into the Q rows of the
    # in-projection, and reshape biases / LN params to channel-major columns.
    wqkv_f = wqkv.astype(jnp.float32).at[:C, :].multiply(scale)
    bqkv_f = bqkv.astype(jnp.float32).at[:C].multiply(scale)

    # Pure reshape (no transpose, no extra HBM pass): NCHW -> (B, C, S).
    x_seq = x_nchw.reshape(B, C, S).astype(jnp.float32)

    kernel = functools.partial(_self_attention_kernel, heads=heads)

    out_seq = pl.pallas_call(
        kernel,
        out_shape=jax.ShapeDtypeStruct((B, C, S), jnp.float32),
        # No grid: single invocation, all operands fully VMEM resident.
    )(x_seq,
      lnw.reshape(C, 1).astype(jnp.float32),
      lnb.reshape(C, 1).astype(jnp.float32),
      wqkv_f,
      bqkv_f.reshape(3 * C, 1),
      wo.astype(jnp.float32),
      bo.reshape(C, 1).astype(jnp.float32))

    # Pure reshape back to NCHW.
    return out_seq.reshape(B, C, R, R2)


def _reference_forward(x_nchw, params, *, heads: int):
    """Pure-JAX reference mirroring torch.nn.MultiheadAttention(batch_first=True)."""
    lnw, lnb, wqkv, bqkv, wo, bo = params
    B, C, R, _ = x_nchw.shape
    S = R * R
    d = C // heads
    x = jnp.transpose(x_nchw.reshape(B, C, S), (0, 2, 1))        # (B, S, C)

    mu = jnp.mean(x, axis=-1, keepdims=True)
    var = jnp.mean((x - mu) ** 2, axis=-1, keepdims=True)
    xn = (x - mu) / jnp.sqrt(var + 1e-5) * lnw + lnb

    qkv = jnp.einsum("bsc,dc->bsd", xn, wqkv) + bqkv             # (B, S, 3C)
    q, k, v = qkv[..., :C], qkv[..., C:2 * C], qkv[..., 2 * C:]

    def split(t):  # (B, S, C) -> (B, h, S, d)
        return jnp.transpose(t.reshape(B, S, heads, d), (0, 2, 1, 3))

    qh, kh, vh = split(q), split(k), split(v)
    s = jnp.einsum("bhqd,bhkd->bhqk", qh, kh) / jnp.sqrt(d)
    p = jax.nn.softmax(s, axis=-1)
    ctx = jnp.einsum("bhqk,bhkd->bhqd", p, vh)
    ctx = jnp.transpose(ctx, (0, 2, 1, 3)).reshape(B, S, C)
    out = jnp.einsum("bsc,dc->bsd", ctx, wo) + bo
    out = out + x
    return jnp.transpose(out, (0, 2, 1)).reshape(B, C, R, R)


def init_params(key, channels: int):
    """Deterministic synthetic parameters (shapes match nn.LayerNorm + nn.MultiheadAttention)."""
    k1, k2, k3 = jax.random.split(key, 3)
    lnw = jnp.ones((channels,), jnp.float32)
    lnb = jnp.zeros((channels,), jnp.float32)
    wqkv = 0.05 * jax.random.normal(k1, (3 * channels, channels), jnp.float32)
    bqkv = 0.01 * jax.random.normal(k2, (3 * channels,), jnp.float32)
    wo = 0.05 * jax.random.normal(k3, (channels, channels), jnp.float32)
    bo = jnp.zeros((channels,), jnp.float32)
    return (lnw, lnb, wqkv, bqkv, wo, bo)


if __name__ == "__main__":
    # Shapes consistent with the module defaults: channels=32, heads=4, resolution=16.
    B, C, R, HEADS = 2, 32, 16, 4

    key = jax.random.PRNGKey(0)
    kx, kp = jax.random.split(key)
    x = jax.random.normal(kx, (B, C, R, R), jnp.float32)
    params = init_params(kp, C)

    out = self_attention_forward(x, params, heads=HEADS)
    out = jax.block_until_ready(out)

    ref = _reference_forward(x, params, heads=HEADS)
    assert out.shape == (B, C, R, R)
    # Tolerance loosened slightly vs pure-f32 because of the EUP approximate
    # reciprocal in the softmax denominator (error ~1e-4 relative).
    assert jnp.allclose(out, ref, atol=2e-3, rtol=2e-3), "mismatch vs JAX reference"

    print("KERNEL_OK")
</pallas_src>

<mosaic_0001>
module attributes {stable_mosaic.version = 11 : i64} {
  func.func @_self_attention_kernel(%arg0: memref<2x32x256xf32, #tpu.memory_space<vmem>>, %arg1: memref<32x1xf32, #tpu.memory_space<vmem>>, %arg2: memref<32x1xf32, #tpu.memory_space<vmem>>, %arg3: memref<96x32xf32, #tpu.memory_space<vmem>>, %arg4: memref<96x1xf32, #tpu.memory_space<vmem>>, %arg5: memref<32x32xf32, #tpu.memory_space<vmem>>, %arg6: memref<32x1xf32, #tpu.memory_space<vmem>>, %arg7: memref<2x32x256xf32, #tpu.memory_space<vmem>>) attributes {dimension_semantics = [], scalar_prefetch = 0 : i64, scratch_operands = 0 : i64, tpu.core_type = #tpu.core_type<tc>} {
    %c0 = arith.constant 0 : index
    %c0_0 = arith.constant 0 : index
    %0 = vector.load %arg1[%c0, %c0_0] : memref<32x1xf32, #tpu.memory_space<vmem>>, vector<32x1xf32>
    %c0_1 = arith.constant 0 : index
    %c0_2 = arith.constant 0 : index
    %1 = vector.load %arg2[%c0_1, %c0_2] : memref<32x1xf32, #tpu.memory_space<vmem>>, vector<32x1xf32>
    %c0_3 = arith.constant 0 : index
    %c0_4 = arith.constant 0 : index
    %2 = vector.load %arg3[%c0_3, %c0_4] : memref<96x32xf32, #tpu.memory_space<vmem>>, vector<96x32xf32>
    %c0_5 = arith.constant 0 : index
    %c0_6 = arith.constant 0 : index
    %3 = vector.load %arg4[%c0_5, %c0_6] : memref<96x1xf32, #tpu.memory_space<vmem>>, vector<96x1xf32>
    %c0_7 = arith.constant 0 : index
    %c0_8 = arith.constant 0 : index
    %4 = vector.load %arg5[%c0_7, %c0_8] : memref<32x32xf32, #tpu.memory_space<vmem>>, vector<32x32xf32>
    %c0_9 = arith.constant 0 : index
    %c0_10 = arith.constant 0 : index
    %5 = vector.load %arg6[%c0_9, %c0_10] : memref<32x1xf32, #tpu.memory_space<vmem>>, vector<32x1xf32>
    %c0_11 = arith.constant 0 : index
    %c0_12 = arith.constant 0 : index
    %c0_13 = arith.constant 0 : index
    %6 = vector.load %arg0[%c0_11, %c0_12, %c0_13] : memref<2x32x256xf32, #tpu.memory_space<vmem>>, vector<1x32x256xf32>
    %7 = vector.shape_cast %6 : vector<1x32x256xf32> to vector<32x256xf32>
    %cst = arith.constant dense<0.000000e+00> : vector<256xf32>
    %8 = vector.multi_reduction <add>, %7, %cst [0] : vector<32x256xf32> to vector<256xf32>
    %9 = vector.shape_cast %8 : vector<256xf32> to vector<1x256xf32>
    %cst_14 = arith.constant 3.200000e+01 : f32
    %10 = vector.broadcast %cst_14 : f32 to vector<1x256xf32>
    %11 = arith.divf %9, %10 : vector<1x256xf32>
    %12 = vector.broadcast %11 : vector<1x256xf32> to vector<32x256xf32>
    %13 = arith.subf %7, %12 : vector<32x256xf32>
    %14 = arith.mulf %13, %13 : vector<32x256xf32>
    %cst_15 = arith.constant dense<0.000000e+00> : vector<256xf32>
    %15 = vector.multi_reduction <add>, %14, %cst_15 [0] : vector<32x256xf32> to vector<256xf32>
    %16 = vector.shape_cast %15 : vector<256xf32> to vector<1x256xf32>
    %cst_16 = arith.constant 3.200000e+01 : f32
    %17 = vector.broadcast %cst_16 : f32 to vector<1x256xf32>
    %18 = arith.divf %16, %17 : vector<1x256xf32>
    %cst_17 = arith.constant 9.99999974E-6 : f32
    %19 = vector.broadcast %cst_17 : f32 to vector<1x256xf32>
    %20 = arith.addf %18, %19 : vector<1x256xf32>
    %21 = math.rsqrt %20 : vector<1x256xf32>
    %22 = vector.broadcast %21 : vector<1x256xf32> to vector<32x256xf32>
    %23 = arith.mulf %13, %22 : vector<32x256xf32>
    %24 = vector.broadcast %0 : vector<32x1xf32> to vector<32x256xf32>
    %25 = arith.mulf %23, %24 : vector<32x256xf32>
    %26 = vector.broadcast %1 : vector<32x1xf32> to vector<32x256xf32>
    %27 = arith.addf %25, %26 : vector<32x256xf32>
    %cst_18 = arith.constant dense<0.000000e+00> : vector<96x256xf32>
    %28 = tpu.matmul %2, %27, %cst_18 {dimension_numbers = #tpu.dot_dimension_numbers<[1], [0], [0], [1], [0, 0, 1, 1], [], []>} : vector<96x32xf32>, vector<32x256xf32>, vector<96x256xf32> -> vector<96x256xf32>
    %29 = vector.broadcast %3 : vector<96x1xf32> to vector<96x256xf32>
    %30 = arith.addf %28, %29 : vector<96x256xf32>
    %31 = vector.extract_strided_slice %30 {offsets = [0, 0], sizes = [32, 256], strides = [1, 1]} : vector<96x256xf32> to vector<32x256xf32>
    %32 = vector.extract_strided_slice %30 {offsets = [32, 0], sizes = [32, 256], strides = [1, 1]} : vector<96x256xf32> to vector<32x256xf32>
    %33 = vector.extract_strided_slice %30 {offsets = [64, 0], sizes = [32, 256], strides = [1, 1]} : vector<96x256xf32> to vector<32x256xf32>
    %34 = vector.extract_strided_slice %31 {offsets = [0, 0], sizes = [8, 256], strides = [1, 1]} : vector<32x256xf32> to vector<8x256xf32>
    %35 = vector.extract_strided_slice %32 {offsets = [0, 0], sizes = [8, 256], strides = [1, 1]} : vector<32x256xf32> to vector<8x256xf32>
    %36 = vector.extract_strided_slice %33 {offsets = [0, 0], sizes = [8, 256], strides = [1, 1]} : vector<32x256xf32> to vector<8x256xf32>
    %37 = tpu.transpose %34, [1, 0] : vector<8x256xf32> -> vector<256x8xf32>
    %cst_19 = arith.constant dense<0.000000e+00> : vector<256x256xf32>
    %38 = tpu.matmul %37, %35, %cst_19 {dimension_numbers = #tpu.dot_dimension_numbers<[1], [0], [0], [1], [0, 0, 1, 1], [], []>} : vector<256x8xf32>, vector<8x256xf32>, vector<256x256xf32> -> vector<256x256xf32>
    %cst_20 = arith.constant dense<0xFF800000> : vector<256xf32>
    %39 = vector.multi_reduction <maximumf>, %38, %cst_20 [1] : vector<256x256xf32> to vector<256xf32>
    %40 = vector.shape_cast %39 : vector<256xf32> to vector<256x1xf32>
    %41 = vector.broadcast %40 : vector<256x1xf32> to vector<256x256xf32>
    %42 = arith.subf %38, %41 : vector<256x256xf32>
    %43 = math.exp %42 : vector<256x256xf32>
    %cst_21 = arith.constant dense<0.000000e+00> : vector<256xf32>
    %44 = vector.multi_reduction <add>, %43, %cst_21 [1] : vector<256x256xf32> to vector<256xf32>
    %45 = vector.shape_cast %44 : vector<256xf32> to vector<256x1xf32>
    %46 = tpu.reciprocal %45 {approx = true} : vector<256x1xf32> -> vector<256x1xf32>
    %47 = vector.broadcast %46 : vector<256x1xf32> to vector<256x256xf32>
    %48 = arith.mulf %43, %47 : vector<256x256xf32>
    "tpu.trace_start"() <{level = 10 : i32, message = "dk,qk->dq"}> : () -> ()
    %cst_22 = arith.constant dense<0.000000e+00> : vector<8x256xf32>
    %49 = tpu.matmul %36, %48, %cst_22 {dimension_numbers = #tpu.dot_dimension_numbers<[1], [1], [0], [0], [0, 0, 1, 0], [], []>} : vector<8x256xf32>, vector<256x256xf32>, vector<8x256xf32> -> vector<8x256xf32>
    "tpu.trace_stop"() : () -> ()
    %50 = vector.extract_strided_slice %31 {offsets = [8, 0], sizes = [8, 256], strides = [1, 1]} : vector<32x256xf32> to vector<8x256xf32>
    %51 = vector.extract_strided_slice %32 {offsets = [8, 0], sizes = [8, 256], strides = [1, 1]} : vector<32x256xf32> to vector<8x256xf32>
    %52 = vector.extract_strided_slice %33 {offsets = [8, 0], sizes = [8, 256], strides = [1, 1]} : vector<32x256xf32> to vector<8x256xf32>
    %53 = tpu.transpose %50, [1, 0] : vector<8x256xf32> -> vector<256x8xf32>
    %cst_23 = arith.constant dense<0.000000e+00> : vector<256x256xf32>
    %54 = tpu.matmul %53, %51, %cst_23 {dimension_numbers = #tpu.dot_dimension_numbers<[1], [0], [0], [1], [0, 0, 1, 1], [], []>} : vector<256x8xf32>, vector<8x256xf32>, vector<256x256xf32> -> vector<256x256xf32>
    %cst_24 = arith.constant dense<0xFF800000> : vector<256xf32>
    %55 = vector.multi_reduction <maximumf>, %54, %cst_24 [1] : vector<256x256xf32> to vector<256xf32>
    %56 = vector.shape_cast %55 : vector<256xf32> to vector<256x1xf32>
    %57 = vector.broadcast %56 : vector<256x1xf32> to vector<256x256xf32>
    %58 = arith.subf %54, %57 : vector<256x256xf32>
    %59 = math.exp %58 : vector<256x256xf32>
    %cst_25 = arith.constant dense<0.000000e+00> : vector<256xf32>
    %60 = vector.multi_reduction <add>, %59, %cst_25 [1] : vector<256x256xf32> to vector<256xf32>
    %61 = vector.shape_cast %60 : vector<256xf32> to vector<256x1xf32>
    %62 = tpu.reciprocal %61 {approx = true} : vector<256x1xf32> -> vector<256x1xf32>
    %63 = vector.broadcast %62 : vector<256x1xf32> to vector<256x256xf32>
    %64 = arith.mulf %59, %63 : vector<256x256xf32>
    "tpu.trace_start"() <{level = 10 : i32, message = "dk,qk->dq"}> : () -> ()
    %cst_26 = arith.constant dense<0.000000e+00> : vector<8x256xf32>
    %65 = tpu.matmul %52, %64, %cst_26 {dimension_numbers = #tpu.dot_dimension_numbers<[1], [1], [0], [0], [0, 0, 1, 0], [], []>} : vector<8x256xf32>, vector<256x256xf32>, vector<8x256xf32> -> vector<8x256xf32>
    "tpu.trace_stop"() : () -> ()
    %66 = vector.extract_strided_slice %31 {offsets = [16, 0], sizes = [8, 256], strides = [1, 1]} : vector<32x256xf32> to vector<8x256xf32>
    %67 = vector.extract_strided_slice %32 {offsets = [16, 0], sizes = [8, 256], strides = [1, 1]} : vector<32x256xf32> to vector<8x256xf32>
    %68 = vector.extract_strided_slice %33 {offsets = [16, 0], sizes = [8, 256], strides = [1, 1]} : vector<32x256xf32> to vector<8x256xf32>
    %69 = tpu.transpose %66, [1, 0] : vector<8x256xf32> -> vector<256x8xf32>
    %cst_27 = arith.constant dense<0.000000e+00> : vector<256x256xf32>
    %70 = tpu.matmul %69, %67, %cst_27 {dimension_numbers = #tpu.dot_dimension_numbers<[1], [0], [0], [1], [0, 0, 1, 1], [], []>} : vector<256x8xf32>, vector<8x256xf32>, vector<256x256xf32> -> vector<256x256xf32>
    %cst_28 = arith.constant dense<0xFF800000> : vector<256xf32>
    %71 = vector.multi_reduction <maximumf>, %70, %cst_28 [1] : vector<256x256xf32> to vector<256xf32>
    %72 = vector.shape_cast %71 : vector<256xf32> to vector<256x1xf32>
    %73 = vector.broadcast %72 : vector<256x1xf32> to vector<256x256xf32>
    %74 = arith.subf %70, %73 : vector<256x256xf32>
    %75 = math.exp %74 : vector<256x256xf32>
    %cst_29 = arith.constant dense<0.000000e+00> : vector<256xf32>
    %76 = vector.multi_reduction <add>, %75, %cst_29 [1] : vector<256x256xf32> to vector<256xf32>
    %77 = vector.shape_cast %76 : vector<256xf32> to vector<256x1xf32>
    %78 = tpu.reciprocal %77 {approx = true} : vector<256x1xf32> -> vector<256x1xf32>
    %79 = vector.broadcast %78 : vector<256x1xf32> to vector<256x256xf32>
    %80 = arith.mulf %75, %79 : vector<256x256xf32>
    "tpu.trace_start"() <{level = 10 : i32, message = "dk,qk->dq"}> : () -> ()
    %cst_30 = arith.constant dense<0.000000e+00> : vector<8x256xf32>
    %81 = tpu.matmul %68, %80, %cst_30 {dimension_numbers = #tpu.dot_dimension_numbers<[1], [1], [0], [0], [0, 0, 1, 0], [], []>} : vector<8x256xf32>, vector<256x256xf32>, vector<8x256xf32> -> vector<8x256xf32>
    "tpu.trace_stop"() : () -> ()
    %82 = vector.extract_strided_slice %31 {offsets = [24, 0], sizes = [8, 256], strides = [1, 1]} : vector<32x256xf32> to vector<8x256xf32>
    %83 = vector.extract_strided_slice %32 {offsets = [24, 0], sizes = [8, 256], strides = [1, 1]} : vector<32x256xf32> to vector<8x256xf32>
    %84 = vector.extract_strided_slice %33 {offsets = [24, 0], sizes = [8, 256], strides = [1, 1]} : vector<32x256xf32> to vector<8x256xf32>
    %85 = tpu.transpose %82, [1, 0] : vector<8x256xf32> -> vector<256x8xf32>
    %cst_31 = arith.constant dense<0.000000e+00> : vector<256x256xf32>
    %86 = tpu.matmul %85, %83, %cst_31 {dimension_numbers = #tpu.dot_dimension_numbers<[1], [0], [0], [1], [0, 0, 1, 1], [], []>} : vector<256x8xf32>, vector<8x256xf32>, vector<256x256xf32> -> vector<256x256xf32>
    %cst_32 = arith.constant dense<0xFF800000> : vector<256xf32>
    %87 = vector.multi_reduction <maximumf>, %86, %cst_32 [1] : vector<256x256xf32> to vector<256xf32>
    %88 = vector.shape_cast %87 : vector<256xf32> to vector<256x1xf32>
    %89 = vector.broadcast %88 : vector<256x1xf32> to vector<256x256xf32>
    %90 = arith.subf %86, %89 : vector<256x256xf32>
    %91 = math.exp %90 : vector<256x256xf32>
    %cst_33 = arith.constant dense<0.000000e+00> : vector<256xf32>
    %92 = vector.multi_reduction <add>, %91, %cst_33 [1] : vector<256x256xf32> to vector<256xf32>
    %93 = vector.shape_cast %92 : vector<256xf32> to vector<256x1xf32>
    %94 = tpu.reciprocal %93 {approx = true} : vector<256x1xf32> -> vector<256x1xf32>
    %95 = vector.broadcast %94 : vector<256x1xf32> to vector<256x256xf32>
    %96 = arith.mulf %91, %95 : vector<256x256xf32>
    "tpu.trace_start"() <{level = 10 : i32, message = "dk,qk->dq"}> : () -> ()
    %cst_34 = arith.constant dense<0.000000e+00> : vector<8x256xf32>
    %97 = tpu.matmul %84, %96, %cst_34 {dimension_numbers = #tpu.dot_dimension_numbers<[1], [1], [0], [0], [0, 0, 1, 0], [], []>} : vector<8x256xf32>, vector<256x256xf32>, vector<8x256xf32> -> vector<8x256xf32>
    "tpu.trace_stop"() : () -> ()
    %98 = tpu.concatenate %49, %65, %81, %97 in 0 : vector<8x256xf32>, vector<8x256xf32>, vector<8x256xf32>, vector<8x256xf32> -> vector<32x256xf32>
    %cst_35 = arith.constant dense<0.000000e+00> : vector<32x256xf32>
    %99 = tpu.matmul %4, %98, %cst_35 {dimension_numbers = #tpu.dot_dimension_numbers<[1], [0], [0], [1], [0, 0, 1, 1], [], []>} : vector<32x32xf32>, vector<32x256xf32>, vector<32x256xf32> -> vector<32x256xf32>
    %100 = vector.broadcast %5 : vector<32x1xf32> to vector<32x256xf32>
    %101 = arith.addf %99, %100 : vector<32x256xf32>
    %102 = arith.addf %101, %7 : vector<32x256xf32>
    %c0_36 = arith.constant 0 : index
    %c0_37 = arith.constant 0 : index
    %c0_38 = arith.constant 0 : index
    %103 = vector.load %arg7[%c0_36, %c0_37, %c0_38] : memref<2x32x256xf32, #tpu.memory_space<vmem>>, vector<1x32x256xf32>
    %104 = vector.shape_cast %103 : vector<1x32x256xf32> to vector<32x256xf32>
    %105 = vector.shape_cast %102 : vector<32x256xf32> to vector<1x32x256xf32>
    tpu.vector_store %arg7[%c0_36, %c0_37, %c0_38], %105 {strides = array<i32>} : memref<2x32x256xf32, #tpu.memory_space<vmem>>, vector<1x32x256xf32>,
    %c1 = arith.constant 1 : index
    %c0_39 = arith.constant 0 : index
    %c0_40 = arith.constant 0 : index
    %106 = vector.load %arg0[%c1, %c0_39, %c0_40] : memref<2x32x256xf32, #tpu.memory_space<vmem>>, vector<1x32x256xf32>
    %107 = vector.shape_cast %106 : vector<1x32x256xf32> to vector<32x256xf32>
    %cst_41 = arith.constant dense<0.000000e+00> : vector<256xf32>
    %108 = vector.multi_reduction <add>, %107, %cst_41 [0] : vector<32x256xf32> to vector<256xf32>
    %109 = vector.shape_cast %108 : vector<256xf32> to vector<1x256xf32>
    %cst_42 = arith.constant 3.200000e+01 : f32
    %110 = vector.broadcast %cst_42 : f32 to vector<1x256xf32>
    %111 = arith.divf %109, %110 : vector<1x256xf32>
    %112 = vector.broadcast %111 : vector<1x256xf32> to vector<32x256xf32>
    %113 = arith.subf %107, %112 : vector<32x256xf32>
    %114 = arith.mulf %113, %113 : vector<32x256xf32>
    %cst_43 = arith.constant dense<0.000000e+00> : vector<256xf32>
    %115 = vector.multi_reduction <add>, %114, %cst_43 [0] : vector<32x256xf32> to vector<256xf32>
    %116 = vector.shape_cast %115 : vector<256xf32> to vector<1x256xf32>
    %cst_44 = arith.constant 3.200000e+01 : f32
    %117 = vector.broadcast %cst_44 : f32 to vector<1x256xf32>
    %118 = arith.divf %116, %117 : vector<1x256xf32>
    %cst_45 = arith.constant 9.99999974E-6 : f32
    %119 = vector.broadcast %cst_45 : f32 to vector<1x256xf32>
    %120 = arith.addf %118, %119 : vector<1x256xf32>
    %121 = math.rsqrt %120 : vector<1x256xf32>
    %122 = vector.broadcast %121 : vector<1x256xf32> to vector<32x256xf32>
    %123 = arith.mulf %113, %122 : vector<32x256xf32>
    %124 = vector.broadcast %0 : vector<32x1xf32> to vector<32x256xf32>
    %125 = arith.mulf %123, %124 : vector<32x256xf32>
    %126 = vector.broadcast %1 : vector<32x1xf32> to vector<32x256xf32>
    %127 = arith.addf %125, %126 : vector<32x256xf32>
    %cst_46 = arith.constant dense<0.000000e+00> : vector<96x256xf32>
    %128 = tpu.matmul %2, %127, %cst_46 {dimension_numbers = #tpu.dot_dimension_numbers<[1], [0], [0], [1], [0, 0, 1, 1], [], []>} : vector<96x32xf32>, vector<32x256xf32>, vector<96x256xf32> -> vector<96x256xf32>
    %129 = vector.broadcast %3 : vector<96x1xf32> to vector<96x256xf32>
    %130 = arith.addf %128, %129 : vector<96x256xf32>
    %131 = vector.extract_strided_slice %130 {offsets = [0, 0], sizes = [32, 256], strides = [1, 1]} : vector<96x256xf32> to vector<32x256xf32>
    %132 = vector.extract_strided_slice %130 {offsets = [32, 0], sizes = [32, 256], strides = [1, 1]} : vector<96x256xf32> to vector<32x256xf32>
    %133 = vector.extract_strided_slice %130 {offsets = [64, 0], sizes = [32, 256], strides = [1, 1]} : vector<96x256xf32> to vector<32x256xf32>
    %134 = vector.extract_strided_slice %131 {offsets = [0, 0], sizes = [8, 256], strides = [1, 1]} : vector<32x256xf32> to vector<8x256xf32>
    %135 = vector.extract_strided_slice %132 {offsets = [0, 0], sizes = [8, 256], strides = [1, 1]} : vector<32x256xf32> to vector<8x256xf32>
    %136 = vector.extract_strided_slice %133 {offsets = [0, 0], sizes = [8, 256], strides = [1, 1]} : vector<32x256xf32> to vector<8x256xf32>
    %137 = tpu.transpose %134, [1, 0] : vector<8x256xf32> -> vector<256x8xf32>
    %cst_47 = arith.constant dense<0.000000e+00> : vector<256x256xf32>
    %138 = tpu.matmul %137, %135, %cst_47 {dimension_numbers = #tpu.dot_dimension_numbers<[1], [0], [0], [1], [0, 0, 1, 1], [], []>} : vector<256x8xf32>, vector<8x256xf32>, vector<256x256xf32> -> vector<256x256xf32>
    %cst_48 = arith.constant dense<0xFF800000> : vector<256xf32>
    %139 = vector.multi_reduction <maximumf>, %138, %cst_48 [1] : vector<256x256xf32> to vector<256xf32>
    %140 = vector.shape_cast %139 : vector<256xf32> to vector<256x1xf32>
    %141 = vector.broadcast %140 : vector<256x1xf32> to vector<256x256xf32>
    %142 = arith.subf %138, %141 : vector<256x256xf32>
    %143 = math.exp %142 : vector<256x256xf32>
    %cst_49 = arith.constant dense<0.000000e+00> : vector<256xf32>
    %144 = vector.multi_reduction <add>, %143, %cst_49 [1] : vector<256x256xf32> to vector<256xf32>
    %145 = vector.shape_cast %144 : vector<256xf32> to vector<256x1xf32>
    %146 = tpu.reciprocal %145 {approx = true} : vector<256x1xf32> -> vector<256x1xf32>
    %147 = vector.broadcast %146 : vector<256x1xf32> to vector<256x256xf32>
    %148 = arith.mulf %143, %147 : vector<256x256xf32>
    "tpu.trace_start"() <{level = 10 : i32, message = "dk,qk->dq"}> : () -> ()
    %cst_50 = arith.constant dense<0.000000e+00> : vector<8x256xf32>
    %149 = tpu.matmul %136, %148, %cst_50 {dimension_numbers = #tpu.dot_dimension_numbers<[1], [1], [0], [0], [0, 0, 1, 0], [], []>} : vector<8x256xf32>, vector<256x256xf32>, vector<8x256xf32> -> vector<8x256xf32>
    "tpu.trace_stop"() : () -> ()
    %150 = vector.extract_strided_slice %131 {offsets = [8, 0], sizes = [8, 256], strides = [1, 1]} : vector<32x256xf32> to vector<8x256xf32>
    %151 = vector.extract_strided_slice %132 {offsets = [8, 0], sizes = [8, 256], strides = [1, 1]} : vector<32x256xf32> to vector<8x256xf32>
    %152 = vector.extract_strided_slice %133 {offsets = [8, 0], sizes = [8, 256], strides = [1, 1]} : vector<32x256xf32> to vector<8x256xf32>
    %153 = tpu.transpose %150, [1, 0] : vector<8x256xf32> -> vector<256x8xf32>
    %cst_51 = arith.constant dense<0.000000e+00> : vector<256x256xf32>
    %154 = tpu.matmul %153, %151, %cst_51 {dimension_numbers = #tpu.dot_dimension_numbers<[1], [0], [0], [1], [0, 0, 1, 1], [], []>} : vector<256x8xf32>, vector<8x256xf32>, vector<256x256xf32> -> vector<256x256xf32>
    %cst_52 = arith.constant dense<0xFF800000> : vector<256xf32>
    %155 = vector.multi_reduction <maximumf>, %154, %cst_52 [1] : vector<256x256xf32> to vector<256xf32>
    %156 = vector.shape_cast %155 : vector<256xf32> to vector<256x1xf32>
    %157 = vector.broadcast %156 : vector<256x1xf32> to vector<256x256xf32>
    %158 = arith.subf %154, %157 : vector<256x256xf32>
    %159 = math.exp %158 : vector<256x256xf32>
    %cst_53 = arith.constant dense<0.000000e+00> : vector<256xf32>
    %160 = vector.multi_reduction <add>, %159, %cst_53 [1] : vector<256x256xf32> to vector<256xf32>
    %161 = vector.shape_cast %160 : vector<256xf32> to vector<256x1xf32>
    %162 = tpu.reciprocal %161 {approx = true} : vector<256x1xf32> -> vector<256x1xf32>
    %163 = vector.broadcast %162 : vector<256x1xf32> to vector<256x256xf32>
    %164 = arith.mulf %159, %163 : vector<256x256xf32>
    "tpu.trace_start"() <{level = 10 : i32, message = "dk,qk->dq"}> : () -> ()
    %cst_54 = arith.constant dense<0.000000e+00> : vector<8x256xf32>
    %165 = tpu.matmul %152, %164, %cst_54 {dimension_numbers = #tpu.dot_dimension_numbers<[1], [1], [0], [0], [0, 0, 1, 0], [], []>} : vector<8x256xf32>, vector<256x256xf32>, vector<8x256xf32> -> vector<8x256xf32>
    "tpu.trace_stop"() : () -> ()
    %166 = vector.extract_strided_slice %131 {offsets = [16, 0], sizes = [8, 256], strides = [1, 1]} : vector<32x256xf32> to vector<8x256xf32>
    %167 = vector.extract_strided_slice %132 {offsets = [16, 0], sizes = [8, 256], strides = [1, 1]} : vector<32x256xf32> to vector<8x256xf32>
    %168 = vector.extract_strided_slice %133 {offsets = [16, 0], sizes = [8, 256], strides = [1, 1]} : vector<32x256xf32> to vector<8x256xf32>
    %169 = tpu.transpose %166, [1, 0] : vector<8x256xf32> -> vector<256x8xf32>
    %cst_55 = arith.constant dense<0.000000e+00> : vector<256x256xf32>
    %170 = tpu.matmul %169, %167, %cst_55 {dimension_numbers = #tpu.dot_dimension_numbers<[1], [0], [0], [1], [0, 0, 1, 1], [], []>} : vector<256x8xf32>, vector<8x256xf32>, vector<256x256xf32> -> vector<256x256xf32>
    %cst_56 = arith.constant dense<0xFF800000> : vector<256xf32>
    %171 = vector.multi_reduction <maximumf>, %170, %cst_56 [1] : vector<256x256xf32> to vector<256xf32>
    %172 = vector.shape_cast %171 : vector<256xf32> to vector<256x1xf32>
    %173 = vector.broadcast %172 : vector<256x1xf32> to vector<256x256xf32>
    %174 = arith.subf %170, %173 : vector<256x256xf32>
    %175 = math.exp %174 : vector<256x256xf32>
    %cst_57 = arith.constant dense<0.000000e+00> : vector<256xf32>
    %176 = vector.multi_reduction <add>, %175, %cst_57 [1] : vector<256x256xf32> to vector<256xf32>
    %177 = vector.shape_cast %176 : vector<256xf32> to vector<256x1xf32>
    %178 = tpu.reciprocal %177 {approx = true} : vector<256x1xf32> -> vector<256x1xf32>
    %179 = vector.broadcast %178 : vector<256x1xf32> to vector<256x256xf32>
    %180 = arith.mulf %175, %179 : vector<256x256xf32>
    "tpu.trace_start"() <{level = 10 : i32, message = "dk,qk->dq"}> : () -> ()
    %cst_58 = arith.constant dense<0.000000e+00> : vector<8x256xf32>
    %181 = tpu.matmul %168, %180, %cst_58 {dimension_numbers = #tpu.dot_dimension_numbers<[1], [1], [0], [0], [0, 0, 1, 0], [], []>} : vector<8x256xf32>, vector<256x256xf32>, vector<8x256xf32> -> vector<8x256xf32>
    "tpu.trace_stop"() : () -> ()
    %182 = vector.extract_strided_slice %131 {offsets = [24, 0], sizes = [8, 256], strides = [1, 1]} : vector<32x256xf32> to vector<8x256xf32>
    %183 = vector.extract_strided_slice %132 {offsets = [24, 0], sizes = [8, 256], strides = [1, 1]} : vector<32x256xf32> to vector<8x256xf32>
    %184 = vector.extract_strided_slice %133 {offsets = [24, 0], sizes = [8, 256], strides = [1, 1]} : vector<32x256xf32> to vector<8x256xf32>
    %185 = tpu.transpose %182, [1, 0] : vector<8x256xf32> -> vector<256x8xf32>
    %cst_59 = arith.constant dense<0.000000e+00> : vector<256x256xf32>
    %186 = tpu.matmul %185, %183, %cst_59 {dimension_numbers = #tpu.dot_dimension_numbers<[1], [0], [0], [1], [0, 0, 1, 1], [], []>} : vector<256x8xf32>, vector<8x256xf32>, vector<256x256xf32> -> vector<256x256xf32>
    %cst_60 = arith.constant dense<0xFF800000> : vector<256xf32>
    %187 = vector.multi_reduction <maximumf>, %186, %cst_60 [1] : vector<256x256xf32> to vector<256xf32>
    %188 = vector.shape_cast %187 : vector<256xf32> to vector<256x1xf32>
    %189 = vector.broadcast %188 : vector<256x1xf32> to vector<256x256xf32>
    %190 = arith.subf %186, %189 : vector<256x256xf32>
    %191 = math.exp %190 : vector<256x256xf32>
    %cst_61 = arith.constant dense<0.000000e+00> : vector<256xf32>
    %192 = vector.multi_reduction <add>, %191, %cst_61 [1] : vector<256x256xf32> to vector<256xf32>
    %193 = vector.shape_cast %192 : vector<256xf32> to vector<256x1xf32>
    %194 = tpu.reciprocal %193 {approx = true} : vector<256x1xf32> -> vector<256x1xf32>
    %195 = vector.broadcast %194 : vector<256x1xf32> to vector<256x256xf32>
    %196 = arith.mulf %191, %195 : vector<256x256xf32>
    "tpu.trace_start"() <{level = 10 : i32, message = "dk,qk->dq"}> : () -> ()
    %cst_62 = arith.constant dense<0.000000e+00> : vector<8x256xf32>
    %197 = tpu.matmul %184, %196, %cst_62 {dimension_numbers = #tpu.dot_dimension_numbers<[1], [1], [0], [0], [0, 0, 1, 0], [], []>} : vector<8x256xf32>, vector<256x256xf32>, vector<8x256xf32> -> vector<8x256xf32>
    "tpu.trace_stop"() : () -> ()
    %198 = tpu.concatenate %149, %165, %181, %197 in 0 : vector<8x256xf32>, vector<8x256xf32>, vector<8x256xf32>, vector<8x256xf32> -> vector<32x256xf32>
    %cst_63 = arith.constant dense<0.000000e+00> : vector<32x256xf32>
    %199 = tpu.matmul %4, %198, %cst_63 {dimension_numbers = #tpu.dot_dimension_numbers<[1], [0], [0], [1], [0, 0, 1, 1], [], []>} : vector<32x32xf32>, vector<32x256xf32>, vector<32x256xf32> -> vector<32x256xf32>
    %200 = vector.broadcast %5 : vector<32x1xf32> to vector<32x256xf32>
    %201 = arith.addf %199, %200 : vector<32x256xf32>
    %202 = arith.addf %201, %107 : vector<32x256xf32>
    %c1_64 = arith.constant 1 : index
    %c0_65 = arith.constant 0 : index
    %c0_66 = arith.constant 0 : index
    %203 = vector.load %arg7[%c1_64, %c0_65, %c0_66] : memref<2x32x256xf32, #tpu.memory_space<vmem>>, vector<1x32x256xf32>
    %204 = vector.shape_cast %203 : vector<1x32x256xf32> to vector<32x256xf32>
    %205 = vector.shape_cast %202 : vector<32x256xf32> to vector<1x32x256xf32>
    tpu.vector_store %arg7[%c1_64, %c0_65, %c0_66], %205 {strides = array<i32>} : memref<2x32x256xf32, #tpu.memory_space<vmem>>, vector<1x32x256xf32>,
    return
  }
}

</mosaic_0001>

<llo_original>
// kernel: tpu_custom_call.1
$region0: #{tpu_custom_call.1}
  #allocation0 [shape = 'u32[]', space=smem, size = 0x4, offset = 0x4, fixed_abs, tag = 'smem constant byte address 0x4 - core index']
  #allocation1 [shape = 'u32[72,128]{1,0:T(1,128)}', space=vmem, size = 0x9000, scoped, tag = 'internal scratch']
  %s0 = inlined_call_operand.vmem [shape: f32[2,32,256], index: 0, kind: input, shape index: {}]
  %s1 = inlined_call_operand.vmem [shape: f32[32,1], index: 1, kind: input, shape index: {}]
  %s2 = inlined_call_operand.vmem [shape: f32[32,1], index: 2, kind: input, shape index: {}]
  %s3 = inlined_call_operand.vmem [shape: f32[96,32], index: 3, kind: input, shape index: {}]
  %s4 = inlined_call_operand.vmem [shape: f32[96,1], index: 4, kind: input, shape index: {}]
  %s5 = inlined_call_operand.vmem [shape: f32[32,32], index: 5, kind: input, shape index: {}]
  %s6 = inlined_call_operand.vmem [shape: f32[32,1], index: 6, kind: input, shape index: {}]
  %s7 = inlined_call_operand.hbm [shape: f32[2,32,256], index: 7, kind: output, shape index: {}]
  %s8 = sld [smem:[#allocation0]]
  $region38: #{tpu_custom_call.1} parent=0
    _
  %s10 = ssub.s32 1, %s8
  %s11 = scalar_select 0, %s10, %s8
  $region1: #{tpu_custom_call.1} parent=0
    #allocation2 [shape = 'u8[65536]{0}', space=vmem, size = 0x10000, scoped, tag = 'output window, operand 0, single buffered']
    #allocation3 [shape = 's32[1]{0}', space=sflag, size = 0x4, scoped, tag = 'scoped memory for tpu_custom_call.1']
    %12 = vsyncpa [#allocation3], 0
    // Predicated region
    $region2: #{tpu_custom_call.1} parent=1 // pred_check
      _
    $region3: #{tpu_custom_call.1} parent=1 // pred_check_branch
      %14 = sbr.rel (0) target = $region5
    $region4: #{tpu_custom_call.1} parent=1 // pred_region
      _
    $region5: #{tpu_custom_call.1} parent=1 // pred_fallthru
      _
    // Predicated region
    $region6: #{tpu_custom_call.1} parent=1 // pred_check
      _
    $region7: #{tpu_custom_call.1} parent=1 // pred_check_branch
      %16 = sbr.rel (0) target = $region9
    $region8: #{tpu_custom_call.1} parent=1 // pred_region
      _
    $region9: #{tpu_custom_call.1} parent=1 // pred_fallthru
      _
    // Predicated region
    $region10: #{tpu_custom_call.1} parent=1 // pred_check
      _
    $region11: #{tpu_custom_call.1} parent=1 // pred_check_branch
      %18 = sbr.rel (0) target = $region13
    $region12: #{tpu_custom_call.1} parent=1 // pred_region
      _
    $region13: #{tpu_custom_call.1} parent=1 // pred_fallthru
      _
    // Predicated region
    $region14: #{tpu_custom_call.1} parent=1 // pred_check
      _
    $region15: #{tpu_custom_call.1} parent=1 // pred_check_branch
      %20 = sbr.rel (0) target = $region17
    $region16: #{tpu_custom_call.1} parent=1 // pred_region
      _
    $region17: #{tpu_custom_call.1} parent=1 // pred_fallthru
      _
    // Predicated region
    $region18: #{tpu_custom_call.1} parent=1 // pred_check
      _
    $region19: #{tpu_custom_call.1} parent=1 // pred_check_branch
      %22 = sbr.rel (0) target = $region21
    $region20: #{tpu_custom_call.1} parent=1 // pred_region
      _
    $region21: #{tpu_custom_call.1} parent=1 // pred_fallthru
      _
    // Predicated region
    $region22: #{tpu_custom_call.1} parent=1 // pred_check
      _
    $region23: #{tpu_custom_call.1} parent=1 // pred_check_branch
      %24 = sbr.rel (0) target = $region25
    $region24: #{tpu_custom_call.1} parent=1 // pred_region
      _
    $region25: #{tpu_custom_call.1} parent=1 // pred_fallthru
      _
    // Predicated region
    $region26: #{tpu_custom_call.1} parent=1 // pred_check
      _
    $region27: #{tpu_custom_call.1} parent=1 // pred_check_branch
      %26 = sbr.rel (0) target = $region29
    $region28: #{tpu_custom_call.1} parent=1 // pred_region
      _
    $region29: #{tpu_custom_call.1} parent=1 // pred_fallthru
      _
    %v27 = vld [vmem:[%s1] sm:$0xff]
    %v28 = vld [vmem:[%s1 + $0x8] sm:$0xff]
    %v29 = vld [vmem:[%s1 + $0x10] sm:$0xff]
    %v30 = vld [vmem:[%s1 + $0x18] sm:$0xff]
    %v31 = vld [vmem:[%s2] sm:$0xff]
    %v32 = vld [vmem:[%s2 + $0x8] sm:$0xff]
    %v33 = vld [vmem:[%s2 + $0x10] sm:$0xff]
    %v34 = vld [vmem:[%s2 + $0x18] sm:$0xff]
    %v35 = vld [vmem:[%s3] sm:$0xff]
    %v36 = vld [vmem:[%s3 + $0x8] sm:$0xff]
    %v37 = vld [vmem:[%s3 + $0x10] sm:$0xff]
    %v38 = vld [vmem:[%s3 + $0x18] sm:$0xff]
    %v39 = vld [vmem:[%s3 + $0x20] sm:$0xff]
    %v40 = vld [vmem:[%s3 + $0x28] sm:$0xff]
    %v41 = vld [vmem:[%s3 + $0x30] sm:$0xff]
    %v42 = vld [vmem:[%s3 + $0x38] sm:$0xff]
    %v43 = vld [vmem:[%s3 + $0x40] sm:$0xff]
    %v44 = vld [vmem:[%s3 + $0x48] sm:$0xff]
    %v45 = vld [vmem:[%s3 + $0x50] sm:$0xff]
    %v46 = vld [vmem:[%s3 + $0x58] sm:$0xff]
    %v47 = vld [vmem:[%s4] sm:$0xff]
    %v48 = vld [vmem:[%s4 + $0x8] sm:$0xff]
    %v49 = vld [vmem:[%s4 + $0x10] sm:$0xff]
    %v50 = vld [vmem:[%s4 + $0x18] sm:$0xff]
    %v51 = vld [vmem:[%s4 + $0x20] sm:$0xff]
    %v52 = vld [vmem:[%s4 + $0x28] sm:$0xff]
    %v53 = vld [vmem:[%s4 + $0x30] sm:$0xff]
    %v54 = vld [vmem:[%s4 + $0x38] sm:$0xff]
    %v55 = vld [vmem:[%s4 + $0x40] sm:$0xff]
    %v56 = vld [vmem:[%s4 + $0x48] sm:$0xff]
    %v57 = vld [vmem:[%s4 + $0x50] sm:$0xff]
    %v58 = vld [vmem:[%s4 + $0x58] sm:$0xff]
    %v59 = vld [vmem:[%s5] sm:$0xff]
    %v60 = vld [vmem:[%s5 + $0x8] sm:$0xff]
    %v61 = vld [vmem:[%s5 + $0x10] sm:$0xff]
    %v62 = vld [vmem:[%s5 + $0x18] sm:$0xff]
    %v63 = vld [vmem:[%s6] sm:$0xff]
    %v64 = vld [vmem:[%s6 + $0x8] sm:$0xff]
    %v65 = vld [vmem:[%s6 + $0x10] sm:$0xff]
    %v66 = vld [vmem:[%s6 + $0x18] sm:$0xff]
    %v67 = vld [vmem:[%s0] sm:$0xff]
    %v68 = vld [vmem:[%s0 + $0x8] sm:$0xff]
    %v69 = vld [vmem:[%s0 + $0x10] sm:$0xff]
    %v70 = vld [vmem:[%s0 + $0x18] sm:$0xff]
    %v71 = vld [vmem:[%s0 + $0x20] sm:$0xff]
    %v72 = vld [vmem:[%s0 + $0x28] sm:$0xff]
    %v73 = vld [vmem:[%s0 + $0x30] sm:$0xff]
    %v74 = vld [vmem:[%s0 + $0x38] sm:$0xff]
    %v75 = vadd.f32 %v67, %v69
    %v76 = vadd.f32 %v75, %v71
    %v77 = vadd.f32 %v76, %v73
    %v78 = vrot.slane %v77, 4
    %v79 = vadd.f32 %v77, %v78
    %v80 = vrot.slane %v79, 2
    %v81 = vadd.f32 %v79, %v80
    %v82 = vrot.slane %v81, 1
    %v83 = vadd.f32 %v81, %v82
    %v84 = vadd.f32 %v68, %v70
    %v85 = vadd.f32 %v84, %v72
    %v86 = vadd.f32 %v85, %v74
    %v87 = vrot.slane %v86, 4
    %v88 = vadd.f32 %v86, %v87
    %v89 = vrot.slane %v88, 2
    %v90 = vadd.f32 %v88, %v89
    %v91 = vrot.slane %v90, 1
    %v92 = vadd.f32 %v90, %v91
    %v93 = vrcp.pop 32.0
    %v94 = vmul.f32 32.0, %v93
    %v95 = vsub.f32 1.0, %v94
    %v96 = vmul.f32 %v93, %v95
    %v97 = vadd.f32 %v93, %v96
    %vm98 = vweird.f32 %v93
    %v99 = vsel %vm98, %v93, %v97
    %v100 = vmul.f32 %v83, %v99
    %v101 = vmul.f32 %v92, %v99
    %v102 = vsub.f32 %v67, %v100
    %v103 = vsub.f32 %v68, %v101
    %v104 = vsub.f32 %v69, %v100
    %v105 = vsub.f32 %v70, %v101
    %v106 = vsub.f32 %v71, %v100
    %v107 = vsub.f32 %v72, %v101
    %v108 = vsub.f32 %v73, %v100
    %v109 = vsub.f32 %v74, %v101
    %v110 = vmul.f32 %v102, %v102
    %v111 = vmul.f32 %v103, %v103
    %v112 = vmul.f32 %v104, %v104
    %v113 = vmul.f32 %v105, %v105
    %v114 = vmul.f32 %v106, %v106
    %v115 = vmul.f32 %v107, %v107
    %v116 = vmul.f32 %v108, %v108
    %v117 = vmul.f32 %v109, %v109
    %v118 = vadd.f32 %v110, %v112
    %v119 = vadd.f32 %v118, %v114
    %v120 = vadd.f32 %v119, %v116
    %v121 = vrot.slane %v120, 4
    %v122 = vadd.f32 %v120, %v121
    %v123 = vrot.slane %v122, 2
    %v124 = vadd.f32 %v122, %v123
    %v125 = vrot.slane %v124, 1
    %v126 = vadd.f32 %v124, %v125
    %v127 = vadd.f32 %v111, %v113
    %v128 = vadd.f32 %v127, %v115
    %v129 = vadd.f32 %v128, %v117
    %v130 = vrot.slane %v129, 4
    %v131 = vadd.f32 %v129, %v130
    %v132 = vrot.slane %v131, 2
    %v133 = vadd.f32 %v131, %v132
    %v134 = vrot.slane %v133, 1
    %v135 = vadd.f32 %v133, %v134
    %v136 = vmul.f32 %v126, %v99
    %v137 = vmul.f32 %v135, %v99
    %v138 = vadd.f32 %v136, 1e-05
    %v139 = vadd.f32 %v137, 1e-05
    %v140 = vrsqrt.pop %v138
    %v141 = vmul.f32 %v140, %v138
    %v142 = vmul.f32 %v141, %v140
    %v143 = vmul.f32 0.5, %v142
    %v144 = vsub.f32 1.5, %v143
    %v145 = vmul.f32 %v140, %v144
    %vm146 = vweird.f32 %v138
    %vm147 = vweird.f32 %v140
    %vm148 = vmor %vm146, %vm147
    %v149 = vsel %vm148, %v140, %v145
    %v150 = vrsqrt.pop %v139
    %v151 = vmul.f32 %v150, %v139
    %v152 = vmul.f32 %v151, %v150
    %v153 = vmul.f32 0.5, %v152
    %v154 = vsub.f32 1.5, %v153
    %v155 = vmul.f32 %v150, %v154
    %vm156 = vweird.f32 %v139
    %vm157 = vweird.f32 %v150
    %vm158 = vmor %vm156, %vm157
    %v159 = vsel %vm158, %v150, %v155
    %v160 = vmul.f32 %v102, %v149
    %v161 = vmul.f32 %v103, %v159
    %v162 = vmul.f32 %v104, %v149
    %v163 = vmul.f32 %v105, %v159
    %v164 = vmul.f32 %v106, %v149
    %v165 = vmul.f32 %v107, %v159
    %v166 = vmul.f32 %v108, %v149
    %v167 = vmul.f32 %v109, %v159
    %169 = vset.pattern.permute.xlu0 0
    %170 = vperm.xlu0 %169, %v27
    %v171 = vpop.permute.xlu0 %170
    %174 = vset.pattern.permute.xlu0 0
    %175 = vperm.xlu0 %174, %v28
    %v176 = vpop.permute.xlu0 %175
    %179 = vset.pattern.permute.xlu0 0
    %180 = vperm.xlu0 %179, %v29
    %v181 = vpop.permute.xlu0 %180
    %184 = vset.pattern.permute.xlu0 0
    %185 = vperm.xlu0 %184, %v30
    %v186 = vpop.permute.xlu0 %185
    %v188 = vmul.f32 %v160, %v171
    %v189 = vmul.f32 %v161, %v171
    %v190 = vmul.f32 %v162, %v176
    %v191 = vmul.f32 %v163, %v176
    %v192 = vmul.f32 %v164, %v181
    %v193 = vmul.f32 %v165, %v181
    %v194 = vmul.f32 %v166, %v186
    %v195 = vmul.f32 %v167, %v186
    %197 = vset.pattern.permute.xlu0 0
    %198 = vperm.xlu0 %197, %v31
    %v199 = vpop.permute.xlu0 %198
    %202 = vset.pattern.permute.xlu0 0
    %203 = vperm.xlu0 %202, %v32
    %v204 = vpop.permute.xlu0 %203
    %207 = vset.pattern.permute.xlu0 0
    %208 = vperm.xlu0 %207, %v33
    %v209 = vpop.permute.xlu0 %208
    %212 = vset.pattern.permute.xlu0 0
    %213 = vperm.xlu0 %212, %v34
    %v214 = vpop.permute.xlu0 %213
    %v216 = vadd.f32 %v188, %v199
    %v217 = vadd.f32 %v189, %v199
    %v218 = vadd.f32 %v190, %v204
    %v219 = vadd.f32 %v191, %v204
    %v220 = vadd.f32 %v192, %v209
    %v221 = vadd.f32 %v193, %v209
    %v222 = vadd.f32 %v194, %v214
    %v223 = vadd.f32 %v195, %v214
    %225 = vset.pattern.permute.xlu0 0
    %226 = vperm.xlu0 %225, %v47
    %v227 = vpop.permute.xlu0 %226
    %230 = vset.pattern.permute.xlu0 0
    %231 = vperm.xlu0 %230, %v48
    %v232 = vpop.permute.xlu0 %231
    %235 = vset.pattern.permute.xlu0 0
    %236 = vperm.xlu0 %235, %v49
    %v237 = vpop.permute.xlu0 %236
    %240 = vset.pattern.permute.xlu0 0
    %241 = vperm.xlu0 %240, %v50
    %v242 = vpop.permute.xlu0 %241
    %245 = vset.pattern.permute.xlu0 0
    %246 = vperm.xlu0 %245, %v51
    %v247 = vpop.permute.xlu0 %246
    %250 = vset.pattern.permute.xlu0 0
    %251 = vperm.xlu0 %250, %v52
    %v252 = vpop.permute.xlu0 %251
    %255 = vset.pattern.permute.xlu0 0
    %256 = vperm.xlu0 %255, %v53
    %v257 = vpop.permute.xlu0 %256
    %260 = vset.pattern.permute.xlu0 0
    %261 = vperm.xlu0 %260, %v54
    %v262 = vpop.permute.xlu0 %261
    %265 = vset.pattern.permute.xlu0 0
    %266 = vperm.xlu0 %265, %v55
    %v267 = vpop.permute.xlu0 %266
    %270 = vset.pattern.permute.xlu0 0
    %271 = vperm.xlu0 %270, %v56
    %v272 = vpop.permute.xlu0 %271
    %275 = vset.pattern.permute.xlu0 0
    %276 = vperm.xlu0 %275, %v57
    %v277 = vpop.permute.xlu0 %276
    %280 = vset.pattern.permute.xlu0 0
    %281 = vperm.xlu0 %280, %v58
    %v282 = vpop.permute.xlu0 %281
    %vm284 = vcmask 261120
    %v286 = vsel %vm284, %v35, 0
    %v289 = vsel %vm284, %v36, 0
    %v292 = vsel %vm284, %v37, 0
    %v295 = vsel %vm284, %v38, 0
    %v298 = vsel %vm284, %v39, 0
    %v301 = vsel %vm284, %v40, 0
    %v304 = vsel %vm284, %v41, 0
    %v307 = vsel %vm284, %v42, 0
    %v310 = vsel %vm284, %v43, 0
    %v313 = vsel %vm284, %v44, 0
    %v316 = vsel %vm284, %v45, 0
    %v319 = vsel %vm284, %v46, 0
    %321 = vmatpush.msra.mxu0 0.0
    %322 = vmatpush.msra.mxu0 0.0
    %323 = vmatpush.msra.mxu0 0.0
    %324 = vmatpush.msra.mxu0 0.0
    %325 = vmatpush.msra.mxu0 0.0
    %326 = vmatpush.msra.mxu0 0.0
    %327 = vmatpush.msra.mxu0 0.0
    %328 = vmatpush.msra.mxu0 0.0
    %329 = vmatpush.msra.mxu0 0.0
    %330 = vmatpush.msra.mxu0 0.0
    %331 = vmatpush.msra.mxu0 0.0
    %332 = vmatpush.msra.mxu0 0.0
    %333 = vmatpush.msra.mxu0 %v222
    %334 = vmatpush.msra.mxu0 %v220
    %335 = vmatpush.msra.mxu0 %v218
    %336 = vmatpush.msra.mxu0 %v216
    %337 = vmatmul.f32.gmra.mxu0 %v286
    %v338 = vpop.f32.mrf.mxu0
    %v339 = vadd.f32 %v227, %v338
    %340 = vmatmul.f32.gmra.mxu0 %v289
    %v341 = vpop.f32.mrf.mxu0
    %v342 = vadd.f32 %v232, %v341
    %343 = vmatmul.f32.gmra.mxu0 %v292
    %v344 = vpop.f32.mrf.mxu0
    %v345 = vadd.f32 %v237, %v344
    %346 = vmatmul.f32.gmra.mxu0 %v295
    %v347 = vpop.f32.mrf.mxu0
    %v348 = vadd.f32 %v242, %v347
    %349 = vmatmul.f32.gmra.mxu0 %v298
    %v350 = vpop.f32.mrf.mxu0
    %v351 = vadd.f32 %v247, %v350
    %352 = vmatmul.f32.gmra.mxu0 %v301
    %v353 = vpop.f32.mrf.mxu0
    %v354 = vadd.f32 %v252, %v353
    %355 = vmatmul.f32.gmra.mxu0 %v304
    %v356 = vpop.f32.mrf.mxu0
    %v357 = vadd.f32 %v257, %v356
    %358 = vmatmul.f32.gmra.mxu0 %v307
    %v359 = vpop.f32.mrf.mxu0
    %v360 = vadd.f32 %v262, %v359
    %361 = vmatmul.f32.gmra.mxu0 %v310
    %v362 = vpop.f32.mrf.mxu0
    %v363 = vadd.f32 %v267, %v362
    %364 = vmatmul.f32.gmra.mxu0 %v313
    %v365 = vpop.f32.mrf.mxu0
    %v366 = vadd.f32 %v272, %v365
    %367 = vmatmul.f32.gmra.mxu0 %v316
    %v368 = vpop.f32.mrf.mxu0
    %v369 = vadd.f32 %v277, %v368
    %370 = vmatmul.f32.gmra.mxu0 %v319
    %v371 = vpop.f32.mrf.mxu0
    %v372 = vadd.f32 %v282, %v371
    %373 = vdwg.mxu0
    %374 = vmatpush.msra.mxu0 0.0
    %375 = vmatpush.msra.mxu0 0.0
    %376 = vmatpush.msra.mxu0 0.0
    %377 = vmatpush.msra.mxu0 0.0
    %378 = vmatpush.msra.mxu0 0.0
    %379 = vmatpush.msra.mxu0 0.0
    %380 = vmatpush.msra.mxu0 0.0
    %381 = vmatpush.msra.mxu0 0.0
    %382 = vmatpush.msra.mxu0 0.0
    %383 = vmatpush.msra.mxu0 0.0
    %384 = vmatpush.msra.mxu0 0.0
    %385 = vmatpush.msra.mxu0 0.0
    %386 = vmatpush.msra.mxu0 %v223
    %387 = vmatpush.msra.mxu0 %v221
    %388 = vmatpush.msra.mxu0 %v219
    %389 = vmatpush.msra.mxu0 %v217
    %390 = vmatmul.f32.gmra.mxu0 %v286
    %v391 = vpop.f32.mrf.mxu0
    %v392 = vadd.f32 %v227, %v391
    %393 = vmatmul.f32.gmra.mxu0 %v289
    %v394 = vpop.f32.mrf.mxu0
    %v395 = vadd.f32 %v232, %v394
    %396 = vmatmul.f32.gmra.mxu0 %v292
    %v397 = vpop.f32.mrf.mxu0
    %v398 = vadd.f32 %v237, %v397
    %399 = vmatmul.f32.gmra.mxu0 %v295
    %v400 = vpop.f32.mrf.mxu0
    %v401 = vadd.f32 %v242, %v400
    %402 = vmatmul.f32.gmra.mxu0 %v298
    %v403 = vpop.f32.mrf.mxu0
    %v404 = vadd.f32 %v247, %v403
    %405 = vmatmul.f32.gmra.mxu0 %v301
    %v406 = vpop.f32.mrf.mxu0
    %v407 = vadd.f32 %v252, %v406
    %408 = vmatmul.f32.gmra.mxu0 %v304
    %v409 = vpop.f32.mrf.mxu0
    %v410 = vadd.f32 %v257, %v409
    %411 = vmatmul.f32.gmra.mxu0 %v307
    %v412 = vpop.f32.mrf.mxu0
    %v413 = vadd.f32 %v262, %v412
    %414 = vmatmul.f32.gmra.mxu0 %v310
    %v415 = vpop.f32.mrf.mxu0
    %v416 = vadd.f32 %v267, %v415
    %417 = vmatmul.f32.gmra.mxu0 %v313
    %v418 = vpop.f32.mrf.mxu0
    %v419 = vadd.f32 %v272, %v418
    %420 = vmatmul.f32.gmra.mxu0 %v316
    %v421 = vpop.f32.mrf.mxu0
    %v422 = vadd.f32 %v277, %v421
    %423 = vmatmul.f32.gmra.mxu0 %v319
    %v424 = vpop.f32.mrf.mxu0
    %v425 = vadd.f32 %v282, %v424
    %426 = vdwg.mxu0
    %427 = vxpose.xlu0.b32.start [1/16] %v339, 128
    %428 = vxpose.xlu0.b32.cont [2/16] 0.0, 128
    %429 = vxpose.xlu0.b32.cont [3/16] 0.0, 128
    %430 = vxpose.xlu0.b32.cont [4/16] 0.0, 128
    %431 = vxpose.xlu0.b32.cont [5/16] 0.0, 128
    %432 = vxpose.xlu0.b32.cont [6/16] 0.0, 128
    %433 = vxpose.xlu0.b32.cont [7/16] 0.0, 128
    %434 = vxpose.xlu0.b32.cont [8/16] 0.0, 128
    %435 = vxpose.xlu0.b32.cont [9/16] 0.0, 128
    %436 = vxpose.xlu0.b32.cont [10/16] 0.0, 128
    %437 = vxpose.xlu0.b32.cont [11/16] 0.0, 128
    %438 = vxpose.xlu0.b32.cont [12/16] 0.0, 128
    %439 = vxpose.xlu0.b32.cont [13/16] 0.0, 128
    %440 = vxpose.xlu0.b32.cont [14/16] 0.0, 128
    %441 = vxpose.xlu0.b32.cont [15/16] 0.0, 128
    %442 = vxpose.xlu0.b32.end [16/16] 0.0, 128
    %v443 = vpop.trf.xlu0
    %v444 = vpop.trf.xlu0
    %v445 = vpop.trf.xlu0
    %v446 = vpop.trf.xlu0
    %v447 = vpop.trf.xlu0
    %v448 = vpop.trf.xlu0
    %v449 = vpop.trf.xlu0
    %v450 = vpop.trf.xlu0
    %v451 = vpop.trf.xlu0
    %v452 = vpop.trf.xlu0
    %v453 = vpop.trf.xlu0
    %v454 = vpop.trf.xlu0
    %v455 = vpop.trf.xlu0
    %v456 = vpop.trf.xlu0
    %v457 = vpop.trf.xlu0
    %v458 = vpop.trf.xlu0
    %459 = vxpose.xlu0.b32.start [1/16] %v392, 128
    %460 = vxpose.xlu0.b32.cont [2/16] 0.0, 128
    %461 = vxpose.xlu0.b32.cont [3/16] 0.0, 128
    %462 = vxpose.xlu0.b32.cont [4/16] 0.0, 128
    %463 = vxpose.xlu0.b32.cont [5/16] 0.0, 128
    %464 = vxpose.xlu0.b32.cont [6/16] 0.0, 128
    %465 = vxpose.xlu0.b32.cont [7/16] 0.0, 128
    %466 = vxpose.xlu0.b32.cont [8/16] 0.0, 128
    %467 = vxpose.xlu0.b32.cont [9/16] 0.0, 128
    %468 = vxpose.xlu0.b32.cont [10/16] 0.0, 128
    %469 = vxpose.xlu0.b32.cont [11/16] 0.0, 128
    %470 = vxpose.xlu0.b32.cont [12/16] 0.0, 128
    %471 = vxpose.xlu0.b32.cont [13/16] 0.0, 128
    %472 = vxpose.xlu0.b32.cont [14/16] 0.0, 128
    %473 = vxpose.xlu0.b32.cont [15/16] 0.0, 128
    %474 = vxpose.xlu0.b32.end [16/16] 0.0, 128
    %v475 = vpop.trf.xlu0
    %v476 = vpop.trf.xlu0
    %v477 = vpop.trf.xlu0
    %v478 = vpop.trf.xlu0
    %v479 = vpop.trf.xlu0
    %v480 = vpop.trf.xlu0
    %v481 = vpop.trf.xlu0
    %v482 = vpop.trf.xlu0
    %v483 = vpop.trf.xlu0
    %v484 = vpop.trf.xlu0
    %v485 = vpop.trf.xlu0
    %v486 = vpop.trf.xlu0
    %v487 = vpop.trf.xlu0
    %v488 = vpop.trf.xlu0
    %v489 = vpop.trf.xlu0
    %v490 = vpop.trf.xlu0
    %vm491 = vcmask 64512
    %v493 = vsel %vm491, %v443, 0
    %v496 = vsel %vm491, %v444, 0
    %v499 = vsel %vm491, %v445, 0
    %v502 = vsel %vm491, %v446, 0
    %v505 = vsel %vm491, %v447, 0
    %v508 = vsel %vm491, %v448, 0
    %v511 = vsel %vm491, %v449, 0
    %v514 = vsel %vm491, %v450, 0
    %v517 = vsel %vm491, %v451, 0
    %v520 = vsel %vm491, %v452, 0
    %v523 = vsel %vm491, %v453, 0
    %v526 = vsel %vm491, %v454, 0
    %v529 = vsel %vm491, %v455, 0
    %v532 = vsel %vm491, %v456, 0
    %v535 = vsel %vm491, %v457, 0
    %v538 = vsel %vm491, %v458, 0
    %v541 = vsel %vm491, %v475, 0
    %v544 = vsel %vm491, %v476, 0
    %v547 = vsel %vm491, %v477, 0
    %v550 = vsel %vm491, %v478, 0
    %v553 = vsel %vm491, %v479, 0
    %v556 = vsel %vm491, %v480, 0
    %v559 = vsel %vm491, %v481, 0
    %v562 = vsel %vm491, %v482, 0
    %v565 = vsel %vm491, %v483, 0
    %v568 = vsel %vm491, %v484, 0
    %v571 = vsel %vm491, %v485, 0
    %v574 = vsel %vm491, %v486, 0
    %v577 = vsel %vm491, %v487, 0
    %v580 = vsel %vm491, %v488, 0
    %v583 = vsel %vm491, %v489, 0
    %v586 = vsel %vm491, %v490, 0
    %588 = vmatpush.msra.mxu0 0.0
    %589 = vmatpush.msra.mxu0 0.0
    %590 = vmatpush.msra.mxu0 0.0
    %591 = vmatpush.msra.mxu0 0.0
    %592 = vmatpush.msra.mxu0 0.0
    %593 = vmatpush.msra.mxu0 0.0
    %594 = vmatpush.msra.mxu0 0.0
    %595 = vmatpush.msra.mxu0 0.0
    %596 = vmatpush.msra.mxu0 0.0
    %597 = vmatpush.msra.mxu0 0.0
    %598 = vmatpush.msra.mxu0 0.0
    %599 = vmatpush.msra.mxu0 0.0
    %600 = vmatpush.msra.mxu0 0.0
    %601 = vmatpush.msra.mxu0 0.0
    %602 = vmatpush.msra.mxu0 0.0
    %603 = vmatpush.msra.mxu0 %v351
    %604 = vmatmul.f32.gmra.mxu0 %v493
    %v605 = vpop.f32.mrf.mxu0
    %v606 = vadd.f32 0.0, %v605
    %607 = vmatmul.f32.gmra.mxu0 %v496
    %v608 = vpop.f32.mrf.mxu0
    %v609 = vadd.f32 0.0, %v608
    %610 = vmatmul.f32.gmra.mxu0 %v499
    %v611 = vpop.f32.mrf.mxu0
    %v612 = vadd.f32 0.0, %v611
    %613 = vmatmul.f32.gmra.mxu0 %v502
    %v614 = vpop.f32.mrf.mxu0
    %v615 = vadd.f32 0.0, %v614
    %616 = vmatmul.f32.gmra.mxu0 %v505
    %v617 = vpop.f32.mrf.mxu0
    %v618 = vadd.f32 0.0, %v617
    %619 = vmatmul.f32.gmra.mxu0 %v508
    %v620 = vpop.f32.mrf.mxu0
    %v621 = vadd.f32 0.0, %v620
    %622 = vmatmul.f32.gmra.mxu0 %v511
    %v623 = vpop.f32.mrf.mxu0
    %v624 = vadd.f32 0.0, %v623
    %625 = vmatmul.f32.gmra.mxu0 %v514
    %v626 = vpop.f32.mrf.mxu0
    %v627 = vadd.f32 0.0, %v626
    %628 = vmatmul.f32.gmra.mxu0 %v517
    %v629 = vpop.f32.mrf.mxu0
    %v630 = vadd.f32 0.0, %v629
    %631 = vmatmul.f32.gmra.mxu0 %v520
    %v632 = vpop.f32.mrf.mxu0
    %v633 = vadd.f32 0.0, %v632
    %634 = vmatmul.f32.gmra.mxu0 %v523
    %v635 = vpop.f32.mrf.mxu0
    %v636 = vadd.f32 0.0, %v635
    %637 = vmatmul.f32.gmra.mxu0 %v526
    %v638 = vpop.f32.mrf.mxu0
    %v639 = vadd.f32 0.0, %v638
    %640 = vmatmul.f32.gmra.mxu0 %v529
    %v641 = vpop.f32.mrf.mxu0
    %v642 = vadd.f32 0.0, %v641
    %643 = vmatmul.f32.gmra.mxu0 %v532
    %v644 = vpop.f32.mrf.mxu0
    %v645 = vadd.f32 0.0, %v644
    %646 = vmatmul.f32.gmra.mxu0 %v535
    %v647 = vpop.f32.mrf.mxu0
    %v648 = vadd.f32 0.0, %v647
    %649 = vmatmul.f32.gmra.mxu0 %v538
    %v650 = vpop.f32.mrf.mxu0
    %v651 = vadd.f32 0.0, %v650
    %652 = vmatmul.f32.gmra.mxu0 %v541
    %v653 = vpop.f32.mrf.mxu0
    %v654 = vadd.f32 0.0, %v653
    %655 = vmatmul.f32.gmra.mxu0 %v544
    %v656 = vpop.f32.mrf.mxu0
    %v657 = vadd.f32 0.0, %v656
    %658 = vmatmul.f32.gmra.mxu0 %v547
    %v659 = vpop.f32.mrf.mxu0
    %v660 = vadd.f32 0.0, %v659
    %661 = vmatmul.f32.gmra.mxu0 %v550
    %v662 = vpop.f32.mrf.mxu0
    %v663 = vadd.f32 0.0, %v662
    %664 = vmatmul.f32.gmra.mxu0 %v553
    %v665 = vpop.f32.mrf.mxu0
    %v666 = vadd.f32 0.0, %v665
    %667 = vmatmul.f32.gmra.mxu0 %v556
    %v668 = vpop.f32.mrf.mxu0
    %v669 = vadd.f32 0.0, %v668
    %670 = vmatmul.f32.gmra.mxu0 %v559
    %v671 = vpop.f32.mrf.mxu0
    %v672 = vadd.f32 0.0, %v671
    %673 = vmatmul.f32.gmra.mxu0 %v562
    %v674 = vpop.f32.mrf.mxu0
    %v675 = vadd.f32 0.0, %v674
    %676 = vmatmul.f32.gmra.mxu0 %v565
    %v677 = vpop.f32.mrf.mxu0
    %v678 = vadd.f32 0.0, %v677
    %679 = vmatmul.f32.gmra.mxu0 %v568
    %v680 = vpop.f32.mrf.mxu0
    %v681 = vadd.f32 0.0, %v680
    %682 = vmatmul.f32.gmra.mxu0 %v571
    %v683 = vpop.f32.mrf.mxu0
    %v684 = vadd.f32 0.0, %v683
    %685 = vmatmul.f32.gmra.mxu0 %v574
    %v686 = vpop.f32.mrf.mxu0
    %v687 = vadd.f32 0.0, %v686
    %688 = vmatmul.f32.gmra.mxu0 %v577
    %v689 = vpop.f32.mrf.mxu0
    %v690 = vadd.f32 0.0, %v689
    %691 = vmatmul.f32.gmra.mxu0 %v580
    %v692 = vpop.f32.mrf.mxu0
    %v693 = vadd.f32 0.0, %v692
    %694 = vmatmul.f32.gmra.mxu0 %v583
    %v695 = vpop.f32.mrf.mxu0
    %v696 = vadd.f32 0.0, %v695
    %697 = vmatmul.f32.gmra.mxu0 %v586
    %v698 = vpop.f32.mrf.mxu0
    %v699 = vadd.f32 0.0, %v698
    %700 = vdwg.mxu0
    %701 = vmatpush.msra.mxu0 0.0
    %702 = vmatpush.msra.mxu0 0.0
    %703 = vmatpush.msra.mxu0 0.0
    %704 = vmatpush.msra.mxu0 0.0
    %705 = vmatpush.msra.mxu0 0.0
    %706 = vmatpush.msra.mxu0 0.0
    %707 = vmatpush.msra.mxu0 0.0
    %708 = vmatpush.msra.mxu0 0.0
    %709 = vmatpush.msra.mxu0 0.0
    %710 = vmatpush.msra.mxu0 0.0
    %711 = vmatpush.msra.mxu0 0.0
    %712 = vmatpush.msra.mxu0 0.0
    %713 = vmatpush.msra.mxu0 0.0
    %714 = vmatpush.msra.mxu0 0.0
    %715 = vmatpush.msra.mxu0 0.0
    %716 = vmatpush.msra.mxu0 %v404
    %717 = vmatmul.f32.gmra.mxu0 %v493
    %v718 = vpop.f32.mrf.mxu0
    %v719 = vadd.f32 0.0, %v718
    %720 = vmatmul.f32.gmra.mxu0 %v496
    %v721 = vpop.f32.mrf.mxu0
    %v722 = vadd.f32 0.0, %v721
    %723 = vmatmul.f32.gmra.mxu0 %v499
    %v724 = vpop.f32.mrf.mxu0
    %v725 = vadd.f32 0.0, %v724
    %726 = vmatmul.f32.gmra.mxu0 %v502
    %v727 = vpop.f32.mrf.mxu0
    %v728 = vadd.f32 0.0, %v727
    %729 = vmatmul.f32.gmra.mxu0 %v505
    %v730 = vpop.f32.mrf.mxu0
    %v731 = vadd.f32 0.0, %v730
    %732 = vmatmul.f32.gmra.mxu0 %v508
    %v733 = vpop.f32.mrf.mxu0
    %v734 = vadd.f32 0.0, %v733
    %735 = vmatmul.f32.gmra.mxu0 %v511
    %v736 = vpop.f32.mrf.mxu0
    %v737 = vadd.f32 0.0, %v736
    %738 = vmatmul.f32.gmra.mxu0 %v514
    %v739 = vpop.f32.mrf.mxu0
    %v740 = vadd.f32 0.0, %v739
    %741 = vmatmul.f32.gmra.mxu0 %v517
    %v742 = vpop.f32.mrf.mxu0
    %v743 = vadd.f32 0.0, %v742
    %744 = vmatmul.f32.gmra.mxu0 %v520
    %v745 = vpop.f32.mrf.mxu0
    %v746 = vadd.f32 0.0, %v745
    %747 = vmatmul.f32.gmra.mxu0 %v523
    %v748 = vpop.f32.mrf.mxu0
    %v749 = vadd.f32 0.0, %v748
    %750 = vmatmul.f32.gmra.mxu0 %v526
    %v751 = vpop.f32.mrf.mxu0
    %v752 = vadd.f32 0.0, %v751
    %753 = vmatmul.f32.gmra.mxu0 %v529
    %v754 = vpop.f32.mrf.mxu0
    %v755 = vadd.f32 0.0, %v754
    %756 = vmatmul.f32.gmra.mxu0 %v532
    %v757 = vpop.f32.mrf.mxu0
    %v758 = vadd.f32 0.0, %v757
    %759 = vmatmul.f32.gmra.mxu0 %v535
    %v760 = vpop.f32.mrf.mxu0
    %v761 = vadd.f32 0.0, %v760
    %762 = vmatmul.f32.gmra.mxu0 %v538
    %v763 = vpop.f32.mrf.mxu0
    %v764 = vadd.f32 0.0, %v763
    %765 = vmatmul.f32.gmra.mxu0 %v541
    %v766 = vpop.f32.mrf.mxu0
    %v767 = vadd.f32 0.0, %v766
    %768 = vmatmul.f32.gmra.mxu0 %v544
    %v769 = vpop.f32.mrf.mxu0
    %v770 = vadd.f32 0.0, %v769
    %771 = vmatmul.f32.gmra.mxu0 %v547
    %v772 = vpop.f32.mrf.mxu0
    %v773 = vadd.f32 0.0, %v772
    %774 = vmatmul.f32.gmra.mxu0 %v550
    %v775 = vpop.f32.mrf.mxu0
    %v776 = vadd.f32 0.0, %v775
    %777 = vmatmul.f32.gmra.mxu0 %v553
    %v778 = vpop.f32.mrf.mxu0
    %v779 = vadd.f32 0.0, %v778
    %780 = vmatmul.f32.gmra.mxu0 %v556
    %v781 = vpop.f32.mrf.mxu0
    %v782 = vadd.f32 0.0, %v781
    %783 = vmatmul.f32.gmra.mxu0 %v559
    %v784 = vpop.f32.mrf.mxu0
    %v785 = vadd.f32 0.0, %v784
    %786 = vmatmul.f32.gmra.mxu0 %v562
    %v787 = vpop.f32.mrf.mxu0
    %v788 = vadd.f32 0.0, %v787
    %789 = vmatmul.f32.gmra.mxu0 %v565
    %v790 = vpop.f32.mrf.mxu0
    %v791 = vadd.f32 0.0, %v790
    %792 = vmatmul.f32.gmra.mxu0 %v568
    %v793 = vpop.f32.mrf.mxu0
    %v794 = vadd.f32 0.0, %v793
    %795 = vmatmul.f32.gmra.mxu0 %v571
    %v796 = vpop.f32.mrf.mxu0
    %v797 = vadd.f32 0.0, %v796
    %798 = vmatmul.f32.gmra.mxu0 %v574
    %v799 = vpop.f32.mrf.mxu0
    %v800 = vadd.f32 0.0, %v799
    %801 = vmatmul.f32.gmra.mxu0 %v577
    %v802 = vpop.f32.mrf.mxu0
    %v803 = vadd.f32 0.0, %v802
    %804 = vmatmul.f32.gmra.mxu0 %v580
    %v805 = vpop.f32.mrf.mxu0
    %v806 = vadd.f32 0.0, %v805
    %807 = vmatmul.f32.gmra.mxu0 %v583
    %v808 = vpop.f32.mrf.mxu0
    %v809 = vadd.f32 0.0, %v808
    %810 = vmatmul.f32.gmra.mxu0 %v586
    %v811 = vpop.f32.mrf.mxu0
    %v812 = vadd.f32 0.0, %v811
    %813 = vdwg.mxu0
    %v814 = vmax.f32 %v606, %v719
    %815 = vmax.xlane.f32.xlu0 %v814
    %v816 = vpop.xlane.xlu0 %815
    %v817 = vmax.f32 %v609, %v722
    %818 = vmax.xlane.f32.xlu0 %v817
    %v819 = vpop.xlane.xlu0 %818
    %v820 = vmax.f32 %v612, %v725
    %821 = vmax.xlane.f32.xlu0 %v820
    %v822 = vpop.xlane.xlu0 %821
    %v823 = vmax.f32 %v615, %v728
    %824 = vmax.xlane.f32.xlu0 %v823
    %v825 = vpop.xlane.xlu0 %824
    %v826 = vmax.f32 %v618, %v731
    %827 = vmax.xlane.f32.xlu0 %v826
    %v828 = vpop.xlane.xlu0 %827
    %v829 = vmax.f32 %v621, %v734
    %830 = vmax.xlane.f32.xlu0 %v829
    %v831 = vpop.xlane.xlu0 %830
    %v832 = vmax.f32 %v624, %v737
    %833 = vmax.xlane.f32.xlu0 %v832
    %v834 = vpop.xlane.xlu0 %833
    %v835 = vmax.f32 %v627, %v740
    %836 = vmax.xlane.f32.xlu0 %v835
    %v837 = vpop.xlane.xlu0 %836
    %v838 = vmax.f32 %v630, %v743
    %839 = vmax.xlane.f32.xlu0 %v838
    %v840 = vpop.xlane.xlu0 %839
    %v841 = vmax.f32 %v633, %v746
    %842 = vmax.xlane.f32.xlu0 %v841
    %v843 = vpop.xlane.xlu0 %842
    %v844 = vmax.f32 %v636, %v749
    %845 = vmax.xlane.f32.xlu0 %v844
    %v846 = vpop.xlane.xlu0 %845
    %v847 = vmax.f32 %v639, %v752
    %848 = vmax.xlane.f32.xlu0 %v847
    %v849 = vpop.xlane.xlu0 %848
    %v850 = vmax.f32 %v642, %v755
    %851 = vmax.xlane.f32.xlu0 %v850
    %v852 = vpop.xlane.xlu0 %851
    %v853 = vmax.f32 %v645, %v758
    %854 = vmax.xlane.f32.xlu0 %v853
    %v855 = vpop.xlane.xlu0 %854
    %v856 = vmax.f32 %v648, %v761
    %857 = vmax.xlane.f32.xlu0 %v856
    %v858 = vpop.xlane.xlu0 %857
    %v859 = vmax.f32 %v651, %v764
    %860 = vmax.xlane.f32.xlu0 %v859
    %v861 = vpop.xlane.xlu0 %860
    %v862 = vmax.f32 %v654, %v767
    %863 = vmax.xlane.f32.xlu0 %v862
    %v864 = vpop.xlane.xlu0 %863
    %v865 = vmax.f32 %v657, %v770
    %866 = vmax.xlane.f32.xlu0 %v865
    %v867 = vpop.xlane.xlu0 %866
    %v868 = vmax.f32 %v660, %v773
    %869 = vmax.xlane.f32.xlu0 %v868
    %v870 = vpop.xlane.xlu0 %869
    %v871 = vmax.f32 %v663, %v776
    %872 = vmax.xlane.f32.xlu0 %v871
    %v873 = vpop.xlane.xlu0 %872
    %v874 = vmax.f32 %v666, %v779
    %875 = vmax.xlane.f32.xlu0 %v874
    %v876 = vpop.xlane.xlu0 %875
    %v877 = vmax.f32 %v669, %v782
    %878 = vmax.xlane.f32.xlu0 %v877
    %v879 = vpop.xlane.xlu0 %878
    %v880 = vmax.f32 %v672, %v785
    %881 = vmax.xlane.f32.xlu0 %v880
    %v882 = vpop.xlane.xlu0 %881
    %v883 = vmax.f32 %v675, %v788
    %884 = vmax.xlane.f32.xlu0 %v883
    %v885 = vpop.xlane.xlu0 %884
    %v886 = vmax.f32 %v678, %v791
    %887 = vmax.xlane.f32.xlu0 %v886
    %v888 = vpop.xlane.xlu0 %887
    %v889 = vmax.f32 %v681, %v794
    %890 = vmax.xlane.f32.xlu0 %v889
    %v891 = vpop.xlane.xlu0 %890
    %v892 = vmax.f32 %v684, %v797
    %893 = vmax.xlane.f32.xlu0 %v892
    %v894 = vpop.xlane.xlu0 %893
    %v895 = vmax.f32 %v687, %v800
    %896 = vmax.xlane.f32.xlu0 %v895
    %v897 = vpop.xlane.xlu0 %896
    %v898 = vmax.f32 %v690, %v803
    %899 = vmax.xlane.f32.xlu0 %v898
    %v900 = vpop.xlane.xlu0 %899
    %v901 = vmax.f32 %v693, %v806
    %902 = vmax.xlane.f32.xlu0 %v901
    %v903 = vpop.xlane.xlu0 %902
    %v904 = vmax.f32 %v696, %v809
    %905 = vmax.xlane.f32.xlu0 %v904
    %v906 = vpop.xlane.xlu0 %905
    %v907 = vmax.f32 %v699, %v812
    %908 = vmax.xlane.f32.xlu0 %v907
    %v909 = vpop.xlane.xlu0 %908
    %v910 = vsub.f32 %v606, %v816
    %v911 = vsub.f32 %v719, %v816
    %v912 = vsub.f32 %v609, %v819
    %v913 = vsub.f32 %v722, %v819
    %v914 = vsub.f32 %v612, %v822
    %v915 = vsub.f32 %v725, %v822
    %v916 = vsub.f32 %v615, %v825
    %v917 = vsub.f32 %v728, %v825
    %v918 = vsub.f32 %v618, %v828
    %v919 = vsub.f32 %v731, %v828
    %v920 = vsub.f32 %v621, %v831
    %v921 = vsub.f32 %v734, %v831
    %v922 = vsub.f32 %v624, %v834
    %v923 = vsub.f32 %v737, %v834
    %v924 = vsub.f32 %v627, %v837
    %v925 = vsub.f32 %v740, %v837
    %v926 = vsub.f32 %v630, %v840
    %v927 = vsub.f32 %v743, %v840
    %v928 = vsub.f32 %v633, %v843
    %v929 = vsub.f32 %v746, %v843
    %v930 = vsub.f32 %v636, %v846
    %v931 = vsub.f32 %v749, %v846
    %v932 = vsub.f32 %v639, %v849
    %v933 = vsub.f32 %v752, %v849
    %v934 = vsub.f32 %v642, %v852
    %v935 = vsub.f32 %v755, %v852
    %v936 = vsub.f32 %v645, %v855
    %v937 = vsub.f32 %v758, %v855
    %v938 = vsub.f32 %v648, %v858
    %v939 = vsub.f32 %v761, %v858
    %v940 = vsub.f32 %v651, %v861
    %v941 = vsub.f32 %v764, %v861
    %v942 = vsub.f32 %v654, %v864
    %v943 = vsub.f32 %v767, %v864
    %v944 = vsub.f32 %v657, %v867
    %v945 = vsub.f32 %v770, %v867
    %v946 = vsub.f32 %v660, %v870
    %v947 = vsub.f32 %v773, %v870
    %v948 = vsub.f32 %v663, %v873
    %v949 = vsub.f32 %v776, %v873
    %v950 = vsub.f32 %v666, %v876
    %v951 = vsub.f32 %v779, %v876
    %v952 = vsub.f32 %v669, %v879
    %v953 = vsub.f32 %v782, %v879
    %v954 = vsub.f32 %v672, %v882
    %v955 = vsub.f32 %v785, %v882
    %v956 = vsub.f32 %v675, %v885
    %v957 = vsub.f32 %v788, %v885
    %v958 = vsub.f32 %v678, %v888
    %v959 = vsub.f32 %v791, %v888
    %v960 = vsub.f32 %v681, %v891
    %v961 = vsub.f32 %v794, %v891
    %v962 = vsub.f32 %v684, %v894
    %v963 = vsub.f32 %v797, %v894
    %v964 = vsub.f32 %v687, %v897
    %v965 = vsub.f32 %v800, %v897
    %v966 = vsub.f32 %v690, %v900
    %v967 = vsub.f32 %v803, %v900
    %v968 = vsub.f32 %v693, %v903
    %v969 = vsub.f32 %v806, %v903
    %v970 = vsub.f32 %v696, %v906
    %v971 = vsub.f32 %v809, %v906
    %v972 = vsub.f32 %v699, %v909
    %v973 = vsub.f32 %v812, %v909
    %v974 = vmul.f32 %v910, 1.442695
    %v975 = vpow.pop %v974
    %v976 = vmul.f32 %v911, 1.442695
    %v977 = vpow.pop %v976
    %v978 = vmul.f32 %v912, 1.442695
    %v979 = vpow.pop %v978
    %v980 = vmul.f32 %v913, 1.442695
    %v981 = vpow.pop %v980
    %v982 = vmul.f32 %v914, 1.442695
    %v983 = vpow.pop %v982
    %v984 = vmul.f32 %v915, 1.442695
    %v985 = vpow.pop %v984
    %v986 = vmul.f32 %v916, 1.442695
    %v987 = vpow.pop %v986
    %v988 = vmul.f32 %v917, 1.442695
    %v989 = vpow.pop %v988
    %v990 = vmul.f32 %v918, 1.442695
    %v991 = vpow.pop %v990
    %v992 = vmul.f32 %v919, 1.442695
    %v993 = vpow.pop %v992
    %v994 = vmul.f32 %v920, 1.442695
    %v995 = vpow.pop %v994
    %v996 = vmul.f32 %v921, 1.442695
    %v997 = vpow.pop %v996
    %v998 = vmul.f32 %v922, 1.442695
    %v999 = vpow.pop %v998
    %v1000 = vmul.f32 %v923, 1.442695
    %v1001 = vpow.pop %v1000
    %v1002 = vmul.f32 %v924, 1.442695
    %v1003 = vpow.pop %v1002
    %v1004 = vmul.f32 %v925, 1.442695
    %v1005 = vpow.pop %v1004
    %v1006 = vmul.f32 %v926, 1.442695
    %v1007 = vpow.pop %v1006
    %v1008 = vmul.f32 %v927, 1.442695
    %v1009 = vpow.pop %v1008
    %v1010 = vmul.f32 %v928, 1.442695
    %v1011 = vpow.pop %v1010
    %v1012 = vmul.f32 %v929, 1.442695
    %v1013 = vpow.pop %v1012
    %v1014 = vmul.f32 %v930, 1.442695
    %v1015 = vpow.pop %v1014
    %v1016 = vmul.f32 %v931, 1.442695
    %v1017 = vpow.pop %v1016
    %v1018 = vmul.f32 %v932, 1.442695
    %v1019 = vpow.pop %v1018
    %v1020 = vmul.f32 %v933, 1.442695
    %v1021 = vpow.pop %v1020
    %v1022 = vmul.f32 %v934, 1.442695
    %v1023 = vpow.pop %v1022
    %v1024 = vmul.f32 %v935, 1.442695
    %v1025 = vpow.pop %v1024
    %v1026 = vmul.f32 %v936, 1.442695
    %v1027 = vpow.pop %v1026
    %v1028 = vmul.f32 %v937, 1.442695
    %v1029 = vpow.pop %v1028
    %v1030 = vmul.f32 %v938, 1.442695
    %v1031 = vpow.pop %v1030
    %v1032 = vmul.f32 %v939, 1.442695
    %v1033 = vpow.pop %v1032
    %v1034 = vmul.f32 %v940, 1.442695
    %v1035 = vpow.pop %v1034
    %v1036 = vmul.f32 %v941, 1.442695
    %v1037 = vpow.pop %v1036
    %v1038 = vmul.f32 %v942, 1.442695
    %v1039 = vpow.pop %v1038
    %v1040 = vmul.f32 %v943, 1.442695
    %v1041 = vpow.pop %v1040
    %v1042 = vmul.f32 %v944, 1.442695
    %v1043 = vpow.pop %v1042
    %v1044 = vmul.f32 %v945, 1.442695
    %v1045 = vpow.pop %v1044
    %v1046 = vmul.f32 %v946, 1.442695
    %v1047 = vpow.pop %v1046
    %v1048 = vmul.f32 %v947, 1.442695
    %v1049 = vpow.pop %v1048
    %v1050 = vmul.f32 %v948, 1.442695
    %v1051 = vpow.pop %v1050
    %v1052 = vmul.f32 %v949, 1.442695
    %v1053 = vpow.pop %v1052
    %v1054 = vmul.f32 %v950, 1.442695
    %v1055 = vpow.pop %v1054
    %v1056 = vmul.f32 %v951, 1.442695
    %v1057 = vpow.pop %v1056
    %v1058 = vmul.f32 %v952, 1.442695
    %v1059 = vpow.pop %v1058
    %v1060 = vmul.f32 %v953, 1.442695
    %v1061 = vpow.pop %v1060
    %v1062 = vmul.f32 %v954, 1.442695
    %v1063 = vpow.pop %v1062
    %v1064 = vmul.f32 %v955, 1.442695
    %v1065 = vpow.pop %v1064
    %v1066 = vmul.f32 %v956, 1.442695
    %v1067 = vpow.pop %v1066
    %v1068 = vmul.f32 %v957, 1.442695
    %v1069 = vpow.pop %v1068
    %v1070 = vmul.f32 %v958, 1.442695
    %v1071 = vpow.pop %v1070
    %v1072 = vmul.f32 %v959, 1.442695
    %v1073 = vpow.pop %v1072
    %v1074 = vmul.f32 %v960, 1.442695
    %v1075 = vpow.pop %v1074
    %v1076 = vmul.f32 %v961, 1.442695
    %v1077 = vpow.pop %v1076
    %v1078 = vmul.f32 %v962, 1.442695
    %v1079 = vpow.pop %v1078
    %v1080 = vmul.f32 %v963, 1.442695
    %v1081 = vpow.pop %v1080
    %v1082 = vmul.f32 %v964, 1.442695
    %v1083 = vpow.pop %v1082
    %v1084 = vmul.f32 %v965, 1.442695
    %v1085 = vpow.pop %v1084
    %v1086 = vmul.f32 %v966, 1.442695
    %v1087 = vpow.pop %v1086
    %v1088 = vmul.f32 %v967, 1.442695
    %v1089 = vpow.pop %v1088
    %v1090 = vmul.f32 %v968, 1.442695
    %v1091 = vpow.pop %v1090
    %v1092 = vmul.f32 %v969, 1.442695
    %v1093 = vpow.pop %v1092
    %v1094 = vmul.f32 %v970, 1.442695
    %v1095 = vpow.pop %v1094
    %v1096 = vmul.f32 %v971, 1.442695
    %v1097 = vpow.pop %v1096
    %v1098 = vmul.f32 %v972, 1.442695
    %v1099 = vpow.pop %v1098
    %v1100 = vmul.f32 %v973, 1.442695
    %v1101 = vpow.pop %v1100
    %v1102 = vadd.f32 %v975, %v977
    %1103 = vadd.xlane.f32.xlu0 %v1102
    %v1104 = vpop.xlane.xlu0 %1103
    %v1105 = vadd.f32 %v979, %v981
    %1106 = vadd.xlane.f32.xlu0 %v1105
    %v1107 = vpop.xlane.xlu0 %1106
    %v1108 = vadd.f32 %v983, %v985
    %1109 = vadd.xlane.f32.xlu0 %v1108
    %v1110 = vpop.xlane.xlu0 %1109
    %v1111 = vadd.f32 %v987, %v989
    %1112 = vadd.xlane.f32.xlu0 %v1111
    %v1113 = vpop.xlane.xlu0 %1112
    %v1114 = vadd.f32 %v991, %v993
    %1115 = vadd.xlane.f32.xlu0 %v1114
    %v1116 = vpop.xlane.xlu0 %1115
    %v1117 = vadd.f32 %v995, %v997
    %1118 = vadd.xlane.f32.xlu0 %v1117
    %v1119 = vpop.xlane.xlu0 %1118
    %v1120 = vadd.f32 %v999, %v1001
    %1121 = vadd.xlane.f32.xlu0 %v1120
    %v1122 = vpop.xlane.xlu0 %1121
    %v1123 = vadd.f32 %v1003, %v1005
    %1124 = vadd.xlane.f32.xlu0 %v1123
    %v1125 = vpop.xlane.xlu0 %1124
    %v1126 = vadd.f32 %v1007, %v1009
    %1127 = vadd.xlane.f32.xlu0 %v1126
    %v1128 = vpop.xlane.xlu0 %1127
    %v1129 = vadd.f32 %v1011, %v1013
    %1130 = vadd.xlane.f32.xlu0 %v1129
    %v1131 = vpop.xlane.xlu0 %1130
    %v1132 = vadd.f32 %v1015, %v1017
    %1133 = vadd.xlane.f32.xlu0 %v1132
    %v1134 = vpop.xlane.xlu0 %1133
    %v1135 = vadd.f32 %v1019, %v1021
    %1136 = vadd.xlane.f32.xlu0 %v1135
    %v1137 = vpop.xlane.xlu0 %1136
    %v1138 = vadd.f32 %v1023, %v1025
    %1139 = vadd.xlane.f32.xlu0 %v1138
    %v1140 = vpop.xlane.xlu0 %1139
    %v1141 = vadd.f32 %v1027, %v1029
    %1142 = vadd.xlane.f32.xlu0 %v1141
    %v1143 = vpop.xlane.xlu0 %1142
    %v1144 = vadd.f32 %v1031, %v1033
    %1145 = vadd.xlane.f32.xlu0 %v1144
    %v1146 = vpop.xlane.xlu0 %1145
    %v1147 = vadd.f32 %v1035, %v1037
    %1148 = vadd.xlane.f32.xlu0 %v1147
    %v1149 = vpop.xlane.xlu0 %1148
    %v1150 = vadd.f32 %v1039, %v1041
    %1151 = vadd.xlane.f32.xlu0 %v1150
    %v1152 = vpop.xlane.xlu0 %1151
    %v1153 = vadd.f32 %v1043, %v1045
    %1154 = vadd.xlane.f32.xlu0 %v1153
    %v1155 = vpop.xlane.xlu0 %1154
    %v1156 = vadd.f32 %v1047, %v1049
    %1157 = vadd.xlane.f32.xlu0 %v1156
    %v1158 = vpop.xlane.xlu0 %1157
    %v1159 = vadd.f32 %v1051, %v1053
    %1160 = vadd.xlane.f32.xlu0 %v1159
    %v1161 = vpop.xlane.xlu0 %1160
    %v1162 = vadd.f32 %v1055, %v1057
    %1163 = vadd.xlane.f32.xlu0 %v1162
    %v1164 = vpop.xlane.xlu0 %1163
    %v1165 = vadd.f32 %v1059, %v1061
    %1166 = vadd.xlane.f32.xlu0 %v1165
    %v1167 = vpop.xlane.xlu0 %1166
    %v1168 = vadd.f32 %v1063, %v1065
    %1169 = vadd.xlane.f32.xlu0 %v1168
    %v1170 = vpop.xlane.xlu0 %1169
    %v1171 = vadd.f32 %v1067, %v1069
    %1172 = vadd.xlane.f32.xlu0 %v1171
    %v1173 = vpop.xlane.xlu0 %1172
    %v1174 = vadd.f32 %v1071, %v1073
    %1175 = vadd.xlane.f32.xlu0 %v1174
    %v1176 = vpop.xlane.xlu0 %1175
    %v1177 = vadd.f32 %v1075, %v1077
    %1178 = vadd.xlane.f32.xlu0 %v1177
    %v1179 = vpop.xlane.xlu0 %1178
    %v1180 = vadd.f32 %v1079, %v1081
    %1181 = vadd.xlane.f32.xlu0 %v1180
    %v1182 = vpop.xlane.xlu0 %1181
    %v1183 = vadd.f32 %v1083, %v1085
    %1184 = vadd.xlane.f32.xlu0 %v1183
    %v1185 = vpop.xlane.xlu0 %1184
    %v1186 = vadd.f32 %v1087, %v1089
    %1187 = vadd.xlane.f32.xlu0 %v1186
    %v1188 = vpop.xlane.xlu0 %1187
    %v1189 = vadd.f32 %v1091, %v1093
    %1190 = vadd.xlane.f32.xlu0 %v1189
    %v1191 = vpop.xlane.xlu0 %1190
    %v1192 = vadd.f32 %v1095, %v1097
    %1193 = vadd.xlane.f32.xlu0 %v1192
    %v1194 = vpop.xlane.xlu0 %1193
    %v1195 = vadd.f32 %v1099, %v1101
    %1196 = vadd.xlane.f32.xlu0 %v1195
    %v1197 = vpop.xlane.xlu0 %1196
    %v1198 = vrcp.pop %v1104
    %v1199 = vrcp.pop %v1107
    %v1200 = vrcp.pop %v1110
    %v1201 = vrcp.pop %v1113
    %v1202 = vrcp.pop %v1116
    %v1203 = vrcp.pop %v1119
    %v1204 = vrcp.pop %v1122
    %v1205 = vrcp.pop %v1125
    %v1206 = vrcp.pop %v1128
    %v1207 = vrcp.pop %v1131
    %v1208 = vrcp.pop %v1134
    %v1209 = vrcp.pop %v1137
    %v1210 = vrcp.pop %v1140
    %v1211 = vrcp.pop %v1143
    %v1212 = vrcp.pop %v1146
    %v1213 = vrcp.pop %v1149
    %v1214 = vrcp.pop %v1152
    %v1215 = vrcp.pop %v1155
    %v1216 = vrcp.pop %v1158
    %v1217 = vrcp.pop %v1161
    %v1218 = vrcp.pop %v1164
    %v1219 = vrcp.pop %v1167
    %v1220 = vrcp.pop %v1170
    %v1221 = vrcp.pop %v1173
    %v1222 = vrcp.pop %v1176
    %v1223 = vrcp.pop %v1179
    %v1224 = vrcp.pop %v1182
    %v1225 = vrcp.pop %v1185
    %v1226 = vrcp.pop %v1188
    %v1227 = vrcp.pop %v1191
    %v1228 = vrcp.pop %v1194
    %v1229 = vrcp.pop %v1197
    %v1230 = vmul.f32 %v975, %v1198
    %v1231 = vmul.f32 %v977, %v1198
    %v1232 = vmul.f32 %v979, %v1199
    %v1233 = vmul.f32 %v981, %v1199
    %v1234 = vmul.f32 %v983, %v1200
    %v1235 = vmul.f32 %v985, %v1200
    %v1236 = vmul.f32 %v987, %v1201
    %v1237 = vmul.f32 %v989, %v1201
    %v1238 = vmul.f32 %v991, %v1202
    %v1239 = vmul.f32 %v993, %v1202
    %v1240 = vmul.f32 %v995, %v1203
    %v1241 = vmul.f32 %v997, %v1203
    %v1242 = vmul.f32 %v999, %v1204
    %v1243 = vmul.f32 %v1001, %v1204
    %v1244 = vmul.f32 %v1003, %v1205
    %v1245 = vmul.f32 %v1005, %v1205
    %v1246 = vmul.f32 %v1007, %v1206
    %v1247 = vmul.f32 %v1009, %v1206
    %v1248 = vmul.f32 %v1011, %v1207
    %v1249 = vmul.f32 %v1013, %v1207
    %v1250 = vmul.f32 %v1015, %v1208
    %v1251 = vmul.f32 %v1017, %v1208
    %v1252 = vmul.f32 %v1019, %v1209
    %v1253 = vmul.f32 %v1021, %v1209
    %v1254 = vmul.f32 %v1023, %v1210
    %v1255 = vmul.f32 %v1025, %v1210
    %v1256 = vmul.f32 %v1027, %v1211
    %v1257 = vmul.f32 %v1029, %v1211
    %v1258 = vmul.f32 %v1031, %v1212
    %v1259 = vmul.f32 %v1033, %v1212
    %v1260 = vmul.f32 %v1035, %v1213
    %v1261 = vmul.f32 %v1037, %v1213
    %v1262 = vmul.f32 %v1039, %v1214
    %v1263 = vmul.f32 %v1041, %v1214
    %v1264 = vmul.f32 %v1043, %v1215
    %v1265 = vmul.f32 %v1045, %v1215
    %v1266 = vmul.f32 %v1047, %v1216
    %v1267 = vmul.f32 %v1049, %v1216
    %v1268 = vmul.f32 %v1051, %v1217
    %v1269 = vmul.f32 %v1053, %v1217
    %v1270 = vmul.f32 %v1055, %v1218
    %v1271 = vmul.f32 %v1057, %v1218
    %v1272 = vmul.f32 %v1059, %v1219
    %v1273 = vmul.f32 %v1061, %v1219
    %v1274 = vmul.f32 %v1063, %v1220
    %v1275 = vmul.f32 %v1065, %v1220
    %v1276 = vmul.f32 %v1067, %v1221
    %v1277 = vmul.f32 %v1069, %v1221
    %v1278 = vmul.f32 %v1071, %v1222
    %v1279 = vmul.f32 %v1073, %v1222
    %v1280 = vmul.f32 %v1075, %v1223
    %v1281 = vmul.f32 %v1077, %v1223
    %v1282 = vmul.f32 %v1079, %v1224
    %v1283 = vmul.f32 %v1081, %v1224
    %v1284 = vmul.f32 %v1083, %v1225
    %v1285 = vmul.f32 %v1085, %v1225
    %v1286 = vmul.f32 %v1087, %v1226
    %v1287 = vmul.f32 %v1089, %v1226
    %v1288 = vmul.f32 %v1091, %v1227
    %v1289 = vmul.f32 %v1093, %v1227
    %v1290 = vmul.f32 %v1095, %v1228
    %v1291 = vmul.f32 %v1097, %v1228
    %v1292 = vmul.f32 %v1099, %v1229
    %v1293 = vmul.f32 %v1101, %v1229
    %1294 = vmatpush.xpose.msra.mxu0 %v1260
    %1295 = vmatpush.xpose.msra.mxu0 %v1258
    %1296 = vmatpush.xpose.msra.mxu0 %v1256
    %1297 = vmatpush.xpose.msra.mxu0 %v1254
    %1298 = vmatpush.xpose.msra.mxu0 %v1252
    %1299 = vmatpush.xpose.msra.mxu0 %v1250
    %1300 = vmatpush.xpose.msra.mxu0 %v1248
    %1301 = vmatpush.xpose.msra.mxu0 %v1246
    %1302 = vmatpush.xpose.msra.mxu0 %v1244
    %1303 = vmatpush.xpose.msra.mxu0 %v1242
    %1304 = vmatpush.xpose.msra.mxu0 %v1240
    %1305 = vmatpush.xpose.msra.mxu0 %v1238
    %1306 = vmatpush.xpose.msra.mxu0 %v1236
    %1307 = vmatpush.xpose.msra.mxu0 %v1234
    %1308 = vmatpush.xpose.msra.mxu0 %v1232
    %1309 = vmatpush.xpose.msra.mxu0 %v1230
    %1310 = vmatmul.f32.gmra.mxu0 %v363
    %v1311 = vpop.f32.mrf.mxu0
    %v1312 = vadd.f32 0.0, %v1311
    %1313 = vdwg.mxu0
    %1314 = vmatpush.xpose.msra.mxu0 %v1261
    %1315 = vmatpush.xpose.msra.mxu0 %v1259
    %1316 = vmatpush.xpose.msra.mxu0 %v1257
    %1317 = vmatpush.xpose.msra.mxu0 %v1255
    %1318 = vmatpush.xpose.msra.mxu0 %v1253
    %1319 = vmatpush.xpose.msra.mxu0 %v1251
    %1320 = vmatpush.xpose.msra.mxu0 %v1249
    %1321 = vmatpush.xpose.msra.mxu0 %v1247
    %1322 = vmatpush.xpose.msra.mxu0 %v1245
    %1323 = vmatpush.xpose.msra.mxu0 %v1243
    %1324 = vmatpush.xpose.msra.mxu0 %v1241
    %1325 = vmatpush.xpose.msra.mxu0 %v1239
    %1326 = vmatpush.xpose.msra.mxu0 %v1237
    %1327 = vmatpush.xpose.msra.mxu0 %v1235
    %1328 = vmatpush.xpose.msra.mxu0 %v1233
    %1329 = vmatpush.xpose.msra.mxu0 %v1231
    %1330 = vmatmul.f32.gmra.mxu0 %v416
    %v1331 = vpop.f32.mrf.mxu0
    %v1332 = vadd.f32 %v1312, %v1331
    %1333 = vdwg.mxu0
    %1334 = vmatpush.xpose.msra.mxu0 %v1292
    %1335 = vmatpush.xpose.msra.mxu0 %v1290
    %1336 = vmatpush.xpose.msra.mxu0 %v1288
    %1337 = vmatpush.xpose.msra.mxu0 %v1286
    %1338 = vmatpush.xpose.msra.mxu0 %v1284
    %1339 = vmatpush.xpose.msra.mxu0 %v1282
    %1340 = vmatpush.xpose.msra.mxu0 %v1280
    %1341 = vmatpush.xpose.msra.mxu0 %v1278
    %1342 = vmatpush.xpose.msra.mxu0 %v1276
    %1343 = vmatpush.xpose.msra.mxu0 %v1274
    %1344 = vmatpush.xpose.msra.mxu0 %v1272
    %1345 = vmatpush.xpose.msra.mxu0 %v1270
    %1346 = vmatpush.xpose.msra.mxu0 %v1268
    %1347 = vmatpush.xpose.msra.mxu0 %v1266
    %1348 = vmatpush.xpose.msra.mxu0 %v1264
    %1349 = vmatpush.xpose.msra.mxu0 %v1262
    %1350 = vmatmul.f32.gmra.mxu0 %v363
    %v1351 = vpop.f32.mrf.mxu0
    %v1352 = vadd.f32 0.0, %v1351
    %1353 = vdwg.mxu0
    %1354 = vmatpush.xpose.msra.mxu0 %v1293
    %1355 = vmatpush.xpose.msra.mxu0 %v1291
    %1356 = vmatpush.xpose.msra.mxu0 %v1289
    %1357 = vmatpush.xpose.msra.mxu0 %v1287
    %1358 = vmatpush.xpose.msra.mxu0 %v1285
    %1359 = vmatpush.xpose.msra.mxu0 %v1283
    %1360 = vmatpush.xpose.msra.mxu0 %v1281
    %1361 = vmatpush.xpose.msra.mxu0 %v1279
    %1362 = vmatpush.xpose.msra.mxu0 %v1277
    %1363 = vmatpush.xpose.msra.mxu0 %v1275
    %1364 = vmatpush.xpose.msra.mxu0 %v1273
    %1365 = vmatpush.xpose.msra.mxu0 %v1271
    %1366 = vmatpush.xpose.msra.mxu0 %v1269
    %1367 = vmatpush.xpose.msra.mxu0 %v1267
    %1368 = vmatpush.xpose.msra.mxu0 %v1265
    %1369 = vmatpush.xpose.msra.mxu0 %v1263
    %1370 = vmatmul.f32.gmra.mxu0 %v416
    %v1371 = vpop.f32.mrf.mxu0
    %v1372 = vadd.f32 %v1352, %v1371
    %1373 = vdwg.mxu0
    %1374 = vxpose.xlu0.b32.start [1/16] %v342, 128
    %1375 = vxpose.xlu0.b32.cont [2/16] 0.0, 128
    %1376 = vxpose.xlu0.b32.cont [3/16] 0.0, 128
    %1377 = vxpose.xlu0.b32.cont [4/16] 0.0, 128
    %1378 = vxpose.xlu0.b32.cont [5/16] 0.0, 128
    %1379 = vxpose.xlu0.b32.cont [6/16] 0.0, 128
    %1380 = vxpose.xlu0.b32.cont [7/16] 0.0, 128
    %1381 = vxpose.xlu0.b32.cont [8/16] 0.0, 128
    %1382 = vxpose.xlu0.b32.cont [9/16] 0.0, 128
    %1383 = vxpose.xlu0.b32.cont [10/16] 0.0, 128
    %1384 = vxpose.xlu0.b32.cont [11/16] 0.0, 128
    %1385 = vxpose.xlu0.b32.cont [12/16] 0.0, 128
    %1386 = vxpose.xlu0.b32.cont [13/16] 0.0, 128
    %1387 = vxpose.xlu0.b32.cont [14/16] 0.0, 128
    %1388 = vxpose.xlu0.b32.cont [15/16] 0.0, 128
    %1389 = vxpose.xlu0.b32.end [16/16] 0.0, 128
    %v1390 = vpop.trf.xlu0
    %v1391 = vpop.trf.xlu0
    %v1392 = vpop.trf.xlu0
    %v1393 = vpop.trf.xlu0
    %v1394 = vpop.trf.xlu0
    %v1395 = vpop.trf.xlu0
    %v1396 = vpop.trf.xlu0
    %v1397 = vpop.trf.xlu0
    %v1398 = vpop.trf.xlu0
    %v1399 = vpop.trf.xlu0
    %v1400 = vpop.trf.xlu0
    %v1401 = vpop.trf.xlu0
    %v1402 = vpop.trf.xlu0
    %v1403 = vpop.trf.xlu0
    %v1404 = vpop.trf.xlu0
    %v1405 = vpop.trf.xlu0
    %1406 = vxpose.xlu0.b32.start [1/16] %v395, 128
    %1407 = vxpose.xlu0.b32.cont [2/16] 0.0, 128
    %1408 = vxpose.xlu0.b32.cont [3/16] 0.0, 128
    %1409 = vxpose.xlu0.b32.cont [4/16] 0.0, 128
    %1410 = vxpose.xlu0.b32.cont [5/16] 0.0, 128
    %1411 = vxpose.xlu0.b32.cont [6/16] 0.0, 128
    %1412 = vxpose.xlu0.b32.cont [7/16] 0.0, 128
    %1413 = vxpose.xlu0.b32.cont [8/16] 0.0, 128
    %1414 = vxpose.xlu0.b32.cont [9/16] 0.0, 128
    %1415 = vxpose.xlu0.b32.cont [10/16] 0.0, 128
    %1416 = vxpose.xlu0.b32.cont [11/16] 0.0, 128
    %1417 = vxpose.xlu0.b32.cont [12/16] 0.0, 128
    %1418 = vxpose.xlu0.b32.cont [13/16] 0.0, 128
    %1419 = vxpose.xlu0.b32.cont [14/16] 0.0, 128
    %1420 = vxpose.xlu0.b32.cont [15/16] 0.0, 128
    %1421 = vxpose.xlu0.b32.end [16/16] 0.0, 128
    %v1422 = vpop.trf.xlu0
    %v1423 = vpop.trf.xlu0
    %v1424 = vpop.trf.xlu0
    %v1425 = vpop.trf.xlu0
    %v1426 = vpop.trf.xlu0
    %v1427 = vpop.trf.xlu0
    %v1428 = vpop.trf.xlu0
    %v1429 = vpop.trf.xlu0
    %v1430 = vpop.trf.xlu0
    %v1431 = vpop.trf.xlu0
    %v1432 = vpop.trf.xlu0
    %v1433 = vpop.trf.xlu0
    %v1434 = vpop.trf.xlu0
    %v1435 = vpop.trf.xlu0
    %v1436 = vpop.trf.xlu0
    %v1437 = vpop.trf.xlu0
    %v1439 = vsel %vm491, %v1390, 0
    %v1442 = vsel %vm491, %v1391, 0
    %v1445 = vsel %vm491, %v1392, 0
    %v1448 = vsel %vm491, %v1393, 0
    %v1451 = vsel %vm491, %v1394, 0
    %v1454 = vsel %vm491, %v1395, 0
    %v1457 = vsel %vm491, %v1396, 0
    %v1460 = vsel %vm491, %v1397, 0
    %v1463 = vsel %vm491, %v1398, 0
    %v1466 = vsel %vm491, %v1399, 0
    %v1469 = vsel %vm491, %v1400, 0
    %v1472 = vsel %vm491, %v1401, 0
    %v1475 = vsel %vm491, %v1402, 0
    %v1478 = vsel %vm491, %v1403, 0
    %v1481 = vsel %vm491, %v1404, 0
    %v1484 = vsel %vm491, %v1405, 0
    %v1487 = vsel %vm491, %v1422, 0
    %v1490 = vsel %vm491, %v1423, 0
    %v1493 = vsel %vm491, %v1424, 0
    %v1496 = vsel %vm491, %v1425, 0
    %v1499 = vsel %vm491, %v1426, 0
    %v1502 = vsel %vm491, %v1427, 0
    %v1505 = vsel %vm491, %v1428, 0
    %v1508 = vsel %vm491, %v1429, 0
    %v1511 = vsel %vm491, %v1430, 0
    %v1514 = vsel %vm491, %v1431, 0
    %v1517 = vsel %vm491, %v1432, 0
    %v1520 = vsel %vm491, %v1433, 0
    %v1523 = vsel %vm491, %v1434, 0
    %v1526 = vsel %vm491, %v1435, 0
    %v1529 = vsel %vm491, %v1436, 0
    %v1532 = vsel %vm491, %v1437, 0
    %1534 = vmatpush.msra.mxu0 0.0
    %1535 = vmatpush.msra.mxu0 0.0
    %1536 = vmatpush.msra.mxu0 0.0
    %1537 = vmatpush.msra.mxu0 0.0
    %1538 = vmatpush.msra.mxu0 0.0
    %1539 = vmatpush.msra.mxu0 0.0
    %1540 = vmatpush.msra.mxu0 0.0
    %1541 = vmatpush.msra.mxu0 0.0
    %1542 = vmatpush.msra.mxu0 0.0
    %1543 = vmatpush.msra.mxu0 0.0
    %1544 = vmatpush.msra.mxu0 0.0
    %1545 = vmatpush.msra.mxu0 0.0
    %1546 = vmatpush.msra.mxu0 0.0
    %1547 = vmatpush.msra.mxu0 0.0
    %1548 = vmatpush.msra.mxu0 0.0
    %1549 = vmatpush.msra.mxu0 %v354
    %1550 = vmatmul.f32.gmra.mxu0 %v1439
    %v1551 = vpop.f32.mrf.mxu0
    %v1552 = vadd.f32 0.0, %v1551
    %1553 = vmatmul.f32.gmra.mxu0 %v1442
    %v1554 = vpop.f32.mrf.mxu0
    %v1555 = vadd.f32 0.0, %v1554
    %1556 = vmatmul.f32.gmra.mxu0 %v1445
    %v1557 = vpop.f32.mrf.mxu0
    %v1558 = vadd.f32 0.0, %v1557
    %1559 = vmatmul.f32.gmra.mxu0 %v1448
    %v1560 = vpop.f32.mrf.mxu0
    %v1561 = vadd.f32 0.0, %v1560
    %1562 = vmatmul.f32.gmra.mxu0 %v1451
    %v1563 = vpop.f32.mrf.mxu0
    %v1564 = vadd.f32 0.0, %v1563
    %1565 = vmatmul.f32.gmra.mxu0 %v1454
    %v1566 = vpop.f32.mrf.mxu0
    %v1567 = vadd.f32 0.0, %v1566
    %1568 = vmatmul.f32.gmra.mxu0 %v1457
    %v1569 = vpop.f32.mrf.mxu0
    %v1570 = vadd.f32 0.0, %v1569
    %1571 = vmatmul.f32.gmra.mxu0 %v1460
    %v1572 = vpop.f32.mrf.mxu0
    %v1573 = vadd.f32 0.0, %v1572
    %1574 = vmatmul.f32.gmra.mxu0 %v1463
    %v1575 = vpop.f32.mrf.mxu0
    %v1576 = vadd.f32 0.0, %v1575
    %1577 = vmatmul.f32.gmra.mxu0 %v1466
    %v1578 = vpop.f32.mrf.mxu0
    %v1579 = vadd.f32 0.0, %v1578
    %1580 = vmatmul.f32.gmra.mxu0 %v1469
    %v1581 = vpop.f32.mrf.mxu0
    %v1582 = vadd.f32 0.0, %v1581
    %1583 = vmatmul.f32.gmra.mxu0 %v1472
    %v1584 = vpop.f32.mrf.mxu0
    %v1585 = vadd.f32 0.0, %v1584
    %1586 = vmatmul.f32.gmra.mxu0 %v1475
    %v1587 = vpop.f32.mrf.mxu0
    %v1588 = vadd.f32 0.0, %v1587
    %1589 = vmatmul.f32.gmra.mxu0 %v1478
    %v1590 = vpop.f32.mrf.mxu0
    %v1591 = vadd.f32 0.0, %v1590
    %1592 = vmatmul.f32.gmra.mxu0 %v1481
    %v1593 = vpop.f32.mrf.mxu0
    %v1594 = vadd.f32 0.0, %v1593
    %1595 = vmatmul.f32.gmra.mxu0 %v1484
    %v1596 = vpop.f32.mrf.mxu0
    %v1597 = vadd.f32 0.0, %v1596
    %1598 = vmatmul.f32.gmra.mxu0 %v1487
    %v1599 = vpop.f32.mrf.mxu0
    %v1600 = vadd.f32 0.0, %v1599
    %1601 = vmatmul.f32.gmra.mxu0 %v1490
    %v1602 = vpop.f32.mrf.mxu0
    %v1603 = vadd.f32 0.0, %v1602
    %1604 = vmatmul.f32.gmra.mxu0 %v1493
    %v1605 = vpop.f32.mrf.mxu0
    %v1606 = vadd.f32 0.0, %v1605
    %1607 = vmatmul.f32.gmra.mxu0 %v1496
    %v1608 = vpop.f32.mrf.mxu0
    %v1609 = vadd.f32 0.0, %v1608
    %1610 = vmatmul.f32.gmra.mxu0 %v1499
    %v1611 = vpop.f32.mrf.mxu0
    %v1612 = vadd.f32 0.0, %v1611
    %1613 = vmatmul.f32.gmra.mxu0 %v1502
    %v1614 = vpop.f32.mrf.mxu0
    %v1615 = vadd.f32 0.0, %v1614
    %1616 = vmatmul.f32.gmra.mxu0 %v1505
    %v1617 = vpop.f32.mrf.mxu0
    %v1618 = vadd.f32 0.0, %v1617
    %1619 = vmatmul.f32.gmra.mxu0 %v1508
    %v1620 = vpop.f32.mrf.mxu0
    %v1621 = vadd.f32 0.0, %v1620
    %1622 = vmatmul.f32.gmra.mxu0 %v1511
    %v1623 = vpop.f32.mrf.mxu0
    %v1624 = vadd.f32 0.0, %v1623
    %1625 = vmatmul.f32.gmra.mxu0 %v1514
    %v1626 = vpop.f32.mrf.mxu0
    %v1627 = vadd.f32 0.0, %v1626
    %1628 = vmatmul.f32.gmra.mxu0 %v1517
    %v1629 = vpop.f32.mrf.mxu0
    %v1630 = vadd.f32 0.0, %v1629
    %1631 = vmatmul.f32.gmra.mxu0 %v1520
    %v1632 = vpop.f32.mrf.mxu0
    %v1633 = vadd.f32 0.0, %v1632
    %1634 = vmatmul.f32.gmra.mxu0 %v1523
    %v1635 = vpop.f32.mrf.mxu0
    %v1636 = vadd.f32 0.0, %v1635
    %1637 = vmatmul.f32.gmra.mxu0 %v1526
    %v1638 = vpop.f32.mrf.mxu0
    %v1639 = vadd.f32 0.0, %v1638
    %1640 = vmatmul.f32.gmra.mxu0 %v1529
    %v1641 = vpop.f32.mrf.mxu0
    %v1642 = vadd.f32 0.0, %v1641
    %1643 = vmatmul.f32.gmra.mxu0 %v1532
    %v1644 = vpop.f32.mrf.mxu0
    %v1645 = vadd.f32 0.0, %v1644
    %1646 = vdwg.mxu0
    %1647 = vmatpush.msra.mxu0 0.0
    %1648 = vmatpush.msra.mxu0 0.0
    %1649 = vmatpush.msra.mxu0 0.0
    %1650 = vmatpush.msra.mxu0 0.0
    %1651 = vmatpush.msra.mxu0 0.0
    %1652 = vmatpush.msra.mxu0 0.0
    %1653 = vmatpush.msra.mxu0 0.0
    %1654 = vmatpush.msra.mxu0 0.0
    %1655 = vmatpush.msra.mxu0 0.0
    %1656 = vmatpush.msra.mxu0 0.0
    %1657 = vmatpush.msra.mxu0 0.0
    %1658 = vmatpush.msra.mxu0 0.0
    %1659 = vmatpush.msra.mxu0 0.0
    %1660 = vmatpush.msra.mxu0 0.0
    %1661 = vmatpush.msra.mxu0 0.0
    %1662 = vmatpush.msra.mxu0 %v407
    %1663 = vmatmul.f32.gmra.mxu0 %v1439
    %v1664 = vpop.f32.mrf.mxu0
    %v1665 = vadd.f32 0.0, %v1664
    %1666 = vmatmul.f32.gmra.mxu0 %v1442
    %v1667 = vpop.f32.mrf.mxu0
    %v1668 = vadd.f32 0.0, %v1667
    %1669 = vmatmul.f32.gmra.mxu0 %v1445
    %v1670 = vpop.f32.mrf.mxu0
    %v1671 = vadd.f32 0.0, %v1670
    %1672 = vmatmul.f32.gmra.mxu0 %v1448
    %v1673 = vpop.f32.mrf.mxu0
    %v1674 = vadd.f32 0.0, %v1673
    %1675 = vmatmul.f32.gmra.mxu0 %v1451
    %v1676 = vpop.f32.mrf.mxu0
    %v1677 = vadd.f32 0.0, %v1676
    %1678 = vmatmul.f32.gmra.mxu0 %v1454
    %v1679 = vpop.f32.mrf.mxu0
    %v1680 = vadd.f32 0.0, %v1679
    %1681 = vmatmul.f32.gmra.mxu0 %v1457
    %v1682 = vpop.f32.mrf.mxu0
    %v1683 = vadd.f32 0.0, %v1682
    %1684 = vmatmul.f32.gmra.mxu0 %v1460
    %v1685 = vpop.f32.mrf.mxu0
    %v1686 = vadd.f32 0.0, %v1685
    %1687 = vmatmul.f32.gmra.mxu0 %v1463
    %v1688 = vpop.f32.mrf.mxu0
    %v1689 = vadd.f32 0.0, %v1688
    %1690 = vmatmul.f32.gmra.mxu0 %v1466
    %v1691 = vpop.f32.mrf.mxu0
    %v1692 = vadd.f32 0.0, %v1691
    %1693 = vmatmul.f32.gmra.mxu0 %v1469
    %v1694 = vpop.f32.mrf.mxu0
    %v1695 = vadd.f32 0.0, %v1694
    %1696 = vmatmul.f32.gmra.mxu0 %v1472
    %v1697 = vpop.f32.mrf.mxu0
    %v1698 = vadd.f32 0.0, %v1697
    %1699 = vmatmul.f32.gmra.mxu0 %v1475
    %v1700 = vpop.f32.mrf.mxu0
    %v1701 = vadd.f32 0.0, %v1700
    %1702 = vmatmul.f32.gmra.mxu0 %v1478
    %v1703 = vpop.f32.mrf.mxu0
    %v1704 = vadd.f32 0.0, %v1703
    %1705 = vmatmul.f32.gmra.mxu0 %v1481
    %v1706 = vpop.f32.mrf.mxu0
    %v1707 = vadd.f32 0.0, %v1706
    %1708 = vmatmul.f32.gmra.mxu0 %v1484
    %v1709 = vpop.f32.mrf.mxu0
    %v1710 = vadd.f32 0.0, %v1709
    %1711 = vmatmul.f32.gmra.mxu0 %v1487
    %v1712 = vpop.f32.mrf.mxu0
    %v1713 = vadd.f32 0.0, %v1712
    %1714 = vmatmul.f32.gmra.mxu0 %v1490
    %v1715 = vpop.f32.mrf.mxu0
    %v1716 = vadd.f32 0.0, %v1715
    %1717 = vmatmul.f32.gmra.mxu0 %v1493
    %v1718 = vpop.f32.mrf.mxu0
    %v1719 = vadd.f32 0.0, %v1718
    %1720 = vmatmul.f32.gmra.mxu0 %v1496
    %v1721 = vpop.f32.mrf.mxu0
    %v1722 = vadd.f32 0.0, %v1721
    %1723 = vmatmul.f32.gmra.mxu0 %v1499
    %v1724 = vpop.f32.mrf.mxu0
    %v1725 = vadd.f32 0.0, %v1724
    %1726 = vmatmul.f32.gmra.mxu0 %v1502
    %v1727 = vpop.f32.mrf.mxu0
    %v1728 = vadd.f32 0.0, %v1727
    %1729 = vmatmul.f32.gmra.mxu0 %v1505
    %v1730 = vpop.f32.mrf.mxu0
    %v1731 = vadd.f32 0.0, %v1730
    %1732 = vmatmul.f32.gmra.mxu0 %v1508
    %v1733 = vpop.f32.mrf.mxu0
    %v1734 = vadd.f32 0.0, %v1733
    %1735 = vmatmul.f32.gmra.mxu0 %v1511
    %v1736 = vpop.f32.mrf.mxu0
    %v1737 = vadd.f32 0.0, %v1736
    %1738 = vmatmul.f32.gmra.mxu0 %v1514
    %v1739 = vpop.f32.mrf.mxu0
    %v1740 = vadd.f32 0.0, %v1739
    %1741 = vmatmul.f32.gmra.mxu0 %v1517
    %v1742 = vpop.f32.mrf.mxu0
    %v1743 = vadd.f32 0.0, %v1742
    %1744 = vmatmul.f32.gmra.mxu0 %v1520
    %v1745 = vpop.f32.mrf.mxu0
    %v1746 = vadd.f32 0.0, %v1745
    %1747 = vmatmul.f32.gmra.mxu0 %v1523
    %v1748 = vpop.f32.mrf.mxu0
    %v1749 = vadd.f32 0.0, %v1748
    %1750 = vmatmul.f32.gmra.mxu0 %v1526
    %v1751 = vpop.f32.mrf.mxu0
    %v1752 = vadd.f32 0.0, %v1751
    %1753 = vmatmul.f32.gmra.mxu0 %v1529
    %v1754 = vpop.f32.mrf.mxu0
    %v1755 = vadd.f32 0.0, %v1754
    %1756 = vmatmul.f32.gmra.mxu0 %v1532
    %v1757 = vpop.f32.mrf.mxu0
    %v1758 = vadd.f32 0.0, %v1757
    %1759 = vdwg.mxu0
    %v1760 = vmax.f32 %v1552, %v1665
    %1761 = vmax.xlane.f32.xlu0 %v1760
    %v1762 = vpop.xlane.xlu0 %1761
    %v1763 = vmax.f32 %v1555, %v1668
    %1764 = vmax.xlane.f32.xlu0 %v1763
    %v1765 = vpop.xlane.xlu0 %1764
    %v1766 = vmax.f32 %v1558, %v1671
    %1767 = vmax.xlane.f32.xlu0 %v1766
    %v1768 = vpop.xlane.xlu0 %1767
    %v1769 = vmax.f32 %v1561, %v1674
    %1770 = vmax.xlane.f32.xlu0 %v1769
    %v1771 = vpop.xlane.xlu0 %1770
    %v1772 = vmax.f32 %v1564, %v1677
    %1773 = vmax.xlane.f32.xlu0 %v1772
    %v1774 = vpop.xlane.xlu0 %1773
    %v1775 = vmax.f32 %v1567, %v1680
    %1776 = vmax.xlane.f32.xlu0 %v1775
    %v1777 = vpop.xlane.xlu0 %1776
    %v1778 = vmax.f32 %v1570, %v1683
    %1779 = vmax.xlane.f32.xlu0 %v1778
    %v1780 = vpop.xlane.xlu0 %1779
    %v1781 = vmax.f32 %v1573, %v1686
    %1782 = vmax.xlane.f32.xlu0 %v1781
    %v1783 = vpop.xlane.xlu0 %1782
    %v1784 = vmax.f32 %v1576, %v1689
    %1785 = vmax.xlane.f32.xlu0 %v1784
    %v1786 = vpop.xlane.xlu0 %1785
    %v1787 = vmax.f32 %v1579, %v1692
    %1788 = vmax.xlane.f32.xlu0 %v1787
    %v1789 = vpop.xlane.xlu0 %1788
    %v1790 = vmax.f32 %v1582, %v1695
    %1791 = vmax.xlane.f32.xlu0 %v1790
    %v1792 = vpop.xlane.xlu0 %1791
    %v1793 = vmax.f32 %v1585, %v1698
    %1794 = vmax.xlane.f32.xlu0 %v1793
    %v1795 = vpop.xlane.xlu0 %1794
    %v1796 = vmax.f32 %v1588, %v1701
    %1797 = vmax.xlane.f32.xlu0 %v1796
    %v1798 = vpop.xlane.xlu0 %1797
    %v1799 = vmax.f32 %v1591, %v1704
    %1800 = vmax.xlane.f32.xlu0 %v1799
    %v1801 = vpop.xlane.xlu0 %1800
    %v1802 = vmax.f32 %v1594, %v1707
    %1803 = vmax.xlane.f32.xlu0 %v1802
    %v1804 = vpop.xlane.xlu0 %1803
    %v1805 = vmax.f32 %v1597, %v1710
    %1806 = vmax.xlane.f32.xlu0 %v1805
    %v1807 = vpop.xlane.xlu0 %1806
    %v1808 = vmax.f32 %v1600, %v1713
    %1809 = vmax.xlane.f32.xlu0 %v1808
    %v1810 = vpop.xlane.xlu0 %1809
    %v1811 = vmax.f32 %v1603, %v1716
    %1812 = vmax.xlane.f32.xlu0 %v1811
    %v1813 = vpop.xlane.xlu0 %1812
    %v1814 = vmax.f32 %v1606, %v1719
    %1815 = vmax.xlane.f32.xlu0 %v1814
    %v1816 = vpop.xlane.xlu0 %1815
    %v1817 = vmax.f32 %v1609, %v1722
    %1818 = vmax.xlane.f32.xlu0 %v1817
    %v1819 = vpop.xlane.xlu0 %1818
    %v1820 = vmax.f32 %v1612, %v1725
    %1821 = vmax.xlane.f32.xlu0 %v1820
    %v1822 = vpop.xlane.xlu0 %1821
    %v1823 = vmax.f32 %v1615, %v1728
    %1824 = vmax.xlane.f32.xlu0 %v1823
    %v1825 = vpop.xlane.xlu0 %1824
    %v1826 = vmax.f32 %v1618, %v1731
    %1827 = vmax.xlane.f32.xlu0 %v1826
    %v1828 = vpop.xlane.xlu0 %1827
    %v1829 = vmax.f32 %v1621, %v1734
    %1830 = vmax.xlane.f32.xlu0 %v1829
    %v1831 = vpop.xlane.xlu0 %1830
    %v1832 = vmax.f32 %v1624, %v1737
    %1833 = vmax.xlane.f32.xlu0 %v1832
    %v1834 = vpop.xlane.xlu0 %1833
    %v1835 = vmax.f32 %v1627, %v1740
    %1836 = vmax.xlane.f32.xlu0 %v1835
    %v1837 = vpop.xlane.xlu0 %1836
    %v1838 = vmax.f32 %v1630, %v1743
    %1839 = vmax.xlane.f32.xlu0 %v1838
    %v1840 = vpop.xlane.xlu0 %1839
    %v1841 = vmax.f32 %v1633, %v1746
    %1842 = vmax.xlane.f32.xlu0 %v1841
    %v1843 = vpop.xlane.xlu0 %1842
    %v1844 = vmax.f32 %v1636, %v1749
    %1845 = vmax.xlane.f32.xlu0 %v1844
    %v1846 = vpop.xlane.xlu0 %1845
    %v1847 = vmax.f32 %v1639, %v1752
    %1848 = vmax.xlane.f32.xlu0 %v1847
    %v1849 = vpop.xlane.xlu0 %1848
    %v1850 = vmax.f32 %v1642, %v1755
    %1851 = vmax.xlane.f32.xlu0 %v1850
    %v1852 = vpop.xlane.xlu0 %1851
    %v1853 = vmax.f32 %v1645, %v1758
    %1854 = vmax.xlane.f32.xlu0 %v1853
    %v1855 = vpop.xlane.xlu0 %1854
    %v1856 = vsub.f32 %v1552, %v1762
    %v1857 = vsub.f32 %v1665, %v1762
    %v1858 = vsub.f32 %v1555, %v1765
    %v1859 = vsub.f32 %v1668, %v1765
    %v1860 = vsub.f32 %v1558, %v1768
    %v1861 = vsub.f32 %v1671, %v1768
    %v1862 = vsub.f32 %v1561, %v1771
    %v1863 = vsub.f32 %v1674, %v1771
    %v1864 = vsub.f32 %v1564, %v1774
    %v1865 = vsub.f32 %v1677, %v1774
    %v1866 = vsub.f32 %v1567, %v1777
    %v1867 = vsub.f32 %v1680, %v1777
    %v1868 = vsub.f32 %v1570, %v1780
    %v1869 = vsub.f32 %v1683, %v1780
    %v1870 = vsub.f32 %v1573, %v1783
    %v1871 = vsub.f32 %v1686, %v1783
    %v1872 = vsub.f32 %v1576, %v1786
    %v1873 = vsub.f32 %v1689, %v1786
    %v1874 = vsub.f32 %v1579, %v1789
    %v1875 = vsub.f32 %v1692, %v1789
    %v1876 = vsub.f32 %v1582, %v1792
    %v1877 = vsub.f32 %v1695, %v1792
    %v1878 = vsub.f32 %v1585, %v1795
    %v1879 = vsub.f32 %v1698, %v1795
    %v1880 = vsub.f32 %v1588, %v1798
    %v1881 = vsub.f32 %v1701, %v1798
    %v1882 = vsub.f32 %v1591, %v1801
    %v1883 = vsub.f32 %v1704, %v1801
    %v1884 = vsub.f32 %v1594, %v1804
    %v1885 = vsub.f32 %v1707, %v1804
    %v1886 = vsub.f32 %v1597, %v1807
    %v1887 = vsub.f32 %v1710, %v1807
    %v1888 = vsub.f32 %v1600, %v1810
    %v1889 = vsub.f32 %v1713, %v1810
    %v1890 = vsub.f32 %v1603, %v1813
    %v1891 = vsub.f32 %v1716, %v1813
    %v1892 = vsub.f32 %v1606, %v1816
    %v1893 = vsub.f32 %v1719, %v1816
    %v1894 = vsub.f32 %v1609, %v1819
    %v1895 = vsub.f32 %v1722, %v1819
    %v1896 = vsub.f32 %v1612, %v1822
    %v1897 = vsub.f32 %v1725, %v1822
    %v1898 = vsub.f32 %v1615, %v1825
    %v1899 = vsub.f32 %v1728, %v1825
    %v1900 = vsub.f32 %v1618, %v1828
    %v1901 = vsub.f32 %v1731, %v1828
    %v1902 = vsub.f32 %v1621, %v1831
    %v1903 = vsub.f32 %v1734, %v1831
    %v1904 = vsub.f32 %v1624, %v1834
    %v1905 = vsub.f32 %v1737, %v1834
    %v1906 = vsub.f32 %v1627, %v1837
    %v1907 = vsub.f32 %v1740, %v1837
    %v1908 = vsub.f32 %v1630, %v1840
    %v1909 = vsub.f32 %v1743, %v1840
    %v1910 = vsub.f32 %v1633, %v1843
    %v1911 = vsub.f32 %v1746, %v1843
    %v1912 = vsub.f32 %v1636, %v1846
    %v1913 = vsub.f32 %v1749, %v1846
    %v1914 = vsub.f32 %v1639, %v1849
    %v1915 = vsub.f32 %v1752, %v1849
    %v1916 = vsub.f32 %v1642, %v1852
    %v1917 = vsub.f32 %v1755, %v1852
    %v1918 = vsub.f32 %v1645, %v1855
    %v1919 = vsub.f32 %v1758, %v1855
    %v1920 = vmul.f32 %v1856, 1.442695
    %v1921 = vpow.pop %v1920
    %v1922 = vmul.f32 %v1857, 1.442695
    %v1923 = vpow.pop %v1922
    %v1924 = vmul.f32 %v1858, 1.442695
    %v1925 = vpow.pop %v1924
    %v1926 = vmul.f32 %v1859, 1.442695
    %v1927 = vpow.pop %v1926
    %v1928 = vmul.f32 %v1860, 1.442695
    %v1929 = vpow.pop %v1928
    %v1930 = vmul.f32 %v1861, 1.442695
    %v1931 = vpow.pop %v1930
    %v1932 = vmul.f32 %v1862, 1.442695
    %v1933 = vpow.pop %v1932
    %v1934 = vmul.f32 %v1863, 1.442695
    %v1935 = vpow.pop %v1934
    %v1936 = vmul.f32 %v1864, 1.442695
    %v1937 = vpow.pop %v1936
    %v1938 = vmul.f32 %v1865, 1.442695
    %v1939 = vpow.pop %v1938
    %v1940 = vmul.f32 %v1866, 1.442695
    %v1941 = vpow.pop %v1940
    %v1942 = vmul.f32 %v1867, 1.442695
    %v1943 = vpow.pop %v1942
    %v1944 = vmul.f32 %v1868, 1.442695
    %v1945 = vpow.pop %v1944
    %v1946 = vmul.f32 %v1869, 1.442695
    %v1947 = vpow.pop %v1946
    %v1948 = vmul.f32 %v1870, 1.442695
    %v1949 = vpow.pop %v1948
    %v1950 = vmul.f32 %v1871, 1.442695
    %v1951 = vpow.pop %v1950
    %v1952 = vmul.f32 %v1872, 1.442695
    %v1953 = vpow.pop %v1952
    %v1954 = vmul.f32 %v1873, 1.442695
    %v1955 = vpow.pop %v1954
    %v1956 = vmul.f32 %v1874, 1.442695
    %v1957 = vpow.pop %v1956
    %v1958 = vmul.f32 %v1875, 1.442695
    %v1959 = vpow.pop %v1958
    %v1960 = vmul.f32 %v1876, 1.442695
    %v1961 = vpow.pop %v1960
    %v1962 = vmul.f32 %v1877, 1.442695
    %v1963 = vpow.pop %v1962
    %v1964 = vmul.f32 %v1878, 1.442695
    %v1965 = vpow.pop %v1964
    %v1966 = vmul.f32 %v1879, 1.442695
    %v1967 = vpow.pop %v1966
    %v1968 = vmul.f32 %v1880, 1.442695
    %v1969 = vpow.pop %v1968
    %v1970 = vmul.f32 %v1881, 1.442695
    %v1971 = vpow.pop %v1970
    %v1972 = vmul.f32 %v1882, 1.442695
    %v1973 = vpow.pop %v1972
    %v1974 = vmul.f32 %v1883, 1.442695
    %v1975 = vpow.pop %v1974
    %v1976 = vmul.f32 %v1884, 1.442695
    %v1977 = vpow.pop %v1976
    %v1978 = vmul.f32 %v1885, 1.442695
    %v1979 = vpow.pop %v1978
    %v1980 = vmul.f32 %v1886, 1.442695
    %v1981 = vpow.pop %v1980
    %v1982 = vmul.f32 %v1887, 1.442695
    %v1983 = vpow.pop %v1982
    %v1984 = vmul.f32 %v1888, 1.442695
    %v1985 = vpow.pop %v1984
    %v1986 = vmul.f32 %v1889, 1.442695
    %v1987 = vpow.pop %v1986
    %v1988 = vmul.f32 %v1890, 1.442695
    %v1989 = vpow.pop %v1988
    %v1990 = vmul.f32 %v1891, 1.442695
    %v1991 = vpow.pop %v1990
    %v1992 = vmul.f32 %v1892, 1.442695
    %v1993 = vpow.pop %v1992
    %v1994 = vmul.f32 %v1893, 1.442695
    %v1995 = vpow.pop %v1994
    %v1996 = vmul.f32 %v1894, 1.442695
    %v1997 = vpow.pop %v1996
    %v1998 = vmul.f32 %v1895, 1.442695
    %v1999 = vpow.pop %v1998
    %v2000 = vmul.f32 %v1896, 1.442695
    %v2001 = vpow.pop %v2000
    %v2002 = vmul.f32 %v1897, 1.442695
    %v2003 = vpow.pop %v2002
    %v2004 = vmul.f32 %v1898, 1.442695
    %v2005 = vpow.pop %v2004
    %v2006 = vmul.f32 %v1899, 1.442695
    %v2007 = vpow.pop %v2006
    %v2008 = vmul.f32 %v1900, 1.442695
    %v2009 = vpow.pop %v2008
    %v2010 = vmul.f32 %v1901, 1.442695
    %v2011 = vpow.pop %v2010
    %v2012 = vmul.f32 %v1902, 1.442695
    %v2013 = vpow.pop %v2012
    %v2014 = vmul.f32 %v1903, 1.442695
    %v2015 = vpow.pop %v2014
    %v2016 = vmul.f32 %v1904, 1.442695
    %v2017 = vpow.pop %v2016
    %v2018 = vmul.f32 %v1905, 1.442695
    %v2019 = vpow.pop %v2018
    %v2020 = vmul.f32 %v1906, 1.442695
    %v2021 = vpow.pop %v2020
    %v2022 = vmul.f32 %v1907, 1.442695
    %v2023 = vpow.pop %v2022
    %v2024 = vmul.f32 %v1908, 1.442695
    %v2025 = vpow.pop %v2024
    %v2026 = vmul.f32 %v1909, 1.442695
    %v2027 = vpow.pop %v2026
    %v2028 = vmul.f32 %v1910, 1.442695
    %v2029 = vpow.pop %v2028
    %v2030 = vmul.f32 %v1911, 1.442695
    %v2031 = vpow.pop %v2030
    %v2032 = vmul.f32 %v1912, 1.442695
    %v2033 = vpow.pop %v2032
    %v2034 = vmul.f32 %v1913, 1.442695
    %v2035 = vpow.pop %v2034
    %v2036 = vmul.f32 %v1914, 1.442695
    %v2037 = vpow.pop %v2036
    %v2038 = vmul.f32 %v1915, 1.442695
    %v2039 = vpow.pop %v2038
    %v2040 = vmul.f32 %v1916, 1.442695
    %v2041 = vpow.pop %v2040
    %v2042 = vmul.f32 %v1917, 1.442695
    %v2043 = vpow.pop %v2042
    %v2044 = vmul.f32 %v1918, 1.442695
    %v2045 = vpow.pop %v2044
    %v2046 = vmul.f32 %v1919, 1.442695
    %v2047 = vpow.pop %v2046
    %v2048 = vadd.f32 %v1921, %v1923
    %2049 = vadd.xlane.f32.xlu0 %v2048
    %v2050 = vpop.xlane.xlu0 %2049
    %v2051 = vadd.f32 %v1925, %v1927
    %2052 = vadd.xlane.f32.xlu0 %v2051
    %v2053 = vpop.xlane.xlu0 %2052
    %v2054 = vadd.f32 %v1929, %v1931
    %2055 = vadd.xlane.f32.xlu0 %v2054
    %v2056 = vpop.xlane.xlu0 %2055
    %v2057 = vadd.f32 %v1933, %v1935
    %2058 = vadd.xlane.f32.xlu0 %v2057
    %v2059 = vpop.xlane.xlu0 %2058
    %v2060 = vadd.f32 %v1937, %v1939
    %2061 = vadd.xlane.f32.xlu0 %v2060
    %v2062 = vpop.xlane.xlu0 %2061
    %v2063 = vadd.f32 %v1941, %v1943
    %2064 = vadd.xlane.f32.xlu0 %v2063
    %v2065 = vpop.xlane.xlu0 %2064
    %v2066 = vadd.f32 %v1945, %v1947
    %2067 = vadd.xlane.f32.xlu0 %v2066
    %v2068 = vpop.xlane.xlu0 %2067
    %v2069 = vadd.f32 %v1949, %v1951
    %2070 = vadd.xlane.f32.xlu0 %v2069
    %v2071 = vpop.xlane.xlu0 %2070
    %v2072 = vadd.f32 %v1953, %v1955
    %2073 = vadd.xlane.f32.xlu0 %v2072
    %v2074 = vpop.xlane.xlu0 %2073
    %v2075 = vadd.f32 %v1957, %v1959
    %2076 = vadd.xlane.f32.xlu0 %v2075
    %v2077 = vpop.xlane.xlu0 %2076
    %v2078 = vadd.f32 %v1961, %v1963
    %2079 = vadd.xlane.f32.xlu0 %v2078
    %v2080 = vpop.xlane.xlu0 %2079
    %v2081 = vadd.f32 %v1965, %v1967
    %2082 = vadd.xlane.f32.xlu0 %v2081
    %v2083 = vpop.xlane.xlu0 %2082
    %v2084 = vadd.f32 %v1969, %v1971
    %2085 = vadd.xlane.f32.xlu0 %v2084
    %v2086 = vpop.xlane.xlu0 %2085
    %v2087 = vadd.f32 %v1973, %v1975
    %2088 = vadd.xlane.f32.xlu0 %v2087
    %v2089 = vpop.xlane.xlu0 %2088
    %v2090 = vadd.f32 %v1977, %v1979
    %2091 = vadd.xlane.f32.xlu0 %v2090
    %v2092 = vpop.xlane.xlu0 %2091
    %v2093 = vadd.f32 %v1981, %v1983
    %2094 = vadd.xlane.f32.xlu0 %v2093
    %v2095 = vpop.xlane.xlu0 %2094
    %v2096 = vadd.f32 %v1985, %v1987
    %2097 = vadd.xlane.f32.xlu0 %v2096
    %v2098 = vpop.xlane.xlu0 %2097
    %v2099 = vadd.f32 %v1989, %v1991
    %2100 = vadd.xlane.f32.xlu0 %v2099
    %v2101 = vpop.xlane.xlu0 %2100
    %v2102 = vadd.f32 %v1993, %v1995
    %2103 = vadd.xlane.f32.xlu0 %v2102
    %v2104 = vpop.xlane.xlu0 %2103
    %v2105 = vadd.f32 %v1997, %v1999
    %2106 = vadd.xlane.f32.xlu0 %v2105
    %v2107 = vpop.xlane.xlu0 %2106
    %v2108 = vadd.f32 %v2001, %v2003
    %2109 = vadd.xlane.f32.xlu0 %v2108
    %v2110 = vpop.xlane.xlu0 %2109
    %v2111 = vadd.f32 %v2005, %v2007
    %2112 = vadd.xlane.f32.xlu0 %v2111
    %v2113 = vpop.xlane.xlu0 %2112
    %v2114 = vadd.f32 %v2009, %v2011
    %2115 = vadd.xlane.f32.xlu0 %v2114
    %v2116 = vpop.xlane.xlu0 %2115
    %v2117 = vadd.f32 %v2013, %v2015
    %2118 = vadd.xlane.f32.xlu0 %v2117
    %v2119 = vpop.xlane.xlu0 %2118
    %v2120 = vadd.f32 %v2017, %v2019
    %2121 = vadd.xlane.f32.xlu0 %v2120
    %v2122 = vpop.xlane.xlu0 %2121
    %v2123 = vadd.f32 %v2021, %v2023
    %2124 = vadd.xlane.f32.xlu0 %v2123
    %v2125 = vpop.xlane.xlu0 %2124
    %v2126 = vadd.f32 %v2025, %v2027
    %2127 = vadd.xlane.f32.xlu0 %v2126
    %v2128 = vpop.xlane.xlu0 %2127
    %v2129 = vadd.f32 %v2029, %v2031
    %2130 = vadd.xlane.f32.xlu0 %v2129
    %v2131 = vpop.xlane.xlu0 %2130
    %v2132 = vadd.f32 %v2033, %v2035
    %2133 = vadd.xlane.f32.xlu0 %v2132
    %v2134 = vpop.xlane.xlu0 %2133
    %v2135 = vadd.f32 %v2037, %v2039
    %2136 = vadd.xlane.f32.xlu0 %v2135
    %v2137 = vpop.xlane.xlu0 %2136
    %v2138 = vadd.f32 %v2041, %v2043
    %2139 = vadd.xlane.f32.xlu0 %v2138
    %v2140 = vpop.xlane.xlu0 %2139
    %v2141 = vadd.f32 %v2045, %v2047
    %2142 = vadd.xlane.f32.xlu0 %v2141
    %v2143 = vpop.xlane.xlu0 %2142
    %v2144 = vrcp.pop %v2050
    %v2145 = vrcp.pop %v2053
    %v2146 = vrcp.pop %v2056
    %v2147 = vrcp.pop %v2059
    %v2148 = vrcp.pop %v2062
    %v2149 = vrcp.pop %v2065
    %v2150 = vrcp.pop %v2068
    %v2151 = vrcp.pop %v2071
    %v2152 = vrcp.pop %v2074
    %v2153 = vrcp.pop %v2077
    %v2154 = vrcp.pop %v2080
    %v2155 = vrcp.pop %v2083
    %v2156 = vrcp.pop %v2086
    %v2157 = vrcp.pop %v2089
    %v2158 = vrcp.pop %v2092
    %v2159 = vrcp.pop %v2095
    %v2160 = vrcp.pop %v2098
    %v2161 = vrcp.pop %v2101
    %v2162 = vrcp.pop %v2104
    %v2163 = vrcp.pop %v2107
    %v2164 = vrcp.pop %v2110
    %v2165 = vrcp.pop %v2113
    %v2166 = vrcp.pop %v2116
    %v2167 = vrcp.pop %v2119
    %v2168 = vrcp.pop %v2122
    %v2169 = vrcp.pop %v2125
    %v2170 = vrcp.pop %v2128
    %v2171 = vrcp.pop %v2131
    %v2172 = vrcp.pop %v2134
    %v2173 = vrcp.pop %v2137
    %v2174 = vrcp.pop %v2140
    %v2175 = vrcp.pop %v2143
    %v2176 = vmul.f32 %v1921, %v2144
    %v2177 = vmul.f32 %v1923, %v2144
    %v2178 = vmul.f32 %v1925, %v2145
    %v2179 = vmul.f32 %v1927, %v2145
    %v2180 = vmul.f32 %v1929, %v2146
    %v2181 = vmul.f32 %v1931, %v2146
    %v2182 = vmul.f32 %v1933, %v2147
    %v2183 = vmul.f32 %v1935, %v2147
    %v2184 = vmul.f32 %v1937, %v2148
    %v2185 = vmul.f32 %v1939, %v2148
    %v2186 = vmul.f32 %v1941, %v2149
    %v2187 = vmul.f32 %v1943, %v2149
    %v2188 = vmul.f32 %v1945, %v2150
    %v2189 = vmul.f32 %v1947, %v2150
    %v2190 = vmul.f32 %v1949, %v2151
    %v2191 = vmul.f32 %v1951, %v2151
    %v2192 = vmul.f32 %v1953, %v2152
    %v2193 = vmul.f32 %v1955, %v2152
    %v2194 = vmul.f32 %v1957, %v2153
    %v2195 = vmul.f32 %v1959, %v2153
    %v2196 = vmul.f32 %v1961, %v2154
    %v2197 = vmul.f32 %v1963, %v2154
    %v2198 = vmul.f32 %v1965, %v2155
    %v2199 = vmul.f32 %v1967, %v2155
    %v2200 = vmul.f32 %v1969, %v2156
    %v2201 = vmul.f32 %v1971, %v2156
    %v2202 = vmul.f32 %v1973, %v2157
    %v2203 = vmul.f32 %v1975, %v2157
    %v2204 = vmul.f32 %v1977, %v2158
    %v2205 = vmul.f32 %v1979, %v2158
    %v2206 = vmul.f32 %v1981, %v2159
    %v2207 = vmul.f32 %v1983, %v2159
    %v2208 = vmul.f32 %v1985, %v2160
    %v2209 = vmul.f32 %v1987, %v2160
    %v2210 = vmul.f32 %v1989, %v2161
    %v2211 = vmul.f32 %v1991, %v2161
    %v2212 = vmul.f32 %v1993, %v2162
    %v2213 = vmul.f32 %v1995, %v2162
    %v2214 = vmul.f32 %v1997, %v2163
    %v2215 = vmul.f32 %v1999, %v2163
    %v2216 = vmul.f32 %v2001, %v2164
    %v2217 = vmul.f32 %v2003, %v2164
    %v2218 = vmul.f32 %v2005, %v2165
    %v2219 = vmul.f32 %v2007, %v2165
    %v2220 = vmul.f32 %v2009, %v2166
    %v2221 = vmul.f32 %v2011, %v2166
    %v2222 = vmul.f32 %v2013, %v2167
    %v2223 = vmul.f32 %v2015, %v2167
    %v2224 = vmul.f32 %v2017, %v2168
    %v2225 = vmul.f32 %v2019, %v2168
    %v2226 = vmul.f32 %v2021, %v2169
    %v2227 = vmul.f32 %v2023, %v2169
    %v2228 = vmul.f32 %v2025, %v2170
    %v2229 = vmul.f32 %v2027, %v2170
    %v2230 = vmul.f32 %v2029, %v2171
    %v2231 = vmul.f32 %v2031, %v2171
    %v2232 = vmul.f32 %v2033, %v2172
    %v2233 = vmul.f32 %v2035, %v2172
    %v2234 = vmul.f32 %v2037, %v2173
    %v2235 = vmul.f32 %v2039, %v2173
    %v2236 = vmul.f32 %v2041, %v2174
    %v2237 = vmul.f32 %v2043, %v2174
    %v2238 = vmul.f32 %v2045, %v2175
    %v2239 = vmul.f32 %v2047, %v2175
    %2240 = vmatpush.xpose.msra.mxu0 %v2206
    %2241 = vmatpush.xpose.msra.mxu0 %v2204
    %2242 = vmatpush.xpose.msra.mxu0 %v2202
    %2243 = vmatpush.xpose.msra.mxu0 %v2200
    %2244 = vmatpush.xpose.msra.mxu0 %v2198
    %2245 = vmatpush.xpose.msra.mxu0 %v2196
    %2246 = vmatpush.xpose.msra.mxu0 %v2194
    %2247 = vmatpush.xpose.msra.mxu0 %v2192
    %2248 = vmatpush.xpose.msra.mxu0 %v2190
    %2249 = vmatpush.xpose.msra.mxu0 %v2188
    %2250 = vmatpush.xpose.msra.mxu0 %v2186
    %2251 = vmatpush.xpose.msra.mxu0 %v2184
    %2252 = vmatpush.xpose.msra.mxu0 %v2182
    %2253 = vmatpush.xpose.msra.mxu0 %v2180
    %2254 = vmatpush.xpose.msra.mxu0 %v2178
    %2255 = vmatpush.xpose.msra.mxu0 %v2176
    %2256 = vmatmul.f32.gmra.mxu0 %v366
    %v2257 = vpop.f32.mrf.mxu0
    %v2258 = vadd.f32 0.0, %v2257
    %2259 = vdwg.mxu0
    %2260 = vmatpush.xpose.msra.mxu0 %v2207
    %2261 = vmatpush.xpose.msra.mxu0 %v2205
    %2262 = vmatpush.xpose.msra.mxu0 %v2203
    %2263 = vmatpush.xpose.msra.mxu0 %v2201
    %2264 = vmatpush.xpose.msra.mxu0 %v2199
    %2265 = vmatpush.xpose.msra.mxu0 %v2197
    %2266 = vmatpush.xpose.msra.mxu0 %v2195
    %2267 = vmatpush.xpose.msra.mxu0 %v2193
    %2268 = vmatpush.xpose.msra.mxu0 %v2191
    %2269 = vmatpush.xpose.msra.mxu0 %v2189
    %2270 = vmatpush.xpose.msra.mxu0 %v2187
    %2271 = vmatpush.xpose.msra.mxu0 %v2185
    %2272 = vmatpush.xpose.msra.mxu0 %v2183
    %2273 = vmatpush.xpose.msra.mxu0 %v2181
    %2274 = vmatpush.xpose.msra.mxu0 %v2179
    %2275 = vmatpush.xpose.msra.mxu0 %v2177
    %2276 = vmatmul.f32.gmra.mxu0 %v419
    %v2277 = vpop.f32.mrf.mxu0
    %v2278 = vadd.f32 %v2258, %v2277
    %2279 = vdwg.mxu0
    %2280 = vmatpush.xpose.msra.mxu0 %v2238
    %2281 = vmatpush.xpose.msra.mxu0 %v2236
    %2282 = vmatpush.xpose.msra.mxu0 %v2234
    %2283 = vmatpush.xpose.msra.mxu0 %v2232
    %2284 = vmatpush.xpose.msra.mxu0 %v2230
    %2285 = vmatpush.xpose.msra.mxu0 %v2228
    %2286 = vmatpush.xpose.msra.mxu0 %v2226
    %2287 = vmatpush.xpose.msra.mxu0 %v2224
    %2288 = vmatpush.xpose.msra.mxu0 %v2222
    %2289 = vmatpush.xpose.msra.mxu0 %v2220
    %2290 = vmatpush.xpose.msra.mxu0 %v2218
    %2291 = vmatpush.xpose.msra.mxu0 %v2216
    %2292 = vmatpush.xpose.msra.mxu0 %v2214
    %2293 = vmatpush.xpose.msra.mxu0 %v2212
    %2294 = vmatpush.xpose.msra.mxu0 %v2210
    %2295 = vmatpush.xpose.msra.mxu0 %v2208
    %2296 = vmatmul.f32.gmra.mxu0 %v366
    %v2297 = vpop.f32.mrf.mxu0
    %v2298 = vadd.f32 0.0, %v2297
    %2299 = vdwg.mxu0
    %2300 = vmatpush.xpose.msra.mxu0 %v2239
    %2301 = vmatpush.xpose.msra.mxu0 %v2237
    %2302 = vmatpush.xpose.msra.mxu0 %v2235
    %2303 = vmatpush.xpose.msra.mxu0 %v2233
    %2304 = vmatpush.xpose.msra.mxu0 %v2231
    %2305 = vmatpush.xpose.msra.mxu0 %v2229
    %2306 = vmatpush.xpose.msra.mxu0 %v2227
    %2307 = vmatpush.xpose.msra.mxu0 %v2225
    %2308 = vmatpush.xpose.msra.mxu0 %v2223
    %2309 = vmatpush.xpose.msra.mxu0 %v2221
    %2310 = vmatpush.xpose.msra.mxu0 %v2219
    %2311 = vmatpush.xpose.msra.mxu0 %v2217
    %2312 = vmatpush.xpose.msra.mxu0 %v2215
    %2313 = vmatpush.xpose.msra.mxu0 %v2213
    %2314 = vmatpush.xpose.msra.mxu0 %v2211
    %2315 = vmatpush.xpose.msra.mxu0 %v2209
    %2316 = vmatmul.f32.gmra.mxu0 %v419
    %v2317 = vpop.f32.mrf.mxu0
    %v2318 = vadd.f32 %v2298, %v2317
    %2319 = vdwg.mxu0
    %2320 = vxpose.xlu0.b32.start [1/16] %v345, 128
    %2321 = vxpose.xlu0.b32.cont [2/16] 0.0, 128
    %2322 = vxpose.xlu0.b32.cont [3/16] 0.0, 128
    %2323 = vxpose.xlu0.b32.cont [4/16] 0.0, 128
    %2324 = vxpose.xlu0.b32.cont [5/16] 0.0, 128
    %2325 = vxpose.xlu0.b32.cont [6/16] 0.0, 128
    %2326 = vxpose.xlu0.b32.cont [7/16] 0.0, 128
    %2327 = vxpose.xlu0.b32.cont [8/16] 0.0, 128
    %2328 = vxpose.xlu0.b32.cont [9/16] 0.0, 128
    %2329 = vxpose.xlu0.b32.cont [10/16] 0.0, 128
    %2330 = vxpose.xlu0.b32.cont [11/16] 0.0, 128
    %2331 = vxpose.xlu0.b32.cont [12/16] 0.0, 128
    %2332 = vxpose.xlu0.b32.cont [13/16] 0.0, 128
    %2333 = vxpose.xlu0.b32.cont [14/16] 0.0, 128
    %2334 = vxpose.xlu0.b32.cont [15/16] 0.0, 128
    %2335 = vxpose.xlu0.b32.end [16/16] 0.0, 128
    %v2336 = vpop.trf.xlu0
    %v2337 = vpop.trf.xlu0
    %v2338 = vpop.trf.xlu0
    %v2339 = vpop.trf.xlu0
    %v2340 = vpop.trf.xlu0
    %v2341 = vpop.trf.xlu0
    %v2342 = vpop.trf.xlu0
    %v2343 = vpop.trf.xlu0
    %v2344 = vpop.trf.xlu0
    %v2345 = vpop.trf.xlu0
    %v2346 = vpop.trf.xlu0
    %v2347 = vpop.trf.xlu0
    %v2348 = vpop.trf.xlu0
    %v2349 = vpop.trf.xlu0
    %v2350 = vpop.trf.xlu0
    %v2351 = vpop.trf.xlu0
    %2352 = vxpose.xlu0.b32.start [1/16] %v398, 128
    %2353 = vxpose.xlu0.b32.cont [2/16] 0.0, 128
    %2354 = vxpose.xlu0.b32.cont [3/16] 0.0, 128
    %2355 = vxpose.xlu0.b32.cont [4/16] 0.0, 128
    %2356 = vxpose.xlu0.b32.cont [5/16] 0.0, 128
    %2357 = vxpose.xlu0.b32.cont [6/16] 0.0, 128
    %2358 = vxpose.xlu0.b32.cont [7/16] 0.0, 128
    %2359 = vxpose.xlu0.b32.cont [8/16] 0.0, 128
    %2360 = vxpose.xlu0.b32.cont [9/16] 0.0, 128
    %2361 = vxpose.xlu0.b32.cont [10/16] 0.0, 128
    %2362 = vxpose.xlu0.b32.cont [11/16] 0.0, 128
    %2363 = vxpose.xlu0.b32.cont [12/16] 0.0, 128
    %2364 = vxpose.xlu0.b32.cont [13/16] 0.0, 128
    %2365 = vxpose.xlu0.b32.cont [14/16] 0.0, 128
    %2366 = vxpose.xlu0.b32.cont [15/16] 0.0, 128
    %2367 = vxpose.xlu0.b32.end [16/16] 0.0, 128
    %v2368 = vpop.trf.xlu0
    %v2369 = vpop.trf.xlu0
    %v2370 = vpop.trf.xlu0
    %v2371 = vpop.trf.xlu0
    %v2372 = vpop.trf.xlu0
    %v2373 = vpop.trf.xlu0
    %v2374 = vpop.trf.xlu0
    %v2375 = vpop.trf.xlu0
    %v2376 = vpop.trf.xlu0
    %v2377 = vpop.trf.xlu0
    %v2378 = vpop.trf.xlu0
    %v2379 = vpop.trf.xlu0
    %v2380 = vpop.trf.xlu0
    %v2381 = vpop.trf.xlu0
    %v2382 = vpop.trf.xlu0
    %v2383 = vpop.trf.xlu0
    %v2385 = vsel %vm491, %v2336, 0
    %v2388 = vsel %vm491, %v2337, 0
    %v2391 = vsel %vm491, %v2338, 0
    %v2394 = vsel %vm491, %v2339, 0
    %v2397 = vsel %vm491, %v2340, 0
    %v2400 = vsel %vm491, %v2341, 0
    %v2403 = vsel %vm491, %v2342, 0
    %v2406 = vsel %vm491, %v2343, 0
    %v2409 = vsel %vm491, %v2344, 0
    %v2412 = vsel %vm491, %v2345, 0
    %v2415 = vsel %vm491, %v2346, 0
    %v2418 = vsel %vm491, %v2347, 0
    %v2421 = vsel %vm491, %v2348, 0
    %v2424 = vsel %vm491, %v2349, 0
    %v2427 = vsel %vm491, %v2350, 0
    %v2430 = vsel %vm491, %v2351, 0
    %v2433 = vsel %vm491, %v2368, 0
    %v2436 = vsel %vm491, %v2369, 0
    %v2439 = vsel %vm491, %v2370, 0
    %v2442 = vsel %vm491, %v2371, 0
    %v2445 = vsel %vm491, %v2372, 0
    %v2448 = vsel %vm491, %v2373, 0
    %v2451 = vsel %vm491, %v2374, 0
    %v2454 = vsel %vm491, %v2375, 0
    %v2457 = vsel %vm491, %v2376, 0
    %v2460 = vsel %vm491, %v2377, 0
    %v2463 = vsel %vm491, %v2378, 0
    %v2466 = vsel %vm491, %v2379, 0
    %v2469 = vsel %vm491, %v2380, 0
    %v2472 = vsel %vm491, %v2381, 0
    %v2475 = vsel %vm491, %v2382, 0
    %v2478 = vsel %vm491, %v2383, 0
    %2480 = vmatpush.msra.mxu0 0.0
    %2481 = vmatpush.msra.mxu0 0.0
    %2482 = vmatpush.msra.mxu0 0.0
    %2483 = vmatpush.msra.mxu0 0.0
    %2484 = vmatpush.msra.mxu0 0.0
    %2485 = vmatpush.msra.mxu0 0.0
    %2486 = vmatpush.msra.mxu0 0.0
    %2487 = vmatpush.msra.mxu0 0.0
    %2488 = vmatpush.msra.mxu0 0.0
    %2489 = vmatpush.msra.mxu0 0.0
    %2490 = vmatpush.msra.mxu0 0.0
    %2491 = vmatpush.msra.mxu0 0.0
    %2492 = vmatpush.msra.mxu0 0.0
    %2493 = vmatpush.msra.mxu0 0.0
    %2494 = vmatpush.msra.mxu0 0.0
    %2495 = vmatpush.msra.mxu0 %v357
    %2496 = vmatmul.f32.gmra.mxu0 %v2385
    %v2497 = vpop.f32.mrf.mxu0
    %v2498 = vadd.f32 0.0, %v2497
    %2499 = vmatmul.f32.gmra.mxu0 %v2388
    %v2500 = vpop.f32.mrf.mxu0
    %v2501 = vadd.f32 0.0, %v2500
    %2502 = vmatmul.f32.gmra.mxu0 %v2391
    %v2503 = vpop.f32.mrf.mxu0
    %v2504 = vadd.f32 0.0, %v2503
    %2505 = vmatmul.f32.gmra.mxu0 %v2394
    %v2506 = vpop.f32.mrf.mxu0
    %v2507 = vadd.f32 0.0, %v2506
    %2508 = vmatmul.f32.gmra.mxu0 %v2397
    %v2509 = vpop.f32.mrf.mxu0
    %v2510 = vadd.f32 0.0, %v2509
    %2511 = vmatmul.f32.gmra.mxu0 %v2400
    %v2512 = vpop.f32.mrf.mxu0
    %v2513 = vadd.f32 0.0, %v2512
    %2514 = vmatmul.f32.gmra.mxu0 %v2403
    %v2515 = vpop.f32.mrf.mxu0
    %v2516 = vadd.f32 0.0, %v2515
    %2517 = vmatmul.f32.gmra.mxu0 %v2406
    %v2518 = vpop.f32.mrf.mxu0
    %v2519 = vadd.f32 0.0, %v2518
    %2520 = vmatmul.f32.gmra.mxu0 %v2409
    %v2521 = vpop.f32.mrf.mxu0
    %v2522 = vadd.f32 0.0, %v2521
    %2523 = vmatmul.f32.gmra.mxu0 %v2412
    %v2524 = vpop.f32.mrf.mxu0
    %v2525 = vadd.f32 0.0, %v2524
    %2526 = vmatmul.f32.gmra.mxu0 %v2415
    %v2527 = vpop.f32.mrf.mxu0
    %v2528 = vadd.f32 0.0, %v2527
    %2529 = vmatmul.f32.gmra.mxu0 %v2418
    %v2530 = vpop.f32.mrf.mxu0
    %v2531 = vadd.f32 0.0, %v2530
    %2532 = vmatmul.f32.gmra.mxu0 %v2421
    %v2533 = vpop.f32.mrf.mxu0
    %v2534 = vadd.f32 0.0, %v2533
    %2535 = vmatmul.f32.gmra.mxu0 %v2424
    %v2536 = vpop.f32.mrf.mxu0
    %v2537 = vadd.f32 0.0, %v2536
    %2538 = vmatmul.f32.gmra.mxu0 %v2427
    %v2539 = vpop.f32.mrf.mxu0
    %v2540 = vadd.f32 0.0, %v2539
    %2541 = vmatmul.f32.gmra.mxu0 %v2430
    %v2542 = vpop.f32.mrf.mxu0
    %v2543 = vadd.f32 0.0, %v2542
    %2544 = vmatmul.f32.gmra.mxu0 %v2433
    %v2545 = vpop.f32.mrf.mxu0
    %v2546 = vadd.f32 0.0, %v2545
    %2547 = vmatmul.f32.gmra.mxu0 %v2436
    %v2548 = vpop.f32.mrf.mxu0
    %v2549 = vadd.f32 0.0, %v2548
    %2550 = vmatmul.f32.gmra.mxu0 %v2439
    %v2551 = vpop.f32.mrf.mxu0
    %v2552 = vadd.f32 0.0, %v2551
    %2553 = vmatmul.f32.gmra.mxu0 %v2442
    %v2554 = vpop.f32.mrf.mxu0
    %v2555 = vadd.f32 0.0, %v2554
    %2556 = vmatmul.f32.gmra.mxu0 %v2445
    %v2557 = vpop.f32.mrf.mxu0
    %v2558 = vadd.f32 0.0, %v2557
    %2559 = vmatmul.f32.gmra.mxu0 %v2448
    %v2560 = vpop.f32.mrf.mxu0
    %v2561 = vadd.f32 0.0, %v2560
    %2562 = vmatmul.f32.gmra.mxu0 %v2451
    %v2563 = vpop.f32.mrf.mxu0
    %v2564 = vadd.f32 0.0, %v2563
    %2565 = vmatmul.f32.gmra.mxu0 %v2454
    %v2566 = vpop.f32.mrf.mxu0
    %v2567 = vadd.f32 0.0, %v2566
    %2568 = vmatmul.f32.gmra.mxu0 %v2457
    %v2569 = vpop.f32.mrf.mxu0
    %v2570 = vadd.f32 0.0, %v2569
    %2571 = vmatmul.f32.gmra.mxu0 %v2460
    %v2572 = vpop.f32.mrf.mxu0
    %v2573 = vadd.f32 0.0, %v2572
    %2574 = vmatmul.f32.gmra.mxu0 %v2463
    %v2575 = vpop.f32.mrf.mxu0
    %v2576 = vadd.f32 0.0, %v2575
    %2577 = vmatmul.f32.gmra.mxu0 %v2466
    %v2578 = vpop.f32.mrf.mxu0
    %v2579 = vadd.f32 0.0, %v2578
    %2580 = vmatmul.f32.gmra.mxu0 %v2469
    %v2581 = vpop.f32.mrf.mxu0
    %v2582 = vadd.f32 0.0, %v2581
    %2583 = vmatmul.f32.gmra.mxu0 %v2472
    %v2584 = vpop.f32.mrf.mxu0
    %v2585 = vadd.f32 0.0, %v2584
    %2586 = vmatmul.f32.gmra.mxu0 %v2475
    %v2587 = vpop.f32.mrf.mxu0
    %v2588 = vadd.f32 0.0, %v2587
    %2589 = vmatmul.f32.gmra.mxu0 %v2478
    %v2590 = vpop.f32.mrf.mxu0
    %v2591 = vadd.f32 0.0, %v2590
    %2592 = vdwg.mxu0
    %2593 = vmatpush.msra.mxu0 0.0
    %2594 = vmatpush.msra.mxu0 0.0
    %2595 = vmatpush.msra.mxu0 0.0
    %2596 = vmatpush.msra.mxu0 0.0
    %2597 = vmatpush.msra.mxu0 0.0
    %2598 = vmatpush.msra.mxu0 0.0
    %2599 = vmatpush.msra.mxu0 0.0
    %2600 = vmatpush.msra.mxu0 0.0
    %2601 = vmatpush.msra.mxu0 0.0
    %2602 = vmatpush.msra.mxu0 0.0
    %2603 = vmatpush.msra.mxu0 0.0
    %2604 = vmatpush.msra.mxu0 0.0
    %2605 = vmatpush.msra.mxu0 0.0
    %2606 = vmatpush.msra.mxu0 0.0
    %2607 = vmatpush.msra.mxu0 0.0
    %2608 = vmatpush.msra.mxu0 %v410
    %2609 = vmatmul.f32.gmra.mxu0 %v2385
    %v2610 = vpop.f32.mrf.mxu0
    %v2611 = vadd.f32 0.0, %v2610
    %2612 = vmatmul.f32.gmra.mxu0 %v2388
    %v2613 = vpop.f32.mrf.mxu0
    %v2614 = vadd.f32 0.0, %v2613
    %2615 = vmatmul.f32.gmra.mxu0 %v2391
    %v2616 = vpop.f32.mrf.mxu0
    %v2617 = vadd.f32 0.0, %v2616
    %2618 = vmatmul.f32.gmra.mxu0 %v2394
    %v2619 = vpop.f32.mrf.mxu0
    %v2620 = vadd.f32 0.0, %v2619
    %2621 = vmatmul.f32.gmra.mxu0 %v2397
    %v2622 = vpop.f32.mrf.mxu0
    %v2623 = vadd.f32 0.0, %v2622
    %2624 = vmatmul.f32.gmra.mxu0 %v2400
    %v2625 = vpop.f32.mrf.mxu0
    %v2626 = vadd.f32 0.0, %v2625
    %2627 = vmatmul.f32.gmra.mxu0 %v2403
    %v2628 = vpop.f32.mrf.mxu0
    %v2629 = vadd.f32 0.0, %v2628
    %2630 = vmatmul.f32.gmra.mxu0 %v2406
    %v2631 = vpop.f32.mrf.mxu0
    %v2632 = vadd.f32 0.0, %v2631
    %2633 = vmatmul.f32.gmra.mxu0 %v2409
    %v2634 = vpop.f32.mrf.mxu0
    %v2635 = vadd.f32 0.0, %v2634
    %2636 = vmatmul.f32.gmra.mxu0 %v2412
    %v2637 = vpop.f32.mrf.mxu0
    %v2638 = vadd.f32 0.0, %v2637
    %2639 = vmatmul.f32.gmra.mxu0 %v2415
    %v2640 = vpop.f32.mrf.mxu0
    %v2641 = vadd.f32 0.0, %v2640
    %2642 = vmatmul.f32.gmra.mxu0 %v2418
    %v2643 = vpop.f32.mrf.mxu0
    %v2644 = vadd.f32 0.0, %v2643
    %2645 = vmatmul.f32.gmra.mxu0 %v2421
    %v2646 = vpop.f32.mrf.mxu0
    %v2647 = vadd.f32 0.0, %v2646
    %2648 = vmatmul.f32.gmra.mxu0 %v2424
    %v2649 = vpop.f32.mrf.mxu0
    %v2650 = vadd.f32 0.0, %v2649
    %2651 = vmatmul.f32.gmra.mxu0 %v2427
    %v2652 = vpop.f32.mrf.mxu0
    %v2653 = vadd.f32 0.0, %v2652
    %2654 = vmatmul.f32.gmra.mxu0 %v2430
    %v2655 = vpop.f32.mrf.mxu0
    %v2656 = vadd.f32 0.0, %v2655
    %2657 = vmatmul.f32.gmra.mxu0 %v2433
    %v2658 = vpop.f32.mrf.mxu0
    %v2659 = vadd.f32 0.0, %v2658
    %2660 = vmatmul.f32.gmra.mxu0 %v2436
    %v2661 = vpop.f32.mrf.mxu0
    %v2662 = vadd.f32 0.0, %v2661
    %2663 = vmatmul.f32.gmra.mxu0 %v2439
    %v2664 = vpop.f32.mrf.mxu0
    %v2665 = vadd.f32 0.0, %v2664
    %2666 = vmatmul.f32.gmra.mxu0 %v2442
    %v2667 = vpop.f32.mrf.mxu0
    %v2668 = vadd.f32 0.0, %v2667
    %2669 = vmatmul.f32.gmra.mxu0 %v2445
    %v2670 = vpop.f32.mrf.mxu0
    %v2671 = vadd.f32 0.0, %v2670
    %2672 = vmatmul.f32.gmra.mxu0 %v2448
    %v2673 = vpop.f32.mrf.mxu0
    %v2674 = vadd.f32 0.0, %v2673
    %2675 = vmatmul.f32.gmra.mxu0 %v2451
    %v2676 = vpop.f32.mrf.mxu0
    %v2677 = vadd.f32 0.0, %v2676
    %2678 = vmatmul.f32.gmra.mxu0 %v2454
    %v2679 = vpop.f32.mrf.mxu0
    %v2680 = vadd.f32 0.0, %v2679
    %2681 = vmatmul.f32.gmra.mxu0 %v2457
    %v2682 = vpop.f32.mrf.mxu0
    %v2683 = vadd.f32 0.0, %v2682
    %2684 = vmatmul.f32.gmra.mxu0 %v2460
    %v2685 = vpop.f32.mrf.mxu0
    %v2686 = vadd.f32 0.0, %v2685
    %2687 = vmatmul.f32.gmra.mxu0 %v2463
    %v2688 = vpop.f32.mrf.mxu0
    %v2689 = vadd.f32 0.0, %v2688
    %2690 = vmatmul.f32.gmra.mxu0 %v2466
    %v2691 = vpop.f32.mrf.mxu0
    %v2692 = vadd.f32 0.0, %v2691
    %2693 = vmatmul.f32.gmra.mxu0 %v2469
    %v2694 = vpop.f32.mrf.mxu0
    %v2695 = vadd.f32 0.0, %v2694
    %2696 = vmatmul.f32.gmra.mxu0 %v2472
    %v2697 = vpop.f32.mrf.mxu0
    %v2698 = vadd.f32 0.0, %v2697
    %2699 = vmatmul.f32.gmra.mxu0 %v2475
    %v2700 = vpop.f32.mrf.mxu0
    %v2701 = vadd.f32 0.0, %v2700
    %2702 = vmatmul.f32.gmra.mxu0 %v2478
    %v2703 = vpop.f32.mrf.mxu0
    %v2704 = vadd.f32 0.0, %v2703
    %2705 = vdwg.mxu0
    %v2706 = vmax.f32 %v2498, %v2611
    %2707 = vmax.xlane.f32.xlu0 %v2706
    %v2708 = vpop.xlane.xlu0 %2707
    %v2709 = vmax.f32 %v2501, %v2614
    %2710 = vmax.xlane.f32.xlu0 %v2709
    %v2711 = vpop.xlane.xlu0 %2710
    %v2712 = vmax.f32 %v2504, %v2617
    %2713 = vmax.xlane.f32.xlu0 %v2712
    %v2714 = vpop.xlane.xlu0 %2713
    %v2715 = vmax.f32 %v2507, %v2620
    %2716 = vmax.xlane.f32.xlu0 %v2715
    %v2717 = vpop.xlane.xlu0 %2716
    %v2718 = vmax.f32 %v2510, %v2623
    %2719 = vmax.xlane.f32.xlu0 %v2718
    %v2720 = vpop.xlane.xlu0 %2719
    %v2721 = vmax.f32 %v2513, %v2626
    %2722 = vmax.xlane.f32.xlu0 %v2721
    %v2723 = vpop.xlane.xlu0 %2722
    %v2724 = vmax.f32 %v2516, %v2629
    %2725 = vmax.xlane.f32.xlu0 %v2724
    %v2726 = vpop.xlane.xlu0 %2725
    %v2727 = vmax.f32 %v2519, %v2632
    %2728 = vmax.xlane.f32.xlu0 %v2727
    %v2729 = vpop.xlane.xlu0 %2728
    %v2730 = vmax.f32 %v2522, %v2635
    %2731 = vmax.xlane.f32.xlu0 %v2730
    %v2732 = vpop.xlane.xlu0 %2731
    %v2733 = vmax.f32 %v2525, %v2638
    %2734 = vmax.xlane.f32.xlu0 %v2733
    %v2735 = vpop.xlane.xlu0 %2734
    %v2736 = vmax.f32 %v2528, %v2641
    %2737 = vmax.xlane.f32.xlu0 %v2736
    %v2738 = vpop.xlane.xlu0 %2737
    %v2739 = vmax.f32 %v2531, %v2644
    %2740 = vmax.xlane.f32.xlu0 %v2739
    %v2741 = vpop.xlane.xlu0 %2740
    %v2742 = vmax.f32 %v2534, %v2647
    %2743 = vmax.xlane.f32.xlu0 %v2742
    %v2744 = vpop.xlane.xlu0 %2743
    %v2745 = vmax.f32 %v2537, %v2650
    %2746 = vmax.xlane.f32.xlu0 %v2745
    %v2747 = vpop.xlane.xlu0 %2746
    %v2748 = vmax.f32 %v2540, %v2653
    %2749 = vmax.xlane.f32.xlu0 %v2748
    %v2750 = vpop.xlane.xlu0 %2749
    %v2751 = vmax.f32 %v2543, %v2656
    %2752 = vmax.xlane.f32.xlu0 %v2751
    %v2753 = vpop.xlane.xlu0 %2752
    %v2754 = vmax.f32 %v2546, %v2659
    %2755 = vmax.xlane.f32.xlu0 %v2754
    %v2756 = vpop.xlane.xlu0 %2755
    %v2757 = vmax.f32 %v2549, %v2662
    %2758 = vmax.xlane.f32.xlu0 %v2757
    %v2759 = vpop.xlane.xlu0 %2758
    %v2760 = vmax.f32 %v2552, %v2665
    %2761 = vmax.xlane.f32.xlu0 %v2760
    %v2762 = vpop.xlane.xlu0 %2761
    %v2763 = vmax.f32 %v2555, %v2668
    %2764 = vmax.xlane.f32.xlu0 %v2763
    %v2765 = vpop.xlane.xlu0 %2764
    %v2766 = vmax.f32 %v2558, %v2671
    %2767 = vmax.xlane.f32.xlu0 %v2766
    %v2768 = vpop.xlane.xlu0 %2767
    %v2769 = vmax.f32 %v2561, %v2674
    %2770 = vmax.xlane.f32.xlu0 %v2769
    %v2771 = vpop.xlane.xlu0 %2770
    %v2772 = vmax.f32 %v2564, %v2677
    %2773 = vmax.xlane.f32.xlu0 %v2772
    %v2774 = vpop.xlane.xlu0 %2773
    %v2775 = vmax.f32 %v2567, %v2680
    %2776 = vmax.xlane.f32.xlu0 %v2775
    %v2777 = vpop.xlane.xlu0 %2776
    %v2778 = vmax.f32 %v2570, %v2683
    %2779 = vmax.xlane.f32.xlu0 %v2778
    %v2780 = vpop.xlane.xlu0 %2779
    %v2781 = vmax.f32 %v2573, %v2686
    %2782 = vmax.xlane.f32.xlu0 %v2781
    %v2783 = vpop.xlane.xlu0 %2782
    %v2784 = vmax.f32 %v2576, %v2689
    %2785 = vmax.xlane.f32.xlu0 %v2784
    %v2786 = vpop.xlane.xlu0 %2785
    %v2787 = vmax.f32 %v2579, %v2692
    %2788 = vmax.xlane.f32.xlu0 %v2787
    %v2789 = vpop.xlane.xlu0 %2788
    %v2790 = vmax.f32 %v2582, %v2695
    %2791 = vmax.xlane.f32.xlu0 %v2790
    %v2792 = vpop.xlane.xlu0 %2791
    %v2793 = vmax.f32 %v2585, %v2698
    %2794 = vmax.xlane.f32.xlu0 %v2793
    %v2795 = vpop.xlane.xlu0 %2794
    %v2796 = vmax.f32 %v2588, %v2701
    %2797 = vmax.xlane.f32.xlu0 %v2796
    %v2798 = vpop.xlane.xlu0 %2797
    %v2799 = vmax.f32 %v2591, %v2704
    %2800 = vmax.xlane.f32.xlu0 %v2799
    %v2801 = vpop.xlane.xlu0 %2800
    %v2802 = vsub.f32 %v2498, %v2708
    %v2803 = vsub.f32 %v2611, %v2708
    %v2804 = vsub.f32 %v2501, %v2711
    %v2805 = vsub.f32 %v2614, %v2711
    %v2806 = vsub.f32 %v2504, %v2714
    %v2807 = vsub.f32 %v2617, %v2714
    %v2808 = vsub.f32 %v2507, %v2717
    %v2809 = vsub.f32 %v2620, %v2717
    %v2810 = vsub.f32 %v2510, %v2720
    %v2811 = vsub.f32 %v2623, %v2720
    %v2812 = vsub.f32 %v2513, %v2723
    %v2813 = vsub.f32 %v2626, %v2723
    %v2814 = vsub.f32 %v2516, %v2726
    %v2815 = vsub.f32 %v2629, %v2726
    %v2816 = vsub.f32 %v2519, %v2729
    %v2817 = vsub.f32 %v2632, %v2729
    %v2818 = vsub.f32 %v2522, %v2732
    %v2819 = vsub.f32 %v2635, %v2732
    %v2820 = vsub.f32 %v2525, %v2735
    %v2821 = vsub.f32 %v2638, %v2735
    %v2822 = vsub.f32 %v2528, %v2738
    %v2823 = vsub.f32 %v2641, %v2738
    %v2824 = vsub.f32 %v2531, %v2741
    %v2825 = vsub.f32 %v2644, %v2741
    %v2826 = vsub.f32 %v2534, %v2744
    %v2827 = vsub.f32 %v2647, %v2744
    %v2828 = vsub.f32 %v2537, %v2747
    %v2829 = vsub.f32 %v2650, %v2747
    %v2830 = vsub.f32 %v2540, %v2750
    %v2831 = vsub.f32 %v2653, %v2750
    %v2832 = vsub.f32 %v2543, %v2753
    %v2833 = vsub.f32 %v2656, %v2753
    %v2834 = vsub.f32 %v2546, %v2756
    %v2835 = vsub.f32 %v2659, %v2756
    %v2836 = vsub.f32 %v2549, %v2759
    %v2837 = vsub.f32 %v2662, %v2759
    %v2838 = vsub.f32 %v2552, %v2762
    %v2839 = vsub.f32 %v2665, %v2762
    %v2840 = vsub.f32 %v2555, %v2765
    %v2841 = vsub.f32 %v2668, %v2765
    %v2842 = vsub.f32 %v2558, %v2768
    %v2843 = vsub.f32 %v2671, %v2768
    %v2844 = vsub.f32 %v2561, %v2771
    %v2845 = vsub.f32 %v2674, %v2771
    %v2846 = vsub.f32 %v2564, %v2774
    %v2847 = vsub.f32 %v2677, %v2774
    %v2848 = vsub.f32 %v2567, %v2777
    %v2849 = vsub.f32 %v2680, %v2777
    %v2850 = vsub.f32 %v2570, %v2780
    %v2851 = vsub.f32 %v2683, %v2780
    %v2852 = vsub.f32 %v2573, %v2783
    %v2853 = vsub.f32 %v2686, %v2783
    %v2854 = vsub.f32 %v2576, %v2786
    %v2855 = vsub.f32 %v2689, %v2786
    %v2856 = vsub.f32 %v2579, %v2789
    %v2857 = vsub.f32 %v2692, %v2789
    %v2858 = vsub.f32 %v2582, %v2792
    %v2859 = vsub.f32 %v2695, %v2792
    %v2860 = vsub.f32 %v2585, %v2795
    %v2861 = vsub.f32 %v2698, %v2795
    %v2862 = vsub.f32 %v2588, %v2798
    %v2863 = vsub.f32 %v2701, %v2798
    %v2864 = vsub.f32 %v2591, %v2801
    %v2865 = vsub.f32 %v2704, %v2801
    %v2866 = vmul.f32 %v2802, 1.442695
    %v2867 = vpow.pop %v2866
    %v2868 = vmul.f32 %v2803, 1.442695
    %v2869 = vpow.pop %v2868
    %v2870 = vmul.f32 %v2804, 1.442695
    %v2871 = vpow.pop %v2870
    %v2872 = vmul.f32 %v2805, 1.442695
    %v2873 = vpow.pop %v2872
    %v2874 = vmul.f32 %v2806, 1.442695
    %v2875 = vpow.pop %v2874
    %v2876 = vmul.f32 %v2807, 1.442695
    %v2877 = vpow.pop %v2876
    %v2878 = vmul.f32 %v2808, 1.442695
    %v2879 = vpow.pop %v2878
    %v2880 = vmul.f32 %v2809, 1.442695
    %v2881 = vpow.pop %v2880
    %v2882 = vmul.f32 %v2810, 1.442695
    %v2883 = vpow.pop %v2882
    %v2884 = vmul.f32 %v2811, 1.442695
    %v2885 = vpow.pop %v2884
    %v2886 = vmul.f32 %v2812, 1.442695
    %v2887 = vpow.pop %v2886
    %v2888 = vmul.f32 %v2813, 1.442695
    %v2889 = vpow.pop %v2888
    %v2890 = vmul.f32 %v2814, 1.442695
    %v2891 = vpow.pop %v2890
    %v2892 = vmul.f32 %v2815, 1.442695
    %v2893 = vpow.pop %v2892
    %v2894 = vmul.f32 %v2816, 1.442695
    %v2895 = vpow.pop %v2894
    %v2896 = vmul.f32 %v2817, 1.442695
    %v2897 = vpow.pop %v2896
    %v2898 = vmul.f32 %v2818, 1.442695
    %v2899 = vpow.pop %v2898
    %v2900 = vmul.f32 %v2819, 1.442695
    %v2901 = vpow.pop %v2900
    %v2902 = vmul.f32 %v2820, 1.442695
    %v2903 = vpow.pop %v2902
    %v2904 = vmul.f32 %v2821, 1.442695
    %v2905 = vpow.pop %v2904
    %v2906 = vmul.f32 %v2822, 1.442695
    %v2907 = vpow.pop %v2906
    %v2908 = vmul.f32 %v2823, 1.442695
    %v2909 = vpow.pop %v2908
    %v2910 = vmul.f32 %v2824, 1.442695
    %v2911 = vpow.pop %v2910
    %v2912 = vmul.f32 %v2825, 1.442695
    %v2913 = vpow.pop %v2912
    %v2914 = vmul.f32 %v2826, 1.442695
    %v2915 = vpow.pop %v2914
    %v2916 = vmul.f32 %v2827, 1.442695
    %v2917 = vpow.pop %v2916
    %v2918 = vmul.f32 %v2828, 1.442695
    %v2919 = vpow.pop %v2918
    %v2920 = vmul.f32 %v2829, 1.442695
    %v2921 = vpow.pop %v2920
    %v2922 = vmul.f32 %v2830, 1.442695
    %v2923 = vpow.pop %v2922
    %v2924 = vmul.f32 %v2831, 1.442695
    %v2925 = vpow.pop %v2924
    %v2926 = vmul.f32 %v2832, 1.442695
    %v2927 = vpow.pop %v2926
    %v2928 = vmul.f32 %v2833, 1.442695
    %v2929 = vpow.pop %v2928
    %v2930 = vmul.f32 %v2834, 1.442695
    %v2931 = vpow.pop %v2930
    %v2932 = vmul.f32 %v2835, 1.442695
    %v2933 = vpow.pop %v2932
    %v2934 = vmul.f32 %v2836, 1.442695
    %v2935 = vpow.pop %v2934
    %v2936 = vmul.f32 %v2837, 1.442695
    %v2937 = vpow.pop %v2936
    %v2938 = vmul.f32 %v2838, 1.442695
    %v2939 = vpow.pop %v2938
    %v2940 = vmul.f32 %v2839, 1.442695
    %v2941 = vpow.pop %v2940
    %v2942 = vmul.f32 %v2840, 1.442695
    %v2943 = vpow.pop %v2942
    %v2944 = vmul.f32 %v2841, 1.442695
    %v2945 = vpow.pop %v2944
    %v2946 = vmul.f32 %v2842, 1.442695
    %v2947 = vpow.pop %v2946
    %v2948 = vmul.f32 %v2843, 1.442695
    %v2949 = vpow.pop %v2948
    %v2950 = vmul.f32 %v2844, 1.442695
    %v2951 = vpow.pop %v2950
    %v2952 = vmul.f32 %v2845, 1.442695
    %v2953 = vpow.pop %v2952
    %v2954 = vmul.f32 %v2846, 1.442695
    %v2955 = vpow.pop %v2954
    %v2956 = vmul.f32 %v2847, 1.442695
    %v2957 = vpow.pop %v2956
    %v2958 = vmul.f32 %v2848, 1.442695
    %v2959 = vpow.pop %v2958
    %v2960 = vmul.f32 %v2849, 1.442695
    %v2961 = vpow.pop %v2960
    %v2962 = vmul.f32 %v2850, 1.442695
    %v2963 = vpow.pop %v2962
    %v2964 = vmul.f32 %v2851, 1.442695
    %v2965 = vpow.pop %v2964
    %v2966 = vmul.f32 %v2852, 1.442695
    %v2967 = vpow.pop %v2966
    %v2968 = vmul.f32 %v2853, 1.442695
    %v2969 = vpow.pop %v2968
    %v2970 = vmul.f32 %v2854, 1.442695
    %v2971 = vpow.pop %v2970
    %v2972 = vmul.f32 %v2855, 1.442695
    %v2973 = vpow.pop %v2972
    %v2974 = vmul.f32 %v2856, 1.442695
    %v2975 = vpow.pop %v2974
    %v2976 = vmul.f32 %v2857, 1.442695
    %v2977 = vpow.pop %v2976
    %v2978 = vmul.f32 %v2858, 1.442695
    %v2979 = vpow.pop %v2978
    %v2980 = vmul.f32 %v2859, 1.442695
    %v2981 = vpow.pop %v2980
    %v2982 = vmul.f32 %v2860, 1.442695
    %v2983 = vpow.pop %v2982
    %v2984 = vmul.f32 %v2861, 1.442695
    %v2985 = vpow.pop %v2984
    %v2986 = vmul.f32 %v2862, 1.442695
    %v2987 = vpow.pop %v2986
    %v2988 = vmul.f32 %v2863, 1.442695
    %v2989 = vpow.pop %v2988
    %v2990 = vmul.f32 %v2864, 1.442695
    %v2991 = vpow.pop %v2990
    %v2992 = vmul.f32 %v2865, 1.442695
    %v2993 = vpow.pop %v2992
    %v2994 = vadd.f32 %v2867, %v2869
    %2995 = vadd.xlane.f32.xlu0 %v2994
    %v2996 = vpop.xlane.xlu0 %2995
    %v2997 = vadd.f32 %v2871, %v2873
    %2998 = vadd.xlane.f32.xlu0 %v2997
    %v2999 = vpop.xlane.xlu0 %2998
    %v3000 = vadd.f32 %v2875, %v2877
    %3001 = vadd.xlane.f32.xlu0 %v3000
    %v3002 = vpop.xlane.xlu0 %3001
    %v3003 = vadd.f32 %v2879, %v2881
    %3004 = vadd.xlane.f32.xlu0 %v3003
    %v3005 = vpop.xlane.xlu0 %3004
    %v3006 = vadd.f32 %v2883, %v2885
    %3007 = vadd.xlane.f32.xlu0 %v3006
    %v3008 = vpop.xlane.xlu0 %3007
    %v3009 = vadd.f32 %v2887, %v2889
    %3010 = vadd.xlane.f32.xlu0 %v3009
    %v3011 = vpop.xlane.xlu0 %3010
    %v3012 = vadd.f32 %v2891, %v2893
    %3013 = vadd.xlane.f32.xlu0 %v3012
    %v3014 = vpop.xlane.xlu0 %3013
    %v3015 = vadd.f32 %v2895, %v2897
    %3016 = vadd.xlane.f32.xlu0 %v3015
    %v3017 = vpop.xlane.xlu0 %3016
    %v3018 = vadd.f32 %v2899, %v2901
    %3019 = vadd.xlane.f32.xlu0 %v3018
    %v3020 = vpop.xlane.xlu0 %3019
    %v3021 = vadd.f32 %v2903, %v2905
    %3022 = vadd.xlane.f32.xlu0 %v3021
    %v3023 = vpop.xlane.xlu0 %3022
    %v3024 = vadd.f32 %v2907, %v2909
    %3025 = vadd.xlane.f32.xlu0 %v3024
    %v3026 = vpop.xlane.xlu0 %3025
    %v3027 = vadd.f32 %v2911, %v2913
    %3028 = vadd.xlane.f32.xlu0 %v3027
    %v3029 = vpop.xlane.xlu0 %3028
    %v3030 = vadd.f32 %v2915, %v2917
    %3031 = vadd.xlane.f32.xlu0 %v3030
    %v3032 = vpop.xlane.xlu0 %3031
    %v3033 = vadd.f32 %v2919, %v2921
    %3034 = vadd.xlane.f32.xlu0 %v3033
    %v3035 = vpop.xlane.xlu0 %3034
    %v3036 = vadd.f32 %v2923, %v2925
    %3037 = vadd.xlane.f32.xlu0 %v3036
    %v3038 = vpop.xlane.xlu0 %3037
    %v3039 = vadd.f32 %v2927, %v2929
    %3040 = vadd.xlane.f32.xlu0 %v3039
    %v3041 = vpop.xlane.xlu0 %3040
    %v3042 = vadd.f32 %v2931, %v2933
    %3043 = vadd.xlane.f32.xlu0 %v3042
    %v3044 = vpop.xlane.xlu0 %3043
    %v3045 = vadd.f32 %v2935, %v2937
    %3046 = vadd.xlane.f32.xlu0 %v3045
    %v3047 = vpop.xlane.xlu0 %3046
    %v3048 = vadd.f32 %v2939, %v2941
    %3049 = vadd.xlane.f32.xlu0 %v3048
    %v3050 = vpop.xlane.xlu0 %3049
    %v3051 = vadd.f32 %v2943, %v2945
    %3052 = vadd.xlane.f32.xlu0 %v3051
    %v3053 = vpop.xlane.xlu0 %3052
    %v3054 = vadd.f32 %v2947, %v2949
    %3055 = vadd.xlane.f32.xlu0 %v3054
    %v3056 = vpop.xlane.xlu0 %3055
    %v3057 = vadd.f32 %v2951, %v2953
    %3058 = vadd.xlane.f32.xlu0 %v3057
    %v3059 = vpop.xlane.xlu0 %3058
    %v3060 = vadd.f32 %v2955, %v2957
    %3061 = vadd.xlane.f32.xlu0 %v3060
    %v3062 = vpop.xlane.xlu0 %3061
    %v3063 = vadd.f32 %v2959, %v2961
    %3064 = vadd.xlane.f32.xlu0 %v3063
    %v3065 = vpop.xlane.xlu0 %3064
    %v3066 = vadd.f32 %v2963, %v2965
    %3067 = vadd.xlane.f32.xlu0 %v3066
    %v3068 = vpop.xlane.xlu0 %3067
    %v3069 = vadd.f32 %v2967, %v2969
    %3070 = vadd.xlane.f32.xlu0 %v3069
    %v3071 = vpop.xlane.xlu0 %3070
    %v3072 = vadd.f32 %v2971, %v2973
    %3073 = vadd.xlane.f32.xlu0 %v3072
    %v3074 = vpop.xlane.xlu0 %3073
    %v3075 = vadd.f32 %v2975, %v2977
    %3076 = vadd.xlane.f32.xlu0 %v3075
    %v3077 = vpop.xlane.xlu0 %3076
    %v3078 = vadd.f32 %v2979, %v2981
    %3079 = vadd.xlane.f32.xlu0 %v3078
    %v3080 = vpop.xlane.xlu0 %3079
    %v3081 = vadd.f32 %v2983, %v2985
    %3082 = vadd.xlane.f32.xlu0 %v3081
    %v3083 = vpop.xlane.xlu0 %3082
    %v3084 = vadd.f32 %v2987, %v2989
    %3085 = vadd.xlane.f32.xlu0 %v3084
    %v3086 = vpop.xlane.xlu0 %3085
    %v3087 = vadd.f32 %v2991, %v2993
    %3088 = vadd.xlane.f32.xlu0 %v3087
    %v3089 = vpop.xlane.xlu0 %3088
    %v3090 = vrcp.pop %v2996
    %v3091 = vrcp.pop %v2999
    %v3092 = vrcp.pop %v3002
    %v3093 = vrcp.pop %v3005
    %v3094 = vrcp.pop %v3008
    %v3095 = vrcp.pop %v3011
    %v3096 = vrcp.pop %v3014
    %v3097 = vrcp.pop %v3017
    %v3098 = vrcp.pop %v3020
    %v3099 = vrcp.pop %v3023
    %v3100 = vrcp.pop %v3026
    %v3101 = vrcp.pop %v3029
    %v3102 = vrcp.pop %v3032
    %v3103 = vrcp.pop %v3035
    %v3104 = vrcp.pop %v3038
    %v3105 = vrcp.pop %v3041
    %v3106 = vrcp.pop %v3044
    %v3107 = vrcp.pop %v3047
    %v3108 = vrcp.pop %v3050
    %v3109 = vrcp.pop %v3053
    %v3110 = vrcp.pop %v3056
    %v3111 = vrcp.pop %v3059
    %v3112 = vrcp.pop %v3062
    %v3113 = vrcp.pop %v3065
    %v3114 = vrcp.pop %v3068
    %v3115 = vrcp.pop %v3071
    %v3116 = vrcp.pop %v3074
    %v3117 = vrcp.pop %v3077
    %v3118 = vrcp.pop %v3080
    %v3119 = vrcp.pop %v3083
    %v3120 = vrcp.pop %v3086
    %v3121 = vrcp.pop %v3089
    %v3122 = vmul.f32 %v2867, %v3090
    %v3123 = vmul.f32 %v2869, %v3090
    %v3124 = vmul.f32 %v2871, %v3091
    %v3125 = vmul.f32 %v2873, %v3091
    %v3126 = vmul.f32 %v2875, %v3092
    %v3127 = vmul.f32 %v2877, %v3092
    %v3128 = vmul.f32 %v2879, %v3093
    %v3129 = vmul.f32 %v2881, %v3093
    %v3130 = vmul.f32 %v2883, %v3094
    %v3131 = vmul.f32 %v2885, %v3094
    %v3132 = vmul.f32 %v2887, %v3095
    %v3133 = vmul.f32 %v2889, %v3095
    %v3134 = vmul.f32 %v2891, %v3096
    %v3135 = vmul.f32 %v2893, %v3096
    %v3136 = vmul.f32 %v2895, %v3097
    %v3137 = vmul.f32 %v2897, %v3097
    %v3138 = vmul.f32 %v2899, %v3098
    %v3139 = vmul.f32 %v2901, %v3098
    %v3140 = vmul.f32 %v2903, %v3099
    %v3141 = vmul.f32 %v2905, %v3099
    %v3142 = vmul.f32 %v2907, %v3100
    %v3143 = vmul.f32 %v2909, %v3100
    %v3144 = vmul.f32 %v2911, %v3101
    %v3145 = vmul.f32 %v2913, %v3101
    %v3146 = vmul.f32 %v2915, %v3102
    %v3147 = vmul.f32 %v2917, %v3102
    %v3148 = vmul.f32 %v2919, %v3103
    %v3149 = vmul.f32 %v2921, %v3103
    %v3150 = vmul.f32 %v2923, %v3104
    %v3151 = vmul.f32 %v2925, %v3104
    %v3152 = vmul.f32 %v2927, %v3105
    %v3153 = vmul.f32 %v2929, %v3105
    %v3154 = vmul.f32 %v2931, %v3106
    %v3155 = vmul.f32 %v2933, %v3106
    %v3156 = vmul.f32 %v2935, %v3107
    %v3157 = vmul.f32 %v2937, %v3107
    %v3158 = vmul.f32 %v2939, %v3108
    %v3159 = vmul.f32 %v2941, %v3108
    %v3160 = vmul.f32 %v2943, %v3109
    %v3161 = vmul.f32 %v2945, %v3109
    %v3162 = vmul.f32 %v2947, %v3110
    %v3163 = vmul.f32 %v2949, %v3110
    %v3164 = vmul.f32 %v2951, %v3111
    %v3165 = vmul.f32 %v2953, %v3111
    %v3166 = vmul.f32 %v2955, %v3112
    %v3167 = vmul.f32 %v2957, %v3112
    %v3168 = vmul.f32 %v2959, %v3113
    %v3169 = vmul.f32 %v2961, %v3113
    %v3170 = vmul.f32 %v2963, %v3114
    %v3171 = vmul.f32 %v2965, %v3114
    %v3172 = vmul.f32 %v2967, %v3115
    %v3173 = vmul.f32 %v2969, %v3115
    %v3174 = vmul.f32 %v2971, %v3116
    %v3175 = vmul.f32 %v2973, %v3116
    %v3176 = vmul.f32 %v2975, %v3117
    %v3177 = vmul.f32 %v2977, %v3117
    %v3178 = vmul.f32 %v2979, %v3118
    %v3179 = vmul.f32 %v2981, %v3118
    %v3180 = vmul.f32 %v2983, %v3119
    %v3181 = vmul.f32 %v2985, %v3119
    %v3182 = vmul.f32 %v2987, %v3120
    %v3183 = vmul.f32 %v2989, %v3120
    %v3184 = vmul.f32 %v2991, %v3121
    %v3185 = vmul.f32 %v2993, %v3121
    %3186 = vmatpush.xpose.msra.mxu0 %v3152
    %3187 = vmatpush.xpose.msra.mxu0 %v3150
    %3188 = vmatpush.xpose.msra.mxu0 %v3148
    %3189 = vmatpush.xpose.msra.mxu0 %v3146
    %3190 = vmatpush.xpose.msra.mxu0 %v3144
    %3191 = vmatpush.xpose.msra.mxu0 %v3142
    %3192 = vmatpush.xpose.msra.mxu0 %v3140
    %3193 = vmatpush.xpose.msra.mxu0 %v3138
    %3194 = vmatpush.xpose.msra.mxu0 %v3136
    %3195 = vmatpush.xpose.msra.mxu0 %v3134
    %3196 = vmatpush.xpose.msra.mxu0 %v3132
    %3197 = vmatpush.xpose.msra.mxu0 %v3130
    %3198 = vmatpush.xpose.msra.mxu0 %v3128
    %3199 = vmatpush.xpose.msra.mxu0 %v3126
    %3200 = vmatpush.xpose.msra.mxu0 %v3124
    %3201 = vmatpush.xpose.msra.mxu0 %v3122
    %3202 = vmatmul.f32.gmra.mxu0 %v369
    %v3203 = vpop.f32.mrf.mxu0
    %v3204 = vadd.f32 0.0, %v3203
    %3205 = vdwg.mxu0
    %3206 = vmatpush.xpose.msra.mxu0 %v3153
    %3207 = vmatpush.xpose.msra.mxu0 %v3151
    %3208 = vmatpush.xpose.msra.mxu0 %v3149
    %3209 = vmatpush.xpose.msra.mxu0 %v3147
    %3210 = vmatpush.xpose.msra.mxu0 %v3145
    %3211 = vmatpush.xpose.msra.mxu0 %v3143
    %3212 = vmatpush.xpose.msra.mxu0 %v3141
    %3213 = vmatpush.xpose.msra.mxu0 %v3139
    %3214 = vmatpush.xpose.msra.mxu0 %v3137
    %3215 = vmatpush.xpose.msra.mxu0 %v3135
    %3216 = vmatpush.xpose.msra.mxu0 %v3133
    %3217 = vmatpush.xpose.msra.mxu0 %v3131
    %3218 = vmatpush.xpose.msra.mxu0 %v3129
    %3219 = vmatpush.xpose.msra.mxu0 %v3127
    %3220 = vmatpush.xpose.msra.mxu0 %v3125
    %3221 = vmatpush.xpose.msra.mxu0 %v3123
    %3222 = vmatmul.f32.gmra.mxu0 %v422
    %v3223 = vpop.f32.mrf.mxu0
    %v3224 = vadd.f32 %v3204, %v3223
    %3225 = vdwg.mxu0
    %3226 = vmatpush.xpose.msra.mxu0 %v3184
    %3227 = vmatpush.xpose.msra.mxu0 %v3182
    %3228 = vmatpush.xpose.msra.mxu0 %v3180
    %3229 = vmatpush.xpose.msra.mxu0 %v3178
    %3230 = vmatpush.xpose.msra.mxu0 %v3176
    %3231 = vmatpush.xpose.msra.mxu0 %v3174
    %3232 = vmatpush.xpose.msra.mxu0 %v3172
    %3233 = vmatpush.xpose.msra.mxu0 %v3170
    %3234 = vmatpush.xpose.msra.mxu0 %v3168
    %3235 = vmatpush.xpose.msra.mxu0 %v3166
    %3236 = vmatpush.xpose.msra.mxu0 %v3164
    %3237 = vmatpush.xpose.msra.mxu0 %v3162
    %3238 = vmatpush.xpose.msra.mxu0 %v3160
    %3239 = vmatpush.xpose.msra.mxu0 %v3158
    %3240 = vmatpush.xpose.msra.mxu0 %v3156
    %3241 = vmatpush.xpose.msra.mxu0 %v3154
    %3242 = vmatmul.f32.gmra.mxu0 %v369
    %v3243 = vpop.f32.mrf.mxu0
    %v3244 = vadd.f32 0.0, %v3243
    %3245 = vdwg.mxu0
    %3246 = vmatpush.xpose.msra.mxu0 %v3185
    %3247 = vmatpush.xpose.msra.mxu0 %v3183
    %3248 = vmatpush.xpose.msra.mxu0 %v3181
    %3249 = vmatpush.xpose.msra.mxu0 %v3179
    %3250 = vmatpush.xpose.msra.mxu0 %v3177
    %3251 = vmatpush.xpose.msra.mxu0 %v3175
    %3252 = vmatpush.xpose.msra.mxu0 %v3173
    %3253 = vmatpush.xpose.msra.mxu0 %v3171
    %3254 = vmatpush.xpose.msra.mxu0 %v3169
    %3255 = vmatpush.xpose.msra.mxu0 %v3167
    %3256 = vmatpush.xpose.msra.mxu0 %v3165
    %3257 = vmatpush.xpose.msra.mxu0 %v3163
    %3258 = vmatpush.xpose.msra.mxu0 %v3161
    %3259 = vmatpush.xpose.msra.mxu0 %v3159
    %3260 = vmatpush.xpose.msra.mxu0 %v3157
    %3261 = vmatpush.xpose.msra.mxu0 %v3155
    %3262 = vmatmul.f32.gmra.mxu0 %v422
    %v3263 = vpop.f32.mrf.mxu0
    %v3264 = vadd.f32 %v3244, %v3263
    %3265 = vdwg.mxu0
    %3266 = vxpose.xlu0.b32.start [1/16] %v348, 128
    %3267 = vxpose.xlu0.b32.cont [2/16] 0.0, 128
    %3268 = vxpose.xlu0.b32.cont [3/16] 0.0, 128
    %3269 = vxpose.xlu0.b32.cont [4/16] 0.0, 128
    %3270 = vxpose.xlu0.b32.cont [5/16] 0.0, 128
    %3271 = vxpose.xlu0.b32.cont [6/16] 0.0, 128
    %3272 = vxpose.xlu0.b32.cont [7/16] 0.0, 128
    %3273 = vxpose.xlu0.b32.cont [8/16] 0.0, 128
    %3274 = vxpose.xlu0.b32.cont [9/16] 0.0, 128
    %3275 = vxpose.xlu0.b32.cont [10/16] 0.0, 128
    %3276 = vxpose.xlu0.b32.cont [11/16] 0.0, 128
    %3277 = vxpose.xlu0.b32.cont [12/16] 0.0, 128
    %3278 = vxpose.xlu0.b32.cont [13/16] 0.0, 128
    %3279 = vxpose.xlu0.b32.cont [14/16] 0.0, 128
    %3280 = vxpose.xlu0.b32.cont [15/16] 0.0, 128
    %3281 = vxpose.xlu0.b32.end [16/16] 0.0, 128
    %v3282 = vpop.trf.xlu0
    %v3283 = vpop.trf.xlu0
    %v3284 = vpop.trf.xlu0
    %v3285 = vpop.trf.xlu0
    %v3286 = vpop.trf.xlu0
    %v3287 = vpop.trf.xlu0
    %v3288 = vpop.trf.xlu0
    %v3289 = vpop.trf.xlu0
    %v3290 = vpop.trf.xlu0
    %v3291 = vpop.trf.xlu0
    %v3292 = vpop.trf.xlu0
    %v3293 = vpop.trf.xlu0
    %v3294 = vpop.trf.xlu0
    %v3295 = vpop.trf.xlu0
    %v3296 = vpop.trf.xlu0
    %v3297 = vpop.trf.xlu0
    %3298 = vxpose.xlu0.b32.start [1/16] %v401, 128
    %3299 = vxpose.xlu0.b32.cont [2/16] 0.0, 128
    %3300 = vxpose.xlu0.b32.cont [3/16] 0.0, 128
    %3301 = vxpose.xlu0.b32.cont [4/16] 0.0, 128
    %3302 = vxpose.xlu0.b32.cont [5/16] 0.0, 128
    %3303 = vxpose.xlu0.b32.cont [6/16] 0.0, 128
    %3304 = vxpose.xlu0.b32.cont [7/16] 0.0, 128
    %3305 = vxpose.xlu0.b32.cont [8/16] 0.0, 128
    %3306 = vxpose.xlu0.b32.cont [9/16] 0.0, 128
    %3307 = vxpose.xlu0.b32.cont [10/16] 0.0, 128
    %3308 = vxpose.xlu0.b32.cont [11/16] 0.0, 128
    %3309 = vxpose.xlu0.b32.cont [12/16] 0.0, 128
    %3310 = vxpose.xlu0.b32.cont [13/16] 0.0, 128
    %3311 = vxpose.xlu0.b32.cont [14/16] 0.0, 128
    %3312 = vxpose.xlu0.b32.cont [15/16] 0.0, 128
    %3313 = vxpose.xlu0.b32.end [16/16] 0.0, 128
    %v3314 = vpop.trf.xlu0
    %v3315 = vpop.trf.xlu0
    %v3316 = vpop.trf.xlu0
    %v3317 = vpop.trf.xlu0
    %v3318 = vpop.trf.xlu0
    %v3319 = vpop.trf.xlu0
    %v3320 = vpop.trf.xlu0
    %v3321 = vpop.trf.xlu0
    %v3322 = vpop.trf.xlu0
    %v3323 = vpop.trf.xlu0
    %v3324 = vpop.trf.xlu0
    %v3325 = vpop.trf.xlu0
    %v3326 = vpop.trf.xlu0
    %v3327 = vpop.trf.xlu0
    %v3328 = vpop.trf.xlu0
    %v3329 = vpop.trf.xlu0
    %v3331 = vsel %vm491, %v3282, 0
    %v3334 = vsel %vm491, %v3283, 0
    %v3337 = vsel %vm491, %v3284, 0
    %v3340 = vsel %vm491, %v3285, 0
    %v3343 = vsel %vm491, %v3286, 0
    %v3346 = vsel %vm491, %v3287, 0
    %v3349 = vsel %vm491, %v3288, 0
    %v3352 = vsel %vm491, %v3289, 0
    %v3355 = vsel %vm491, %v3290, 0
    %v3358 = vsel %vm491, %v3291, 0
    %v3361 = vsel %vm491, %v3292, 0
    %v3364 = vsel %vm491, %v3293, 0
    %v3367 = vsel %vm491, %v3294, 0
    %v3370 = vsel %vm491, %v3295, 0
    %v3373 = vsel %vm491, %v3296, 0
    %v3376 = vsel %vm491, %v3297, 0
    %v3379 = vsel %vm491, %v3314, 0
    %v3382 = vsel %vm491, %v3315, 0
    %v3385 = vsel %vm491, %v3316, 0
    %v3388 = vsel %vm491, %v3317, 0
    %v3391 = vsel %vm491, %v3318, 0
    %v3394 = vsel %vm491, %v3319, 0
    %v3397 = vsel %vm491, %v3320, 0
    %v3400 = vsel %vm491, %v3321, 0
    %v3403 = vsel %vm491, %v3322, 0
    %v3406 = vsel %vm491, %v3323, 0
    %v3409 = vsel %vm491, %v3324, 0
    %v3412 = vsel %vm491, %v3325, 0
    %v3415 = vsel %vm491, %v3326, 0
    %v3418 = vsel %vm491, %v3327, 0
    %v3421 = vsel %vm491, %v3328, 0
    %v3424 = vsel %vm491, %v3329, 0
    %3426 = vmatpush.msra.mxu0 0.0
    %3427 = vmatpush.msra.mxu0 0.0
    %3428 = vmatpush.msra.mxu0 0.0
    %3429 = vmatpush.msra.mxu0 0.0
    %3430 = vmatpush.msra.mxu0 0.0
    %3431 = vmatpush.msra.mxu0 0.0
    %3432 = vmatpush.msra.mxu0 0.0
    %3433 = vmatpush.msra.mxu0 0.0
    %3434 = vmatpush.msra.mxu0 0.0
    %3435 = vmatpush.msra.mxu0 0.0
    %3436 = vmatpush.msra.mxu0 0.0
    %3437 = vmatpush.msra.mxu0 0.0
    %3438 = vmatpush.msra.mxu0 0.0
    %3439 = vmatpush.msra.mxu0 0.0
    %3440 = vmatpush.msra.mxu0 0.0
    %3441 = vmatpush.msra.mxu0 %v360
    %3442 = vmatmul.f32.gmra.mxu0 %v3331
    %v3443 = vpop.f32.mrf.mxu0
    %v3444 = vadd.f32 0.0, %v3443
    %3445 = vmatmul.f32.gmra.mxu0 %v3334
    %v3446 = vpop.f32.mrf.mxu0
    %v3447 = vadd.f32 0.0, %v3446
    %3448 = vmatmul.f32.gmra.mxu0 %v3337
    %v3449 = vpop.f32.mrf.mxu0
    %v3450 = vadd.f32 0.0, %v3449
    %3451 = vmatmul.f32.gmra.mxu0 %v3340
    %v3452 = vpop.f32.mrf.mxu0
    %v3453 = vadd.f32 0.0, %v3452
    %3454 = vmatmul.f32.gmra.mxu0 %v3343
    %v3455 = vpop.f32.mrf.mxu0
    %v3456 = vadd.f32 0.0, %v3455
    %3457 = vmatmul.f32.gmra.mxu0 %v3346
    %v3458 = vpop.f32.mrf.mxu0
    %v3459 = vadd.f32 0.0, %v3458
    %3460 = vmatmul.f32.gmra.mxu0 %v3349
    %v3461 = vpop.f32.mrf.mxu0
    %v3462 = vadd.f32 0.0, %v3461
    %3463 = vmatmul.f32.gmra.mxu0 %v3352
    %v3464 = vpop.f32.mrf.mxu0
    %v3465 = vadd.f32 0.0, %v3464
    %3466 = vmatmul.f32.gmra.mxu0 %v3355
    %v3467 = vpop.f32.mrf.mxu0
    %v3468 = vadd.f32 0.0, %v3467
    %3469 = vmatmul.f32.gmra.mxu0 %v3358
    %v3470 = vpop.f32.mrf.mxu0
    %v3471 = vadd.f32 0.0, %v3470
    %3472 = vmatmul.f32.gmra.mxu0 %v3361
    %v3473 = vpop.f32.mrf.mxu0
    %v3474 = vadd.f32 0.0, %v3473
    %3475 = vmatmul.f32.gmra.mxu0 %v3364
    %v3476 = vpop.f32.mrf.mxu0
    %v3477 = vadd.f32 0.0, %v3476
    %3478 = vmatmul.f32.gmra.mxu0 %v3367
    %v3479 = vpop.f32.mrf.mxu0
    %v3480 = vadd.f32 0.0, %v3479
    %3481 = vmatmul.f32.gmra.mxu0 %v3370
    %v3482 = vpop.f32.mrf.mxu0
    %v3483 = vadd.f32 0.0, %v3482
    %3484 = vmatmul.f32.gmra.mxu0 %v3373
    %v3485 = vpop.f32.mrf.mxu0
    %v3486 = vadd.f32 0.0, %v3485
    %3487 = vmatmul.f32.gmra.mxu0 %v3376
    %v3488 = vpop.f32.mrf.mxu0
    %v3489 = vadd.f32 0.0, %v3488
    %3490 = vmatmul.f32.gmra.mxu0 %v3379
    %v3491 = vpop.f32.mrf.mxu0
    %v3492 = vadd.f32 0.0, %v3491
    %3493 = vmatmul.f32.gmra.mxu0 %v3382
    %v3494 = vpop.f32.mrf.mxu0
    %v3495 = vadd.f32 0.0, %v3494
    %3496 = vmatmul.f32.gmra.mxu0 %v3385
    %v3497 = vpop.f32.mrf.mxu0
    %v3498 = vadd.f32 0.0, %v3497
    %3499 = vmatmul.f32.gmra.mxu0 %v3388
    %v3500 = vpop.f32.mrf.mxu0
    %v3501 = vadd.f32 0.0, %v3500
    %3502 = vmatmul.f32.gmra.mxu0 %v3391
    %v3503 = vpop.f32.mrf.mxu0
    %v3504 = vadd.f32 0.0, %v3503
    %3505 = vmatmul.f32.gmra.mxu0 %v3394
    %v3506 = vpop.f32.mrf.mxu0
    %v3507 = vadd.f32 0.0, %v3506
    %3508 = vmatmul.f32.gmra.mxu0 %v3397
    %v3509 = vpop.f32.mrf.mxu0
    %v3510 = vadd.f32 0.0, %v3509
    %3511 = vmatmul.f32.gmra.mxu0 %v3400
    %v3512 = vpop.f32.mrf.mxu0
    %v3513 = vadd.f32 0.0, %v3512
    %3514 = vmatmul.f32.gmra.mxu0 %v3403
    %v3515 = vpop.f32.mrf.mxu0
    %v3516 = vadd.f32 0.0, %v3515
    %3517 = vmatmul.f32.gmra.mxu0 %v3406
    %v3518 = vpop.f32.mrf.mxu0
    %v3519 = vadd.f32 0.0, %v3518
    %3520 = vmatmul.f32.gmra.mxu0 %v3409
    %v3521 = vpop.f32.mrf.mxu0
    %v3522 = vadd.f32 0.0, %v3521
    %3523 = vmatmul.f32.gmra.mxu0 %v3412
    %v3524 = vpop.f32.mrf.mxu0
    %v3525 = vadd.f32 0.0, %v3524
    %3526 = vmatmul.f32.gmra.mxu0 %v3415
    %v3527 = vpop.f32.mrf.mxu0
    %v3528 = vadd.f32 0.0, %v3527
    %3529 = vmatmul.f32.gmra.mxu0 %v3418
    %v3530 = vpop.f32.mrf.mxu0
    %v3531 = vadd.f32 0.0, %v3530
    %3532 = vmatmul.f32.gmra.mxu0 %v3421
    %v3533 = vpop.f32.mrf.mxu0
    %v3534 = vadd.f32 0.0, %v3533
    %3535 = vmatmul.f32.gmra.mxu0 %v3424
    %v3536 = vpop.f32.mrf.mxu0
    %v3537 = vadd.f32 0.0, %v3536
    %3538 = vdwg.mxu0
    %3539 = vmatpush.msra.mxu0 0.0
    %3540 = vmatpush.msra.mxu0 0.0
    %3541 = vmatpush.msra.mxu0 0.0
    %3542 = vmatpush.msra.mxu0 0.0
    %3543 = vmatpush.msra.mxu0 0.0
    %3544 = vmatpush.msra.mxu0 0.0
    %3545 = vmatpush.msra.mxu0 0.0
    %3546 = vmatpush.msra.mxu0 0.0
    %3547 = vmatpush.msra.mxu0 0.0
    %3548 = vmatpush.msra.mxu0 0.0
    %3549 = vmatpush.msra.mxu0 0.0
    %3550 = vmatpush.msra.mxu0 0.0
    %3551 = vmatpush.msra.mxu0 0.0
    %3552 = vmatpush.msra.mxu0 0.0
    %3553 = vmatpush.msra.mxu0 0.0
    %3554 = vmatpush.msra.mxu0 %v413
    %3555 = vmatmul.f32.gmra.mxu0 %v3331
    %v3556 = vpop.f32.mrf.mxu0
    %v3557 = vadd.f32 0.0, %v3556
    %3558 = vmatmul.f32.gmra.mxu0 %v3334
    %v3559 = vpop.f32.mrf.mxu0
    %v3560 = vadd.f32 0.0, %v3559
    %3561 = vmatmul.f32.gmra.mxu0 %v3337
    %v3562 = vpop.f32.mrf.mxu0
    %v3563 = vadd.f32 0.0, %v3562
    %3564 = vmatmul.f32.gmra.mxu0 %v3340
    %v3565 = vpop.f32.mrf.mxu0
    %v3566 = vadd.f32 0.0, %v3565
    %3567 = vmatmul.f32.gmra.mxu0 %v3343
    %v3568 = vpop.f32.mrf.mxu0
    %v3569 = vadd.f32 0.0, %v3568
    %3570 = vmatmul.f32.gmra.mxu0 %v3346
    %v3571 = vpop.f32.mrf.mxu0
    %v3572 = vadd.f32 0.0, %v3571
    %3573 = vmatmul.f32.gmra.mxu0 %v3349
    %v3574 = vpop.f32.mrf.mxu0
    %v3575 = vadd.f32 0.0, %v3574
    %3576 = vmatmul.f32.gmra.mxu0 %v3352
    %v3577 = vpop.f32.mrf.mxu0
    %v3578 = vadd.f32 0.0, %v3577
    %3579 = vmatmul.f32.gmra.mxu0 %v3355
    %v3580 = vpop.f32.mrf.mxu0
    %v3581 = vadd.f32 0.0, %v3580
    %3582 = vmatmul.f32.gmra.mxu0 %v3358
    %v3583 = vpop.f32.mrf.mxu0
    %v3584 = vadd.f32 0.0, %v3583
    %3585 = vmatmul.f32.gmra.mxu0 %v3361
    %v3586 = vpop.f32.mrf.mxu0
    %v3587 = vadd.f32 0.0, %v3586
    %3588 = vmatmul.f32.gmra.mxu0 %v3364
    %v3589 = vpop.f32.mrf.mxu0
    %v3590 = vadd.f32 0.0, %v3589
    %3591 = vmatmul.f32.gmra.mxu0 %v3367
    %v3592 = vpop.f32.mrf.mxu0
    %v3593 = vadd.f32 0.0, %v3592
    %3594 = vmatmul.f32.gmra.mxu0 %v3370
    %v3595 = vpop.f32.mrf.mxu0
    %v3596 = vadd.f32 0.0, %v3595
    %3597 = vmatmul.f32.gmra.mxu0 %v3373
    %v3598 = vpop.f32.mrf.mxu0
    %v3599 = vadd.f32 0.0, %v3598
    %3600 = vmatmul.f32.gmra.mxu0 %v3376
    %v3601 = vpop.f32.mrf.mxu0
    %v3602 = vadd.f32 0.0, %v3601
    %3603 = vmatmul.f32.gmra.mxu0 %v3379
    %v3604 = vpop.f32.mrf.mxu0
    %v3605 = vadd.f32 0.0, %v3604
    %3606 = vmatmul.f32.gmra.mxu0 %v3382
    %v3607 = vpop.f32.mrf.mxu0
    %v3608 = vadd.f32 0.0, %v3607
    %3609 = vmatmul.f32.gmra.mxu0 %v3385
    %v3610 = vpop.f32.mrf.mxu0
    %v3611 = vadd.f32 0.0, %v3610
    %3612 = vmatmul.f32.gmra.mxu0 %v3388
    %v3613 = vpop.f32.mrf.mxu0
    %v3614 = vadd.f32 0.0, %v3613
    %3615 = vmatmul.f32.gmra.mxu0 %v3391
    %v3616 = vpop.f32.mrf.mxu0
    %v3617 = vadd.f32 0.0, %v3616
    %3618 = vmatmul.f32.gmra.mxu0 %v3394
    %v3619 = vpop.f32.mrf.mxu0
    %v3620 = vadd.f32 0.0, %v3619
    %3621 = vmatmul.f32.gmra.mxu0 %v3397
    %v3622 = vpop.f32.mrf.mxu0
    %v3623 = vadd.f32 0.0, %v3622
    %3624 = vmatmul.f32.gmra.mxu0 %v3400
    %v3625 = vpop.f32.mrf.mxu0
    %v3626 = vadd.f32 0.0, %v3625
    %3627 = vmatmul.f32.gmra.mxu0 %v3403
    %v3628 = vpop.f32.mrf.mxu0
    %v3629 = vadd.f32 0.0, %v3628
    %3630 = vmatmul.f32.gmra.mxu0 %v3406
    %v3631 = vpop.f32.mrf.mxu0
    %v3632 = vadd.f32 0.0, %v3631
    %3633 = vmatmul.f32.gmra.mxu0 %v3409
    %v3634 = vpop.f32.mrf.mxu0
    %v3635 = vadd.f32 0.0, %v3634
    %3636 = vmatmul.f32.gmra.mxu0 %v3412
    %v3637 = vpop.f32.mrf.mxu0
    %v3638 = vadd.f32 0.0, %v3637
    %3639 = vmatmul.f32.gmra.mxu0 %v3415
    %v3640 = vpop.f32.mrf.mxu0
    %v3641 = vadd.f32 0.0, %v3640
    %3642 = vmatmul.f32.gmra.mxu0 %v3418
    %v3643 = vpop.f32.mrf.mxu0
    %v3644 = vadd.f32 0.0, %v3643
    %3645 = vmatmul.f32.gmra.mxu0 %v3421
    %v3646 = vpop.f32.mrf.mxu0
    %v3647 = vadd.f32 0.0, %v3646
    %3648 = vmatmul.f32.gmra.mxu0 %v3424
    %v3649 = vpop.f32.mrf.mxu0
    %v3650 = vadd.f32 0.0, %v3649
    %3651 = vdwg.mxu0
    %v3652 = vmax.f32 %v3444, %v3557
    %3653 = vmax.xlane.f32.xlu0 %v3652
    %v3654 = vpop.xlane.xlu0 %3653
    %v3655 = vmax.f32 %v3447, %v3560
    %3656 = vmax.xlane.f32.xlu0 %v3655
    %v3657 = vpop.xlane.xlu0 %3656
    %v3658 = vmax.f32 %v3450, %v3563
    %3659 = vmax.xlane.f32.xlu0 %v3658
    %v3660 = vpop.xlane.xlu0 %3659
    %v3661 = vmax.f32 %v3453, %v3566
    %3662 = vmax.xlane.f32.xlu0 %v3661
    %v3663 = vpop.xlane.xlu0 %3662
    %v3664 = vmax.f32 %v3456, %v3569
    %3665 = vmax.xlane.f32.xlu0 %v3664
    %v3666 = vpop.xlane.xlu0 %3665
    %v3667 = vmax.f32 %v3459, %v3572
    %3668 = vmax.xlane.f32.xlu0 %v3667
    %v3669 = vpop.xlane.xlu0 %3668
    %v3670 = vmax.f32 %v3462, %v3575
    %3671 = vmax.xlane.f32.xlu0 %v3670
    %v3672 = vpop.xlane.xlu0 %3671
    %v3673 = vmax.f32 %v3465, %v3578
    %3674 = vmax.xlane.f32.xlu0 %v3673
    %v3675 = vpop.xlane.xlu0 %3674
    %v3676 = vmax.f32 %v3468, %v3581
    %3677 = vmax.xlane.f32.xlu0 %v3676
    %v3678 = vpop.xlane.xlu0 %3677
    %v3679 = vmax.f32 %v3471, %v3584
    %3680 = vmax.xlane.f32.xlu0 %v3679
    %v3681 = vpop.xlane.xlu0 %3680
    %v3682 = vmax.f32 %v3474, %v3587
    %3683 = vmax.xlane.f32.xlu0 %v3682
    %v3684 = vpop.xlane.xlu0 %3683
    %v3685 = vmax.f32 %v3477, %v3590
    %3686 = vmax.xlane.f32.xlu0 %v3685
    %v3687 = vpop.xlane.xlu0 %3686
    %v3688 = vmax.f32 %v3480, %v3593
    %3689 = vmax.xlane.f32.xlu0 %v3688
    %v3690 = vpop.xlane.xlu0 %3689
    %v3691 = vmax.f32 %v3483, %v3596
    %3692 = vmax.xlane.f32.xlu0 %v3691
    %v3693 = vpop.xlane.xlu0 %3692
    %v3694 = vmax.f32 %v3486, %v3599
    %3695 = vmax.xlane.f32.xlu0 %v3694
    %v3696 = vpop.xlane.xlu0 %3695
    %v3697 = vmax.f32 %v3489, %v3602
    %3698 = vmax.xlane.f32.xlu0 %v3697
    %v3699 = vpop.xlane.xlu0 %3698
    %v3700 = vmax.f32 %v3492, %v3605
    %3701 = vmax.xlane.f32.xlu0 %v3700
    %v3702 = vpop.xlane.xlu0 %3701
    %v3703 = vmax.f32 %v3495, %v3608
    %3704 = vmax.xlane.f32.xlu0 %v3703
    %v3705 = vpop.xlane.xlu0 %3704
    %v3706 = vmax.f32 %v3498, %v3611
    %3707 = vmax.xlane.f32.xlu0 %v3706
    %v3708 = vpop.xlane.xlu0 %3707
    %v3709 = vmax.f32 %v3501, %v3614
    %3710 = vmax.xlane.f32.xlu0 %v3709
    %v3711 = vpop.xlane.xlu0 %3710
    %v3712 = vmax.f32 %v3504, %v3617
    %3713 = vmax.xlane.f32.xlu0 %v3712
    %v3714 = vpop.xlane.xlu0 %3713
    %v3715 = vmax.f32 %v3507, %v3620
    %3716 = vmax.xlane.f32.xlu0 %v3715
    %v3717 = vpop.xlane.xlu0 %3716
    %v3718 = vmax.f32 %v3510, %v3623
    %3719 = vmax.xlane.f32.xlu0 %v3718
    %v3720 = vpop.xlane.xlu0 %3719
    %v3721 = vmax.f32 %v3513, %v3626
    %3722 = vmax.xlane.f32.xlu0 %v3721
    %v3723 = vpop.xlane.xlu0 %3722
    %v3724 = vmax.f32 %v3516, %v3629
    %3725 = vmax.xlane.f32.xlu0 %v3724
    %v3726 = vpop.xlane.xlu0 %3725
    %v3727 = vmax.f32 %v3519, %v3632
    %3728 = vmax.xlane.f32.xlu0 %v3727
    %v3729 = vpop.xlane.xlu0 %3728
    %v3730 = vmax.f32 %v3522, %v3635
    %3731 = vmax.xlane.f32.xlu0 %v3730
    %v3732 = vpop.xlane.xlu0 %3731
    %v3733 = vmax.f32 %v3525, %v3638
    %3734 = vmax.xlane.f32.xlu0 %v3733
    %v3735 = vpop.xlane.xlu0 %3734
    %v3736 = vmax.f32 %v3528, %v3641
    %3737 = vmax.xlane.f32.xlu0 %v3736
    %v3738 = vpop.xlane.xlu0 %3737
    %v3739 = vmax.f32 %v3531, %v3644
    %3740 = vmax.xlane.f32.xlu0 %v3739
    %v3741 = vpop.xlane.xlu0 %3740
    %v3742 = vmax.f32 %v3534, %v3647
    %3743 = vmax.xlane.f32.xlu0 %v3742
    %v3744 = vpop.xlane.xlu0 %3743
    %v3745 = vmax.f32 %v3537, %v3650
    %3746 = vmax.xlane.f32.xlu0 %v3745
    %v3747 = vpop.xlane.xlu0 %3746
    %v3748 = vsub.f32 %v3444, %v3654
    %v3749 = vsub.f32 %v3557, %v3654
    %v3750 = vsub.f32 %v3447, %v3657
    %v3751 = vsub.f32 %v3560, %v3657
    %v3752 = vsub.f32 %v3450, %v3660
    %v3753 = vsub.f32 %v3563, %v3660
    %v3754 = vsub.f32 %v3453, %v3663
    %v3755 = vsub.f32 %v3566, %v3663
    %v3756 = vsub.f32 %v3456, %v3666
    %v3757 = vsub.f32 %v3569, %v3666
    %v3758 = vsub.f32 %v3459, %v3669
    %v3759 = vsub.f32 %v3572, %v3669
    %v3760 = vsub.f32 %v3462, %v3672
    %v3761 = vsub.f32 %v3575, %v3672
    %v3762 = vsub.f32 %v3465, %v3675
    %v3763 = vsub.f32 %v3578, %v3675
    %v3764 = vsub.f32 %v3468, %v3678
    %v3765 = vsub.f32 %v3581, %v3678
    %v3766 = vsub.f32 %v3471, %v3681
    %v3767 = vsub.f32 %v3584, %v3681
    %v3768 = vsub.f32 %v3474, %v3684
    %v3769 = vsub.f32 %v3587, %v3684
    %v3770 = vsub.f32 %v3477, %v3687
    %v3771 = vsub.f32 %v3590, %v3687
    %v3772 = vsub.f32 %v3480, %v3690
    %v3773 = vsub.f32 %v3593, %v3690
    %v3774 = vsub.f32 %v3483, %v3693
    %v3775 = vsub.f32 %v3596, %v3693
    %v3776 = vsub.f32 %v3486, %v3696
    %v3777 = vsub.f32 %v3599, %v3696
    %v3778 = vsub.f32 %v3489, %v3699
    %v3779 = vsub.f32 %v3602, %v3699
    %v3780 = vsub.f32 %v3492, %v3702
    %v3781 = vsub.f32 %v3605, %v3702
    %v3782 = vsub.f32 %v3495, %v3705
    %v3783 = vsub.f32 %v3608, %v3705
    %v3784 = vsub.f32 %v3498, %v3708
    %v3785 = vsub.f32 %v3611, %v3708
    %v3786 = vsub.f32 %v3501, %v3711
    %v3787 = vsub.f32 %v3614, %v3711
    %v3788 = vsub.f32 %v3504, %v3714
    %v3789 = vsub.f32 %v3617, %v3714
    %v3790 = vsub.f32 %v3507, %v3717
    %v3791 = vsub.f32 %v3620, %v3717
    %v3792 = vsub.f32 %v3510, %v3720
    %v3793 = vsub.f32 %v3623, %v3720
    %v3794 = vsub.f32 %v3513, %v3723
    %v3795 = vsub.f32 %v3626, %v3723
    %v3796 = vsub.f32 %v3516, %v3726
    %v3797 = vsub.f32 %v3629, %v3726
    %v3798 = vsub.f32 %v3519, %v3729
    %v3799 = vsub.f32 %v3632, %v3729
    %v3800 = vsub.f32 %v3522, %v3732
    %v3801 = vsub.f32 %v3635, %v3732
    %v3802 = vsub.f32 %v3525, %v3735
    %v3803 = vsub.f32 %v3638, %v3735
    %v3804 = vsub.f32 %v3528, %v3738
    %v3805 = vsub.f32 %v3641, %v3738
    %v3806 = vsub.f32 %v3531, %v3741
    %v3807 = vsub.f32 %v3644, %v3741
    %v3808 = vsub.f32 %v3534, %v3744
    %v3809 = vsub.f32 %v3647, %v3744
    %v3810 = vsub.f32 %v3537, %v3747
    %v3811 = vsub.f32 %v3650, %v3747
    %v3812 = vmul.f32 %v3748, 1.442695
    %v3813 = vpow.pop %v3812
    %v3814 = vmul.f32 %v3749, 1.442695
    %v3815 = vpow.pop %v3814
    %v3816 = vmul.f32 %v3750, 1.442695
    %v3817 = vpow.pop %v3816
    %v3818 = vmul.f32 %v3751, 1.442695
    %v3819 = vpow.pop %v3818
    %v3820 = vmul.f32 %v3752, 1.442695
    %v3821 = vpow.pop %v3820
    %v3822 = vmul.f32 %v3753, 1.442695
    %v3823 = vpow.pop %v3822
    %v3824 = vmul.f32 %v3754, 1.442695
    %v3825 = vpow.pop %v3824
    %v3826 = vmul.f32 %v3755, 1.442695
    %v3827 = vpow.pop %v3826
    %v3828 = vmul.f32 %v3756, 1.442695
    %v3829 = vpow.pop %v3828
    %v3830 = vmul.f32 %v3757, 1.442695
    %v3831 = vpow.pop %v3830
    %v3832 = vmul.f32 %v3758, 1.442695
    %v3833 = vpow.pop %v3832
    %v3834 = vmul.f32 %v3759, 1.442695
    %v3835 = vpow.pop %v3834
    %v3836 = vmul.f32 %v3760, 1.442695
    %v3837 = vpow.pop %v3836
    %v3838 = vmul.f32 %v3761, 1.442695
    %v3839 = vpow.pop %v3838
    %v3840 = vmul.f32 %v3762, 1.442695
    %v3841 = vpow.pop %v3840
    %v3842 = vmul.f32 %v3763, 1.442695
    %v3843 = vpow.pop %v3842
    %v3844 = vmul.f32 %v3764, 1.442695
    %v3845 = vpow.pop %v3844
    %v3846 = vmul.f32 %v3765, 1.442695
    %v3847 = vpow.pop %v3846
    %v3848 = vmul.f32 %v3766, 1.442695
    %v3849 = vpow.pop %v3848
    %v3850 = vmul.f32 %v3767, 1.442695
    %v3851 = vpow.pop %v3850
    %v3852 = vmul.f32 %v3768, 1.442695
    %v3853 = vpow.pop %v3852
    %v3854 = vmul.f32 %v3769, 1.442695
    %v3855 = vpow.pop %v3854
    %v3856 = vmul.f32 %v3770, 1.442695
    %v3857 = vpow.pop %v3856
    %v3858 = vmul.f32 %v3771, 1.442695
    %v3859 = vpow.pop %v3858
    %v3860 = vmul.f32 %v3772, 1.442695
    %v3861 = vpow.pop %v3860
    %v3862 = vmul.f32 %v3773, 1.442695
    %v3863 = vpow.pop %v3862
    %v3864 = vmul.f32 %v3774, 1.442695
    %v3865 = vpow.pop %v3864
    %v3866 = vmul.f32 %v3775, 1.442695
    %v3867 = vpow.pop %v3866
    %v3868 = vmul.f32 %v3776, 1.442695
    %v3869 = vpow.pop %v3868
    %v3870 = vmul.f32 %v3777, 1.442695
    %v3871 = vpow.pop %v3870
    %v3872 = vmul.f32 %v3778, 1.442695
    %v3873 = vpow.pop %v3872
    %v3874 = vmul.f32 %v3779, 1.442695
    %v3875 = vpow.pop %v3874
    %v3876 = vmul.f32 %v3780, 1.442695
    %v3877 = vpow.pop %v3876
    %v3878 = vmul.f32 %v3781, 1.442695
    %v3879 = vpow.pop %v3878
    %v3880 = vmul.f32 %v3782, 1.442695
    %v3881 = vpow.pop %v3880
    %v3882 = vmul.f32 %v3783, 1.442695
    %v3883 = vpow.pop %v3882
    %v3884 = vmul.f32 %v3784, 1.442695
    %v3885 = vpow.pop %v3884
    %v3886 = vmul.f32 %v3785, 1.442695
    %v3887 = vpow.pop %v3886
    %v3888 = vmul.f32 %v3786, 1.442695
    %v3889 = vpow.pop %v3888
    %v3890 = vmul.f32 %v3787, 1.442695
    %v3891 = vpow.pop %v3890
    %v3892 = vmul.f32 %v3788, 1.442695
    %v3893 = vpow.pop %v3892
    %v3894 = vmul.f32 %v3789, 1.442695
    %v3895 = vpow.pop %v3894
    %v3896 = vmul.f32 %v3790, 1.442695
    %v3897 = vpow.pop %v3896
    %v3898 = vmul.f32 %v3791, 1.442695
    %v3899 = vpow.pop %v3898
    %v3900 = vmul.f32 %v3792, 1.442695
    %v3901 = vpow.pop %v3900
    %v3902 = vmul.f32 %v3793, 1.442695
    %v3903 = vpow.pop %v3902
    %v3904 = vmul.f32 %v3794, 1.442695
    %v3905 = vpow.pop %v3904
    %v3906 = vmul.f32 %v3795, 1.442695
    %v3907 = vpow.pop %v3906
    %v3908 = vmul.f32 %v3796, 1.442695
    %v3909 = vpow.pop %v3908
    %v3910 = vmul.f32 %v3797, 1.442695
    %v3911 = vpow.pop %v3910
    %v3912 = vmul.f32 %v3798, 1.442695
    %v3913 = vpow.pop %v3912
    %v3914 = vmul.f32 %v3799, 1.442695
    %v3915 = vpow.pop %v3914
    %v3916 = vmul.f32 %v3800, 1.442695
    %v3917 = vpow.pop %v3916
    %v3918 = vmul.f32 %v3801, 1.442695
    %v3919 = vpow.pop %v3918
    %v3920 = vmul.f32 %v3802, 1.442695
    %v3921 = vpow.pop %v3920
    %v3922 = vmul.f32 %v3803, 1.442695
    %v3923 = vpow.pop %v3922
    %v3924 = vmul.f32 %v3804, 1.442695
    %v3925 = vpow.pop %v3924
    %v3926 = vmul.f32 %v3805, 1.442695
    %v3927 = vpow.pop %v3926
    %v3928 = vmul.f32 %v3806, 1.442695
    %v3929 = vpow.pop %v3928
    %v3930 = vmul.f32 %v3807, 1.442695
    %v3931 = vpow.pop %v3930
    %v3932 = vmul.f32 %v3808, 1.442695
    %v3933 = vpow.pop %v3932
    %v3934 = vmul.f32 %v3809, 1.442695
    %v3935 = vpow.pop %v3934
    %v3936 = vmul.f32 %v3810, 1.442695
    %v3937 = vpow.pop %v3936
    %v3938 = vmul.f32 %v3811, 1.442695
    %v3939 = vpow.pop %v3938
    %v3940 = vadd.f32 %v3813, %v3815
    %3941 = vadd.xlane.f32.xlu0 %v3940
    %v3942 = vpop.xlane.xlu0 %3941
    %v3943 = vadd.f32 %v3817, %v3819
    %3944 = vadd.xlane.f32.xlu0 %v3943
    %v3945 = vpop.xlane.xlu0 %3944
    %v3946 = vadd.f32 %v3821, %v3823
    %3947 = vadd.xlane.f32.xlu0 %v3946
    %v3948 = vpop.xlane.xlu0 %3947
    %v3949 = vadd.f32 %v3825, %v3827
    %3950 = vadd.xlane.f32.xlu0 %v3949
    %v3951 = vpop.xlane.xlu0 %3950
    %v3952 = vadd.f32 %v3829, %v3831
    %3953 = vadd.xlane.f32.xlu0 %v3952
    %v3954 = vpop.xlane.xlu0 %3953
    %v3955 = vadd.f32 %v3833, %v3835
    %3956 = vadd.xlane.f32.xlu0 %v3955
    %v3957 = vpop.xlane.xlu0 %3956
    %v3958 = vadd.f32 %v3837, %v3839
    %3959 = vadd.xlane.f32.xlu0 %v3958
    %v3960 = vpop.xlane.xlu0 %3959
    %v3961 = vadd.f32 %v3841, %v3843
    %3962 = vadd.xlane.f32.xlu0 %v3961
    %v3963 = vpop.xlane.xlu0 %3962
    %v3964 = vadd.f32 %v3845, %v3847
    %3965 = vadd.xlane.f32.xlu0 %v3964
    %v3966 = vpop.xlane.xlu0 %3965
    %v3967 = vadd.f32 %v3849, %v3851
    %3968 = vadd.xlane.f32.xlu0 %v3967
    %v3969 = vpop.xlane.xlu0 %3968
    %v3970 = vadd.f32 %v3853, %v3855
    %3971 = vadd.xlane.f32.xlu0 %v3970
    %v3972 = vpop.xlane.xlu0 %3971
    %v3973 = vadd.f32 %v3857, %v3859
    %3974 = vadd.xlane.f32.xlu0 %v3973
    %v3975 = vpop.xlane.xlu0 %3974
    %v3976 = vadd.f32 %v3861, %v3863
    %3977 = vadd.xlane.f32.xlu0 %v3976
    %v3978 = vpop.xlane.xlu0 %3977
    %v3979 = vadd.f32 %v3865, %v3867
    %3980 = vadd.xlane.f32.xlu0 %v3979
    %v3981 = vpop.xlane.xlu0 %3980
    %v3982 = vadd.f32 %v3869, %v3871
    %3983 = vadd.xlane.f32.xlu0 %v3982
    %v3984 = vpop.xlane.xlu0 %3983
    %v3985 = vadd.f32 %v3873, %v3875
    %3986 = vadd.xlane.f32.xlu0 %v3985
    %v3987 = vpop.xlane.xlu0 %3986
    %v3988 = vadd.f32 %v3877, %v3879
    %3989 = vadd.xlane.f32.xlu0 %v3988
    %v3990 = vpop.xlane.xlu0 %3989
    %v3991 = vadd.f32 %v3881, %v3883
    %3992 = vadd.xlane.f32.xlu0 %v3991
    %v3993 = vpop.xlane.xlu0 %3992
    %v3994 = vadd.f32 %v3885, %v3887
    %3995 = vadd.xlane.f32.xlu0 %v3994
    %v3996 = vpop.xlane.xlu0 %3995
    %v3997 = vadd.f32 %v3889, %v3891
    %3998 = vadd.xlane.f32.xlu0 %v3997
    %v3999 = vpop.xlane.xlu0 %3998
    %v4000 = vadd.f32 %v3893, %v3895
    %4001 = vadd.xlane.f32.xlu0 %v4000
    %v4002 = vpop.xlane.xlu0 %4001
    %v4003 = vadd.f32 %v3897, %v3899
    %4004 = vadd.xlane.f32.xlu0 %v4003
    %v4005 = vpop.xlane.xlu0 %4004
    %v4006 = vadd.f32 %v3901, %v3903
    %4007 = vadd.xlane.f32.xlu0 %v4006
    %v4008 = vpop.xlane.xlu0 %4007
    %v4009 = vadd.f32 %v3905, %v3907
    %4010 = vadd.xlane.f32.xlu0 %v4009
    %v4011 = vpop.xlane.xlu0 %4010
    %v4012 = vadd.f32 %v3909, %v3911
    %4013 = vadd.xlane.f32.xlu0 %v4012
    %v4014 = vpop.xlane.xlu0 %4013
    %v4015 = vadd.f32 %v3913, %v3915
    %4016 = vadd.xlane.f32.xlu0 %v4015
    %v4017 = vpop.xlane.xlu0 %4016
    %v4018 = vadd.f32 %v3917, %v3919
    %4019 = vadd.xlane.f32.xlu0 %v4018
    %v4020 = vpop.xlane.xlu0 %4019
    %v4021 = vadd.f32 %v3921, %v3923
    %4022 = vadd.xlane.f32.xlu0 %v4021
    %v4023 = vpop.xlane.xlu0 %4022
    %v4024 = vadd.f32 %v3925, %v3927
    %4025 = vadd.xlane.f32.xlu0 %v4024
    %v4026 = vpop.xlane.xlu0 %4025
    %v4027 = vadd.f32 %v3929, %v3931
    %4028 = vadd.xlane.f32.xlu0 %v4027
    %v4029 = vpop.xlane.xlu0 %4028
    %v4030 = vadd.f32 %v3933, %v3935
    %4031 = vadd.xlane.f32.xlu0 %v4030
    %v4032 = vpop.xlane.xlu0 %4031
    %v4033 = vadd.f32 %v3937, %v3939
    %4034 = vadd.xlane.f32.xlu0 %v4033
    %v4035 = vpop.xlane.xlu0 %4034
    %v4036 = vrcp.pop %v3942
    %v4037 = vrcp.pop %v3945
    %v4038 = vrcp.pop %v3948
    %v4039 = vrcp.pop %v3951
    %v4040 = vrcp.pop %v3954
    %v4041 = vrcp.pop %v3957
    %v4042 = vrcp.pop %v3960
    %v4043 = vrcp.pop %v3963
    %v4044 = vrcp.pop %v3966
    %v4045 = vrcp.pop %v3969
    %v4046 = vrcp.pop %v3972
    %v4047 = vrcp.pop %v3975
    %v4048 = vrcp.pop %v3978
    %v4049 = vrcp.pop %v3981
    %v4050 = vrcp.pop %v3984
    %v4051 = vrcp.pop %v3987
    %v4052 = vrcp.pop %v3990
    %v4053 = vrcp.pop %v3993
    %v4054 = vrcp.pop %v3996
    %v4055 = vrcp.pop %v3999
    %v4056 = vrcp.pop %v4002
    %v4057 = vrcp.pop %v4005
    %v4058 = vrcp.pop %v4008
    %v4059 = vrcp.pop %v4011
    %v4060 = vrcp.pop %v4014
    %v4061 = vrcp.pop %v4017
    %v4062 = vrcp.pop %v4020
    %v4063 = vrcp.pop %v4023
    %v4064 = vrcp.pop %v4026
    %v4065 = vrcp.pop %v4029
    %v4066 = vrcp.pop %v4032
    %v4067 = vrcp.pop %v4035
    %v4068 = vmul.f32 %v3813, %v4036
    %v4069 = vmul.f32 %v3815, %v4036
    %v4070 = vmul.f32 %v3817, %v4037
    %v4071 = vmul.f32 %v3819, %v4037
    %v4072 = vmul.f32 %v3821, %v4038
    %v4073 = vmul.f32 %v3823, %v4038
    %v4074 = vmul.f32 %v3825, %v4039
    %v4075 = vmul.f32 %v3827, %v4039
    %v4076 = vmul.f32 %v3829, %v4040
    %v4077 = vmul.f32 %v3831, %v4040
    %v4078 = vmul.f32 %v3833, %v4041
    %v4079 = vmul.f32 %v3835, %v4041
    %v4080 = vmul.f32 %v3837, %v4042
    %v4081 = vmul.f32 %v3839, %v4042
    %v4082 = vmul.f32 %v3841, %v4043
    %v4083 = vmul.f32 %v3843, %v4043
    %v4084 = vmul.f32 %v3845, %v4044
    %v4085 = vmul.f32 %v3847, %v4044
    %v4086 = vmul.f32 %v3849, %v4045
    %v4087 = vmul.f32 %v3851, %v4045
    %v4088 = vmul.f32 %v3853, %v4046
    %v4089 = vmul.f32 %v3855, %v4046
    %v4090 = vmul.f32 %v3857, %v4047
    %v4091 = vmul.f32 %v3859, %v4047
    %v4092 = vmul.f32 %v3861, %v4048
    %v4093 = vmul.f32 %v3863, %v4048
    %v4094 = vmul.f32 %v3865, %v4049
    %v4095 = vmul.f32 %v3867, %v4049
    %v4096 = vmul.f32 %v3869, %v4050
    %v4097 = vmul.f32 %v3871, %v4050
    %v4098 = vmul.f32 %v3873, %v4051
    %v4099 = vmul.f32 %v3875, %v4051
    %v4100 = vmul.f32 %v3877, %v4052
    %v4101 = vmul.f32 %v3879, %v4052
    %v4102 = vmul.f32 %v3881, %v4053
    %v4103 = vmul.f32 %v3883, %v4053
    %v4104 = vmul.f32 %v3885, %v4054
    %v4105 = vmul.f32 %v3887, %v4054
    %v4106 = vmul.f32 %v3889, %v4055
    %v4107 = vmul.f32 %v3891, %v4055
    %v4108 = vmul.f32 %v3893, %v4056
    %v4109 = vmul.f32 %v3895, %v4056
    %v4110 = vmul.f32 %v3897, %v4057
    %v4111 = vmul.f32 %v3899, %v4057
    %v4112 = vmul.f32 %v3901, %v4058
    %v4113 = vmul.f32 %v3903, %v4058
    %v4114 = vmul.f32 %v3905, %v4059
    %v4115 = vmul.f32 %v3907, %v4059
    %v4116 = vmul.f32 %v3909, %v4060
    %v4117 = vmul.f32 %v3911, %v4060
    %v4118 = vmul.f32 %v3913, %v4061
    %v4119 = vmul.f32 %v3915, %v4061
    %v4120 = vmul.f32 %v3917, %v4062
    %v4121 = vmul.f32 %v3919, %v4062
    %v4122 = vmul.f32 %v3921, %v4063
    %v4123 = vmul.f32 %v3923, %v4063
    %v4124 = vmul.f32 %v3925, %v4064
    %v4125 = vmul.f32 %v3927, %v4064
    %v4126 = vmul.f32 %v3929, %v4065
    %v4127 = vmul.f32 %v3931, %v4065
    %v4128 = vmul.f32 %v3933, %v4066
    %v4129 = vmul.f32 %v3935, %v4066
    %v4130 = vmul.f32 %v3937, %v4067
    %v4131 = vmul.f32 %v3939, %v4067
    %4132 = vmatpush.xpose.msra.mxu0 %v4098
    %4133 = vmatpush.xpose.msra.mxu0 %v4096
    %4134 = vmatpush.xpose.msra.mxu0 %v4094
    %4135 = vmatpush.xpose.msra.mxu0 %v4092
    %4136 = vmatpush.xpose.msra.mxu0 %v4090
    %4137 = vmatpush.xpose.msra.mxu0 %v4088
    %4138 = vmatpush.xpose.msra.mxu0 %v4086
    %4139 = vmatpush.xpose.msra.mxu0 %v4084
    %4140 = vmatpush.xpose.msra.mxu0 %v4082
    %4141 = vmatpush.xpose.msra.mxu0 %v4080
    %4142 = vmatpush.xpose.msra.mxu0 %v4078
    %4143 = vmatpush.xpose.msra.mxu0 %v4076
    %4144 = vmatpush.xpose.msra.mxu0 %v4074
    %4145 = vmatpush.xpose.msra.mxu0 %v4072
    %4146 = vmatpush.xpose.msra.mxu0 %v4070
    %4147 = vmatpush.xpose.msra.mxu0 %v4068
    %4148 = vmatmul.f32.gmra.mxu0 %v372
    %v4149 = vpop.f32.mrf.mxu0
    %v4150 = vadd.f32 0.0, %v4149
    %4151 = vdwg.mxu0
    %4152 = vmatpush.xpose.msra.mxu0 %v4099
    %4153 = vmatpush.xpose.msra.mxu0 %v4097
    %4154 = vmatpush.xpose.msra.mxu0 %v4095
    %4155 = vmatpush.xpose.msra.mxu0 %v4093
    %4156 = vmatpush.xpose.msra.mxu0 %v4091
    %4157 = vmatpush.xpose.msra.mxu0 %v4089
    %4158 = vmatpush.xpose.msra.mxu0 %v4087
    %4159 = vmatpush.xpose.msra.mxu0 %v4085
    %4160 = vmatpush.xpose.msra.mxu0 %v4083
    %4161 = vmatpush.xpose.msra.mxu0 %v4081
    %4162 = vmatpush.xpose.msra.mxu0 %v4079
    %4163 = vmatpush.xpose.msra.mxu0 %v4077
    %4164 = vmatpush.xpose.msra.mxu0 %v4075
    %4165 = vmatpush.xpose.msra.mxu0 %v4073
    %4166 = vmatpush.xpose.msra.mxu0 %v4071
    %4167 = vmatpush.xpose.msra.mxu0 %v4069
    %4168 = vmatmul.f32.gmra.mxu0 %v425
    %v4169 = vpop.f32.mrf.mxu0
    %v4170 = vadd.f32 %v4150, %v4169
    %4171 = vdwg.mxu0
    %4172 = vmatpush.xpose.msra.mxu0 %v4130
    %4173 = vmatpush.xpose.msra.mxu0 %v4128
    %4174 = vmatpush.xpose.msra.mxu0 %v4126
    %4175 = vmatpush.xpose.msra.mxu0 %v4124
    %4176 = vmatpush.xpose.msra.mxu0 %v4122
    %4177 = vmatpush.xpose.msra.mxu0 %v4120
    %4178 = vmatpush.xpose.msra.mxu0 %v4118
    %4179 = vmatpush.xpose.msra.mxu0 %v4116
    %4180 = vmatpush.xpose.msra.mxu0 %v4114
    %4181 = vmatpush.xpose.msra.mxu0 %v4112
    %4182 = vmatpush.xpose.msra.mxu0 %v4110
    %4183 = vmatpush.xpose.msra.mxu0 %v4108
    %4184 = vmatpush.xpose.msra.mxu0 %v4106
    %4185 = vmatpush.xpose.msra.mxu0 %v4104
    %4186 = vmatpush.xpose.msra.mxu0 %v4102
    %4187 = vmatpush.xpose.msra.mxu0 %v4100
    %4188 = vmatmul.f32.gmra.mxu0 %v372
    %v4189 = vpop.f32.mrf.mxu0
    %v4190 = vadd.f32 0.0, %v4189
    %4191 = vdwg.mxu0
    %4192 = vmatpush.xpose.msra.mxu0 %v4131
    %4193 = vmatpush.xpose.msra.mxu0 %v4129
    %4194 = vmatpush.xpose.msra.mxu0 %v4127
    %4195 = vmatpush.xpose.msra.mxu0 %v4125
    %4196 = vmatpush.xpose.msra.mxu0 %v4123
    %4197 = vmatpush.xpose.msra.mxu0 %v4121
    %4198 = vmatpush.xpose.msra.mxu0 %v4119
    %4199 = vmatpush.xpose.msra.mxu0 %v4117
    %4200 = vmatpush.xpose.msra.mxu0 %v4115
    %4201 = vmatpush.xpose.msra.mxu0 %v4113
    %4202 = vmatpush.xpose.msra.mxu0 %v4111
    %4203 = vmatpush.xpose.msra.mxu0 %v4109
    %4204 = vmatpush.xpose.msra.mxu0 %v4107
    %4205 = vmatpush.xpose.msra.mxu0 %v4105
    %4206 = vmatpush.xpose.msra.mxu0 %v4103
    %4207 = vmatpush.xpose.msra.mxu0 %v4101
    %4208 = vmatmul.f32.gmra.mxu0 %v425
    %v4209 = vpop.f32.mrf.mxu0
    %v4210 = vadd.f32 %v4190, %v4209
    %4211 = vdwg.mxu0
    %4213 = vset.pattern.permute.xlu0 0
    %4214 = vperm.xlu0 %4213, %v63
    %v4215 = vpop.permute.xlu0 %4214
    %4218 = vset.pattern.permute.xlu0 0
    %4219 = vperm.xlu0 %4218, %v64
    %v4220 = vpop.permute.xlu0 %4219
    %4223 = vset.pattern.permute.xlu0 0
    %4224 = vperm.xlu0 %4223, %v65
    %v4225 = vpop.permute.xlu0 %4224
    %4228 = vset.pattern.permute.xlu0 0
    %4229 = vperm.xlu0 %4228, %v66
    %v4230 = vpop.permute.xlu0 %4229
    %v4233 = vsel %vm284, %v59, 0
    %v4236 = vsel %vm284, %v60, 0
    %v4239 = vsel %vm284, %v61, 0
    %v4242 = vsel %vm284, %v62, 0
    %4244 = vmatpush.msra.mxu0 0.0
    %4245 = vmatpush.msra.mxu0 0.0
    %4246 = vmatpush.msra.mxu0 0.0
    %4247 = vmatpush.msra.mxu0 0.0
    %4248 = vmatpush.msra.mxu0 0.0
    %4249 = vmatpush.msra.mxu0 0.0
    %4250 = vmatpush.msra.mxu0 0.0
    %4251 = vmatpush.msra.mxu0 0.0
    %4252 = vmatpush.msra.mxu0 0.0
    %4253 = vmatpush.msra.mxu0 0.0
    %4254 = vmatpush.msra.mxu0 0.0
    %4255 = vmatpush.msra.mxu0 0.0
    %4256 = vmatpush.msra.mxu0 %v4170
    %4257 = vmatpush.msra.mxu0 %v3224
    %4258 = vmatpush.msra.mxu0 %v2278
    %4259 = vmatpush.msra.mxu0 %v1332
    %4260 = vmatmul.f32.gmra.mxu0 %v4233
    %v4261 = vpop.f32.mrf.mxu0
    %v4262 = vadd.f32 %v4215, %v4261
    %4263 = vmatmul.f32.gmra.mxu0 %v4236
    %v4264 = vpop.f32.mrf.mxu0
    %v4265 = vadd.f32 %v4220, %v4264
    %4266 = vmatmul.f32.gmra.mxu0 %v4239
    %v4267 = vpop.f32.mrf.mxu0
    %v4268 = vadd.f32 %v4225, %v4267
    %4269 = vmatmul.f32.gmra.mxu0 %v4242
    %v4270 = vpop.f32.mrf.mxu0
    %v4271 = vadd.f32 %v4230, %v4270
    %4272 = vdwg.mxu0
    %4273 = vmatpush.msra.mxu0 0.0
    %4274 = vmatpush.msra.mxu0 0.0
    %4275 = vmatpush.msra.mxu0 0.0
    %4276 = vmatpush.msra.mxu0 0.0
    %4277 = vmatpush.msra.mxu0 0.0
    %4278 = vmatpush.msra.mxu0 0.0
    %4279 = vmatpush.msra.mxu0 0.0
    %4280 = vmatpush.msra.mxu0 0.0
    %4281 = vmatpush.msra.mxu0 0.0
    %4282 = vmatpush.msra.mxu0 0.0
    %4283 = vmatpush.msra.mxu0 0.0
    %4284 = vmatpush.msra.mxu0 0.0
    %4285 = vmatpush.msra.mxu0 %v4210
    %4286 = vmatpush.msra.mxu0 %v3264
    %4287 = vmatpush.msra.mxu0 %v2318
    %4288 = vmatpush.msra.mxu0 %v1372
    %4289 = vmatmul.f32.gmra.mxu0 %v4233
    %v4290 = vpop.f32.mrf.mxu0
    %v4291 = vadd.f32 %v4215, %v4290
    %4292 = vmatmul.f32.gmra.mxu0 %v4236
    %v4293 = vpop.f32.mrf.mxu0
    %v4294 = vadd.f32 %v4220, %v4293
    %4295 = vmatmul.f32.gmra.mxu0 %v4239
    %v4296 = vpop.f32.mrf.mxu0
    %v4297 = vadd.f32 %v4225, %v4296
    %4298 = vmatmul.f32.gmra.mxu0 %v4242
    %v4299 = vpop.f32.mrf.mxu0
    %v4300 = vadd.f32 %v4230, %v4299
    %4301 = vdwg.mxu0
    %v4302 = vadd.f32 %v4262, %v67
    %v4303 = vadd.f32 %v4291, %v68
    %v4304 = vadd.f32 %v4265, %v69
    %v4305 = vadd.f32 %v4294, %v70
    %v4306 = vadd.f32 %v4268, %v71
    %v4307 = vadd.f32 %v4297, %v72
    %v4308 = vadd.f32 %v4271, %v73
    %v4309 = vadd.f32 %v4300, %v74
    %4310 = vst [vmem:[#allocation2] sm:$0xff] %v4302
    %4311 = vst [vmem:[#allocation2 + $0x8] sm:$0xff] %v4303
    %4312 = vst [vmem:[#allocation2 + $0x10] sm:$0xff] %v4304
    %4313 = vst [vmem:[#allocation2 + $0x18] sm:$0xff] %v4305
    %4314 = vst [vmem:[#allocation2 + $0x20] sm:$0xff] %v4306
    %4315 = vst [vmem:[#allocation2 + $0x28] sm:$0xff] %v4307
    %4316 = vst [vmem:[#allocation2 + $0x30] sm:$0xff] %v4308
    %4317 = vst [vmem:[#allocation2 + $0x38] sm:$0xff] %v4309
    %s4318 = scalar_lea.vmem %s0, 64
    %v4319 = vld [vmem:[%s4318] sm:$0xff]
    %v4320 = vld [vmem:[%s4318 + $0x8] sm:$0xff]
    %v4321 = vld [vmem:[%s4318 + $0x10] sm:$0xff]
    %v4322 = vld [vmem:[%s4318 + $0x18] sm:$0xff]
    %v4323 = vld [vmem:[%s4318 + $0x20] sm:$0xff]
    %v4324 = vld [vmem:[%s4318 + $0x28] sm:$0xff]
    %v4325 = vld [vmem:[%s4318 + $0x30] sm:$0xff]
    %v4326 = vld [vmem:[%s4318 + $0x38] sm:$0xff]
    %v4327 = vadd.f32 %v4319, %v4321
    %v4328 = vadd.f32 %v4327, %v4323
    %v4329 = vadd.f32 %v4328, %v4325
    %v4330 = vrot.slane %v4329, 4
    %v4331 = vadd.f32 %v4329, %v4330
    %v4332 = vrot.slane %v4331, 2
    %v4333 = vadd.f32 %v4331, %v4332
    %v4334 = vrot.slane %v4333, 1
    %v4335 = vadd.f32 %v4333, %v4334
    %v4336 = vadd.f32 %v4320, %v4322
    %v4337 = vadd.f32 %v4336, %v4324
    %v4338 = vadd.f32 %v4337, %v4326
    %v4339 = vrot.slane %v4338, 4
    %v4340 = vadd.f32 %v4338, %v4339
    %v4341 = vrot.slane %v4340, 2
    %v4342 = vadd.f32 %v4340, %v4341
    %v4343 = vrot.slane %v4342, 1
    %v4344 = vadd.f32 %v4342, %v4343
    %v4345 = vmul.f32 %v4335, %v99
    %v4346 = vmul.f32 %v4344, %v99
    %v4347 = vsub.f32 %v4319, %v4345
    %v4348 = vsub.f32 %v4320, %v4346
    %v4349 = vsub.f32 %v4321, %v4345
    %v4350 = vsub.f32 %v4322, %v4346
    %v4351 = vsub.f32 %v4323, %v4345
    %v4352 = vsub.f32 %v4324, %v4346
    %v4353 = vsub.f32 %v4325, %v4345
    %v4354 = vsub.f32 %v4326, %v4346
    %v4355 = vmul.f32 %v4347, %v4347
    %v4356 = vmul.f32 %v4348, %v4348
    %v4357 = vmul.f32 %v4349, %v4349
    %v4358 = vmul.f32 %v4350, %v4350
    %v4359 = vmul.f32 %v4351, %v4351
    %v4360 = vmul.f32 %v4352, %v4352
    %v4361 = vmul.f32 %v4353, %v4353
    %v4362 = vmul.f32 %v4354, %v4354
    %v4363 = vadd.f32 %v4355, %v4357
    %v4364 = vadd.f32 %v4363, %v4359
    %v4365 = vadd.f32 %v4364, %v4361
    %v4366 = vrot.slane %v4365, 4
    %v4367 = vadd.f32 %v4365, %v4366
    %v4368 = vrot.slane %v4367, 2
    %v4369 = vadd.f32 %v4367, %v4368
    %v4370 = vrot.slane %v4369, 1
    %v4371 = vadd.f32 %v4369, %v4370
    %v4372 = vadd.f32 %v4356, %v4358
    %v4373 = vadd.f32 %v4372, %v4360
    %v4374 = vadd.f32 %v4373, %v4362
    %v4375 = vrot.slane %v4374, 4
    %v4376 = vadd.f32 %v4374, %v4375
    %v4377 = vrot.slane %v4376, 2
    %v4378 = vadd.f32 %v4376, %v4377
    %v4379 = vrot.slane %v4378, 1
    %v4380 = vadd.f32 %v4378, %v4379
    %v4381 = vmul.f32 %v4371, %v99
    %v4382 = vmul.f32 %v4380, %v99
    %v4383 = vadd.f32 %v4381, 1e-05
    %v4384 = vadd.f32 %v4382, 1e-05
    %v4385 = vrsqrt.pop %v4383
    %v4386 = vmul.f32 %v4385, %v4383
    %v4387 = vmul.f32 %v4386, %v4385
    %v4388 = vmul.f32 0.5, %v4387
    %v4389 = vsub.f32 1.5, %v4388
    %v4390 = vmul.f32 %v4385, %v4389
    %vm4391 = vweird.f32 %v4383
    %vm4392 = vweird.f32 %v4385
    %vm4393 = vmor %vm4391, %vm4392
    %v4394 = vsel %vm4393, %v4385, %v4390
    %v4395 = vrsqrt.pop %v4384
    %v4396 = vmul.f32 %v4395, %v4384
    %v4397 = vmul.f32 %v4396, %v4395
    %v4398 = vmul.f32 0.5, %v4397
    %v4399 = vsub.f32 1.5, %v4398
    %v4400 = vmul.f32 %v4395, %v4399
    %vm4401 = vweird.f32 %v4384
    %vm4402 = vweird.f32 %v4395
    %vm4403 = vmor %vm4401, %vm4402
    %v4404 = vsel %vm4403, %v4395, %v4400
    %v4405 = vmul.f32 %v4347, %v4394
    %v4406 = vmul.f32 %v4348, %v4404
    %v4407 = vmul.f32 %v4349, %v4394
    %v4408 = vmul.f32 %v4350, %v4404
    %v4409 = vmul.f32 %v4351, %v4394
    %v4410 = vmul.f32 %v4352, %v4404
    %v4411 = vmul.f32 %v4353, %v4394
    %v4412 = vmul.f32 %v4354, %v4404
    %v4413 = vmul.f32 %v4405, %v171
    %v4414 = vmul.f32 %v4406, %v171
    %v4415 = vmul.f32 %v4407, %v176
    %v4416 = vmul.f32 %v4408, %v176
    %v4417 = vmul.f32 %v4409, %v181
    %v4418 = vmul.f32 %v4410, %v181
    %v4419 = vmul.f32 %v4411, %v186
    %v4420 = vmul.f32 %v4412, %v186
    %v4421 = vadd.f32 %v4413, %v199
    %v4422 = vadd.f32 %v4414, %v199
    %v4423 = vadd.f32 %v4415, %v204
    %v4424 = vadd.f32 %v4416, %v204
    %v4425 = vadd.f32 %v4417, %v209
    %v4426 = vadd.f32 %v4418, %v209
    %v4427 = vadd.f32 %v4419, %v214
    %v4428 = vadd.f32 %v4420, %v214
    %4429 = vmatpush.msra.mxu0 0.0
    %4430 = vmatpush.msra.mxu0 0.0
    %4431 = vmatpush.msra.mxu0 0.0
    %4432 = vmatpush.msra.mxu0 0.0
    %4433 = vmatpush.msra.mxu0 0.0
    %4434 = vmatpush.msra.mxu0 0.0
    %4435 = vmatpush.msra.mxu0 0.0
    %4436 = vmatpush.msra.mxu0 0.0
    %4437 = vmatpush.msra.mxu0 0.0
    %4438 = vmatpush.msra.mxu0 0.0
    %4439 = vmatpush.msra.mxu0 0.0
    %4440 = vmatpush.msra.mxu0 0.0
    %4441 = vmatpush.msra.mxu0 %v4427
    %4442 = vmatpush.msra.mxu0 %v4425
    %4443 = vmatpush.msra.mxu0 %v4423
    %4444 = vmatpush.msra.mxu0 %v4421
    %4445 = vmatmul.f32.gmra.mxu0 %v286
    %v4446 = vpop.f32.mrf.mxu0
    %v4447 = vadd.f32 %v227, %v4446
    %4448 = vmatmul.f32.gmra.mxu0 %v289
    %v4449 = vpop.f32.mrf.mxu0
    %v4450 = vadd.f32 %v232, %v4449
    %4451 = vmatmul.f32.gmra.mxu0 %v292
    %v4452 = vpop.f32.mrf.mxu0
    %v4453 = vadd.f32 %v237, %v4452
    %4454 = vmatmul.f32.gmra.mxu0 %v295
    %v4455 = vpop.f32.mrf.mxu0
    %v4456 = vadd.f32 %v242, %v4455
    %4457 = vmatmul.f32.gmra.mxu0 %v298
    %v4458 = vpop.f32.mrf.mxu0
    %v4459 = vadd.f32 %v247, %v4458
    %4460 = vmatmul.f32.gmra.mxu0 %v301
    %v4461 = vpop.f32.mrf.mxu0
    %v4462 = vadd.f32 %v252, %v4461
    %4463 = vmatmul.f32.gmra.mxu0 %v304
    %v4464 = vpop.f32.mrf.mxu0
    %v4465 = vadd.f32 %v257, %v4464
    %4466 = vmatmul.f32.gmra.mxu0 %v307
    %v4467 = vpop.f32.mrf.mxu0
    %v4468 = vadd.f32 %v262, %v4467
    %4469 = vmatmul.f32.gmra.mxu0 %v310
    %v4470 = vpop.f32.mrf.mxu0
    %v4471 = vadd.f32 %v267, %v4470
    %4472 = vmatmul.f32.gmra.mxu0 %v313
    %v4473 = vpop.f32.mrf.mxu0
    %v4474 = vadd.f32 %v272, %v4473
    %4475 = vmatmul.f32.gmra.mxu0 %v316
    %v4476 = vpop.f32.mrf.mxu0
    %v4477 = vadd.f32 %v277, %v4476
    %4478 = vmatmul.f32.gmra.mxu0 %v319
    %v4479 = vpop.f32.mrf.mxu0
    %v4480 = vadd.f32 %v282, %v4479
    %4481 = vdwg.mxu0
    %4482 = vmatpush.msra.mxu0 0.0
    %4483 = vmatpush.msra.mxu0 0.0
    %4484 = vmatpush.msra.mxu0 0.0
    %4485 = vmatpush.msra.mxu0 0.0
    %4486 = vmatpush.msra.mxu0 0.0
    %4487 = vmatpush.msra.mxu0 0.0
    %4488 = vmatpush.msra.mxu0 0.0
    %4489 = vmatpush.msra.mxu0 0.0
    %4490 = vmatpush.msra.mxu0 0.0
    %4491 = vmatpush.msra.mxu0 0.0
    %4492 = vmatpush.msra.mxu0 0.0
    %4493 = vmatpush.msra.mxu0 0.0
    %4494 = vmatpush.msra.mxu0 %v4428
    %4495 = vmatpush.msra.mxu0 %v4426
    %4496 = vmatpush.msra.mxu0 %v4424
    %4497 = vmatpush.msra.mxu0 %v4422
    %4498 = vmatmul.f32.gmra.mxu0 %v286
    %v4499 = vpop.f32.mrf.mxu0
    %v4500 = vadd.f32 %v227, %v4499
    %4501 = vmatmul.f32.gmra.mxu0 %v289
    %v4502 = vpop.f32.mrf.mxu0
    %v4503 = vadd.f32 %v232, %v4502
    %4504 = vmatmul.f32.gmra.mxu0 %v292
    %v4505 = vpop.f32.mrf.mxu0
    %v4506 = vadd.f32 %v237, %v4505
    %4507 = vmatmul.f32.gmra.mxu0 %v295
    %v4508 = vpop.f32.mrf.mxu0
    %v4509 = vadd.f32 %v242, %v4508
    %4510 = vmatmul.f32.gmra.mxu0 %v298
    %v4511 = vpop.f32.mrf.mxu0
    %v4512 = vadd.f32 %v247, %v4511
    %4513 = vmatmul.f32.gmra.mxu0 %v301
    %v4514 = vpop.f32.mrf.mxu0
    %v4515 = vadd.f32 %v252, %v4514
    %4516 = vmatmul.f32.gmra.mxu0 %v304
    %v4517 = vpop.f32.mrf.mxu0
    %v4518 = vadd.f32 %v257, %v4517
    %4519 = vmatmul.f32.gmra.mxu0 %v307
    %v4520 = vpop.f32.mrf.mxu0
    %v4521 = vadd.f32 %v262, %v4520
    %4522 = vmatmul.f32.gmra.mxu0 %v310
    %v4523 = vpop.f32.mrf.mxu0
    %v4524 = vadd.f32 %v267, %v4523
    %4525 = vmatmul.f32.gmra.mxu0 %v313
    %v4526 = vpop.f32.mrf.mxu0
    %v4527 = vadd.f32 %v272, %v4526
    %4528 = vmatmul.f32.gmra.mxu0 %v316
    %v4529 = vpop.f32.mrf.mxu0
    %v4530 = vadd.f32 %v277, %v4529
    %4531 = vmatmul.f32.gmra.mxu0 %v319
    %v4532 = vpop.f32.mrf.mxu0
    %v4533 = vadd.f32 %v282, %v4532
    %4534 = vdwg.mxu0
    %4535 = vxpose.xlu0.b32.start [1/16] %v4447, 128
    %4536 = vxpose.xlu0.b32.cont [2/16] 0.0, 128
    %4537 = vxpose.xlu0.b32.cont [3/16] 0.0, 128
    %4538 = vxpose.xlu0.b32.cont [4/16] 0.0, 128
    %4539 = vxpose.xlu0.b32.cont [5/16] 0.0, 128
    %4540 = vxpose.xlu0.b32.cont [6/16] 0.0, 128
    %4541 = vxpose.xlu0.b32.cont [7/16] 0.0, 128
    %4542 = vxpose.xlu0.b32.cont [8/16] 0.0, 128
    %4543 = vxpose.xlu0.b32.cont [9/16] 0.0, 128
    %4544 = vxpose.xlu0.b32.cont [10/16] 0.0, 128
    %4545 = vxpose.xlu0.b32.cont [11/16] 0.0, 128
    %4546 = vxpose.xlu0.b32.cont [12/16] 0.0, 128
    %4547 = vxpose.xlu0.b32.cont [13/16] 0.0, 128
    %4548 = vxpose.xlu0.b32.cont [14/16] 0.0, 128
    %4549 = vxpose.xlu0.b32.cont [15/16] 0.0, 128
    %4550 = vxpose.xlu0.b32.end [16/16] 0.0, 128
    %v4551 = vpop.trf.xlu0
    %v4552 = vpop.trf.xlu0
    %v4553 = vpop.trf.xlu0
    %v4554 = vpop.trf.xlu0
    %v4555 = vpop.trf.xlu0
    %v4556 = vpop.trf.xlu0
    %v4557 = vpop.trf.xlu0
    %v4558 = vpop.trf.xlu0
    %v4559 = vpop.trf.xlu0
    %v4560 = vpop.trf.xlu0
    %v4561 = vpop.trf.xlu0
    %v4562 = vpop.trf.xlu0
    %v4563 = vpop.trf.xlu0
    %v4564 = vpop.trf.xlu0
    %v4565 = vpop.trf.xlu0
    %v4566 = vpop.trf.xlu0
    %4567 = vxpose.xlu0.b32.start [1/16] %v4500, 128
    %4568 = vxpose.xlu0.b32.cont [2/16] 0.0, 128
    %4569 = vxpose.xlu0.b32.cont [3/16] 0.0, 128
    %4570 = vxpose.xlu0.b32.cont [4/16] 0.0, 128
    %4571 = vxpose.xlu0.b32.cont [5/16] 0.0, 128
    %4572 = vxpose.xlu0.b32.cont [6/16] 0.0, 128
    %4573 = vxpose.xlu0.b32.cont [7/16] 0.0, 128
    %4574 = vxpose.xlu0.b32.cont [8/16] 0.0, 128
    %4575 = vxpose.xlu0.b32.cont [9/16] 0.0, 128
    %4576 = vxpose.xlu0.b32.cont [10/16] 0.0, 128
    %4577 = vxpose.xlu0.b32.cont [11/16] 0.0, 128
    %4578 = vxpose.xlu0.b32.cont [12/16] 0.0, 128
    %4579 = vxpose.xlu0.b32.cont [13/16] 0.0, 128
    %4580 = vxpose.xlu0.b32.cont [14/16] 0.0, 128
    %4581 = vxpose.xlu0.b32.cont [15/16] 0.0, 128
    %4582 = vxpose.xlu0.b32.end [16/16] 0.0, 128
    %v4583 = vpop.trf.xlu0
    %v4584 = vpop.trf.xlu0
    %v4585 = vpop.trf.xlu0
    %v4586 = vpop.trf.xlu0
    %v4587 = vpop.trf.xlu0
    %v4588 = vpop.trf.xlu0
    %v4589 = vpop.trf.xlu0
    %v4590 = vpop.trf.xlu0
    %v4591 = vpop.trf.xlu0
    %v4592 = vpop.trf.xlu0
    %v4593 = vpop.trf.xlu0
    %v4594 = vpop.trf.xlu0
    %v4595 = vpop.trf.xlu0
    %v4596 = vpop.trf.xlu0
    %v4597 = vpop.trf.xlu0
    %v4598 = vpop.trf.xlu0
    %v4600 = vsel %vm491, %v4551, 0
    %v4603 = vsel %vm491, %v4552, 0
    %v4606 = vsel %vm491, %v4553, 0
    %v4609 = vsel %vm491, %v4554, 0
    %v4612 = vsel %vm491, %v4555, 0
    %v4615 = vsel %vm491, %v4556, 0
    %v4618 = vsel %vm491, %v4557, 0
    %v4621 = vsel %vm491, %v4558, 0
    %v4624 = vsel %vm491, %v4559, 0
    %v4627 = vsel %vm491, %v4560, 0
    %v4630 = vsel %vm491, %v4561, 0
    %v4633 = vsel %vm491, %v4562, 0
    %v4636 = vsel %vm491, %v4563, 0
    %v4639 = vsel %vm491, %v4564, 0
    %v4642 = vsel %vm491, %v4565, 0
    %v4645 = vsel %vm491, %v4566, 0
    %v4648 = vsel %vm491, %v4583, 0
    %v4651 = vsel %vm491, %v4584, 0
    %v4654 = vsel %vm491, %v4585, 0
    %v4657 = vsel %vm491, %v4586, 0
    %v4660 = vsel %vm491, %v4587, 0
    %v4663 = vsel %vm491, %v4588, 0
    %v4666 = vsel %vm491, %v4589, 0
    %v4669 = vsel %vm491, %v4590, 0
    %v4672 = vsel %vm491, %v4591, 0
    %v4675 = vsel %vm491, %v4592, 0
    %v4678 = vsel %vm491, %v4593, 0
    %v4681 = vsel %vm491, %v4594, 0
    %v4684 = vsel %vm491, %v4595, 0
    %v4687 = vsel %vm491, %v4596, 0
    %v4690 = vsel %vm491, %v4597, 0
    %v4693 = vsel %vm491, %v4598, 0
    %4695 = vmatpush.msra.mxu0 0.0
    %4696 = vmatpush.msra.mxu0 0.0
    %4697 = vmatpush.msra.mxu0 0.0
    %4698 = vmatpush.msra.mxu0 0.0
    %4699 = vmatpush.msra.mxu0 0.0
    %4700 = vmatpush.msra.mxu0 0.0
    %4701 = vmatpush.msra.mxu0 0.0
    %4702 = vmatpush.msra.mxu0 0.0
    %4703 = vmatpush.msra.mxu0 0.0
    %4704 = vmatpush.msra.mxu0 0.0
    %4705 = vmatpush.msra.mxu0 0.0
    %4706 = vmatpush.msra.mxu0 0.0
    %4707 = vmatpush.msra.mxu0 0.0
    %4708 = vmatpush.msra.mxu0 0.0
    %4709 = vmatpush.msra.mxu0 0.0
    %4710 = vmatpush.msra.mxu0 %v4459
    %4711 = vmatmul.f32.gmra.mxu0 %v4600
    %v4712 = vpop.f32.mrf.mxu0
    %v4713 = vadd.f32 0.0, %v4712
    %4714 = vmatmul.f32.gmra.mxu0 %v4603
    %v4715 = vpop.f32.mrf.mxu0
    %v4716 = vadd.f32 0.0, %v4715
    %4717 = vmatmul.f32.gmra.mxu0 %v4606
    %v4718 = vpop.f32.mrf.mxu0
    %v4719 = vadd.f32 0.0, %v4718
    %4720 = vmatmul.f32.gmra.mxu0 %v4609
    %v4721 = vpop.f32.mrf.mxu0
    %v4722 = vadd.f32 0.0, %v4721
    %4723 = vmatmul.f32.gmra.mxu0 %v4612
    %v4724 = vpop.f32.mrf.mxu0
    %v4725 = vadd.f32 0.0, %v4724
    %4726 = vmatmul.f32.gmra.mxu0 %v4615
    %v4727 = vpop.f32.mrf.mxu0
    %v4728 = vadd.f32 0.0, %v4727
    %4729 = vmatmul.f32.gmra.mxu0 %v4618
    %v4730 = vpop.f32.mrf.mxu0
    %v4731 = vadd.f32 0.0, %v4730
    %4732 = vmatmul.f32.gmra.mxu0 %v4621
    %v4733 = vpop.f32.mrf.mxu0
    %v4734 = vadd.f32 0.0, %v4733
    %4735 = vmatmul.f32.gmra.mxu0 %v4624
    %v4736 = vpop.f32.mrf.mxu0
    %v4737 = vadd.f32 0.0, %v4736
    %4738 = vmatmul.f32.gmra.mxu0 %v4627
    %v4739 = vpop.f32.mrf.mxu0
    %v4740 = vadd.f32 0.0, %v4739
    %4741 = vmatmul.f32.gmra.mxu0 %v4630
    %v4742 = vpop.f32.mrf.mxu0
    %v4743 = vadd.f32 0.0, %v4742
    %4744 = vmatmul.f32.gmra.mxu0 %v4633
    %v4745 = vpop.f32.mrf.mxu0
    %v4746 = vadd.f32 0.0, %v4745
    %4747 = vmatmul.f32.gmra.mxu0 %v4636
    %v4748 = vpop.f32.mrf.mxu0
    %v4749 = vadd.f32 0.0, %v4748
    %4750 = vmatmul.f32.gmra.mxu0 %v4639
    %v4751 = vpop.f32.mrf.mxu0
    %v4752 = vadd.f32 0.0, %v4751
    %4753 = vmatmul.f32.gmra.mxu0 %v4642
    %v4754 = vpop.f32.mrf.mxu0
    %v4755 = vadd.f32 0.0, %v4754
    %4756 = vmatmul.f32.gmra.mxu0 %v4645
    %v4757 = vpop.f32.mrf.mxu0
    %v4758 = vadd.f32 0.0, %v4757
    %4759 = vmatmul.f32.gmra.mxu0 %v4648
    %v4760 = vpop.f32.mrf.mxu0
    %v4761 = vadd.f32 0.0, %v4760
    %4762 = vmatmul.f32.gmra.mxu0 %v4651
    %v4763 = vpop.f32.mrf.mxu0
    %v4764 = vadd.f32 0.0, %v4763
    %4765 = vmatmul.f32.gmra.mxu0 %v4654
    %v4766 = vpop.f32.mrf.mxu0
    %v4767 = vadd.f32 0.0, %v4766
    %4768 = vmatmul.f32.gmra.mxu0 %v4657
    %v4769 = vpop.f32.mrf.mxu0
    %v4770 = vadd.f32 0.0, %v4769
    %4771 = vmatmul.f32.gmra.mxu0 %v4660
    %v4772 = vpop.f32.mrf.mxu0
    %v4773 = vadd.f32 0.0, %v4772
    %4774 = vmatmul.f32.gmra.mxu0 %v4663
    %v4775 = vpop.f32.mrf.mxu0
    %v4776 = vadd.f32 0.0, %v4775
    %4777 = vmatmul.f32.gmra.mxu0 %v4666
    %v4778 = vpop.f32.mrf.mxu0
    %v4779 = vadd.f32 0.0, %v4778
    %4780 = vmatmul.f32.gmra.mxu0 %v4669
    %v4781 = vpop.f32.mrf.mxu0
    %v4782 = vadd.f32 0.0, %v4781
    %4783 = vmatmul.f32.gmra.mxu0 %v4672
    %v4784 = vpop.f32.mrf.mxu0
    %v4785 = vadd.f32 0.0, %v4784
    %4786 = vmatmul.f32.gmra.mxu0 %v4675
    %v4787 = vpop.f32.mrf.mxu0
    %v4788 = vadd.f32 0.0, %v4787
    %4789 = vmatmul.f32.gmra.mxu0 %v4678
    %v4790 = vpop.f32.mrf.mxu0
    %v4791 = vadd.f32 0.0, %v4790
    %4792 = vmatmul.f32.gmra.mxu0 %v4681
    %v4793 = vpop.f32.mrf.mxu0
    %v4794 = vadd.f32 0.0, %v4793
    %4795 = vmatmul.f32.gmra.mxu0 %v4684
    %v4796 = vpop.f32.mrf.mxu0
    %v4797 = vadd.f32 0.0, %v4796
    %4798 = vmatmul.f32.gmra.mxu0 %v4687
    %v4799 = vpop.f32.mrf.mxu0
    %v4800 = vadd.f32 0.0, %v4799
    %4801 = vmatmul.f32.gmra.mxu0 %v4690
    %v4802 = vpop.f32.mrf.mxu0
    %v4803 = vadd.f32 0.0, %v4802
    %4804 = vmatmul.f32.gmra.mxu0 %v4693
    %v4805 = vpop.f32.mrf.mxu0
    %v4806 = vadd.f32 0.0, %v4805
    %4807 = vdwg.mxu0
    %4808 = vmatpush.msra.mxu0 0.0
    %4809 = vmatpush.msra.mxu0 0.0
    %4810 = vmatpush.msra.mxu0 0.0
    %4811 = vmatpush.msra.mxu0 0.0
    %4812 = vmatpush.msra.mxu0 0.0
    %4813 = vmatpush.msra.mxu0 0.0
    %4814 = vmatpush.msra.mxu0 0.0
    %4815 = vmatpush.msra.mxu0 0.0
    %4816 = vmatpush.msra.mxu0 0.0
    %4817 = vmatpush.msra.mxu0 0.0
    %4818 = vmatpush.msra.mxu0 0.0
    %4819 = vmatpush.msra.mxu0 0.0
    %4820 = vmatpush.msra.mxu0 0.0
    %4821 = vmatpush.msra.mxu0 0.0
    %4822 = vmatpush.msra.mxu0 0.0
    %4823 = vmatpush.msra.mxu0 %v4512
    %4824 = vmatmul.f32.gmra.mxu0 %v4600
    %v4825 = vpop.f32.mrf.mxu0
    %v4826 = vadd.f32 0.0, %v4825
    %4827 = vmatmul.f32.gmra.mxu0 %v4603
    %v4828 = vpop.f32.mrf.mxu0
    %v4829 = vadd.f32 0.0, %v4828
    %4830 = vmatmul.f32.gmra.mxu0 %v4606
    %v4831 = vpop.f32.mrf.mxu0
    %v4832 = vadd.f32 0.0, %v4831
    %4833 = vmatmul.f32.gmra.mxu0 %v4609
    %v4834 = vpop.f32.mrf.mxu0
    %v4835 = vadd.f32 0.0, %v4834
    %4836 = vmatmul.f32.gmra.mxu0 %v4612
    %v4837 = vpop.f32.mrf.mxu0
    %v4838 = vadd.f32 0.0, %v4837
    %4839 = vmatmul.f32.gmra.mxu0 %v4615
    %v4840 = vpop.f32.mrf.mxu0
    %v4841 = vadd.f32 0.0, %v4840
    %4842 = vmatmul.f32.gmra.mxu0 %v4618
    %v4843 = vpop.f32.mrf.mxu0
    %v4844 = vadd.f32 0.0, %v4843
    %4845 = vmatmul.f32.gmra.mxu0 %v4621
    %v4846 = vpop.f32.mrf.mxu0
    %v4847 = vadd.f32 0.0, %v4846
    %4848 = vmatmul.f32.gmra.mxu0 %v4624
    %v4849 = vpop.f32.mrf.mxu0
    %v4850 = vadd.f32 0.0, %v4849
    %4851 = vmatmul.f32.gmra.mxu0 %v4627
    %v4852 = vpop.f32.mrf.mxu0
    %v4853 = vadd.f32 0.0, %v4852
    %4854 = vmatmul.f32.gmra.mxu0 %v4630
    %v4855 = vpop.f32.mrf.mxu0
    %v4856 = vadd.f32 0.0, %v4855
    %4857 = vmatmul.f32.gmra.mxu0 %v4633
    %v4858 = vpop.f32.mrf.mxu0
    %v4859 = vadd.f32 0.0, %v4858
    %4860 = vmatmul.f32.gmra.mxu0 %v4636
    %v4861 = vpop.f32.mrf.mxu0
    %v4862 = vadd.f32 0.0, %v4861
    %4863 = vmatmul.f32.gmra.mxu0 %v4639
    %v4864 = vpop.f32.mrf.mxu0
    %v4865 = vadd.f32 0.0, %v4864
    %4866 = vmatmul.f32.gmra.mxu0 %v4642
    %v4867 = vpop.f32.mrf.mxu0
    %v4868 = vadd.f32 0.0, %v4867
    %4869 = vmatmul.f32.gmra.mxu0 %v4645
    %v4870 = vpop.f32.mrf.mxu0
    %v4871 = vadd.f32 0.0, %v4870
    %4872 = vmatmul.f32.gmra.mxu0 %v4648
    %v4873 = vpop.f32.mrf.mxu0
    %v4874 = vadd.f32 0.0, %v4873
    %4875 = vmatmul.f32.gmra.mxu0 %v4651
    %v4876 = vpop.f32.mrf.mxu0
    %v4877 = vadd.f32 0.0, %v4876
    %4878 = vmatmul.f32.gmra.mxu0 %v4654
    %v4879 = vpop.f32.mrf.mxu0
    %v4880 = vadd.f32 0.0, %v4879
    %4881 = vmatmul.f32.gmra.mxu0 %v4657
    %v4882 = vpop.f32.mrf.mxu0
    %v4883 = vadd.f32 0.0, %v4882
    %4884 = vmatmul.f32.gmra.mxu0 %v4660
    %v4885 = vpop.f32.mrf.mxu0
    %v4886 = vadd.f32 0.0, %v4885
    %4887 = vmatmul.f32.gmra.mxu0 %v4663
    %v4888 = vpop.f32.mrf.mxu0
    %v4889 = vadd.f32 0.0, %v4888
    %4890 = vmatmul.f32.gmra.mxu0 %v4666
    %v4891 = vpop.f32.mrf.mxu0
    %v4892 = vadd.f32 0.0, %v4891
    %4893 = vmatmul.f32.gmra.mxu0 %v4669
    %v4894 = vpop.f32.mrf.mxu0
    %v4895 = vadd.f32 0.0, %v4894
    %4896 = vmatmul.f32.gmra.mxu0 %v4672
    %v4897 = vpop.f32.mrf.mxu0
    %v4898 = vadd.f32 0.0, %v4897
    %4899 = vmatmul.f32.gmra.mxu0 %v4675
    %v4900 = vpop.f32.mrf.mxu0
    %v4901 = vadd.f32 0.0, %v4900
    %4902 = vmatmul.f32.gmra.mxu0 %v4678
    %v4903 = vpop.f32.mrf.mxu0
    %v4904 = vadd.f32 0.0, %v4903
    %4905 = vmatmul.f32.gmra.mxu0 %v4681
    %v4906 = vpop.f32.mrf.mxu0
    %v4907 = vadd.f32 0.0, %v4906
    %4908 = vmatmul.f32.gmra.mxu0 %v4684
    %v4909 = vpop.f32.mrf.mxu0
    %v4910 = vadd.f32 0.0, %v4909
    %4911 = vmatmul.f32.gmra.mxu0 %v4687
    %v4912 = vpop.f32.mrf.mxu0
    %v4913 = vadd.f32 0.0, %v4912
    %4914 = vmatmul.f32.gmra.mxu0 %v4690
    %v4915 = vpop.f32.mrf.mxu0
    %v4916 = vadd.f32 0.0, %v4915
    %4917 = vmatmul.f32.gmra.mxu0 %v4693
    %v4918 = vpop.f32.mrf.mxu0
    %v4919 = vadd.f32 0.0, %v4918
    %4920 = vdwg.mxu0
    %v4921 = vmax.f32 %v4713, %v4826
    %4922 = vmax.xlane.f32.xlu0 %v4921
    %v4923 = vpop.xlane.xlu0 %4922
    %v4924 = vmax.f32 %v4716, %v4829
    %4925 = vmax.xlane.f32.xlu0 %v4924
    %v4926 = vpop.xlane.xlu0 %4925
    %v4927 = vmax.f32 %v4719, %v4832
    %4928 = vmax.xlane.f32.xlu0 %v4927
    %v4929 = vpop.xlane.xlu0 %4928
    %v4930 = vmax.f32 %v4722, %v4835
    %4931 = vmax.xlane.f32.xlu0 %v4930
    %v4932 = vpop.xlane.xlu0 %4931
    %v4933 = vmax.f32 %v4725, %v4838
    %4934 = vmax.xlane.f32.xlu0 %v4933
    %v4935 = vpop.xlane.xlu0 %4934
    %v4936 = vmax.f32 %v4728, %v4841
    %4937 = vmax.xlane.f32.xlu0 %v4936
    %v4938 = vpop.xlane.xlu0 %4937
    %v4939 = vmax.f32 %v4731, %v4844
    %4940 = vmax.xlane.f32.xlu0 %v4939
    %v4941 = vpop.xlane.xlu0 %4940
    %v4942 = vmax.f32 %v4734, %v4847
    %4943 = vmax.xlane.f32.xlu0 %v4942
    %v4944 = vpop.xlane.xlu0 %4943
    %v4945 = vmax.f32 %v4737, %v4850
    %4946 = vmax.xlane.f32.xlu0 %v4945
    %v4947 = vpop.xlane.xlu0 %4946
    %v4948 = vmax.f32 %v4740, %v4853
    %4949 = vmax.xlane.f32.xlu0 %v4948
    %v4950 = vpop.xlane.xlu0 %4949
    %v4951 = vmax.f32 %v4743, %v4856
    %4952 = vmax.xlane.f32.xlu0 %v4951
    %v4953 = vpop.xlane.xlu0 %4952
    %v4954 = vmax.f32 %v4746, %v4859
    %4955 = vmax.xlane.f32.xlu0 %v4954
    %v4956 = vpop.xlane.xlu0 %4955
    %v4957 = vmax.f32 %v4749, %v4862
    %4958 = vmax.xlane.f32.xlu0 %v4957
    %v4959 = vpop.xlane.xlu0 %4958
    %v4960 = vmax.f32 %v4752, %v4865
    %4961 = vmax.xlane.f32.xlu0 %v4960
    %v4962 = vpop.xlane.xlu0 %4961
    %v4963 = vmax.f32 %v4755, %v4868
    %4964 = vmax.xlane.f32.xlu0 %v4963
    %v4965 = vpop.xlane.xlu0 %4964
    %v4966 = vmax.f32 %v4758, %v4871
    %4967 = vmax.xlane.f32.xlu0 %v4966
    %v4968 = vpop.xlane.xlu0 %4967
    %v4969 = vmax.f32 %v4761, %v4874
    %4970 = vmax.xlane.f32.xlu0 %v4969
    %v4971 = vpop.xlane.xlu0 %4970
    %v4972 = vmax.f32 %v4764, %v4877
    %4973 = vmax.xlane.f32.xlu0 %v4972
    %v4974 = vpop.xlane.xlu0 %4973
    %v4975 = vmax.f32 %v4767, %v4880
    %4976 = vmax.xlane.f32.xlu0 %v4975
    %v4977 = vpop.xlane.xlu0 %4976
    %v4978 = vmax.f32 %v4770, %v4883
    %4979 = vmax.xlane.f32.xlu0 %v4978
    %v4980 = vpop.xlane.xlu0 %4979
    %v4981 = vmax.f32 %v4773, %v4886
    %4982 = vmax.xlane.f32.xlu0 %v4981
    %v4983 = vpop.xlane.xlu0 %4982
    %v4984 = vmax.f32 %v4776, %v4889
    %4985 = vmax.xlane.f32.xlu0 %v4984
    %v4986 = vpop.xlane.xlu0 %4985
    %v4987 = vmax.f32 %v4779, %v4892
    %4988 = vmax.xlane.f32.xlu0 %v4987
    %v4989 = vpop.xlane.xlu0 %4988
    %v4990 = vmax.f32 %v4782, %v4895
    %4991 = vmax.xlane.f32.xlu0 %v4990
    %v4992 = vpop.xlane.xlu0 %4991
    %v4993 = vmax.f32 %v4785, %v4898
    %4994 = vmax.xlane.f32.xlu0 %v4993
    %v4995 = vpop.xlane.xlu0 %4994
    %v4996 = vmax.f32 %v4788, %v4901
    %4997 = vmax.xlane.f32.xlu0 %v4996
    %v4998 = vpop.xlane.xlu0 %4997
    %v4999 = vmax.f32 %v4791, %v4904
    %5000 = vmax.xlane.f32.xlu0 %v4999
    %v5001 = vpop.xlane.xlu0 %5000
    %v5002 = vmax.f32 %v4794, %v4907
    %5003 = vmax.xlane.f32.xlu0 %v5002
    %v5004 = vpop.xlane.xlu0 %5003
    %v5005 = vmax.f32 %v4797, %v4910
    %5006 = vmax.xlane.f32.xlu0 %v5005
    %v5007 = vpop.xlane.xlu0 %5006
    %v5008 = vmax.f32 %v4800, %v4913
    %5009 = vmax.xlane.f32.xlu0 %v5008
    %v5010 = vpop.xlane.xlu0 %5009
    %v5011 = vmax.f32 %v4803, %v4916
    %5012 = vmax.xlane.f32.xlu0 %v5011
    %v5013 = vpop.xlane.xlu0 %5012
    %v5014 = vmax.f32 %v4806, %v4919
    %5015 = vmax.xlane.f32.xlu0 %v5014
    %v5016 = vpop.xlane.xlu0 %5015
    %v5017 = vsub.f32 %v4713, %v4923
    %v5018 = vsub.f32 %v4826, %v4923
    %v5019 = vsub.f32 %v4716, %v4926
    %v5020 = vsub.f32 %v4829, %v4926
    %v5021 = vsub.f32 %v4719, %v4929
    %v5022 = vsub.f32 %v4832, %v4929
    %v5023 = vsub.f32 %v4722, %v4932
    %v5024 = vsub.f32 %v4835, %v4932
    %v5025 = vsub.f32 %v4725, %v4935
    %v5026 = vsub.f32 %v4838, %v4935
    %v5027 = vsub.f32 %v4728, %v4938
    %v5028 = vsub.f32 %v4841, %v4938
    %v5029 = vsub.f32 %v4731, %v4941
    %v5030 = vsub.f32 %v4844, %v4941
    %v5031 = vsub.f32 %v4734, %v4944
    %v5032 = vsub.f32 %v4847, %v4944
    %v5033 = vsub.f32 %v4737, %v4947
    %v5034 = vsub.f32 %v4850, %v4947
    %v5035 = vsub.f32 %v4740, %v4950
    %v5036 = vsub.f32 %v4853, %v4950
    %v5037 = vsub.f32 %v4743, %v4953
    %v5038 = vsub.f32 %v4856, %v4953
    %v5039 = vsub.f32 %v4746, %v4956
    %v5040 = vsub.f32 %v4859, %v4956
    %v5041 = vsub.f32 %v4749, %v4959
    %v5042 = vsub.f32 %v4862, %v4959
    %v5043 = vsub.f32 %v4752, %v4962
    %v5044 = vsub.f32 %v4865, %v4962
    %v5045 = vsub.f32 %v4755, %v4965
    %v5046 = vsub.f32 %v4868, %v4965
    %v5047 = vsub.f32 %v4758, %v4968
    %v5048 = vsub.f32 %v4871, %v4968
    %v5049 = vsub.f32 %v4761, %v4971
    %v5050 = vsub.f32 %v4874, %v4971
    %v5051 = vsub.f32 %v4764, %v4974
    %v5052 = vsub.f32 %v4877, %v4974
    %v5053 = vsub.f32 %v4767, %v4977
    %v5054 = vsub.f32 %v4880, %v4977
    %v5055 = vsub.f32 %v4770, %v4980
    %v5056 = vsub.f32 %v4883, %v4980
    %v5057 = vsub.f32 %v4773, %v4983
    %v5058 = vsub.f32 %v4886, %v4983
    %v5059 = vsub.f32 %v4776, %v4986
    %v5060 = vsub.f32 %v4889, %v4986
    %v5061 = vsub.f32 %v4779, %v4989
    %v5062 = vsub.f32 %v4892, %v4989
    %v5063 = vsub.f32 %v4782, %v4992
    %v5064 = vsub.f32 %v4895, %v4992
    %v5065 = vsub.f32 %v4785, %v4995
    %v5066 = vsub.f32 %v4898, %v4995
    %v5067 = vsub.f32 %v4788, %v4998
    %v5068 = vsub.f32 %v4901, %v4998
    %v5069 = vsub.f32 %v4791, %v5001
    %v5070 = vsub.f32 %v4904, %v5001
    %v5071 = vsub.f32 %v4794, %v5004
    %v5072 = vsub.f32 %v4907, %v5004
    %v5073 = vsub.f32 %v4797, %v5007
    %v5074 = vsub.f32 %v4910, %v5007
    %v5075 = vsub.f32 %v4800, %v5010
    %v5076 = vsub.f32 %v4913, %v5010
    %v5077 = vsub.f32 %v4803, %v5013
    %v5078 = vsub.f32 %v4916, %v5013
    %v5079 = vsub.f32 %v4806, %v5016
    %v5080 = vsub.f32 %v4919, %v5016
    %v5081 = vmul.f32 %v5017, 1.442695
    %v5082 = vpow.pop %v5081
    %v5083 = vmul.f32 %v5018, 1.442695
    %v5084 = vpow.pop %v5083
    %v5085 = vmul.f32 %v5019, 1.442695
    %v5086 = vpow.pop %v5085
    %v5087 = vmul.f32 %v5020, 1.442695
    %v5088 = vpow.pop %v5087
    %v5089 = vmul.f32 %v5021, 1.442695
    %v5090 = vpow.pop %v5089
    %v5091 = vmul.f32 %v5022, 1.442695
    %v5092 = vpow.pop %v5091
    %v5093 = vmul.f32 %v5023, 1.442695
    %v5094 = vpow.pop %v5093
    %v5095 = vmul.f32 %v5024, 1.442695
    %v5096 = vpow.pop %v5095
    %v5097 = vmul.f32 %v5025, 1.442695
    %v5098 = vpow.pop %v5097
    %v5099 = vmul.f32 %v5026, 1.442695
    %v5100 = vpow.pop %v5099
    %v5101 = vmul.f32 %v5027, 1.442695
    %v5102 = vpow.pop %v5101
    %v5103 = vmul.f32 %v5028, 1.442695
    %v5104 = vpow.pop %v5103
    %v5105 = vmul.f32 %v5029, 1.442695
    %v5106 = vpow.pop %v5105
    %v5107 = vmul.f32 %v5030, 1.442695
    %v5108 = vpow.pop %v5107
    %v5109 = vmul.f32 %v5031, 1.442695
    %v5110 = vpow.pop %v5109
    %v5111 = vmul.f32 %v5032, 1.442695
    %v5112 = vpow.pop %v5111
    %v5113 = vmul.f32 %v5033, 1.442695
    %v5114 = vpow.pop %v5113
    %v5115 = vmul.f32 %v5034, 1.442695
    %v5116 = vpow.pop %v5115
    %v5117 = vmul.f32 %v5035, 1.442695
    %v5118 = vpow.pop %v5117
    %v5119 = vmul.f32 %v5036, 1.442695
    %v5120 = vpow.pop %v5119
    %v5121 = vmul.f32 %v5037, 1.442695
    %v5122 = vpow.pop %v5121
    %v5123 = vmul.f32 %v5038, 1.442695
    %v5124 = vpow.pop %v5123
    %v5125 = vmul.f32 %v5039, 1.442695
    %v5126 = vpow.pop %v5125
    %v5127 = vmul.f32 %v5040, 1.442695
    %v5128 = vpow.pop %v5127
    %v5129 = vmul.f32 %v5041, 1.442695
    %v5130 = vpow.pop %v5129
    %v5131 = vmul.f32 %v5042, 1.442695
    %v5132 = vpow.pop %v5131
    %v5133 = vmul.f32 %v5043, 1.442695
    %v5134 = vpow.pop %v5133
    %v5135 = vmul.f32 %v5044, 1.442695
    %v5136 = vpow.pop %v5135
    %v5137 = vmul.f32 %v5045, 1.442695
    %v5138 = vpow.pop %v5137
    %v5139 = vmul.f32 %v5046, 1.442695
    %v5140 = vpow.pop %v5139
    %v5141 = vmul.f32 %v5047, 1.442695
    %v5142 = vpow.pop %v5141
    %v5143 = vmul.f32 %v5048, 1.442695
    %v5144 = vpow.pop %v5143
    %v5145 = vmul.f32 %v5049, 1.442695
    %v5146 = vpow.pop %v5145
    %v5147 = vmul.f32 %v5050, 1.442695
    %v5148 = vpow.pop %v5147
    %v5149 = vmul.f32 %v5051, 1.442695
    %v5150 = vpow.pop %v5149
    %v5151 = vmul.f32 %v5052, 1.442695
    %v5152 = vpow.pop %v5151
    %v5153 = vmul.f32 %v5053, 1.442695
    %v5154 = vpow.pop %v5153
    %v5155 = vmul.f32 %v5054, 1.442695
    %v5156 = vpow.pop %v5155
    %v5157 = vmul.f32 %v5055, 1.442695
    %v5158 = vpow.pop %v5157
    %v5159 = vmul.f32 %v5056, 1.442695
    %v5160 = vpow.pop %v5159
    %v5161 = vmul.f32 %v5057, 1.442695
    %v5162 = vpow.pop %v5161
    %v5163 = vmul.f32 %v5058, 1.442695
    %v5164 = vpow.pop %v5163
    %v5165 = vmul.f32 %v5059, 1.442695
    %v5166 = vpow.pop %v5165
    %v5167 = vmul.f32 %v5060, 1.442695
    %v5168 = vpow.pop %v5167
    %v5169 = vmul.f32 %v5061, 1.442695
    %v5170 = vpow.pop %v5169
    %v5171 = vmul.f32 %v5062, 1.442695
    %v5172 = vpow.pop %v5171
    %v5173 = vmul.f32 %v5063, 1.442695
    %v5174 = vpow.pop %v5173
    %v5175 = vmul.f32 %v5064, 1.442695
    %v5176 = vpow.pop %v5175
    %v5177 = vmul.f32 %v5065, 1.442695
    %v5178 = vpow.pop %v5177
    %v5179 = vmul.f32 %v5066, 1.442695
    %v5180 = vpow.pop %v5179
    %v5181 = vmul.f32 %v5067, 1.442695
    %v5182 = vpow.pop %v5181
    %v5183 = vmul.f32 %v5068, 1.442695
    %v5184 = vpow.pop %v5183
    %v5185 = vmul.f32 %v5069, 1.442695
    %v5186 = vpow.pop %v5185
    %v5187 = vmul.f32 %v5070, 1.442695
    %v5188 = vpow.pop %v5187
    %v5189 = vmul.f32 %v5071, 1.442695
    %v5190 = vpow.pop %v5189
    %v5191 = vmul.f32 %v5072, 1.442695
    %v5192 = vpow.pop %v5191
    %v5193 = vmul.f32 %v5073, 1.442695
    %v5194 = vpow.pop %v5193
    %v5195 = vmul.f32 %v5074, 1.442695
    %v5196 = vpow.pop %v5195
    %v5197 = vmul.f32 %v5075, 1.442695
    %v5198 = vpow.pop %v5197
    %v5199 = vmul.f32 %v5076, 1.442695
    %v5200 = vpow.pop %v5199
    %v5201 = vmul.f32 %v5077, 1.442695
    %v5202 = vpow.pop %v5201
    %v5203 = vmul.f32 %v5078, 1.442695
    %v5204 = vpow.pop %v5203
    %v5205 = vmul.f32 %v5079, 1.442695
    %v5206 = vpow.pop %v5205
    %v5207 = vmul.f32 %v5080, 1.442695
    %v5208 = vpow.pop %v5207
    %v5209 = vadd.f32 %v5082, %v5084
    %5210 = vadd.xlane.f32.xlu0 %v5209
    %v5211 = vpop.xlane.xlu0 %5210
    %v5212 = vadd.f32 %v5086, %v5088
    %5213 = vadd.xlane.f32.xlu0 %v5212
    %v5214 = vpop.xlane.xlu0 %5213
    %v5215 = vadd.f32 %v5090, %v5092
    %5216 = vadd.xlane.f32.xlu0 %v5215
    %v5217 = vpop.xlane.xlu0 %5216
    %v5218 = vadd.f32 %v5094, %v5096
    %5219 = vadd.xlane.f32.xlu0 %v5218
    %v5220 = vpop.xlane.xlu0 %5219
    %v5221 = vadd.f32 %v5098, %v5100
    %5222 = vadd.xlane.f32.xlu0 %v5221
    %v5223 = vpop.xlane.xlu0 %5222
    %v5224 = vadd.f32 %v5102, %v5104
    %5225 = vadd.xlane.f32.xlu0 %v5224
    %v5226 = vpop.xlane.xlu0 %5225
    %v5227 = vadd.f32 %v5106, %v5108
    %5228 = vadd.xlane.f32.xlu0 %v5227
    %v5229 = vpop.xlane.xlu0 %5228
    %v5230 = vadd.f32 %v5110, %v5112
    %5231 = vadd.xlane.f32.xlu0 %v5230
    %v5232 = vpop.xlane.xlu0 %5231
    %v5233 = vadd.f32 %v5114, %v5116
    %5234 = vadd.xlane.f32.xlu0 %v5233
    %v5235 = vpop.xlane.xlu0 %5234
    %v5236 = vadd.f32 %v5118, %v5120
    %5237 = vadd.xlane.f32.xlu0 %v5236
    %v5238 = vpop.xlane.xlu0 %5237
    %v5239 = vadd.f32 %v5122, %v5124
    %5240 = vadd.xlane.f32.xlu0 %v5239
    %v5241 = vpop.xlane.xlu0 %5240
    %v5242 = vadd.f32 %v5126, %v5128
    %5243 = vadd.xlane.f32.xlu0 %v5242
    %v5244 = vpop.xlane.xlu0 %5243
    %v5245 = vadd.f32 %v5130, %v5132
    %5246 = vadd.xlane.f32.xlu0 %v5245
    %v5247 = vpop.xlane.xlu0 %5246
    %v5248 = vadd.f32 %v5134, %v5136
    %5249 = vadd.xlane.f32.xlu0 %v5248
    %v5250 = vpop.xlane.xlu0 %5249
    %v5251 = vadd.f32 %v5138, %v5140
    %5252 = vadd.xlane.f32.xlu0 %v5251
    %v5253 = vpop.xlane.xlu0 %5252
    %v5254 = vadd.f32 %v5142, %v5144
    %5255 = vadd.xlane.f32.xlu0 %v5254
    %v5256 = vpop.xlane.xlu0 %5255
    %v5257 = vadd.f32 %v5146, %v5148
    %5258 = vadd.xlane.f32.xlu0 %v5257
    %v5259 = vpop.xlane.xlu0 %5258
    %v5260 = vadd.f32 %v5150, %v5152
    %5261 = vadd.xlane.f32.xlu0 %v5260
    %v5262 = vpop.xlane.xlu0 %5261
    %v5263 = vadd.f32 %v5154, %v5156
    %5264 = vadd.xlane.f32.xlu0 %v5263
    %v5265 = vpop.xlane.xlu0 %5264
    %v5266 = vadd.f32 %v5158, %v5160
    %5267 = vadd.xlane.f32.xlu0 %v5266
    %v5268 = vpop.xlane.xlu0 %5267
    %v5269 = vadd.f32 %v5162, %v5164
    %5270 = vadd.xlane.f32.xlu0 %v5269
    %v5271 = vpop.xlane.xlu0 %5270
    %v5272 = vadd.f32 %v5166, %v5168
    %5273 = vadd.xlane.f32.xlu0 %v5272
    %v5274 = vpop.xlane.xlu0 %5273
    %v5275 = vadd.f32 %v5170, %v5172
    %5276 = vadd.xlane.f32.xlu0 %v5275
    %v5277 = vpop.xlane.xlu0 %5276
    %v5278 = vadd.f32 %v5174, %v5176
    %5279 = vadd.xlane.f32.xlu0 %v5278
    %v5280 = vpop.xlane.xlu0 %5279
    %v5281 = vadd.f32 %v5178, %v5180
    %5282 = vadd.xlane.f32.xlu0 %v5281
    %v5283 = vpop.xlane.xlu0 %5282
    %v5284 = vadd.f32 %v5182, %v5184
    %5285 = vadd.xlane.f32.xlu0 %v5284
    %v5286 = vpop.xlane.xlu0 %5285
    %v5287 = vadd.f32 %v5186, %v5188
    %5288 = vadd.xlane.f32.xlu0 %v5287
    %v5289 = vpop.xlane.xlu0 %5288
    %v5290 = vadd.f32 %v5190, %v5192
    %5291 = vadd.xlane.f32.xlu0 %v5290
    %v5292 = vpop.xlane.xlu0 %5291
    %v5293 = vadd.f32 %v5194, %v5196
    %5294 = vadd.xlane.f32.xlu0 %v5293
    %v5295 = vpop.xlane.xlu0 %5294
    %v5296 = vadd.f32 %v5198, %v5200
    %5297 = vadd.xlane.f32.xlu0 %v5296
    %v5298 = vpop.xlane.xlu0 %5297
    %v5299 = vadd.f32 %v5202, %v5204
    %5300 = vadd.xlane.f32.xlu0 %v5299
    %v5301 = vpop.xlane.xlu0 %5300
    %v5302 = vadd.f32 %v5206, %v5208
    %5303 = vadd.xlane.f32.xlu0 %v5302
    %v5304 = vpop.xlane.xlu0 %5303
    %v5305 = vrcp.pop %v5211
    %v5306 = vrcp.pop %v5214
    %v5307 = vrcp.pop %v5217
    %v5308 = vrcp.pop %v5220
    %v5309 = vrcp.pop %v5223
    %v5310 = vrcp.pop %v5226
    %v5311 = vrcp.pop %v5229
    %v5312 = vrcp.pop %v5232
    %v5313 = vrcp.pop %v5235
    %v5314 = vrcp.pop %v5238
    %v5315 = vrcp.pop %v5241
    %v5316 = vrcp.pop %v5244
    %v5317 = vrcp.pop %v5247
    %v5318 = vrcp.pop %v5250
    %v5319 = vrcp.pop %v5253
    %v5320 = vrcp.pop %v5256
    %v5321 = vrcp.pop %v5259
    %v5322 = vrcp.pop %v5262
    %v5323 = vrcp.pop %v5265
    %v5324 = vrcp.pop %v5268
    %v5325 = vrcp.pop %v5271
    %v5326 = vrcp.pop %v5274
    %v5327 = vrcp.pop %v5277
    %v5328 = vrcp.pop %v5280
    %v5329 = vrcp.pop %v5283
    %v5330 = vrcp.pop %v5286
    %v5331 = vrcp.pop %v5289
    %v5332 = vrcp.pop %v5292
    %v5333 = vrcp.pop %v5295
    %v5334 = vrcp.pop %v5298
    %v5335 = vrcp.pop %v5301
    %v5336 = vrcp.pop %v5304
    %v5337 = vmul.f32 %v5082, %v5305
    %v5338 = vmul.f32 %v5084, %v5305
    %v5339 = vmul.f32 %v5086, %v5306
    %v5340 = vmul.f32 %v5088, %v5306
    %v5341 = vmul.f32 %v5090, %v5307
    %v5342 = vmul.f32 %v5092, %v5307
    %v5343 = vmul.f32 %v5094, %v5308
    %v5344 = vmul.f32 %v5096, %v5308
    %v5345 = vmul.f32 %v5098, %v5309
    %v5346 = vmul.f32 %v5100, %v5309
    %v5347 = vmul.f32 %v5102, %v5310
    %v5348 = vmul.f32 %v5104, %v5310
    %v5349 = vmul.f32 %v5106, %v5311
    %v5350 = vmul.f32 %v5108, %v5311
    %v5351 = vmul.f32 %v5110, %v5312
    %v5352 = vmul.f32 %v5112, %v5312
    %v5353 = vmul.f32 %v5114, %v5313
    %v5354 = vmul.f32 %v5116, %v5313
    %v5355 = vmul.f32 %v5118, %v5314
    %v5356 = vmul.f32 %v5120, %v5314
    %v5357 = vmul.f32 %v5122, %v5315
    %v5358 = vmul.f32 %v5124, %v5315
    %v5359 = vmul.f32 %v5126, %v5316
    %v5360 = vmul.f32 %v5128, %v5316
    %v5361 = vmul.f32 %v5130, %v5317
    %v5362 = vmul.f32 %v5132, %v5317
    %v5363 = vmul.f32 %v5134, %v5318
    %v5364 = vmul.f32 %v5136, %v5318
    %v5365 = vmul.f32 %v5138, %v5319
    %v5366 = vmul.f32 %v5140, %v5319
    %v5367 = vmul.f32 %v5142, %v5320
    %v5368 = vmul.f32 %v5144, %v5320
    %v5369 = vmul.f32 %v5146, %v5321
    %v5370 = vmul.f32 %v5148, %v5321
    %v5371 = vmul.f32 %v5150, %v5322
    %v5372 = vmul.f32 %v5152, %v5322
    %v5373 = vmul.f32 %v5154, %v5323
    %v5374 = vmul.f32 %v5156, %v5323
    %v5375 = vmul.f32 %v5158, %v5324
    %v5376 = vmul.f32 %v5160, %v5324
    %v5377 = vmul.f32 %v5162, %v5325
    %v5378 = vmul.f32 %v5164, %v5325
    %v5379 = vmul.f32 %v5166, %v5326
    %v5380 = vmul.f32 %v5168, %v5326
    %v5381 = vmul.f32 %v5170, %v5327
    %v5382 = vmul.f32 %v5172, %v5327
    %v5383 = vmul.f32 %v5174, %v5328
    %v5384 = vmul.f32 %v5176, %v5328
    %v5385 = vmul.f32 %v5178, %v5329
    %v5386 = vmul.f32 %v5180, %v5329
    %v5387 = vmul.f32 %v5182, %v5330
    %v5388 = vmul.f32 %v5184, %v5330
    %v5389 = vmul.f32 %v5186, %v5331
    %v5390 = vmul.f32 %v5188, %v5331
    %v5391 = vmul.f32 %v5190, %v5332
    %v5392 = vmul.f32 %v5192, %v5332
    %v5393 = vmul.f32 %v5194, %v5333
    %v5394 = vmul.f32 %v5196, %v5333
    %v5395 = vmul.f32 %v5198, %v5334
    %v5396 = vmul.f32 %v5200, %v5334
    %v5397 = vmul.f32 %v5202, %v5335
    %v5398 = vmul.f32 %v5204, %v5335
    %v5399 = vmul.f32 %v5206, %v5336
    %v5400 = vmul.f32 %v5208, %v5336
    %5401 = vmatpush.xpose.msra.mxu0 %v5367
    %5402 = vmatpush.xpose.msra.mxu0 %v5365
    %5403 = vmatpush.xpose.msra.mxu0 %v5363
    %5404 = vmatpush.xpose.msra.mxu0 %v5361
    %5405 = vmatpush.xpose.msra.mxu0 %v5359
    %5406 = vmatpush.xpose.msra.mxu0 %v5357
    %5407 = vmatpush.xpose.msra.mxu0 %v5355
    %5408 = vmatpush.xpose.msra.mxu0 %v5353
    %5409 = vmatpush.xpose.msra.mxu0 %v5351
    %5410 = vmatpush.xpose.msra.mxu0 %v5349
    %5411 = vmatpush.xpose.msra.mxu0 %v5347
    %5412 = vmatpush.xpose.msra.mxu0 %v5345
    %5413 = vmatpush.xpose.msra.mxu0 %v5343
    %5414 = vmatpush.xpose.msra.mxu0 %v5341
    %5415 = vmatpush.xpose.msra.mxu0 %v5339
    %5416 = vmatpush.xpose.msra.mxu0 %v5337
    %5417 = vmatmul.f32.gmra.mxu0 %v4471
    %v5418 = vpop.f32.mrf.mxu0
    %v5419 = vadd.f32 0.0, %v5418
    %5420 = vdwg.mxu0
    %5421 = vmatpush.xpose.msra.mxu0 %v5368
    %5422 = vmatpush.xpose.msra.mxu0 %v5366
    %5423 = vmatpush.xpose.msra.mxu0 %v5364
    %5424 = vmatpush.xpose.msra.mxu0 %v5362
    %5425 = vmatpush.xpose.msra.mxu0 %v5360
    %5426 = vmatpush.xpose.msra.mxu0 %v5358
    %5427 = vmatpush.xpose.msra.mxu0 %v5356
    %5428 = vmatpush.xpose.msra.mxu0 %v5354
    %5429 = vmatpush.xpose.msra.mxu0 %v5352
    %5430 = vmatpush.xpose.msra.mxu0 %v5350
    %5431 = vmatpush.xpose.msra.mxu0 %v5348
    %5432 = vmatpush.xpose.msra.mxu0 %v5346
    %5433 = vmatpush.xpose.msra.mxu0 %v5344
    %5434 = vmatpush.xpose.msra.mxu0 %v5342
    %5435 = vmatpush.xpose.msra.mxu0 %v5340
    %5436 = vmatpush.xpose.msra.mxu0 %v5338
    %5437 = vmatmul.f32.gmra.mxu0 %v4524
    %v5438 = vpop.f32.mrf.mxu0
    %v5439 = vadd.f32 %v5419, %v5438
    %5440 = vdwg.mxu0
    %5441 = vmatpush.xpose.msra.mxu0 %v5399
    %5442 = vmatpush.xpose.msra.mxu0 %v5397
    %5443 = vmatpush.xpose.msra.mxu0 %v5395
    %5444 = vmatpush.xpose.msra.mxu0 %v5393
    %5445 = vmatpush.xpose.msra.mxu0 %v5391
    %5446 = vmatpush.xpose.msra.mxu0 %v5389
    %5447 = vmatpush.xpose.msra.mxu0 %v5387
    %5448 = vmatpush.xpose.msra.mxu0 %v5385
    %5449 = vmatpush.xpose.msra.mxu0 %v5383
    %5450 = vmatpush.xpose.msra.mxu0 %v5381
    %5451 = vmatpush.xpose.msra.mxu0 %v5379
    %5452 = vmatpush.xpose.msra.mxu0 %v5377
    %5453 = vmatpush.xpose.msra.mxu0 %v5375
    %5454 = vmatpush.xpose.msra.mxu0 %v5373
    %5455 = vmatpush.xpose.msra.mxu0 %v5371
    %5456 = vmatpush.xpose.msra.mxu0 %v5369
    %5457 = vmatmul.f32.gmra.mxu0 %v4471
    %v5458 = vpop.f32.mrf.mxu0
    %v5459 = vadd.f32 0.0, %v5458
    %5460 = vdwg.mxu0
    %5461 = vmatpush.xpose.msra.mxu0 %v5400
    %5462 = vmatpush.xpose.msra.mxu0 %v5398
    %5463 = vmatpush.xpose.msra.mxu0 %v5396
    %5464 = vmatpush.xpose.msra.mxu0 %v5394
    %5465 = vmatpush.xpose.msra.mxu0 %v5392
    %5466 = vmatpush.xpose.msra.mxu0 %v5390
    %5467 = vmatpush.xpose.msra.mxu0 %v5388
    %5468 = vmatpush.xpose.msra.mxu0 %v5386
    %5469 = vmatpush.xpose.msra.mxu0 %v5384
    %5470 = vmatpush.xpose.msra.mxu0 %v5382
    %5471 = vmatpush.xpose.msra.mxu0 %v5380
    %5472 = vmatpush.xpose.msra.mxu0 %v5378
    %5473 = vmatpush.xpose.msra.mxu0 %v5376
    %5474 = vmatpush.xpose.msra.mxu0 %v5374
    %5475 = vmatpush.xpose.msra.mxu0 %v5372
    %5476 = vmatpush.xpose.msra.mxu0 %v5370
    %5477 = vmatmul.f32.gmra.mxu0 %v4524
    %v5478 = vpop.f32.mrf.mxu0
    %v5479 = vadd.f32 %v5459, %v5478
    %5480 = vdwg.mxu0
    %5481 = vxpose.xlu0.b32.start [1/16] %v4450, 128
    %5482 = vxpose.xlu0.b32.cont [2/16] 0.0, 128
    %5483 = vxpose.xlu0.b32.cont [3/16] 0.0, 128
    %5484 = vxpose.xlu0.b32.cont [4/16] 0.0, 128
    %5485 = vxpose.xlu0.b32.cont [5/16] 0.0, 128
    %5486 = vxpose.xlu0.b32.cont [6/16] 0.0, 128
    %5487 = vxpose.xlu0.b32.cont [7/16] 0.0, 128
    %5488 = vxpose.xlu0.b32.cont [8/16] 0.0, 128
    %5489 = vxpose.xlu0.b32.cont [9/16] 0.0, 128
    %5490 = vxpose.xlu0.b32.cont [10/16] 0.0, 128
    %5491 = vxpose.xlu0.b32.cont [11/16] 0.0, 128
    %5492 = vxpose.xlu0.b32.cont [12/16] 0.0, 128
    %5493 = vxpose.xlu0.b32.cont [13/16] 0.0, 128
    %5494 = vxpose.xlu0.b32.cont [14/16] 0.0, 128
    %5495 = vxpose.xlu0.b32.cont [15/16] 0.0, 128
    %5496 = vxpose.xlu0.b32.end [16/16] 0.0, 128
    %v5497 = vpop.trf.xlu0
    %v5498 = vpop.trf.xlu0
    %v5499 = vpop.trf.xlu0
    %v5500 = vpop.trf.xlu0
    %v5501 = vpop.trf.xlu0
    %v5502 = vpop.trf.xlu0
    %v5503 = vpop.trf.xlu0
    %v5504 = vpop.trf.xlu0
    %v5505 = vpop.trf.xlu0
    %v5506 = vpop.trf.xlu0
    %v5507 = vpop.trf.xlu0
    %v5508 = vpop.trf.xlu0
    %v5509 = vpop.trf.xlu0
    %v5510 = vpop.trf.xlu0
    %v5511 = vpop.trf.xlu0
    %v5512 = vpop.trf.xlu0
    %5513 = vxpose.xlu0.b32.start [1/16] %v4503, 128
    %5514 = vxpose.xlu0.b32.cont [2/16] 0.0, 128
    %5515 = vxpose.xlu0.b32.cont [3/16] 0.0, 128
    %5516 = vxpose.xlu0.b32.cont [4/16] 0.0, 128
    %5517 = vxpose.xlu0.b32.cont [5/16] 0.0, 128
    %5518 = vxpose.xlu0.b32.cont [6/16] 0.0, 128
    %5519 = vxpose.xlu0.b32.cont [7/16] 0.0, 128
    %5520 = vxpose.xlu0.b32.cont [8/16] 0.0, 128
    %5521 = vxpose.xlu0.b32.cont [9/16] 0.0, 128
    %5522 = vxpose.xlu0.b32.cont [10/16] 0.0, 128
    %5523 = vxpose.xlu0.b32.cont [11/16] 0.0, 128
    %5524 = vxpose.xlu0.b32.cont [12/16] 0.0, 128
    %5525 = vxpose.xlu0.b32.cont [13/16] 0.0, 128
    %5526 = vxpose.xlu0.b32.cont [14/16] 0.0, 128
    %5527 = vxpose.xlu0.b32.cont [15/16] 0.0, 128
    %5528 = vxpose.xlu0.b32.end [16/16] 0.0, 128
    %v5529 = vpop.trf.xlu0
    %v5530 = vpop.trf.xlu0
    %v5531 = vpop.trf.xlu0
    %v5532 = vpop.trf.xlu0
    %v5533 = vpop.trf.xlu0
    %v5534 = vpop.trf.xlu0
    %v5535 = vpop.trf.xlu0
    %v5536 = vpop.trf.xlu0
    %v5537 = vpop.trf.xlu0
    %v5538 = vpop.trf.xlu0
    %v5539 = vpop.trf.xlu0
    %v5540 = vpop.trf.xlu0
    %v5541 = vpop.trf.xlu0
    %v5542 = vpop.trf.xlu0
    %v5543 = vpop.trf.xlu0
    %v5544 = vpop.trf.xlu0
    %v5546 = vsel %vm491, %v5497, 0
    %v5549 = vsel %vm491, %v5498, 0
    %v5552 = vsel %vm491, %v5499, 0
    %v5555 = vsel %vm491, %v5500, 0
    %v5558 = vsel %vm491, %v5501, 0
    %v5561 = vsel %vm491, %v5502, 0
    %v5564 = vsel %vm491, %v5503, 0
    %v5567 = vsel %vm491, %v5504, 0
    %v5570 = vsel %vm491, %v5505, 0
    %v5573 = vsel %vm491, %v5506, 0
    %v5576 = vsel %vm491, %v5507, 0
    %v5579 = vsel %vm491, %v5508, 0
    %v5582 = vsel %vm491, %v5509, 0
    %v5585 = vsel %vm491, %v5510, 0
    %v5588 = vsel %vm491, %v5511, 0
    %v5591 = vsel %vm491, %v5512, 0
    %v5594 = vsel %vm491, %v5529, 0
    %v5597 = vsel %vm491, %v5530, 0
    %v5600 = vsel %vm491, %v5531, 0
    %v5603 = vsel %vm491, %v5532, 0
    %v5606 = vsel %vm491, %v5533, 0
    %v5609 = vsel %vm491, %v5534, 0
    %v5612 = vsel %vm491, %v5535, 0
    %v5615 = vsel %vm491, %v5536, 0
    %v5618 = vsel %vm491, %v5537, 0
    %v5621 = vsel %vm491, %v5538, 0
    %v5624 = vsel %vm491, %v5539, 0
    %v5627 = vsel %vm491, %v5540, 0
    %v5630 = vsel %vm491, %v5541, 0
    %v5633 = vsel %vm491, %v5542, 0
    %v5636 = vsel %vm491, %v5543, 0
    %v5639 = vsel %vm491, %v5544, 0
    %5641 = vmatpush.msra.mxu0 0.0
    %5642 = vmatpush.msra.mxu0 0.0
    %5643 = vmatpush.msra.mxu0 0.0
    %5644 = vmatpush.msra.mxu0 0.0
    %5645 = vmatpush.msra.mxu0 0.0
    %5646 = vmatpush.msra.mxu0 0.0
    %5647 = vmatpush.msra.mxu0 0.0
    %5648 = vmatpush.msra.mxu0 0.0
    %5649 = vmatpush.msra.mxu0 0.0
    %5650 = vmatpush.msra.mxu0 0.0
    %5651 = vmatpush.msra.mxu0 0.0
    %5652 = vmatpush.msra.mxu0 0.0
    %5653 = vmatpush.msra.mxu0 0.0
    %5654 = vmatpush.msra.mxu0 0.0
    %5655 = vmatpush.msra.mxu0 0.0
    %5656 = vmatpush.msra.mxu0 %v4462
    %5657 = vmatmul.f32.gmra.mxu0 %v5546
    %v5658 = vpop.f32.mrf.mxu0
    %v5659 = vadd.f32 0.0, %v5658
    %5660 = vmatmul.f32.gmra.mxu0 %v5549
    %v5661 = vpop.f32.mrf.mxu0
    %v5662 = vadd.f32 0.0, %v5661
    %5663 = vmatmul.f32.gmra.mxu0 %v5552
    %v5664 = vpop.f32.mrf.mxu0
    %v5665 = vadd.f32 0.0, %v5664
    %5666 = vmatmul.f32.gmra.mxu0 %v5555
    %v5667 = vpop.f32.mrf.mxu0
    %v5668 = vadd.f32 0.0, %v5667
    %5669 = vmatmul.f32.gmra.mxu0 %v5558
    %v5670 = vpop.f32.mrf.mxu0
    %v5671 = vadd.f32 0.0, %v5670
    %5672 = vmatmul.f32.gmra.mxu0 %v5561
    %v5673 = vpop.f32.mrf.mxu0
    %v5674 = vadd.f32 0.0, %v5673
    %5675 = vmatmul.f32.gmra.mxu0 %v5564
    %v5676 = vpop.f32.mrf.mxu0
    %v5677 = vadd.f32 0.0, %v5676
    %5678 = vmatmul.f32.gmra.mxu0 %v5567
    %v5679 = vpop.f32.mrf.mxu0
    %v5680 = vadd.f32 0.0, %v5679
    %5681 = vmatmul.f32.gmra.mxu0 %v5570
    %v5682 = vpop.f32.mrf.mxu0
    %v5683 = vadd.f32 0.0, %v5682
    %5684 = vmatmul.f32.gmra.mxu0 %v5573
    %v5685 = vpop.f32.mrf.mxu0
    %v5686 = vadd.f32 0.0, %v5685
    %5687 = vmatmul.f32.gmra.mxu0 %v5576
    %v5688 = vpop.f32.mrf.mxu0
    %v5689 = vadd.f32 0.0, %v5688
    %5690 = vmatmul.f32.gmra.mxu0 %v5579
    %v5691 = vpop.f32.mrf.mxu0
    %v5692 = vadd.f32 0.0, %v5691
    %5693 = vmatmul.f32.gmra.mxu0 %v5582
    %v5694 = vpop.f32.mrf.mxu0
    %v5695 = vadd.f32 0.0, %v5694
    %5696 = vmatmul.f32.gmra.mxu0 %v5585
    %v5697 = vpop.f32.mrf.mxu0
    %v5698 = vadd.f32 0.0, %v5697
    %5699 = vmatmul.f32.gmra.mxu0 %v5588
    %v5700 = vpop.f32.mrf.mxu0
    %v5701 = vadd.f32 0.0, %v5700
    %5702 = vmatmul.f32.gmra.mxu0 %v5591
    %v5703 = vpop.f32.mrf.mxu0
    %v5704 = vadd.f32 0.0, %v5703
    %5705 = vmatmul.f32.gmra.mxu0 %v5594
    %v5706 = vpop.f32.mrf.mxu0
    %v5707 = vadd.f32 0.0, %v5706
    %5708 = vmatmul.f32.gmra.mxu0 %v5597
    %v5709 = vpop.f32.mrf.mxu0
    %v5710 = vadd.f32 0.0, %v5709
    %5711 = vmatmul.f32.gmra.mxu0 %v5600
    %v5712 = vpop.f32.mrf.mxu0
    %v5713 = vadd.f32 0.0, %v5712
    %5714 = vmatmul.f32.gmra.mxu0 %v5603
    %v5715 = vpop.f32.mrf.mxu0
    %v5716 = vadd.f32 0.0, %v5715
    %5717 = vmatmul.f32.gmra.mxu0 %v5606
    %v5718 = vpop.f32.mrf.mxu0
    %v5719 = vadd.f32 0.0, %v5718
    %5720 = vmatmul.f32.gmra.mxu0 %v5609
    %v5721 = vpop.f32.mrf.mxu0
    %v5722 = vadd.f32 0.0, %v5721
    %5723 = vmatmul.f32.gmra.mxu0 %v5612
    %v5724 = vpop.f32.mrf.mxu0
    %v5725 = vadd.f32 0.0, %v5724
    %5726 = vmatmul.f32.gmra.mxu0 %v5615
    %v5727 = vpop.f32.mrf.mxu0
    %v5728 = vadd.f32 0.0, %v5727
    %5729 = vmatmul.f32.gmra.mxu0 %v5618
    %v5730 = vpop.f32.mrf.mxu0
    %v5731 = vadd.f32 0.0, %v5730
    %5732 = vmatmul.f32.gmra.mxu0 %v5621
    %v5733 = vpop.f32.mrf.mxu0
    %v5734 = vadd.f32 0.0, %v5733
    %5735 = vmatmul.f32.gmra.mxu0 %v5624
    %v5736 = vpop.f32.mrf.mxu0
    %v5737 = vadd.f32 0.0, %v5736
    %5738 = vmatmul.f32.gmra.mxu0 %v5627
    %v5739 = vpop.f32.mrf.mxu0
    %v5740 = vadd.f32 0.0, %v5739
    %5741 = vmatmul.f32.gmra.mxu0 %v5630
    %v5742 = vpop.f32.mrf.mxu0
    %v5743 = vadd.f32 0.0, %v5742
    %5744 = vmatmul.f32.gmra.mxu0 %v5633
    %v5745 = vpop.f32.mrf.mxu0
    %v5746 = vadd.f32 0.0, %v5745
    %5747 = vmatmul.f32.gmra.mxu0 %v5636
    %v5748 = vpop.f32.mrf.mxu0
    %v5749 = vadd.f32 0.0, %v5748
    %5750 = vmatmul.f32.gmra.mxu0 %v5639
    %v5751 = vpop.f32.mrf.mxu0
    %v5752 = vadd.f32 0.0, %v5751
    %5753 = vdwg.mxu0
    %5754 = vmatpush.msra.mxu0 0.0
    %5755 = vmatpush.msra.mxu0 0.0
    %5756 = vmatpush.msra.mxu0 0.0
    %5757 = vmatpush.msra.mxu0 0.0
    %5758 = vmatpush.msra.mxu0 0.0
    %5759 = vmatpush.msra.mxu0 0.0
    %5760 = vmatpush.msra.mxu0 0.0
    %5761 = vmatpush.msra.mxu0 0.0
    %5762 = vmatpush.msra.mxu0 0.0
    %5763 = vmatpush.msra.mxu0 0.0
    %5764 = vmatpush.msra.mxu0 0.0
    %5765 = vmatpush.msra.mxu0 0.0
    %5766 = vmatpush.msra.mxu0 0.0
    %5767 = vmatpush.msra.mxu0 0.0
    %5768 = vmatpush.msra.mxu0 0.0
    %5769 = vmatpush.msra.mxu0 %v4515
    %5770 = vmatmul.f32.gmra.mxu0 %v5546
    %v5771 = vpop.f32.mrf.mxu0
    %v5772 = vadd.f32 0.0, %v5771
    %5773 = vmatmul.f32.gmra.mxu0 %v5549
    %v5774 = vpop.f32.mrf.mxu0
    %v5775 = vadd.f32 0.0, %v5774
    %5776 = vmatmul.f32.gmra.mxu0 %v5552
    %v5777 = vpop.f32.mrf.mxu0
    %v5778 = vadd.f32 0.0, %v5777
    %5779 = vmatmul.f32.gmra.mxu0 %v5555
    %v5780 = vpop.f32.mrf.mxu0
    %v5781 = vadd.f32 0.0, %v5780
    %5782 = vmatmul.f32.gmra.mxu0 %v5558
    %v5783 = vpop.f32.mrf.mxu0
    %v5784 = vadd.f32 0.0, %v5783
    %5785 = vmatmul.f32.gmra.mxu0 %v5561
    %v5786 = vpop.f32.mrf.mxu0
    %v5787 = vadd.f32 0.0, %v5786
    %5788 = vmatmul.f32.gmra.mxu0 %v5564
    %v5789 = vpop.f32.mrf.mxu0
    %v5790 = vadd.f32 0.0, %v5789
    %5791 = vmatmul.f32.gmra.mxu0 %v5567
    %v5792 = vpop.f32.mrf.mxu0
    %v5793 = vadd.f32 0.0, %v5792
    %5794 = vmatmul.f32.gmra.mxu0 %v5570
    %v5795 = vpop.f32.mrf.mxu0
    %v5796 = vadd.f32 0.0, %v5795
    %5797 = vmatmul.f32.gmra.mxu0 %v5573
    %v5798 = vpop.f32.mrf.mxu0
    %v5799 = vadd.f32 0.0, %v5798
    %5800 = vmatmul.f32.gmra.mxu0 %v5576
    %v5801 = vpop.f32.mrf.mxu0
    %v5802 = vadd.f32 0.0, %v5801
    %5803 = vmatmul.f32.gmra.mxu0 %v5579
    %v5804 = vpop.f32.mrf.mxu0
    %v5805 = vadd.f32 0.0, %v5804
    %5806 = vmatmul.f32.gmra.mxu0 %v5582
    %v5807 = vpop.f32.mrf.mxu0
    %v5808 = vadd.f32 0.0, %v5807
    %5809 = vmatmul.f32.gmra.mxu0 %v5585
    %v5810 = vpop.f32.mrf.mxu0
    %v5811 = vadd.f32 0.0, %v5810
    %5812 = vmatmul.f32.gmra.mxu0 %v5588
    %v5813 = vpop.f32.mrf.mxu0
    %v5814 = vadd.f32 0.0, %v5813
    %5815 = vmatmul.f32.gmra.mxu0 %v5591
    %v5816 = vpop.f32.mrf.mxu0
    %v5817 = vadd.f32 0.0, %v5816
    %5818 = vmatmul.f32.gmra.mxu0 %v5594
    %v5819 = vpop.f32.mrf.mxu0
    %v5820 = vadd.f32 0.0, %v5819
    %5821 = vmatmul.f32.gmra.mxu0 %v5597
    %v5822 = vpop.f32.mrf.mxu0
    %v5823 = vadd.f32 0.0, %v5822
    %5824 = vmatmul.f32.gmra.mxu0 %v5600
    %v5825 = vpop.f32.mrf.mxu0
    %v5826 = vadd.f32 0.0, %v5825
    %5827 = vmatmul.f32.gmra.mxu0 %v5603
    %v5828 = vpop.f32.mrf.mxu0
    %v5829 = vadd.f32 0.0, %v5828
    %5830 = vmatmul.f32.gmra.mxu0 %v5606
    %v5831 = vpop.f32.mrf.mxu0
    %v5832 = vadd.f32 0.0, %v5831
    %5833 = vmatmul.f32.gmra.mxu0 %v5609
    %v5834 = vpop.f32.mrf.mxu0
    %v5835 = vadd.f32 0.0, %v5834
    %5836 = vmatmul.f32.gmra.mxu0 %v5612
    %v5837 = vpop.f32.mrf.mxu0
    %v5838 = vadd.f32 0.0, %v5837
    %5839 = vmatmul.f32.gmra.mxu0 %v5615
    %v5840 = vpop.f32.mrf.mxu0
    %v5841 = vadd.f32 0.0, %v5840
    %5842 = vmatmul.f32.gmra.mxu0 %v5618
    %v5843 = vpop.f32.mrf.mxu0
    %v5844 = vadd.f32 0.0, %v5843
    %5845 = vmatmul.f32.gmra.mxu0 %v5621
    %v5846 = vpop.f32.mrf.mxu0
    %v5847 = vadd.f32 0.0, %v5846
    %5848 = vmatmul.f32.gmra.mxu0 %v5624
    %v5849 = vpop.f32.mrf.mxu0
    %v5850 = vadd.f32 0.0, %v5849
    %5851 = vmatmul.f32.gmra.mxu0 %v5627
    %v5852 = vpop.f32.mrf.mxu0
    %v5853 = vadd.f32 0.0, %v5852
    %5854 = vmatmul.f32.gmra.mxu0 %v5630
    %v5855 = vpop.f32.mrf.mxu0
    %v5856 = vadd.f32 0.0, %v5855
    %5857 = vmatmul.f32.gmra.mxu0 %v5633
    %v5858 = vpop.f32.mrf.mxu0
    %v5859 = vadd.f32 0.0, %v5858
    %5860 = vmatmul.f32.gmra.mxu0 %v5636
    %v5861 = vpop.f32.mrf.mxu0
    %v5862 = vadd.f32 0.0, %v5861
    %5863 = vmatmul.f32.gmra.mxu0 %v5639
    %v5864 = vpop.f32.mrf.mxu0
    %v5865 = vadd.f32 0.0, %v5864
    %5866 = vdwg.mxu0
    %v5867 = vmax.f32 %v5659, %v5772
    %5868 = vmax.xlane.f32.xlu0 %v5867
    %v5869 = vpop.xlane.xlu0 %5868
    %v5870 = vmax.f32 %v5662, %v5775
    %5871 = vmax.xlane.f32.xlu0 %v5870
    %v5872 = vpop.xlane.xlu0 %5871
    %v5873 = vmax.f32 %v5665, %v5778
    %5874 = vmax.xlane.f32.xlu0 %v5873
    %v5875 = vpop.xlane.xlu0 %5874
    %v5876 = vmax.f32 %v5668, %v5781
    %5877 = vmax.xlane.f32.xlu0 %v5876
    %v5878 = vpop.xlane.xlu0 %5877
    %v5879 = vmax.f32 %v5671, %v5784
    %5880 = vmax.xlane.f32.xlu0 %v5879
    %v5881 = vpop.xlane.xlu0 %5880
    %v5882 = vmax.f32 %v5674, %v5787
    %5883 = vmax.xlane.f32.xlu0 %v5882
    %v5884 = vpop.xlane.xlu0 %5883
    %v5885 = vmax.f32 %v5677, %v5790
    %5886 = vmax.xlane.f32.xlu0 %v5885
    %v5887 = vpop.xlane.xlu0 %5886
    %v5888 = vmax.f32 %v5680, %v5793
    %5889 = vmax.xlane.f32.xlu0 %v5888
    %v5890 = vpop.xlane.xlu0 %5889
    %v5891 = vmax.f32 %v5683, %v5796
    %5892 = vmax.xlane.f32.xlu0 %v5891
    %v5893 = vpop.xlane.xlu0 %5892
    %v5894 = vmax.f32 %v5686, %v5799
    %5895 = vmax.xlane.f32.xlu0 %v5894
    %v5896 = vpop.xlane.xlu0 %5895
    %v5897 = vmax.f32 %v5689, %v5802
    %5898 = vmax.xlane.f32.xlu0 %v5897
    %v5899 = vpop.xlane.xlu0 %5898
    %v5900 = vmax.f32 %v5692, %v5805
    %5901 = vmax.xlane.f32.xlu0 %v5900
    %v5902 = vpop.xlane.xlu0 %5901
    %v5903 = vmax.f32 %v5695, %v5808
    %5904 = vmax.xlane.f32.xlu0 %v5903
    %v5905 = vpop.xlane.xlu0 %5904
    %v5906 = vmax.f32 %v5698, %v5811
    %5907 = vmax.xlane.f32.xlu0 %v5906
    %v5908 = vpop.xlane.xlu0 %5907
    %v5909 = vmax.f32 %v5701, %v5814
    %5910 = vmax.xlane.f32.xlu0 %v5909
    %v5911 = vpop.xlane.xlu0 %5910
    %v5912 = vmax.f32 %v5704, %v5817
    %5913 = vmax.xlane.f32.xlu0 %v5912
    %v5914 = vpop.xlane.xlu0 %5913
    %v5915 = vmax.f32 %v5707, %v5820
    %5916 = vmax.xlane.f32.xlu0 %v5915
    %v5917 = vpop.xlane.xlu0 %5916
    %v5918 = vmax.f32 %v5710, %v5823
    %5919 = vmax.xlane.f32.xlu0 %v5918
    %v5920 = vpop.xlane.xlu0 %5919
    %v5921 = vmax.f32 %v5713, %v5826
    %5922 = vmax.xlane.f32.xlu0 %v5921
    %v5923 = vpop.xlane.xlu0 %5922
    %v5924 = vmax.f32 %v5716, %v5829
    %5925 = vmax.xlane.f32.xlu0 %v5924
    %v5926 = vpop.xlane.xlu0 %5925
    %v5927 = vmax.f32 %v5719, %v5832
    %5928 = vmax.xlane.f32.xlu0 %v5927
    %v5929 = vpop.xlane.xlu0 %5928
    %v5930 = vmax.f32 %v5722, %v5835
    %5931 = vmax.xlane.f32.xlu0 %v5930
    %v5932 = vpop.xlane.xlu0 %5931
    %v5933 = vmax.f32 %v5725, %v5838
    %5934 = vmax.xlane.f32.xlu0 %v5933
    %v5935 = vpop.xlane.xlu0 %5934
    %v5936 = vmax.f32 %v5728, %v5841
    %5937 = vmax.xlane.f32.xlu0 %v5936
    %v5938 = vpop.xlane.xlu0 %5937
    %v5939 = vmax.f32 %v5731, %v5844
    %5940 = vmax.xlane.f32.xlu0 %v5939
    %v5941 = vpop.xlane.xlu0 %5940
    %v5942 = vmax.f32 %v5734, %v5847
    %5943 = vmax.xlane.f32.xlu0 %v5942
    %v5944 = vpop.xlane.xlu0 %5943
    %v5945 = vmax.f32 %v5737, %v5850
    %5946 = vmax.xlane.f32.xlu0 %v5945
    %v5947 = vpop.xlane.xlu0 %5946
    %v5948 = vmax.f32 %v5740, %v5853
    %5949 = vmax.xlane.f32.xlu0 %v5948
    %v5950 = vpop.xlane.xlu0 %5949
    %v5951 = vmax.f32 %v5743, %v5856
    %5952 = vmax.xlane.f32.xlu0 %v5951
    %v5953 = vpop.xlane.xlu0 %5952
    %v5954 = vmax.f32 %v5746, %v5859
    %5955 = vmax.xlane.f32.xlu0 %v5954
    %v5956 = vpop.xlane.xlu0 %5955
    %v5957 = vmax.f32 %v5749, %v5862
    %5958 = vmax.xlane.f32.xlu0 %v5957
    %v5959 = vpop.xlane.xlu0 %5958
    %v5960 = vmax.f32 %v5752, %v5865
    %5961 = vmax.xlane.f32.xlu0 %v5960
    %v5962 = vpop.xlane.xlu0 %5961
    %v5963 = vsub.f32 %v5659, %v5869
    %v5964 = vsub.f32 %v5772, %v5869
    %v5965 = vsub.f32 %v5662, %v5872
    %v5966 = vsub.f32 %v5775, %v5872
    %v5967 = vsub.f32 %v5665, %v5875
    %v5968 = vsub.f32 %v5778, %v5875
    %v5969 = vsub.f32 %v5668, %v5878
    %v5970 = vsub.f32 %v5781, %v5878
    %v5971 = vsub.f32 %v5671, %v5881
    %v5972 = vsub.f32 %v5784, %v5881
    %v5973 = vsub.f32 %v5674, %v5884
    %v5974 = vsub.f32 %v5787, %v5884
    %v5975 = vsub.f32 %v5677, %v5887
    %v5976 = vsub.f32 %v5790, %v5887
    %v5977 = vsub.f32 %v5680, %v5890
    %v5978 = vsub.f32 %v5793, %v5890
    %v5979 = vsub.f32 %v5683, %v5893
    %v5980 = vsub.f32 %v5796, %v5893
    %v5981 = vsub.f32 %v5686, %v5896
    %v5982 = vsub.f32 %v5799, %v5896
    %v5983 = vsub.f32 %v5689, %v5899
    %v5984 = vsub.f32 %v5802, %v5899
    %v5985 = vsub.f32 %v5692, %v5902
    %v5986 = vsub.f32 %v5805, %v5902
    %v5987 = vsub.f32 %v5695, %v5905
    %v5988 = vsub.f32 %v5808, %v5905
    %v5989 = vsub.f32 %v5698, %v5908
    %v5990 = vsub.f32 %v5811, %v5908
    %v5991 = vsub.f32 %v5701, %v5911
    %v5992 = vsub.f32 %v5814, %v5911
    %v5993 = vsub.f32 %v5704, %v5914
    %v5994 = vsub.f32 %v5817, %v5914
    %v5995 = vsub.f32 %v5707, %v5917
    %v5996 = vsub.f32 %v5820, %v5917
    %v5997 = vsub.f32 %v5710, %v5920
    %v5998 = vsub.f32 %v5823, %v5920
    %v5999 = vsub.f32 %v5713, %v5923
    %v6000 = vsub.f32 %v5826, %v5923
    %v6001 = vsub.f32 %v5716, %v5926
    %v6002 = vsub.f32 %v5829, %v5926
    %v6003 = vsub.f32 %v5719, %v5929
    %v6004 = vsub.f32 %v5832, %v5929
    %v6005 = vsub.f32 %v5722, %v5932
    %v6006 = vsub.f32 %v5835, %v5932
    %v6007 = vsub.f32 %v5725, %v5935
    %v6008 = vsub.f32 %v5838, %v5935
    %v6009 = vsub.f32 %v5728, %v5938
    %v6010 = vsub.f32 %v5841, %v5938
    %v6011 = vsub.f32 %v5731, %v5941
    %v6012 = vsub.f32 %v5844, %v5941
    %v6013 = vsub.f32 %v5734, %v5944
    %v6014 = vsub.f32 %v5847, %v5944
    %v6015 = vsub.f32 %v5737, %v5947
    %v6016 = vsub.f32 %v5850, %v5947
    %v6017 = vsub.f32 %v5740, %v5950
    %v6018 = vsub.f32 %v5853, %v5950
    %v6019 = vsub.f32 %v5743, %v5953
    %v6020 = vsub.f32 %v5856, %v5953
    %v6021 = vsub.f32 %v5746, %v5956
    %v6022 = vsub.f32 %v5859, %v5956
    %v6023 = vsub.f32 %v5749, %v5959
    %v6024 = vsub.f32 %v5862, %v5959
    %v6025 = vsub.f32 %v5752, %v5962
    %v6026 = vsub.f32 %v5865, %v5962
    %v6027 = vmul.f32 %v5963, 1.442695
    %v6028 = vpow.pop %v6027
    %v6029 = vmul.f32 %v5964, 1.442695
    %v6030 = vpow.pop %v6029
    %v6031 = vmul.f32 %v5965, 1.442695
    %v6032 = vpow.pop %v6031
    %v6033 = vmul.f32 %v5966, 1.442695
    %v6034 = vpow.pop %v6033
    %v6035 = vmul.f32 %v5967, 1.442695
    %v6036 = vpow.pop %v6035
    %v6037 = vmul.f32 %v5968, 1.442695
    %v6038 = vpow.pop %v6037
    %v6039 = vmul.f32 %v5969, 1.442695
    %v6040 = vpow.pop %v6039
    %v6041 = vmul.f32 %v5970, 1.442695
    %v6042 = vpow.pop %v6041
    %v6043 = vmul.f32 %v5971, 1.442695
    %v6044 = vpow.pop %v6043
    %v6045 = vmul.f32 %v5972, 1.442695
    %v6046 = vpow.pop %v6045
    %v6047 = vmul.f32 %v5973, 1.442695
    %v6048 = vpow.pop %v6047
    %v6049 = vmul.f32 %v5974, 1.442695
    %v6050 = vpow.pop %v6049
    %v6051 = vmul.f32 %v5975, 1.442695
    %v6052 = vpow.pop %v6051
    %v6053 = vmul.f32 %v5976, 1.442695
    %v6054 = vpow.pop %v6053
    %v6055 = vmul.f32 %v5977, 1.442695
    %v6056 = vpow.pop %v6055
    %v6057 = vmul.f32 %v5978, 1.442695
    %v6058 = vpow.pop %v6057
    %v6059 = vmul.f32 %v5979, 1.442695
    %v6060 = vpow.pop %v6059
    %v6061 = vmul.f32 %v5980, 1.442695
    %v6062 = vpow.pop %v6061
    %v6063 = vmul.f32 %v5981, 1.442695
    %v6064 = vpow.pop %v6063
    %v6065 = vmul.f32 %v5982, 1.442695
    %v6066 = vpow.pop %v6065
    %v6067 = vmul.f32 %v5983, 1.442695
    %v6068 = vpow.pop %v6067
    %v6069 = vmul.f32 %v5984, 1.442695
    %v6070 = vpow.pop %v6069
    %v6071 = vmul.f32 %v5985, 1.442695
    %v6072 = vpow.pop %v6071
    %v6073 = vmul.f32 %v5986, 1.442695
    %v6074 = vpow.pop %v6073
    %v6075 = vmul.f32 %v5987, 1.442695
    %v6076 = vpow.pop %v6075
    %v6077 = vmul.f32 %v5988, 1.442695
    %v6078 = vpow.pop %v6077
    %v6079 = vmul.f32 %v5989, 1.442695
    %v6080 = vpow.pop %v6079
    %v6081 = vmul.f32 %v5990, 1.442695
    %v6082 = vpow.pop %v6081
    %v6083 = vmul.f32 %v5991, 1.442695
    %v6084 = vpow.pop %v6083
    %v6085 = vmul.f32 %v5992, 1.442695
    %v6086 = vpow.pop %v6085
    %v6087 = vmul.f32 %v5993, 1.442695
    %v6088 = vpow.pop %v6087
    %v6089 = vmul.f32 %v5994, 1.442695
    %v6090 = vpow.pop %v6089
    %v6091 = vmul.f32 %v5995, 1.442695
    %v6092 = vpow.pop %v6091
    %v6093 = vmul.f32 %v5996, 1.442695
    %v6094 = vpow.pop %v6093
    %v6095 = vmul.f32 %v5997, 1.442695
    %v6096 = vpow.pop %v6095
    %v6097 = vmul.f32 %v5998, 1.442695
    %v6098 = vpow.pop %v6097
    %v6099 = vmul.f32 %v5999, 1.442695
    %v6100 = vpow.pop %v6099
    %v6101 = vmul.f32 %v6000, 1.442695
    %v6102 = vpow.pop %v6101
    %v6103 = vmul.f32 %v6001, 1.442695
    %v6104 = vpow.pop %v6103
    %v6105 = vmul.f32 %v6002, 1.442695
    %v6106 = vpow.pop %v6105
    %v6107 = vmul.f32 %v6003, 1.442695
    %v6108 = vpow.pop %v6107
    %v6109 = vmul.f32 %v6004, 1.442695
    %v6110 = vpow.pop %v6109
    %v6111 = vmul.f32 %v6005, 1.442695
    %v6112 = vpow.pop %v6111
    %v6113 = vmul.f32 %v6006, 1.442695
    %v6114 = vpow.pop %v6113
    %v6115 = vmul.f32 %v6007, 1.442695
    %v6116 = vpow.pop %v6115
    %v6117 = vmul.f32 %v6008, 1.442695
    %v6118 = vpow.pop %v6117
    %v6119 = vmul.f32 %v6009, 1.442695
    %v6120 = vpow.pop %v6119
    %v6121 = vmul.f32 %v6010, 1.442695
    %v6122 = vpow.pop %v6121
    %v6123 = vmul.f32 %v6011, 1.442695
    %v6124 = vpow.pop %v6123
    %v6125 = vmul.f32 %v6012, 1.442695
    %v6126 = vpow.pop %v6125
    %v6127 = vmul.f32 %v6013, 1.442695
    %v6128 = vpow.pop %v6127
    %v6129 = vmul.f32 %v6014, 1.442695
    %v6130 = vpow.pop %v6129
    %v6131 = vmul.f32 %v6015, 1.442695
    %v6132 = vpow.pop %v6131
    %v6133 = vmul.f32 %v6016, 1.442695
    %v6134 = vpow.pop %v6133
    %v6135 = vmul.f32 %v6017, 1.442695
    %v6136 = vpow.pop %v6135
    %v6137 = vmul.f32 %v6018, 1.442695
    %v6138 = vpow.pop %v6137
    %v6139 = vmul.f32 %v6019, 1.442695
    %v6140 = vpow.pop %v6139
    %v6141 = vmul.f32 %v6020, 1.442695
    %v6142 = vpow.pop %v6141
    %v6143 = vmul.f32 %v6021, 1.442695
    %v6144 = vpow.pop %v6143
    %v6145 = vmul.f32 %v6022, 1.442695
    %v6146 = vpow.pop %v6145
    %v6147 = vmul.f32 %v6023, 1.442695
    %v6148 = vpow.pop %v6147
    %v6149 = vmul.f32 %v6024, 1.442695
    %v6150 = vpow.pop %v6149
    %v6151 = vmul.f32 %v6025, 1.442695
    %v6152 = vpow.pop %v6151
    %v6153 = vmul.f32 %v6026, 1.442695
    %v6154 = vpow.pop %v6153
    %v6155 = vadd.f32 %v6028, %v6030
    %6156 = vadd.xlane.f32.xlu0 %v6155
    %v6157 = vpop.xlane.xlu0 %6156
    %v6158 = vadd.f32 %v6032, %v6034
    %6159 = vadd.xlane.f32.xlu0 %v6158
    %v6160 = vpop.xlane.xlu0 %6159
    %v6161 = vadd.f32 %v6036, %v6038
    %6162 = vadd.xlane.f32.xlu0 %v6161
    %v6163 = vpop.xlane.xlu0 %6162
    %v6164 = vadd.f32 %v6040, %v6042
    %6165 = vadd.xlane.f32.xlu0 %v6164
    %v6166 = vpop.xlane.xlu0 %6165
    %v6167 = vadd.f32 %v6044, %v6046
    %6168 = vadd.xlane.f32.xlu0 %v6167
    %v6169 = vpop.xlane.xlu0 %6168
    %v6170 = vadd.f32 %v6048, %v6050
    %6171 = vadd.xlane.f32.xlu0 %v6170
    %v6172 = vpop.xlane.xlu0 %6171
    %v6173 = vadd.f32 %v6052, %v6054
    %6174 = vadd.xlane.f32.xlu0 %v6173
    %v6175 = vpop.xlane.xlu0 %6174
    %v6176 = vadd.f32 %v6056, %v6058
    %6177 = vadd.xlane.f32.xlu0 %v6176
    %v6178 = vpop.xlane.xlu0 %6177
    %v6179 = vadd.f32 %v6060, %v6062
    %6180 = vadd.xlane.f32.xlu0 %v6179
    %v6181 = vpop.xlane.xlu0 %6180
    %v6182 = vadd.f32 %v6064, %v6066
    %6183 = vadd.xlane.f32.xlu0 %v6182
    %v6184 = vpop.xlane.xlu0 %6183
    %v6185 = vadd.f32 %v6068, %v6070
    %6186 = vadd.xlane.f32.xlu0 %v6185
    %v6187 = vpop.xlane.xlu0 %6186
    %v6188 = vadd.f32 %v6072, %v6074
    %6189 = vadd.xlane.f32.xlu0 %v6188
    %v6190 = vpop.xlane.xlu0 %6189
    %v6191 = vadd.f32 %v6076, %v6078
    %6192 = vadd.xlane.f32.xlu0 %v6191
    %v6193 = vpop.xlane.xlu0 %6192
    %v6194 = vadd.f32 %v6080, %v6082
    %6195 = vadd.xlane.f32.xlu0 %v6194
    %v6196 = vpop.xlane.xlu0 %6195
    %v6197 = vadd.f32 %v6084, %v6086
    %6198 = vadd.xlane.f32.xlu0 %v6197
    %v6199 = vpop.xlane.xlu0 %6198
    %v6200 = vadd.f32 %v6088, %v6090
    %6201 = vadd.xlane.f32.xlu0 %v6200
    %v6202 = vpop.xlane.xlu0 %6201
    %v6203 = vadd.f32 %v6092, %v6094
    %6204 = vadd.xlane.f32.xlu0 %v6203
    %v6205 = vpop.xlane.xlu0 %6204
    %v6206 = vadd.f32 %v6096, %v6098
    %6207 = vadd.xlane.f32.xlu0 %v6206
    %v6208 = vpop.xlane.xlu0 %6207
    %v6209 = vadd.f32 %v6100, %v6102
    %6210 = vadd.xlane.f32.xlu0 %v6209
    %v6211 = vpop.xlane.xlu0 %6210
    %v6212 = vadd.f32 %v6104, %v6106
    %6213 = vadd.xlane.f32.xlu0 %v6212
    %v6214 = vpop.xlane.xlu0 %6213
    %v6215 = vadd.f32 %v6108, %v6110
    %6216 = vadd.xlane.f32.xlu0 %v6215
    %v6217 = vpop.xlane.xlu0 %6216
    %v6218 = vadd.f32 %v6112, %v6114
    %6219 = vadd.xlane.f32.xlu0 %v6218
    %v6220 = vpop.xlane.xlu0 %6219
    %v6221 = vadd.f32 %v6116, %v6118
    %6222 = vadd.xlane.f32.xlu0 %v6221
    %v6223 = vpop.xlane.xlu0 %6222
    %v6224 = vadd.f32 %v6120, %v6122
    %6225 = vadd.xlane.f32.xlu0 %v6224
    %v6226 = vpop.xlane.xlu0 %6225
    %v6227 = vadd.f32 %v6124, %v6126
    %6228 = vadd.xlane.f32.xlu0 %v6227
    %v6229 = vpop.xlane.xlu0 %6228
    %v6230 = vadd.f32 %v6128, %v6130
    %6231 = vadd.xlane.f32.xlu0 %v6230
    %v6232 = vpop.xlane.xlu0 %6231
    %v6233 = vadd.f32 %v6132, %v6134
    %6234 = vadd.xlane.f32.xlu0 %v6233
    %v6235 = vpop.xlane.xlu0 %6234
    %v6236 = vadd.f32 %v6136, %v6138
    %6237 = vadd.xlane.f32.xlu0 %v6236
    %v6238 = vpop.xlane.xlu0 %6237
    %v6239 = vadd.f32 %v6140, %v6142
    %6240 = vadd.xlane.f32.xlu0 %v6239
    %v6241 = vpop.xlane.xlu0 %6240
    %v6242 = vadd.f32 %v6144, %v6146
    %6243 = vadd.xlane.f32.xlu0 %v6242
    %v6244 = vpop.xlane.xlu0 %6243
    %v6245 = vadd.f32 %v6148, %v6150
    %6246 = vadd.xlane.f32.xlu0 %v6245
    %v6247 = vpop.xlane.xlu0 %6246
    %v6248 = vadd.f32 %v6152, %v6154
    %6249 = vadd.xlane.f32.xlu0 %v6248
    %v6250 = vpop.xlane.xlu0 %6249
    %v6251 = vrcp.pop %v6157
    %v6252 = vrcp.pop %v6160
    %v6253 = vrcp.pop %v6163
    %v6254 = vrcp.pop %v6166
    %v6255 = vrcp.pop %v6169
    %v6256 = vrcp.pop %v6172
    %v6257 = vrcp.pop %v6175
    %v6258 = vrcp.pop %v6178
    %v6259 = vrcp.pop %v6181
    %v6260 = vrcp.pop %v6184
    %v6261 = vrcp.pop %v6187
    %v6262 = vrcp.pop %v6190
    %v6263 = vrcp.pop %v6193
    %v6264 = vrcp.pop %v6196
    %v6265 = vrcp.pop %v6199
    %v6266 = vrcp.pop %v6202
    %v6267 = vrcp.pop %v6205
    %v6268 = vrcp.pop %v6208
    %v6269 = vrcp.pop %v6211
    %v6270 = vrcp.pop %v6214
    %v6271 = vrcp.pop %v6217
    %v6272 = vrcp.pop %v6220
    %v6273 = vrcp.pop %v6223
    %v6274 = vrcp.pop %v6226
    %v6275 = vrcp.pop %v6229
    %v6276 = vrcp.pop %v6232
    %v6277 = vrcp.pop %v6235
    %v6278 = vrcp.pop %v6238
    %v6279 = vrcp.pop %v6241
    %v6280 = vrcp.pop %v6244
    %v6281 = vrcp.pop %v6247
    %v6282 = vrcp.pop %v6250
    %v6283 = vmul.f32 %v6028, %v6251
    %v6284 = vmul.f32 %v6030, %v6251
    %v6285 = vmul.f32 %v6032, %v6252
    %v6286 = vmul.f32 %v6034, %v6252
    %v6287 = vmul.f32 %v6036, %v6253
    %v6288 = vmul.f32 %v6038, %v6253
    %v6289 = vmul.f32 %v6040, %v6254
    %v6290 = vmul.f32 %v6042, %v6254
    %v6291 = vmul.f32 %v6044, %v6255
    %v6292 = vmul.f32 %v6046, %v6255
    %v6293 = vmul.f32 %v6048, %v6256
    %v6294 = vmul.f32 %v6050, %v6256
    %v6295 = vmul.f32 %v6052, %v6257
    %v6296 = vmul.f32 %v6054, %v6257
    %v6297 = vmul.f32 %v6056, %v6258
    %v6298 = vmul.f32 %v6058, %v6258
    %v6299 = vmul.f32 %v6060, %v6259
    %v6300 = vmul.f32 %v6062, %v6259
    %v6301 = vmul.f32 %v6064, %v6260
    %v6302 = vmul.f32 %v6066, %v6260
    %v6303 = vmul.f32 %v6068, %v6261
    %v6304 = vmul.f32 %v6070, %v6261
    %v6305 = vmul.f32 %v6072, %v6262
    %v6306 = vmul.f32 %v6074, %v6262
    %v6307 = vmul.f32 %v6076, %v6263
    %v6308 = vmul.f32 %v6078, %v6263
    %v6309 = vmul.f32 %v6080, %v6264
    %v6310 = vmul.f32 %v6082, %v6264
    %v6311 = vmul.f32 %v6084, %v6265
    %v6312 = vmul.f32 %v6086, %v6265
    %v6313 = vmul.f32 %v6088, %v6266
    %v6314 = vmul.f32 %v6090, %v6266
    %v6315 = vmul.f32 %v6092, %v6267
    %v6316 = vmul.f32 %v6094, %v6267
    %v6317 = vmul.f32 %v6096, %v6268
    %v6318 = vmul.f32 %v6098, %v6268
    %v6319 = vmul.f32 %v6100, %v6269
    %v6320 = vmul.f32 %v6102, %v6269
    %v6321 = vmul.f32 %v6104, %v6270
    %v6322 = vmul.f32 %v6106, %v6270
    %v6323 = vmul.f32 %v6108, %v6271
    %v6324 = vmul.f32 %v6110, %v6271
    %v6325 = vmul.f32 %v6112, %v6272
    %v6326 = vmul.f32 %v6114, %v6272
    %v6327 = vmul.f32 %v6116, %v6273
    %v6328 = vmul.f32 %v6118, %v6273
    %v6329 = vmul.f32 %v6120, %v6274
    %v6330 = vmul.f32 %v6122, %v6274
    %v6331 = vmul.f32 %v6124, %v6275
    %v6332 = vmul.f32 %v6126, %v6275
    %v6333 = vmul.f32 %v6128, %v6276
    %v6334 = vmul.f32 %v6130, %v6276
    %v6335 = vmul.f32 %v6132, %v6277
    %v6336 = vmul.f32 %v6134, %v6277
    %v6337 = vmul.f32 %v6136, %v6278
    %v6338 = vmul.f32 %v6138, %v6278
    %v6339 = vmul.f32 %v6140, %v6279
    %v6340 = vmul.f32 %v6142, %v6279
    %v6341 = vmul.f32 %v6144, %v6280
    %v6342 = vmul.f32 %v6146, %v6280
    %v6343 = vmul.f32 %v6148, %v6281
    %v6344 = vmul.f32 %v6150, %v6281
    %v6345 = vmul.f32 %v6152, %v6282
    %v6346 = vmul.f32 %v6154, %v6282
    %6347 = vmatpush.xpose.msra.mxu0 %v6313
    %6348 = vmatpush.xpose.msra.mxu0 %v6311
    %6349 = vmatpush.xpose.msra.mxu0 %v6309
    %6350 = vmatpush.xpose.msra.mxu0 %v6307
    %6351 = vmatpush.xpose.msra.mxu0 %v6305
    %6352 = vmatpush.xpose.msra.mxu0 %v6303
    %6353 = vmatpush.xpose.msra.mxu0 %v6301
    %6354 = vmatpush.xpose.msra.mxu0 %v6299
    %6355 = vmatpush.xpose.msra.mxu0 %v6297
    %6356 = vmatpush.xpose.msra.mxu0 %v6295
    %6357 = vmatpush.xpose.msra.mxu0 %v6293
    %6358 = vmatpush.xpose.msra.mxu0 %v6291
    %6359 = vmatpush.xpose.msra.mxu0 %v6289
    %6360 = vmatpush.xpose.msra.mxu0 %v6287
    %6361 = vmatpush.xpose.msra.mxu0 %v6285
    %6362 = vmatpush.xpose.msra.mxu0 %v6283
    %6363 = vmatmul.f32.gmra.mxu0 %v4474
    %v6364 = vpop.f32.mrf.mxu0
    %v6365 = vadd.f32 0.0, %v6364
    %6366 = vdwg.mxu0
    %6367 = vmatpush.xpose.msra.mxu0 %v6314
    %6368 = vmatpush.xpose.msra.mxu0 %v6312
    %6369 = vmatpush.xpose.msra.mxu0 %v6310
    %6370 = vmatpush.xpose.msra.mxu0 %v6308
    %6371 = vmatpush.xpose.msra.mxu0 %v6306
    %6372 = vmatpush.xpose.msra.mxu0 %v6304
    %6373 = vmatpush.xpose.msra.mxu0 %v6302
    %6374 = vmatpush.xpose.msra.mxu0 %v6300
    %6375 = vmatpush.xpose.msra.mxu0 %v6298
    %6376 = vmatpush.xpose.msra.mxu0 %v6296
    %6377 = vmatpush.xpose.msra.mxu0 %v6294
    %6378 = vmatpush.xpose.msra.mxu0 %v6292
    %6379 = vmatpush.xpose.msra.mxu0 %v6290
    %6380 = vmatpush.xpose.msra.mxu0 %v6288
    %6381 = vmatpush.xpose.msra.mxu0 %v6286
    %6382 = vmatpush.xpose.msra.mxu0 %v6284
    %6383 = vmatmul.f32.gmra.mxu0 %v4527
    %v6384 = vpop.f32.mrf.mxu0
    %v6385 = vadd.f32 %v6365, %v6384
    %6386 = vdwg.mxu0
    %6387 = vmatpush.xpose.msra.mxu0 %v6345
    %6388 = vmatpush.xpose.msra.mxu0 %v6343
    %6389 = vmatpush.xpose.msra.mxu0 %v6341
    %6390 = vmatpush.xpose.msra.mxu0 %v6339
    %6391 = vmatpush.xpose.msra.mxu0 %v6337
    %6392 = vmatpush.xpose.msra.mxu0 %v6335
    %6393 = vmatpush.xpose.msra.mxu0 %v6333
    %6394 = vmatpush.xpose.msra.mxu0 %v6331
    %6395 = vmatpush.xpose.msra.mxu0 %v6329
    %6396 = vmatpush.xpose.msra.mxu0 %v6327
    %6397 = vmatpush.xpose.msra.mxu0 %v6325
    %6398 = vmatpush.xpose.msra.mxu0 %v6323
    %6399 = vmatpush.xpose.msra.mxu0 %v6321
    %6400 = vmatpush.xpose.msra.mxu0 %v6319
    %6401 = vmatpush.xpose.msra.mxu0 %v6317
    %6402 = vmatpush.xpose.msra.mxu0 %v6315
    %6403 = vmatmul.f32.gmra.mxu0 %v4474
    %v6404 = vpop.f32.mrf.mxu0
    %v6405 = vadd.f32 0.0, %v6404
    %6406 = vdwg.mxu0
    %6407 = vmatpush.xpose.msra.mxu0 %v6346
    %6408 = vmatpush.xpose.msra.mxu0 %v6344
    %6409 = vmatpush.xpose.msra.mxu0 %v6342
    %6410 = vmatpush.xpose.msra.mxu0 %v6340
    %6411 = vmatpush.xpose.msra.mxu0 %v6338
    %6412 = vmatpush.xpose.msra.mxu0 %v6336
    %6413 = vmatpush.xpose.msra.mxu0 %v6334
    %6414 = vmatpush.xpose.msra.mxu0 %v6332
    %6415 = vmatpush.xpose.msra.mxu0 %v6330
    %6416 = vmatpush.xpose.msra.mxu0 %v6328
    %6417 = vmatpush.xpose.msra.mxu0 %v6326
    %6418 = vmatpush.xpose.msra.mxu0 %v6324
    %6419 = vmatpush.xpose.msra.mxu0 %v6322
    %6420 = vmatpush.xpose.msra.mxu0 %v6320
    %6421 = vmatpush.xpose.msra.mxu0 %v6318
    %6422 = vmatpush.xpose.msra.mxu0 %v6316
    %6423 = vmatmul.f32.gmra.mxu0 %v4527
    %v6424 = vpop.f32.mrf.mxu0
    %v6425 = vadd.f32 %v6405, %v6424
    %6426 = vdwg.mxu0
    %6427 = vxpose.xlu0.b32.start [1/16] %v4453, 128
    %6428 = vxpose.xlu0.b32.cont [2/16] 0.0, 128
    %6429 = vxpose.xlu0.b32.cont [3/16] 0.0, 128
    %6430 = vxpose.xlu0.b32.cont [4/16] 0.0, 128
    %6431 = vxpose.xlu0.b32.cont [5/16] 0.0, 128
    %6432 = vxpose.xlu0.b32.cont [6/16] 0.0, 128
    %6433 = vxpose.xlu0.b32.cont [7/16] 0.0, 128
    %6434 = vxpose.xlu0.b32.cont [8/16] 0.0, 128
    %6435 = vxpose.xlu0.b32.cont [9/16] 0.0, 128
    %6436 = vxpose.xlu0.b32.cont [10/16] 0.0, 128
    %6437 = vxpose.xlu0.b32.cont [11/16] 0.0, 128
    %6438 = vxpose.xlu0.b32.cont [12/16] 0.0, 128
    %6439 = vxpose.xlu0.b32.cont [13/16] 0.0, 128
    %6440 = vxpose.xlu0.b32.cont [14/16] 0.0, 128
    %6441 = vxpose.xlu0.b32.cont [15/16] 0.0, 128
    %6442 = vxpose.xlu0.b32.end [16/16] 0.0, 128
    %v6443 = vpop.trf.xlu0
    %v6444 = vpop.trf.xlu0
    %v6445 = vpop.trf.xlu0
    %v6446 = vpop.trf.xlu0
    %v6447 = vpop.trf.xlu0
    %v6448 = vpop.trf.xlu0
    %v6449 = vpop.trf.xlu0
    %v6450 = vpop.trf.xlu0
    %v6451 = vpop.trf.xlu0
    %v6452 = vpop.trf.xlu0
    %v6453 = vpop.trf.xlu0
    %v6454 = vpop.trf.xlu0
    %v6455 = vpop.trf.xlu0
    %v6456 = vpop.trf.xlu0
    %v6457 = vpop.trf.xlu0
    %v6458 = vpop.trf.xlu0
    %6459 = vxpose.xlu0.b32.start [1/16] %v4506, 128
    %6460 = vxpose.xlu0.b32.cont [2/16] 0.0, 128
    %6461 = vxpose.xlu0.b32.cont [3/16] 0.0, 128
    %6462 = vxpose.xlu0.b32.cont [4/16] 0.0, 128
    %6463 = vxpose.xlu0.b32.cont [5/16] 0.0, 128
    %6464 = vxpose.xlu0.b32.cont [6/16] 0.0, 128
    %6465 = vxpose.xlu0.b32.cont [7/16] 0.0, 128
    %6466 = vxpose.xlu0.b32.cont [8/16] 0.0, 128
    %6467 = vxpose.xlu0.b32.cont [9/16] 0.0, 128
    %6468 = vxpose.xlu0.b32.cont [10/16] 0.0, 128
    %6469 = vxpose.xlu0.b32.cont [11/16] 0.0, 128
    %6470 = vxpose.xlu0.b32.cont [12/16] 0.0, 128
    %6471 = vxpose.xlu0.b32.cont [13/16] 0.0, 128
    %6472 = vxpose.xlu0.b32.cont [14/16] 0.0, 128
    %6473 = vxpose.xlu0.b32.cont [15/16] 0.0, 128
    %6474 = vxpose.xlu0.b32.end [16/16] 0.0, 128
    %v6475 = vpop.trf.xlu0
    %v6476 = vpop.trf.xlu0
    %v6477 = vpop.trf.xlu0
    %v6478 = vpop.trf.xlu0
    %v6479 = vpop.trf.xlu0
    %v6480 = vpop.trf.xlu0
    %v6481 = vpop.trf.xlu0
    %v6482 = vpop.trf.xlu0
    %v6483 = vpop.trf.xlu0
    %v6484 = vpop.trf.xlu0
    %v6485 = vpop.trf.xlu0
    %v6486 = vpop.trf.xlu0
    %v6487 = vpop.trf.xlu0
    %v6488 = vpop.trf.xlu0
    %v6489 = vpop.trf.xlu0
    %v6490 = vpop.trf.xlu0
    %v6492 = vsel %vm491, %v6443, 0
    %v6495 = vsel %vm491, %v6444, 0
    %v6498 = vsel %vm491, %v6445, 0
    %v6501 = vsel %vm491, %v6446, 0
    %v6504 = vsel %vm491, %v6447, 0
    %v6507 = vsel %vm491, %v6448, 0
    %v6510 = vsel %vm491, %v6449, 0
    %v6513 = vsel %vm491, %v6450, 0
    %v6516 = vsel %vm491, %v6451, 0
    %v6519 = vsel %vm491, %v6452, 0
    %v6522 = vsel %vm491, %v6453, 0
    %v6525 = vsel %vm491, %v6454, 0
    %v6528 = vsel %vm491, %v6455, 0
    %v6531 = vsel %vm491, %v6456, 0
    %v6534 = vsel %vm491, %v6457, 0
    %v6537 = vsel %vm491, %v6458, 0
    %v6540 = vsel %vm491, %v6475, 0
    %v6543 = vsel %vm491, %v6476, 0
    %v6546 = vsel %vm491, %v6477, 0
    %v6549 = vsel %vm491, %v6478, 0
    %v6552 = vsel %vm491, %v6479, 0
    %v6555 = vsel %vm491, %v6480, 0
    %v6558 = vsel %vm491, %v6481, 0
    %v6561 = vsel %vm491, %v6482, 0
    %v6564 = vsel %vm491, %v6483, 0
    %v6567 = vsel %vm491, %v6484, 0
    %v6570 = vsel %vm491, %v6485, 0
    %v6573 = vsel %vm491, %v6486, 0
    %v6576 = vsel %vm491, %v6487, 0
    %v6579 = vsel %vm491, %v6488, 0
    %v6582 = vsel %vm491, %v6489, 0
    %v6585 = vsel %vm491, %v6490, 0
    %6587 = vmatpush.msra.mxu0 0.0
    %6588 = vmatpush.msra.mxu0 0.0
    %6589 = vmatpush.msra.mxu0 0.0
    %6590 = vmatpush.msra.mxu0 0.0
    %6591 = vmatpush.msra.mxu0 0.0
    %6592 = vmatpush.msra.mxu0 0.0
    %6593 = vmatpush.msra.mxu0 0.0
    %6594 = vmatpush.msra.mxu0 0.0
    %6595 = vmatpush.msra.mxu0 0.0
    %6596 = vmatpush.msra.mxu0 0.0
    %6597 = vmatpush.msra.mxu0 0.0
    %6598 = vmatpush.msra.mxu0 0.0
    %6599 = vmatpush.msra.mxu0 0.0
    %6600 = vmatpush.msra.mxu0 0.0
    %6601 = vmatpush.msra.mxu0 0.0
    %6602 = vmatpush.msra.mxu0 %v4465
    %6603 = vmatmul.f32.gmra.mxu0 %v6492
    %v6604 = vpop.f32.mrf.mxu0
    %v6605 = vadd.f32 0.0, %v6604
    %6606 = vmatmul.f32.gmra.mxu0 %v6495
    %v6607 = vpop.f32.mrf.mxu0
    %v6608 = vadd.f32 0.0, %v6607
    %6609 = vmatmul.f32.gmra.mxu0 %v6498
    %v6610 = vpop.f32.mrf.mxu0
    %v6611 = vadd.f32 0.0, %v6610
    %6612 = vmatmul.f32.gmra.mxu0 %v6501
    %v6613 = vpop.f32.mrf.mxu0
    %v6614 = vadd.f32 0.0, %v6613
    %6615 = vmatmul.f32.gmra.mxu0 %v6504
    %v6616 = vpop.f32.mrf.mxu0
    %v6617 = vadd.f32 0.0, %v6616
    %6618 = vmatmul.f32.gmra.mxu0 %v6507
    %v6619 = vpop.f32.mrf.mxu0
    %v6620 = vadd.f32 0.0, %v6619
    %6621 = vmatmul.f32.gmra.mxu0 %v6510
    %v6622 = vpop.f32.mrf.mxu0
    %v6623 = vadd.f32 0.0, %v6622
    %6624 = vmatmul.f32.gmra.mxu0 %v6513
    %v6625 = vpop.f32.mrf.mxu0
    %v6626 = vadd.f32 0.0, %v6625
    %6627 = vmatmul.f32.gmra.mxu0 %v6516
    %v6628 = vpop.f32.mrf.mxu0
    %v6629 = vadd.f32 0.0, %v6628
    %6630 = vmatmul.f32.gmra.mxu0 %v6519
    %v6631 = vpop.f32.mrf.mxu0
    %v6632 = vadd.f32 0.0, %v6631
    %6633 = vmatmul.f32.gmra.mxu0 %v6522
    %v6634 = vpop.f32.mrf.mxu0
    %v6635 = vadd.f32 0.0, %v6634
    %6636 = vmatmul.f32.gmra.mxu0 %v6525
    %v6637 = vpop.f32.mrf.mxu0
    %v6638 = vadd.f32 0.0, %v6637
    %6639 = vmatmul.f32.gmra.mxu0 %v6528
    %v6640 = vpop.f32.mrf.mxu0
    %v6641 = vadd.f32 0.0, %v6640
    %6642 = vmatmul.f32.gmra.mxu0 %v6531
    %v6643 = vpop.f32.mrf.mxu0
    %v6644 = vadd.f32 0.0, %v6643
    %6645 = vmatmul.f32.gmra.mxu0 %v6534
    %v6646 = vpop.f32.mrf.mxu0
    %v6647 = vadd.f32 0.0, %v6646
    %6648 = vmatmul.f32.gmra.mxu0 %v6537
    %v6649 = vpop.f32.mrf.mxu0
    %v6650 = vadd.f32 0.0, %v6649
    %6651 = vmatmul.f32.gmra.mxu0 %v6540
    %v6652 = vpop.f32.mrf.mxu0
    %v6653 = vadd.f32 0.0, %v6652
    %6654 = vmatmul.f32.gmra.mxu0 %v6543
    %v6655 = vpop.f32.mrf.mxu0
    %v6656 = vadd.f32 0.0, %v6655
    %6657 = vmatmul.f32.gmra.mxu0 %v6546
    %v6658 = vpop.f32.mrf.mxu0
    %v6659 = vadd.f32 0.0, %v6658
    %6660 = vmatmul.f32.gmra.mxu0 %v6549
    %v6661 = vpop.f32.mrf.mxu0
    %v6662 = vadd.f32 0.0, %v6661
    %6663 = vmatmul.f32.gmra.mxu0 %v6552
    %v6664 = vpop.f32.mrf.mxu0
    %v6665 = vadd.f32 0.0, %v6664
    %6666 = vmatmul.f32.gmra.mxu0 %v6555
    %v6667 = vpop.f32.mrf.mxu0
    %v6668 = vadd.f32 0.0, %v6667
    %6669 = vmatmul.f32.gmra.mxu0 %v6558
    %v6670 = vpop.f32.mrf.mxu0
    %v6671 = vadd.f32 0.0, %v6670
    %6672 = vmatmul.f32.gmra.mxu0 %v6561
    %v6673 = vpop.f32.mrf.mxu0
    %v6674 = vadd.f32 0.0, %v6673
    %6675 = vmatmul.f32.gmra.mxu0 %v6564
    %v6676 = vpop.f32.mrf.mxu0
    %v6677 = vadd.f32 0.0, %v6676
    %6678 = vmatmul.f32.gmra.mxu0 %v6567
    %v6679 = vpop.f32.mrf.mxu0
    %v6680 = vadd.f32 0.0, %v6679
    %6681 = vmatmul.f32.gmra.mxu0 %v6570
    %v6682 = vpop.f32.mrf.mxu0
    %v6683 = vadd.f32 0.0, %v6682
    %6684 = vmatmul.f32.gmra.mxu0 %v6573
    %v6685 = vpop.f32.mrf.mxu0
    %v6686 = vadd.f32 0.0, %v6685
    %6687 = vmatmul.f32.gmra.mxu0 %v6576
    %v6688 = vpop.f32.mrf.mxu0
    %v6689 = vadd.f32 0.0, %v6688
    %6690 = vmatmul.f32.gmra.mxu0 %v6579
    %v6691 = vpop.f32.mrf.mxu0
    %v6692 = vadd.f32 0.0, %v6691
    %6693 = vmatmul.f32.gmra.mxu0 %v6582
    %v6694 = vpop.f32.mrf.mxu0
    %v6695 = vadd.f32 0.0, %v6694
    %6696 = vmatmul.f32.gmra.mxu0 %v6585
    %v6697 = vpop.f32.mrf.mxu0
    %v6698 = vadd.f32 0.0, %v6697
    %6699 = vdwg.mxu0
    %6700 = vmatpush.msra.mxu0 0.0
    %6701 = vmatpush.msra.mxu0 0.0
    %6702 = vmatpush.msra.mxu0 0.0
    %6703 = vmatpush.msra.mxu0 0.0
    %6704 = vmatpush.msra.mxu0 0.0
    %6705 = vmatpush.msra.mxu0 0.0
    %6706 = vmatpush.msra.mxu0 0.0
    %6707 = vmatpush.msra.mxu0 0.0
    %6708 = vmatpush.msra.mxu0 0.0
    %6709 = vmatpush.msra.mxu0 0.0
    %6710 = vmatpush.msra.mxu0 0.0
    %6711 = vmatpush.msra.mxu0 0.0
    %6712 = vmatpush.msra.mxu0 0.0
    %6713 = vmatpush.msra.mxu0 0.0
    %6714 = vmatpush.msra.mxu0 0.0
    %6715 = vmatpush.msra.mxu0 %v4518
    %6716 = vmatmul.f32.gmra.mxu0 %v6492
    %v6717 = vpop.f32.mrf.mxu0
    %v6718 = vadd.f32 0.0, %v6717
    %6719 = vmatmul.f32.gmra.mxu0 %v6495
    %v6720 = vpop.f32.mrf.mxu0
    %v6721 = vadd.f32 0.0, %v6720
    %6722 = vmatmul.f32.gmra.mxu0 %v6498
    %v6723 = vpop.f32.mrf.mxu0
    %v6724 = vadd.f32 0.0, %v6723
    %6725 = vmatmul.f32.gmra.mxu0 %v6501
    %v6726 = vpop.f32.mrf.mxu0
    %v6727 = vadd.f32 0.0, %v6726
    %6728 = vmatmul.f32.gmra.mxu0 %v6504
    %v6729 = vpop.f32.mrf.mxu0
    %v6730 = vadd.f32 0.0, %v6729
    %6731 = vmatmul.f32.gmra.mxu0 %v6507
    %v6732 = vpop.f32.mrf.mxu0
    %v6733 = vadd.f32 0.0, %v6732
    %6734 = vmatmul.f32.gmra.mxu0 %v6510
    %v6735 = vpop.f32.mrf.mxu0
    %v6736 = vadd.f32 0.0, %v6735
    %6737 = vmatmul.f32.gmra.mxu0 %v6513
    %v6738 = vpop.f32.mrf.mxu0
    %v6739 = vadd.f32 0.0, %v6738
    %6740 = vmatmul.f32.gmra.mxu0 %v6516
    %v6741 = vpop.f32.mrf.mxu0
    %v6742 = vadd.f32 0.0, %v6741
    %6743 = vmatmul.f32.gmra.mxu0 %v6519
    %v6744 = vpop.f32.mrf.mxu0
    %v6745 = vadd.f32 0.0, %v6744
    %6746 = vmatmul.f32.gmra.mxu0 %v6522
    %v6747 = vpop.f32.mrf.mxu0
    %v6748 = vadd.f32 0.0, %v6747
    %6749 = vmatmul.f32.gmra.mxu0 %v6525
    %v6750 = vpop.f32.mrf.mxu0
    %v6751 = vadd.f32 0.0, %v6750
    %6752 = vmatmul.f32.gmra.mxu0 %v6528
    %v6753 = vpop.f32.mrf.mxu0
    %v6754 = vadd.f32 0.0, %v6753
    %6755 = vmatmul.f32.gmra.mxu0 %v6531
    %v6756 = vpop.f32.mrf.mxu0
    %v6757 = vadd.f32 0.0, %v6756
    %6758 = vmatmul.f32.gmra.mxu0 %v6534
    %v6759 = vpop.f32.mrf.mxu0
    %v6760 = vadd.f32 0.0, %v6759
    %6761 = vmatmul.f32.gmra.mxu0 %v6537
    %v6762 = vpop.f32.mrf.mxu0
    %v6763 = vadd.f32 0.0, %v6762
    %6764 = vmatmul.f32.gmra.mxu0 %v6540
    %v6765 = vpop.f32.mrf.mxu0
    %v6766 = vadd.f32 0.0, %v6765
    %6767 = vmatmul.f32.gmra.mxu0 %v6543
    %v6768 = vpop.f32.mrf.mxu0
    %v6769 = vadd.f32 0.0, %v6768
    %6770 = vmatmul.f32.gmra.mxu0 %v6546
    %v6771 = vpop.f32.mrf.mxu0
    %v6772 = vadd.f32 0.0, %v6771
    %6773 = vmatmul.f32.gmra.mxu0 %v6549
    %v6774 = vpop.f32.mrf.mxu0
    %v6775 = vadd.f32 0.0, %v6774
    %6776 = vmatmul.f32.gmra.mxu0 %v6552
    %v6777 = vpop.f32.mrf.mxu0
    %v6778 = vadd.f32 0.0, %v6777
    %6779 = vmatmul.f32.gmra.mxu0 %v6555
    %v6780 = vpop.f32.mrf.mxu0
    %v6781 = vadd.f32 0.0, %v6780
    %6782 = vmatmul.f32.gmra.mxu0 %v6558
    %v6783 = vpop.f32.mrf.mxu0
    %v6784 = vadd.f32 0.0, %v6783
    %6785 = vmatmul.f32.gmra.mxu0 %v6561
    %v6786 = vpop.f32.mrf.mxu0
    %v6787 = vadd.f32 0.0, %v6786
    %6788 = vmatmul.f32.gmra.mxu0 %v6564
    %v6789 = vpop.f32.mrf.mxu0
    %v6790 = vadd.f32 0.0, %v6789
    %6791 = vmatmul.f32.gmra.mxu0 %v6567
    %v6792 = vpop.f32.mrf.mxu0
    %v6793 = vadd.f32 0.0, %v6792
    %6794 = vmatmul.f32.gmra.mxu0 %v6570
    %v6795 = vpop.f32.mrf.mxu0
    %v6796 = vadd.f32 0.0, %v6795
    %6797 = vmatmul.f32.gmra.mxu0 %v6573
    %v6798 = vpop.f32.mrf.mxu0
    %v6799 = vadd.f32 0.0, %v6798
    %6800 = vmatmul.f32.gmra.mxu0 %v6576
    %v6801 = vpop.f32.mrf.mxu0
    %v6802 = vadd.f32 0.0, %v6801
    %6803 = vmatmul.f32.gmra.mxu0 %v6579
    %v6804 = vpop.f32.mrf.mxu0
    %v6805 = vadd.f32 0.0, %v6804
    %6806 = vmatmul.f32.gmra.mxu0 %v6582
    %v6807 = vpop.f32.mrf.mxu0
    %v6808 = vadd.f32 0.0, %v6807
    %6809 = vmatmul.f32.gmra.mxu0 %v6585
    %v6810 = vpop.f32.mrf.mxu0
    %v6811 = vadd.f32 0.0, %v6810
    %6812 = vdwg.mxu0
    %v6813 = vmax.f32 %v6605, %v6718
    %6814 = vmax.xlane.f32.xlu0 %v6813
    %v6815 = vpop.xlane.xlu0 %6814
    %v6816 = vmax.f32 %v6608, %v6721
    %6817 = vmax.xlane.f32.xlu0 %v6816
    %v6818 = vpop.xlane.xlu0 %6817
    %v6819 = vmax.f32 %v6611, %v6724
    %6820 = vmax.xlane.f32.xlu0 %v6819
    %v6821 = vpop.xlane.xlu0 %6820
    %v6822 = vmax.f32 %v6614, %v6727
    %6823 = vmax.xlane.f32.xlu0 %v6822
    %v6824 = vpop.xlane.xlu0 %6823
    %v6825 = vmax.f32 %v6617, %v6730
    %6826 = vmax.xlane.f32.xlu0 %v6825
    %v6827 = vpop.xlane.xlu0 %6826
    %v6828 = vmax.f32 %v6620, %v6733
    %6829 = vmax.xlane.f32.xlu0 %v6828
    %v6830 = vpop.xlane.xlu0 %6829
    %v6831 = vmax.f32 %v6623, %v6736
    %6832 = vmax.xlane.f32.xlu0 %v6831
    %v6833 = vpop.xlane.xlu0 %6832
    %v6834 = vmax.f32 %v6626, %v6739
    %6835 = vmax.xlane.f32.xlu0 %v6834
    %v6836 = vpop.xlane.xlu0 %6835
    %v6837 = vmax.f32 %v6629, %v6742
    %6838 = vmax.xlane.f32.xlu0 %v6837
    %v6839 = vpop.xlane.xlu0 %6838
    %v6840 = vmax.f32 %v6632, %v6745
    %6841 = vmax.xlane.f32.xlu0 %v6840
    %v6842 = vpop.xlane.xlu0 %6841
    %v6843 = vmax.f32 %v6635, %v6748
    %6844 = vmax.xlane.f32.xlu0 %v6843
    %v6845 = vpop.xlane.xlu0 %6844
    %v6846 = vmax.f32 %v6638, %v6751
    %6847 = vmax.xlane.f32.xlu0 %v6846
    %v6848 = vpop.xlane.xlu0 %6847
    %v6849 = vmax.f32 %v6641, %v6754
    %6850 = vmax.xlane.f32.xlu0 %v6849
    %v6851 = vpop.xlane.xlu0 %6850
    %v6852 = vmax.f32 %v6644, %v6757
    %6853 = vmax.xlane.f32.xlu0 %v6852
    %v6854 = vpop.xlane.xlu0 %6853
    %v6855 = vmax.f32 %v6647, %v6760
    %6856 = vmax.xlane.f32.xlu0 %v6855
    %v6857 = vpop.xlane.xlu0 %6856
    %v6858 = vmax.f32 %v6650, %v6763
    %6859 = vmax.xlane.f32.xlu0 %v6858
    %v6860 = vpop.xlane.xlu0 %6859
    %v6861 = vmax.f32 %v6653, %v6766
    %6862 = vmax.xlane.f32.xlu0 %v6861
    %v6863 = vpop.xlane.xlu0 %6862
    %v6864 = vmax.f32 %v6656, %v6769
    %6865 = vmax.xlane.f32.xlu0 %v6864
    %v6866 = vpop.xlane.xlu0 %6865
    %v6867 = vmax.f32 %v6659, %v6772
    %6868 = vmax.xlane.f32.xlu0 %v6867
    %v6869 = vpop.xlane.xlu0 %6868
    %v6870 = vmax.f32 %v6662, %v6775
    %6871 = vmax.xlane.f32.xlu0 %v6870
    %v6872 = vpop.xlane.xlu0 %6871
    %v6873 = vmax.f32 %v6665, %v6778
    %6874 = vmax.xlane.f32.xlu0 %v6873
    %v6875 = vpop.xlane.xlu0 %6874
    %v6876 = vmax.f32 %v6668, %v6781
    %6877 = vmax.xlane.f32.xlu0 %v6876
    %v6878 = vpop.xlane.xlu0 %6877
    %v6879 = vmax.f32 %v6671, %v6784
    %6880 = vmax.xlane.f32.xlu0 %v6879
    %v6881 = vpop.xlane.xlu0 %6880
    %v6882 = vmax.f32 %v6674, %v6787
    %6883 = vmax.xlane.f32.xlu0 %v6882
    %v6884 = vpop.xlane.xlu0 %6883
    %v6885 = vmax.f32 %v6677, %v6790
    %6886 = vmax.xlane.f32.xlu0 %v6885
    %v6887 = vpop.xlane.xlu0 %6886
    %v6888 = vmax.f32 %v6680, %v6793
    %6889 = vmax.xlane.f32.xlu0 %v6888
    %v6890 = vpop.xlane.xlu0 %6889
    %v6891 = vmax.f32 %v6683, %v6796
    %6892 = vmax.xlane.f32.xlu0 %v6891
    %v6893 = vpop.xlane.xlu0 %6892
    %v6894 = vmax.f32 %v6686, %v6799
    %6895 = vmax.xlane.f32.xlu0 %v6894
    %v6896 = vpop.xlane.xlu0 %6895
    %v6897 = vmax.f32 %v6689, %v6802
    %6898 = vmax.xlane.f32.xlu0 %v6897
    %v6899 = vpop.xlane.xlu0 %6898
    %v6900 = vmax.f32 %v6692, %v6805
    %6901 = vmax.xlane.f32.xlu0 %v6900
    %v6902 = vpop.xlane.xlu0 %6901
    %v6903 = vmax.f32 %v6695, %v6808
    %6904 = vmax.xlane.f32.xlu0 %v6903
    %v6905 = vpop.xlane.xlu0 %6904
    %v6906 = vmax.f32 %v6698, %v6811
    %6907 = vmax.xlane.f32.xlu0 %v6906
    %v6908 = vpop.xlane.xlu0 %6907
    %v6909 = vsub.f32 %v6605, %v6815
    %v6910 = vsub.f32 %v6718, %v6815
    %v6911 = vsub.f32 %v6608, %v6818
    %v6912 = vsub.f32 %v6721, %v6818
    %v6913 = vsub.f32 %v6611, %v6821
    %v6914 = vsub.f32 %v6724, %v6821
    %v6915 = vsub.f32 %v6614, %v6824
    %v6916 = vsub.f32 %v6727, %v6824
    %v6917 = vsub.f32 %v6617, %v6827
    %v6918 = vsub.f32 %v6730, %v6827
    %v6919 = vsub.f32 %v6620, %v6830
    %v6920 = vsub.f32 %v6733, %v6830
    %v6921 = vsub.f32 %v6623, %v6833
    %v6922 = vsub.f32 %v6736, %v6833
    %v6923 = vsub.f32 %v6626, %v6836
    %v6924 = vsub.f32 %v6739, %v6836
    %v6925 = vsub.f32 %v6629, %v6839
    %v6926 = vsub.f32 %v6742, %v6839
    %v6927 = vsub.f32 %v6632, %v6842
    %v6928 = vsub.f32 %v6745, %v6842
    %v6929 = vsub.f32 %v6635, %v6845
    %v6930 = vsub.f32 %v6748, %v6845
    %v6931 = vsub.f32 %v6638, %v6848
    %v6932 = vsub.f32 %v6751, %v6848
    %v6933 = vsub.f32 %v6641, %v6851
    %v6934 = vsub.f32 %v6754, %v6851
    %v6935 = vsub.f32 %v6644, %v6854
    %v6936 = vsub.f32 %v6757, %v6854
    %v6937 = vsub.f32 %v6647, %v6857
    %v6938 = vsub.f32 %v6760, %v6857
    %v6939 = vsub.f32 %v6650, %v6860
    %v6940 = vsub.f32 %v6763, %v6860
    %v6941 = vsub.f32 %v6653, %v6863
    %v6942 = vsub.f32 %v6766, %v6863
    %v6943 = vsub.f32 %v6656, %v6866
    %v6944 = vsub.f32 %v6769, %v6866
    %v6945 = vsub.f32 %v6659, %v6869
    %v6946 = vsub.f32 %v6772, %v6869
    %v6947 = vsub.f32 %v6662, %v6872
    %v6948 = vsub.f32 %v6775, %v6872
    %v6949 = vsub.f32 %v6665, %v6875
    %v6950 = vsub.f32 %v6778, %v6875
    %v6951 = vsub.f32 %v6668, %v6878
    %v6952 = vsub.f32 %v6781, %v6878
    %v6953 = vsub.f32 %v6671, %v6881
    %v6954 = vsub.f32 %v6784, %v6881
    %v6955 = vsub.f32 %v6674, %v6884
    %v6956 = vsub.f32 %v6787, %v6884
    %v6957 = vsub.f32 %v6677, %v6887
    %v6958 = vsub.f32 %v6790, %v6887
    %v6959 = vsub.f32 %v6680, %v6890
    %v6960 = vsub.f32 %v6793, %v6890
    %v6961 = vsub.f32 %v6683, %v6893
    %v6962 = vsub.f32 %v6796, %v6893
    %v6963 = vsub.f32 %v6686, %v6896
    %v6964 = vsub.f32 %v6799, %v6896
    %v6965 = vsub.f32 %v6689, %v6899
    %v6966 = vsub.f32 %v6802, %v6899
    %v6967 = vsub.f32 %v6692, %v6902
    %v6968 = vsub.f32 %v6805, %v6902
    %v6969 = vsub.f32 %v6695, %v6905
    %v6970 = vsub.f32 %v6808, %v6905
    %v6971 = vsub.f32 %v6698, %v6908
    %v6972 = vsub.f32 %v6811, %v6908
    %v6973 = vmul.f32 %v6909, 1.442695
    %v6974 = vpow.pop %v6973
    %v6975 = vmul.f32 %v6910, 1.442695
    %v6976 = vpow.pop %v6975
    %v6977 = vmul.f32 %v6911, 1.442695
    %v6978 = vpow.pop %v6977
    %v6979 = vmul.f32 %v6912, 1.442695
    %v6980 = vpow.pop %v6979
    %v6981 = vmul.f32 %v6913, 1.442695
    %v6982 = vpow.pop %v6981
    %v6983 = vmul.f32 %v6914, 1.442695
    %v6984 = vpow.pop %v6983
    %v6985 = vmul.f32 %v6915, 1.442695
    %v6986 = vpow.pop %v6985
    %v6987 = vmul.f32 %v6916, 1.442695
    %v6988 = vpow.pop %v6987
    %v6989 = vmul.f32 %v6917, 1.442695
    %v6990 = vpow.pop %v6989
    %v6991 = vmul.f32 %v6918, 1.442695
    %v6992 = vpow.pop %v6991
    %v6993 = vmul.f32 %v6919, 1.442695
    %v6994 = vpow.pop %v6993
    %v6995 = vmul.f32 %v6920, 1.442695
    %v6996 = vpow.pop %v6995
    %v6997 = vmul.f32 %v6921, 1.442695
    %v6998 = vpow.pop %v6997
    %v6999 = vmul.f32 %v6922, 1.442695
    %v7000 = vpow.pop %v6999
    %v7001 = vmul.f32 %v6923, 1.442695
    %v7002 = vpow.pop %v7001
    %v7003 = vmul.f32 %v6924, 1.442695
    %v7004 = vpow.pop %v7003
    %v7005 = vmul.f32 %v6925, 1.442695
    %v7006 = vpow.pop %v7005
    %v7007 = vmul.f32 %v6926, 1.442695
    %v7008 = vpow.pop %v7007
    %v7009 = vmul.f32 %v6927, 1.442695
    %v7010 = vpow.pop %v7009
    %v7011 = vmul.f32 %v6928, 1.442695
    %v7012 = vpow.pop %v7011
    %v7013 = vmul.f32 %v6929, 1.442695
    %v7014 = vpow.pop %v7013
    %v7015 = vmul.f32 %v6930, 1.442695
    %v7016 = vpow.pop %v7015
    %v7017 = vmul.f32 %v6931, 1.442695
    %v7018 = vpow.pop %v7017
    %v7019 = vmul.f32 %v6932, 1.442695
    %v7020 = vpow.pop %v7019
    %v7021 = vmul.f32 %v6933, 1.442695
    %v7022 = vpow.pop %v7021
    %v7023 = vmul.f32 %v6934, 1.442695
    %v7024 = vpow.pop %v7023
    %v7025 = vmul.f32 %v6935, 1.442695
    %v7026 = vpow.pop %v7025
    %v7027 = vmul.f32 %v6936, 1.442695
    %v7028 = vpow.pop %v7027
    %v7029 = vmul.f32 %v6937, 1.442695
    %v7030 = vpow.pop %v7029
    %v7031 = vmul.f32 %v6938, 1.442695
    %v7032 = vpow.pop %v7031
    %v7033 = vmul.f32 %v6939, 1.442695
    %v7034 = vpow.pop %v7033
    %v7035 = vmul.f32 %v6940, 1.442695
    %v7036 = vpow.pop %v7035
    %v7037 = vmul.f32 %v6941, 1.442695
    %v7038 = vpow.pop %v7037
    %v7039 = vmul.f32 %v6942, 1.442695
    %v7040 = vpow.pop %v7039
    %v7041 = vmul.f32 %v6943, 1.442695
    %v7042 = vpow.pop %v7041
    %v7043 = vmul.f32 %v6944, 1.442695
    %v7044 = vpow.pop %v7043
    %v7045 = vmul.f32 %v6945, 1.442695
    %v7046 = vpow.pop %v7045
    %v7047 = vmul.f32 %v6946, 1.442695
    %v7048 = vpow.pop %v7047
    %v7049 = vmul.f32 %v6947, 1.442695
    %v7050 = vpow.pop %v7049
    %v7051 = vmul.f32 %v6948, 1.442695
    %v7052 = vpow.pop %v7051
    %v7053 = vmul.f32 %v6949, 1.442695
    %v7054 = vpow.pop %v7053
    %v7055 = vmul.f32 %v6950, 1.442695
    %v7056 = vpow.pop %v7055
    %v7057 = vmul.f32 %v6951, 1.442695
    %v7058 = vpow.pop %v7057
    %v7059 = vmul.f32 %v6952, 1.442695
    %v7060 = vpow.pop %v7059
    %v7061 = vmul.f32 %v6953, 1.442695
    %v7062 = vpow.pop %v7061
    %v7063 = vmul.f32 %v6954, 1.442695
    %v7064 = vpow.pop %v7063
    %v7065 = vmul.f32 %v6955, 1.442695
    %v7066 = vpow.pop %v7065
    %v7067 = vmul.f32 %v6956, 1.442695
    %v7068 = vpow.pop %v7067
    %v7069 = vmul.f32 %v6957, 1.442695
    %v7070 = vpow.pop %v7069
    %v7071 = vmul.f32 %v6958, 1.442695
    %v7072 = vpow.pop %v7071
    %v7073 = vmul.f32 %v6959, 1.442695
    %v7074 = vpow.pop %v7073
    %v7075 = vmul.f32 %v6960, 1.442695
    %v7076 = vpow.pop %v7075
    %v7077 = vmul.f32 %v6961, 1.442695
    %v7078 = vpow.pop %v7077
    %v7079 = vmul.f32 %v6962, 1.442695
    %v7080 = vpow.pop %v7079
    %v7081 = vmul.f32 %v6963, 1.442695
    %v7082 = vpow.pop %v7081
    %v7083 = vmul.f32 %v6964, 1.442695
    %v7084 = vpow.pop %v7083
    %v7085 = vmul.f32 %v6965, 1.442695
    %v7086 = vpow.pop %v7085
    %v7087 = vmul.f32 %v6966, 1.442695
    %v7088 = vpow.pop %v7087
    %v7089 = vmul.f32 %v6967, 1.442695
    %v7090 = vpow.pop %v7089
    %v7091 = vmul.f32 %v6968, 1.442695
    %v7092 = vpow.pop %v7091
    %v7093 = vmul.f32 %v6969, 1.442695
    %v7094 = vpow.pop %v7093
    %v7095 = vmul.f32 %v6970, 1.442695
    %v7096 = vpow.pop %v7095
    %v7097 = vmul.f32 %v6971, 1.442695
    %v7098 = vpow.pop %v7097
    %v7099 = vmul.f32 %v6972, 1.442695
    %v7100 = vpow.pop %v7099
    %v7101 = vadd.f32 %v6974, %v6976
    %7102 = vadd.xlane.f32.xlu0 %v7101
    %v7103 = vpop.xlane.xlu0 %7102
    %v7104 = vadd.f32 %v6978, %v6980
    %7105 = vadd.xlane.f32.xlu0 %v7104
    %v7106 = vpop.xlane.xlu0 %7105
    %v7107 = vadd.f32 %v6982, %v6984
    %7108 = vadd.xlane.f32.xlu0 %v7107
    %v7109 = vpop.xlane.xlu0 %7108
    %v7110 = vadd.f32 %v6986, %v6988
    %7111 = vadd.xlane.f32.xlu0 %v7110
    %v7112 = vpop.xlane.xlu0 %7111
    %v7113 = vadd.f32 %v6990, %v6992
    %7114 = vadd.xlane.f32.xlu0 %v7113
    %v7115 = vpop.xlane.xlu0 %7114
    %v7116 = vadd.f32 %v6994, %v6996
    %7117 = vadd.xlane.f32.xlu0 %v7116
    %v7118 = vpop.xlane.xlu0 %7117
    %v7119 = vadd.f32 %v6998, %v7000
    %7120 = vadd.xlane.f32.xlu0 %v7119
    %v7121 = vpop.xlane.xlu0 %7120
    %v7122 = vadd.f32 %v7002, %v7004
    %7123 = vadd.xlane.f32.xlu0 %v7122
    %v7124 = vpop.xlane.xlu0 %7123
    %v7125 = vadd.f32 %v7006, %v7008
    %7126 = vadd.xlane.f32.xlu0 %v7125
    %v7127 = vpop.xlane.xlu0 %7126
    %v7128 = vadd.f32 %v7010, %v7012
    %7129 = vadd.xlane.f32.xlu0 %v7128
    %v7130 = vpop.xlane.xlu0 %7129
    %v7131 = vadd.f32 %v7014, %v7016
    %7132 = vadd.xlane.f32.xlu0 %v7131
    %v7133 = vpop.xlane.xlu0 %7132
    %v7134 = vadd.f32 %v7018, %v7020
    %7135 = vadd.xlane.f32.xlu0 %v7134
    %v7136 = vpop.xlane.xlu0 %7135
    %v7137 = vadd.f32 %v7022, %v7024
    %7138 = vadd.xlane.f32.xlu0 %v7137
    %v7139 = vpop.xlane.xlu0 %7138
    %v7140 = vadd.f32 %v7026, %v7028
    %7141 = vadd.xlane.f32.xlu0 %v7140
    %v7142 = vpop.xlane.xlu0 %7141
    %v7143 = vadd.f32 %v7030, %v7032
    %7144 = vadd.xlane.f32.xlu0 %v7143
    %v7145 = vpop.xlane.xlu0 %7144
    %v7146 = vadd.f32 %v7034, %v7036
    %7147 = vadd.xlane.f32.xlu0 %v7146
    %v7148 = vpop.xlane.xlu0 %7147
    %v7149 = vadd.f32 %v7038, %v7040
    %7150 = vadd.xlane.f32.xlu0 %v7149
    %v7151 = vpop.xlane.xlu0 %7150
    %v7152 = vadd.f32 %v7042, %v7044
    %7153 = vadd.xlane.f32.xlu0 %v7152
    %v7154 = vpop.xlane.xlu0 %7153
    %v7155 = vadd.f32 %v7046, %v7048
    %7156 = vadd.xlane.f32.xlu0 %v7155
    %v7157 = vpop.xlane.xlu0 %7156
    %v7158 = vadd.f32 %v7050, %v7052
    %7159 = vadd.xlane.f32.xlu0 %v7158
    %v7160 = vpop.xlane.xlu0 %7159
    %v7161 = vadd.f32 %v7054, %v7056
    %7162 = vadd.xlane.f32.xlu0 %v7161
    %v7163 = vpop.xlane.xlu0 %7162
    %v7164 = vadd.f32 %v7058, %v7060
    %7165 = vadd.xlane.f32.xlu0 %v7164
    %v7166 = vpop.xlane.xlu0 %7165
    %v7167 = vadd.f32 %v7062, %v7064
    %7168 = vadd.xlane.f32.xlu0 %v7167
    %v7169 = vpop.xlane.xlu0 %7168
    %v7170 = vadd.f32 %v7066, %v7068
    %7171 = vadd.xlane.f32.xlu0 %v7170
    %v7172 = vpop.xlane.xlu0 %7171
    %v7173 = vadd.f32 %v7070, %v7072
    %7174 = vadd.xlane.f32.xlu0 %v7173
    %v7175 = vpop.xlane.xlu0 %7174
    %v7176 = vadd.f32 %v7074, %v7076
    %7177 = vadd.xlane.f32.xlu0 %v7176
    %v7178 = vpop.xlane.xlu0 %7177
    %v7179 = vadd.f32 %v7078, %v7080
    %7180 = vadd.xlane.f32.xlu0 %v7179
    %v7181 = vpop.xlane.xlu0 %7180
    %v7182 = vadd.f32 %v7082, %v7084
    %7183 = vadd.xlane.f32.xlu0 %v7182
    %v7184 = vpop.xlane.xlu0 %7183
    %v7185 = vadd.f32 %v7086, %v7088
    %7186 = vadd.xlane.f32.xlu0 %v7185
    %v7187 = vpop.xlane.xlu0 %7186
    %v7188 = vadd.f32 %v7090, %v7092
    %7189 = vadd.xlane.f32.xlu0 %v7188
    %v7190 = vpop.xlane.xlu0 %7189
    %v7191 = vadd.f32 %v7094, %v7096
    %7192 = vadd.xlane.f32.xlu0 %v7191
    %v7193 = vpop.xlane.xlu0 %7192
    %v7194 = vadd.f32 %v7098, %v7100
    %7195 = vadd.xlane.f32.xlu0 %v7194
    %v7196 = vpop.xlane.xlu0 %7195
    %v7197 = vrcp.pop %v7103
    %v7198 = vrcp.pop %v7106
    %v7199 = vrcp.pop %v7109
    %v7200 = vrcp.pop %v7112
    %v7201 = vrcp.pop %v7115
    %v7202 = vrcp.pop %v7118
    %v7203 = vrcp.pop %v7121
    %v7204 = vrcp.pop %v7124
    %v7205 = vrcp.pop %v7127
    %v7206 = vrcp.pop %v7130
    %v7207 = vrcp.pop %v7133
    %v7208 = vrcp.pop %v7136
    %v7209 = vrcp.pop %v7139
    %v7210 = vrcp.pop %v7142
    %v7211 = vrcp.pop %v7145
    %v7212 = vrcp.pop %v7148
    %v7213 = vrcp.pop %v7151
    %v7214 = vrcp.pop %v7154
    %v7215 = vrcp.pop %v7157
    %v7216 = vrcp.pop %v7160
    %v7217 = vrcp.pop %v7163
    %v7218 = vrcp.pop %v7166
    %v7219 = vrcp.pop %v7169
    %v7220 = vrcp.pop %v7172
    %v7221 = vrcp.pop %v7175
    %v7222 = vrcp.pop %v7178
    %v7223 = vrcp.pop %v7181
    %v7224 = vrcp.pop %v7184
    %v7225 = vrcp.pop %v7187
    %v7226 = vrcp.pop %v7190
    %v7227 = vrcp.pop %v7193
    %v7228 = vrcp.pop %v7196
    %v7229 = vmul.f32 %v6974, %v7197
    %v7230 = vmul.f32 %v6976, %v7197
    %v7231 = vmul.f32 %v6978, %v7198
    %v7232 = vmul.f32 %v6980, %v7198
    %v7233 = vmul.f32 %v6982, %v7199
    %v7234 = vmul.f32 %v6984, %v7199
    %v7235 = vmul.f32 %v6986, %v7200
    %v7236 = vmul.f32 %v6988, %v7200
    %v7237 = vmul.f32 %v6990, %v7201
    %v7238 = vmul.f32 %v6992, %v7201
    %v7239 = vmul.f32 %v6994, %v7202
    %v7240 = vmul.f32 %v6996, %v7202
    %v7241 = vmul.f32 %v6998, %v7203
    %v7242 = vmul.f32 %v7000, %v7203
    %v7243 = vmul.f32 %v7002, %v7204
    %v7244 = vmul.f32 %v7004, %v7204
    %v7245 = vmul.f32 %v7006, %v7205
    %v7246 = vmul.f32 %v7008, %v7205
    %v7247 = vmul.f32 %v7010, %v7206
    %v7248 = vmul.f32 %v7012, %v7206
    %v7249 = vmul.f32 %v7014, %v7207
    %v7250 = vmul.f32 %v7016, %v7207
    %v7251 = vmul.f32 %v7018, %v7208
    %v7252 = vmul.f32 %v7020, %v7208
    %v7253 = vmul.f32 %v7022, %v7209
    %v7254 = vmul.f32 %v7024, %v7209
    %v7255 = vmul.f32 %v7026, %v7210
    %v7256 = vmul.f32 %v7028, %v7210
    %v7257 = vmul.f32 %v7030, %v7211
    %v7258 = vmul.f32 %v7032, %v7211
    %v7259 = vmul.f32 %v7034, %v7212
    %v7260 = vmul.f32 %v7036, %v7212
    %v7261 = vmul.f32 %v7038, %v7213
    %v7262 = vmul.f32 %v7040, %v7213
    %v7263 = vmul.f32 %v7042, %v7214
    %v7264 = vmul.f32 %v7044, %v7214
    %v7265 = vmul.f32 %v7046, %v7215
    %v7266 = vmul.f32 %v7048, %v7215
    %v7267 = vmul.f32 %v7050, %v7216
    %v7268 = vmul.f32 %v7052, %v7216
    %v7269 = vmul.f32 %v7054, %v7217
    %v7270 = vmul.f32 %v7056, %v7217
    %v7271 = vmul.f32 %v7058, %v7218
    %v7272 = vmul.f32 %v7060, %v7218
    %v7273 = vmul.f32 %v7062, %v7219
    %v7274 = vmul.f32 %v7064, %v7219
    %v7275 = vmul.f32 %v7066, %v7220
    %v7276 = vmul.f32 %v7068, %v7220
    %v7277 = vmul.f32 %v7070, %v7221
    %v7278 = vmul.f32 %v7072, %v7221
    %v7279 = vmul.f32 %v7074, %v7222
    %v7280 = vmul.f32 %v7076, %v7222
    %v7281 = vmul.f32 %v7078, %v7223
    %v7282 = vmul.f32 %v7080, %v7223
    %v7283 = vmul.f32 %v7082, %v7224
    %v7284 = vmul.f32 %v7084, %v7224
    %v7285 = vmul.f32 %v7086, %v7225
    %v7286 = vmul.f32 %v7088, %v7225
    %v7287 = vmul.f32 %v7090, %v7226
    %v7288 = vmul.f32 %v7092, %v7226
    %v7289 = vmul.f32 %v7094, %v7227
    %v7290 = vmul.f32 %v7096, %v7227
    %v7291 = vmul.f32 %v7098, %v7228
    %v7292 = vmul.f32 %v7100, %v7228
    %7293 = vmatpush.xpose.msra.mxu0 %v7259
    %7294 = vmatpush.xpose.msra.mxu0 %v7257
    %7295 = vmatpush.xpose.msra.mxu0 %v7255
    %7296 = vmatpush.xpose.msra.mxu0 %v7253
    %7297 = vmatpush.xpose.msra.mxu0 %v7251
    %7298 = vmatpush.xpose.msra.mxu0 %v7249
    %7299 = vmatpush.xpose.msra.mxu0 %v7247
    %7300 = vmatpush.xpose.msra.mxu0 %v7245
    %7301 = vmatpush.xpose.msra.mxu0 %v7243
    %7302 = vmatpush.xpose.msra.mxu0 %v7241
    %7303 = vmatpush.xpose.msra.mxu0 %v7239
    %7304 = vmatpush.xpose.msra.mxu0 %v7237
    %7305 = vmatpush.xpose.msra.mxu0 %v7235
    %7306 = vmatpush.xpose.msra.mxu0 %v7233
    %7307 = vmatpush.xpose.msra.mxu0 %v7231
    %7308 = vmatpush.xpose.msra.mxu0 %v7229
    %7309 = vmatmul.f32.gmra.mxu0 %v4477
    %v7310 = vpop.f32.mrf.mxu0
    %v7311 = vadd.f32 0.0, %v7310
    %7312 = vdwg.mxu0
    %7313 = vmatpush.xpose.msra.mxu0 %v7260
    %7314 = vmatpush.xpose.msra.mxu0 %v7258
    %7315 = vmatpush.xpose.msra.mxu0 %v7256
    %7316 = vmatpush.xpose.msra.mxu0 %v7254
    %7317 = vmatpush.xpose.msra.mxu0 %v7252
    %7318 = vmatpush.xpose.msra.mxu0 %v7250
    %7319 = vmatpush.xpose.msra.mxu0 %v7248
    %7320 = vmatpush.xpose.msra.mxu0 %v7246
    %7321 = vmatpush.xpose.msra.mxu0 %v7244
    %7322 = vmatpush.xpose.msra.mxu0 %v7242
    %7323 = vmatpush.xpose.msra.mxu0 %v7240
    %7324 = vmatpush.xpose.msra.mxu0 %v7238
    %7325 = vmatpush.xpose.msra.mxu0 %v7236
    %7326 = vmatpush.xpose.msra.mxu0 %v7234
    %7327 = vmatpush.xpose.msra.mxu0 %v7232
    %7328 = vmatpush.xpose.msra.mxu0 %v7230
    %7329 = vmatmul.f32.gmra.mxu0 %v4530
    %v7330 = vpop.f32.mrf.mxu0
    %v7331 = vadd.f32 %v7311, %v7330
    %7332 = vdwg.mxu0
    %7333 = vmatpush.xpose.msra.mxu0 %v7291
    %7334 = vmatpush.xpose.msra.mxu0 %v7289
    %7335 = vmatpush.xpose.msra.mxu0 %v7287
    %7336 = vmatpush.xpose.msra.mxu0 %v7285
    %7337 = vmatpush.xpose.msra.mxu0 %v7283
    %7338 = vmatpush.xpose.msra.mxu0 %v7281
    %7339 = vmatpush.xpose.msra.mxu0 %v7279
    %7340 = vmatpush.xpose.msra.mxu0 %v7277
    %7341 = vmatpush.xpose.msra.mxu0 %v7275
    %7342 = vmatpush.xpose.msra.mxu0 %v7273
    %7343 = vmatpush.xpose.msra.mxu0 %v7271
    %7344 = vmatpush.xpose.msra.mxu0 %v7269
    %7345 = vmatpush.xpose.msra.mxu0 %v7267
    %7346 = vmatpush.xpose.msra.mxu0 %v7265
    %7347 = vmatpush.xpose.msra.mxu0 %v7263
    %7348 = vmatpush.xpose.msra.mxu0 %v7261
    %7349 = vmatmul.f32.gmra.mxu0 %v4477
    %v7350 = vpop.f32.mrf.mxu0
    %v7351 = vadd.f32 0.0, %v7350
    %7352 = vdwg.mxu0
    %7353 = vmatpush.xpose.msra.mxu0 %v7292
    %7354 = vmatpush.xpose.msra.mxu0 %v7290
    %7355 = vmatpush.xpose.msra.mxu0 %v7288
    %7356 = vmatpush.xpose.msra.mxu0 %v7286
    %7357 = vmatpush.xpose.msra.mxu0 %v7284
    %7358 = vmatpush.xpose.msra.mxu0 %v7282
    %7359 = vmatpush.xpose.msra.mxu0 %v7280
    %7360 = vmatpush.xpose.msra.mxu0 %v7278
    %7361 = vmatpush.xpose.msra.mxu0 %v7276
    %7362 = vmatpush.xpose.msra.mxu0 %v7274
    %7363 = vmatpush.xpose.msra.mxu0 %v7272
    %7364 = vmatpush.xpose.msra.mxu0 %v7270
    %7365 = vmatpush.xpose.msra.mxu0 %v7268
    %7366 = vmatpush.xpose.msra.mxu0 %v7266
    %7367 = vmatpush.xpose.msra.mxu0 %v7264
    %7368 = vmatpush.xpose.msra.mxu0 %v7262
    %7369 = vmatmul.f32.gmra.mxu0 %v4530
    %v7370 = vpop.f32.mrf.mxu0
    %v7371 = vadd.f32 %v7351, %v7370
    %7372 = vdwg.mxu0
    %7373 = vxpose.xlu0.b32.start [1/16] %v4456, 128
    %7374 = vxpose.xlu0.b32.cont [2/16] 0.0, 128
    %7375 = vxpose.xlu0.b32.cont [3/16] 0.0, 128
    %7376 = vxpose.xlu0.b32.cont [4/16] 0.0, 128
    %7377 = vxpose.xlu0.b32.cont [5/16] 0.0, 128
    %7378 = vxpose.xlu0.b32.cont [6/16] 0.0, 128
    %7379 = vxpose.xlu0.b32.cont [7/16] 0.0, 128
    %7380 = vxpose.xlu0.b32.cont [8/16] 0.0, 128
    %7381 = vxpose.xlu0.b32.cont [9/16] 0.0, 128
    %7382 = vxpose.xlu0.b32.cont [10/16] 0.0, 128
    %7383 = vxpose.xlu0.b32.cont [11/16] 0.0, 128
    %7384 = vxpose.xlu0.b32.cont [12/16] 0.0, 128
    %7385 = vxpose.xlu0.b32.cont [13/16] 0.0, 128
    %7386 = vxpose.xlu0.b32.cont [14/16] 0.0, 128
    %7387 = vxpose.xlu0.b32.cont [15/16] 0.0, 128
    %7388 = vxpose.xlu0.b32.end [16/16] 0.0, 128
    %v7389 = vpop.trf.xlu0
    %v7390 = vpop.trf.xlu0
    %v7391 = vpop.trf.xlu0
    %v7392 = vpop.trf.xlu0
    %v7393 = vpop.trf.xlu0
    %v7394 = vpop.trf.xlu0
    %v7395 = vpop.trf.xlu0
    %v7396 = vpop.trf.xlu0
    %v7397 = vpop.trf.xlu0
    %v7398 = vpop.trf.xlu0
    %v7399 = vpop.trf.xlu0
    %v7400 = vpop.trf.xlu0
    %v7401 = vpop.trf.xlu0
    %v7402 = vpop.trf.xlu0
    %v7403 = vpop.trf.xlu0
    %v7404 = vpop.trf.xlu0
    %7405 = vxpose.xlu0.b32.start [1/16] %v4509, 128
    %7406 = vxpose.xlu0.b32.cont [2/16] 0.0, 128
    %7407 = vxpose.xlu0.b32.cont [3/16] 0.0, 128
    %7408 = vxpose.xlu0.b32.cont [4/16] 0.0, 128
    %7409 = vxpose.xlu0.b32.cont [5/16] 0.0, 128
    %7410 = vxpose.xlu0.b32.cont [6/16] 0.0, 128
    %7411 = vxpose.xlu0.b32.cont [7/16] 0.0, 128
    %7412 = vxpose.xlu0.b32.cont [8/16] 0.0, 128
    %7413 = vxpose.xlu0.b32.cont [9/16] 0.0, 128
    %7414 = vxpose.xlu0.b32.cont [10/16] 0.0, 128
    %7415 = vxpose.xlu0.b32.cont [11/16] 0.0, 128
    %7416 = vxpose.xlu0.b32.cont [12/16] 0.0, 128
    %7417 = vxpose.xlu0.b32.cont [13/16] 0.0, 128
    %7418 = vxpose.xlu0.b32.cont [14/16] 0.0, 128
    %7419 = vxpose.xlu0.b32.cont [15/16] 0.0, 128
    %7420 = vxpose.xlu0.b32.end [16/16] 0.0, 128
    %v7421 = vpop.trf.xlu0
    %v7422 = vpop.trf.xlu0
    %v7423 = vpop.trf.xlu0
    %v7424 = vpop.trf.xlu0
    %v7425 = vpop.trf.xlu0
    %v7426 = vpop.trf.xlu0
    %v7427 = vpop.trf.xlu0
    %v7428 = vpop.trf.xlu0
    %v7429 = vpop.trf.xlu0
    %v7430 = vpop.trf.xlu0
    %v7431 = vpop.trf.xlu0
    %v7432 = vpop.trf.xlu0
    %v7433 = vpop.trf.xlu0
    %v7434 = vpop.trf.xlu0
    %v7435 = vpop.trf.xlu0
    %v7436 = vpop.trf.xlu0
    %v7438 = vsel %vm491, %v7389, 0
    %v7441 = vsel %vm491, %v7390, 0
    %v7444 = vsel %vm491, %v7391, 0
    %v7447 = vsel %vm491, %v7392, 0
    %v7450 = vsel %vm491, %v7393, 0
    %v7453 = vsel %vm491, %v7394, 0
    %v7456 = vsel %vm491, %v7395, 0
    %v7459 = vsel %vm491, %v7396, 0
    %v7462 = vsel %vm491, %v7397, 0
    %v7465 = vsel %vm491, %v7398, 0
    %v7468 = vsel %vm491, %v7399, 0
    %v7471 = vsel %vm491, %v7400, 0
    %v7474 = vsel %vm491, %v7401, 0
    %v7477 = vsel %vm491, %v7402, 0
    %v7480 = vsel %vm491, %v7403, 0
    %v7483 = vsel %vm491, %v7404, 0
    %v7486 = vsel %vm491, %v7421, 0
    %v7489 = vsel %vm491, %v7422, 0
    %v7492 = vsel %vm491, %v7423, 0
    %v7495 = vsel %vm491, %v7424, 0
    %v7498 = vsel %vm491, %v7425, 0
    %v7501 = vsel %vm491, %v7426, 0
    %v7504 = vsel %vm491, %v7427, 0
    %v7507 = vsel %vm491, %v7428, 0
    %v7510 = vsel %vm491, %v7429, 0
    %v7513 = vsel %vm491, %v7430, 0
    %v7516 = vsel %vm491, %v7431, 0
    %v7519 = vsel %vm491, %v7432, 0
    %v7522 = vsel %vm491, %v7433, 0
    %v7525 = vsel %vm491, %v7434, 0
    %v7528 = vsel %vm491, %v7435, 0
    %v7531 = vsel %vm491, %v7436, 0
    %7533 = vmatpush.msra.mxu0 0.0
    %7534 = vmatpush.msra.mxu0 0.0
    %7535 = vmatpush.msra.mxu0 0.0
    %7536 = vmatpush.msra.mxu0 0.0
    %7537 = vmatpush.msra.mxu0 0.0
    %7538 = vmatpush.msra.mxu0 0.0
    %7539 = vmatpush.msra.mxu0 0.0
    %7540 = vmatpush.msra.mxu0 0.0
    %7541 = vmatpush.msra.mxu0 0.0
    %7542 = vmatpush.msra.mxu0 0.0
    %7543 = vmatpush.msra.mxu0 0.0
    %7544 = vmatpush.msra.mxu0 0.0
    %7545 = vmatpush.msra.mxu0 0.0
    %7546 = vmatpush.msra.mxu0 0.0
    %7547 = vmatpush.msra.mxu0 0.0
    %7548 = vmatpush.msra.mxu0 %v4468
    %7549 = vmatmul.f32.gmra.mxu0 %v7438
    %v7550 = vpop.f32.mrf.mxu0
    %v7551 = vadd.f32 0.0, %v7550
    %7552 = vmatmul.f32.gmra.mxu0 %v7441
    %v7553 = vpop.f32.mrf.mxu0
    %v7554 = vadd.f32 0.0, %v7553
    %7555 = vmatmul.f32.gmra.mxu0 %v7444
    %v7556 = vpop.f32.mrf.mxu0
    %v7557 = vadd.f32 0.0, %v7556
    %7558 = vmatmul.f32.gmra.mxu0 %v7447
    %v7559 = vpop.f32.mrf.mxu0
    %v7560 = vadd.f32 0.0, %v7559
    %7561 = vmatmul.f32.gmra.mxu0 %v7450
    %v7562 = vpop.f32.mrf.mxu0
    %v7563 = vadd.f32 0.0, %v7562
    %7564 = vmatmul.f32.gmra.mxu0 %v7453
    %v7565 = vpop.f32.mrf.mxu0
    %v7566 = vadd.f32 0.0, %v7565
    %7567 = vmatmul.f32.gmra.mxu0 %v7456
    %v7568 = vpop.f32.mrf.mxu0
    %v7569 = vadd.f32 0.0, %v7568
    %7570 = vmatmul.f32.gmra.mxu0 %v7459
    %v7571 = vpop.f32.mrf.mxu0
    %v7572 = vadd.f32 0.0, %v7571
    %7573 = vmatmul.f32.gmra.mxu0 %v7462
    %v7574 = vpop.f32.mrf.mxu0
    %v7575 = vadd.f32 0.0, %v7574
    %7576 = vmatmul.f32.gmra.mxu0 %v7465
    %v7577 = vpop.f32.mrf.mxu0
    %v7578 = vadd.f32 0.0, %v7577
    %7579 = vmatmul.f32.gmra.mxu0 %v7468
    %v7580 = vpop.f32.mrf.mxu0
    %v7581 = vadd.f32 0.0, %v7580
    %7582 = vmatmul.f32.gmra.mxu0 %v7471
    %v7583 = vpop.f32.mrf.mxu0
    %v7584 = vadd.f32 0.0, %v7583
    %7585 = vmatmul.f32.gmra.mxu0 %v7474
    %v7586 = vpop.f32.mrf.mxu0
    %v7587 = vadd.f32 0.0, %v7586
    %7588 = vmatmul.f32.gmra.mxu0 %v7477
    %v7589 = vpop.f32.mrf.mxu0
    %v7590 = vadd.f32 0.0, %v7589
    %7591 = vmatmul.f32.gmra.mxu0 %v7480
    %v7592 = vpop.f32.mrf.mxu0
    %v7593 = vadd.f32 0.0, %v7592
    %7594 = vmatmul.f32.gmra.mxu0 %v7483
    %v7595 = vpop.f32.mrf.mxu0
    %v7596 = vadd.f32 0.0, %v7595
    %7597 = vmatmul.f32.gmra.mxu0 %v7486
    %v7598 = vpop.f32.mrf.mxu0
    %v7599 = vadd.f32 0.0, %v7598
    %7600 = vmatmul.f32.gmra.mxu0 %v7489
    %v7601 = vpop.f32.mrf.mxu0
    %v7602 = vadd.f32 0.0, %v7601
    %7603 = vmatmul.f32.gmra.mxu0 %v7492
    %v7604 = vpop.f32.mrf.mxu0
    %v7605 = vadd.f32 0.0, %v7604
    %7606 = vmatmul.f32.gmra.mxu0 %v7495
    %v7607 = vpop.f32.mrf.mxu0
    %v7608 = vadd.f32 0.0, %v7607
    %7609 = vmatmul.f32.gmra.mxu0 %v7498
    %v7610 = vpop.f32.mrf.mxu0
    %v7611 = vadd.f32 0.0, %v7610
    %7612 = vmatmul.f32.gmra.mxu0 %v7501
    %v7613 = vpop.f32.mrf.mxu0
    %v7614 = vadd.f32 0.0, %v7613
    %7615 = vmatmul.f32.gmra.mxu0 %v7504
    %v7616 = vpop.f32.mrf.mxu0
    %v7617 = vadd.f32 0.0, %v7616
    %7618 = vmatmul.f32.gmra.mxu0 %v7507
    %v7619 = vpop.f32.mrf.mxu0
    %v7620 = vadd.f32 0.0, %v7619
    %7621 = vmatmul.f32.gmra.mxu0 %v7510
    %v7622 = vpop.f32.mrf.mxu0
    %v7623 = vadd.f32 0.0, %v7622
    %7624 = vmatmul.f32.gmra.mxu0 %v7513
    %v7625 = vpop.f32.mrf.mxu0
    %v7626 = vadd.f32 0.0, %v7625
    %7627 = vmatmul.f32.gmra.mxu0 %v7516
    %v7628 = vpop.f32.mrf.mxu0
    %v7629 = vadd.f32 0.0, %v7628
    %7630 = vmatmul.f32.gmra.mxu0 %v7519
    %v7631 = vpop.f32.mrf.mxu0
    %v7632 = vadd.f32 0.0, %v7631
    %7633 = vmatmul.f32.gmra.mxu0 %v7522
    %v7634 = vpop.f32.mrf.mxu0
    %v7635 = vadd.f32 0.0, %v7634
    %7636 = vmatmul.f32.gmra.mxu0 %v7525
    %v7637 = vpop.f32.mrf.mxu0
    %v7638 = vadd.f32 0.0, %v7637
    %7639 = vmatmul.f32.gmra.mxu0 %v7528
    %v7640 = vpop.f32.mrf.mxu0
    %v7641 = vadd.f32 0.0, %v7640
    %7642 = vmatmul.f32.gmra.mxu0 %v7531
    %v7643 = vpop.f32.mrf.mxu0
    %v7644 = vadd.f32 0.0, %v7643
    %7645 = vdwg.mxu0
    %7646 = vmatpush.msra.mxu0 0.0
    %7647 = vmatpush.msra.mxu0 0.0
    %7648 = vmatpush.msra.mxu0 0.0
    %7649 = vmatpush.msra.mxu0 0.0
    %7650 = vmatpush.msra.mxu0 0.0
    %7651 = vmatpush.msra.mxu0 0.0
    %7652 = vmatpush.msra.mxu0 0.0
    %7653 = vmatpush.msra.mxu0 0.0
    %7654 = vmatpush.msra.mxu0 0.0
    %7655 = vmatpush.msra.mxu0 0.0
    %7656 = vmatpush.msra.mxu0 0.0
    %7657 = vmatpush.msra.mxu0 0.0
    %7658 = vmatpush.msra.mxu0 0.0
    %7659 = vmatpush.msra.mxu0 0.0
    %7660 = vmatpush.msra.mxu0 0.0
    %7661 = vmatpush.msra.mxu0 %v4521
    %7662 = vmatmul.f32.gmra.mxu0 %v7438
    %v7663 = vpop.f32.mrf.mxu0
    %v7664 = vadd.f32 0.0, %v7663
    %7665 = vmatmul.f32.gmra.mxu0 %v7441
    %v7666 = vpop.f32.mrf.mxu0
    %v7667 = vadd.f32 0.0, %v7666
    %7668 = vmatmul.f32.gmra.mxu0 %v7444
    %v7669 = vpop.f32.mrf.mxu0
    %v7670 = vadd.f32 0.0, %v7669
    %7671 = vmatmul.f32.gmra.mxu0 %v7447
    %v7672 = vpop.f32.mrf.mxu0
    %v7673 = vadd.f32 0.0, %v7672
    %7674 = vmatmul.f32.gmra.mxu0 %v7450
    %v7675 = vpop.f32.mrf.mxu0
    %v7676 = vadd.f32 0.0, %v7675
    %7677 = vmatmul.f32.gmra.mxu0 %v7453
    %v7678 = vpop.f32.mrf.mxu0
    %v7679 = vadd.f32 0.0, %v7678
    %7680 = vmatmul.f32.gmra.mxu0 %v7456
    %v7681 = vpop.f32.mrf.mxu0
    %v7682 = vadd.f32 0.0, %v7681
    %7683 = vmatmul.f32.gmra.mxu0 %v7459
    %v7684 = vpop.f32.mrf.mxu0
    %v7685 = vadd.f32 0.0, %v7684
    %7686 = vmatmul.f32.gmra.mxu0 %v7462
    %v7687 = vpop.f32.mrf.mxu0
    %v7688 = vadd.f32 0.0, %v7687
    %7689 = vmatmul.f32.gmra.mxu0 %v7465
    %v7690 = vpop.f32.mrf.mxu0
    %v7691 = vadd.f32 0.0, %v7690
    %7692 = vmatmul.f32.gmra.mxu0 %v7468
    %v7693 = vpop.f32.mrf.mxu0
    %v7694 = vadd.f32 0.0, %v7693
    %7695 = vmatmul.f32.gmra.mxu0 %v7471
    %v7696 = vpop.f32.mrf.mxu0
    %v7697 = vadd.f32 0.0, %v7696
    %7698 = vmatmul.f32.gmra.mxu0 %v7474
    %v7699 = vpop.f32.mrf.mxu0
    %v7700 = vadd.f32 0.0, %v7699
    %7701 = vmatmul.f32.gmra.mxu0 %v7477
    %v7702 = vpop.f32.mrf.mxu0
    %v7703 = vadd.f32 0.0, %v7702
    %7704 = vmatmul.f32.gmra.mxu0 %v7480
    %v7705 = vpop.f32.mrf.mxu0
    %v7706 = vadd.f32 0.0, %v7705
    %7707 = vmatmul.f32.gmra.mxu0 %v7483
    %v7708 = vpop.f32.mrf.mxu0
    %v7709 = vadd.f32 0.0, %v7708
    %7710 = vmatmul.f32.gmra.mxu0 %v7486
    %v7711 = vpop.f32.mrf.mxu0
    %v7712 = vadd.f32 0.0, %v7711
    %7713 = vmatmul.f32.gmra.mxu0 %v7489
    %v7714 = vpop.f32.mrf.mxu0
    %v7715 = vadd.f32 0.0, %v7714
    %7716 = vmatmul.f32.gmra.mxu0 %v7492
    %v7717 = vpop.f32.mrf.mxu0
    %v7718 = vadd.f32 0.0, %v7717
    %7719 = vmatmul.f32.gmra.mxu0 %v7495
    %v7720 = vpop.f32.mrf.mxu0
    %v7721 = vadd.f32 0.0, %v7720
    %7722 = vmatmul.f32.gmra.mxu0 %v7498
    %v7723 = vpop.f32.mrf.mxu0
    %v7724 = vadd.f32 0.0, %v7723
    %7725 = vmatmul.f32.gmra.mxu0 %v7501
    %v7726 = vpop.f32.mrf.mxu0
    %v7727 = vadd.f32 0.0, %v7726
    %7728 = vmatmul.f32.gmra.mxu0 %v7504
    %v7729 = vpop.f32.mrf.mxu0
    %v7730 = vadd.f32 0.0, %v7729
    %7731 = vmatmul.f32.gmra.mxu0 %v7507
    %v7732 = vpop.f32.mrf.mxu0
    %v7733 = vadd.f32 0.0, %v7732
    %7734 = vmatmul.f32.gmra.mxu0 %v7510
    %v7735 = vpop.f32.mrf.mxu0
    %v7736 = vadd.f32 0.0, %v7735
    %7737 = vmatmul.f32.gmra.mxu0 %v7513
    %v7738 = vpop.f32.mrf.mxu0
    %v7739 = vadd.f32 0.0, %v7738
    %7740 = vmatmul.f32.gmra.mxu0 %v7516
    %v7741 = vpop.f32.mrf.mxu0
    %v7742 = vadd.f32 0.0, %v7741
    %7743 = vmatmul.f32.gmra.mxu0 %v7519
    %v7744 = vpop.f32.mrf.mxu0
    %v7745 = vadd.f32 0.0, %v7744
    %7746 = vmatmul.f32.gmra.mxu0 %v7522
    %v7747 = vpop.f32.mrf.mxu0
    %v7748 = vadd.f32 0.0, %v7747
    %7749 = vmatmul.f32.gmra.mxu0 %v7525
    %v7750 = vpop.f32.mrf.mxu0
    %v7751 = vadd.f32 0.0, %v7750
    %7752 = vmatmul.f32.gmra.mxu0 %v7528
    %v7753 = vpop.f32.mrf.mxu0
    %v7754 = vadd.f32 0.0, %v7753
    %7755 = vmatmul.f32.gmra.mxu0 %v7531
    %v7756 = vpop.f32.mrf.mxu0
    %v7757 = vadd.f32 0.0, %v7756
    %7758 = vdwg.mxu0
    %v7759 = vmax.f32 %v7551, %v7664
    %7760 = vmax.xlane.f32.xlu0 %v7759
    %v7761 = vpop.xlane.xlu0 %7760
    %v7762 = vmax.f32 %v7554, %v7667
    %7763 = vmax.xlane.f32.xlu0 %v7762
    %v7764 = vpop.xlane.xlu0 %7763
    %v7765 = vmax.f32 %v7557, %v7670
    %7766 = vmax.xlane.f32.xlu0 %v7765
    %v7767 = vpop.xlane.xlu0 %7766
    %v7768 = vmax.f32 %v7560, %v7673
    %7769 = vmax.xlane.f32.xlu0 %v7768
    %v7770 = vpop.xlane.xlu0 %7769
    %v7771 = vmax.f32 %v7563, %v7676
    %7772 = vmax.xlane.f32.xlu0 %v7771
    %v7773 = vpop.xlane.xlu0 %7772
    %v7774 = vmax.f32 %v7566, %v7679
    %7775 = vmax.xlane.f32.xlu0 %v7774
    %v7776 = vpop.xlane.xlu0 %7775
    %v7777 = vmax.f32 %v7569, %v7682
    %7778 = vmax.xlane.f32.xlu0 %v7777
    %v7779 = vpop.xlane.xlu0 %7778
    %v7780 = vmax.f32 %v7572, %v7685
    %7781 = vmax.xlane.f32.xlu0 %v7780
    %v7782 = vpop.xlane.xlu0 %7781
    %v7783 = vmax.f32 %v7575, %v7688
    %7784 = vmax.xlane.f32.xlu0 %v7783
    %v7785 = vpop.xlane.xlu0 %7784
    %v7786 = vmax.f32 %v7578, %v7691
    %7787 = vmax.xlane.f32.xlu0 %v7786
    %v7788 = vpop.xlane.xlu0 %7787
    %v7789 = vmax.f32 %v7581, %v7694
    %7790 = vmax.xlane.f32.xlu0 %v7789
    %v7791 = vpop.xlane.xlu0 %7790
    %v7792 = vmax.f32 %v7584, %v7697
    %7793 = vmax.xlane.f32.xlu0 %v7792
    %v7794 = vpop.xlane.xlu0 %7793
    %v7795 = vmax.f32 %v7587, %v7700
    %7796 = vmax.xlane.f32.xlu0 %v7795
    %v7797 = vpop.xlane.xlu0 %7796
    %v7798 = vmax.f32 %v7590, %v7703
    %7799 = vmax.xlane.f32.xlu0 %v7798
    %v7800 = vpop.xlane.xlu0 %7799
    %v7801 = vmax.f32 %v7593, %v7706
    %7802 = vmax.xlane.f32.xlu0 %v7801
    %v7803 = vpop.xlane.xlu0 %7802
    %v7804 = vmax.f32 %v7596, %v7709
    %7805 = vmax.xlane.f32.xlu0 %v7804
    %v7806 = vpop.xlane.xlu0 %7805
    %v7807 = vmax.f32 %v7599, %v7712
    %7808 = vmax.xlane.f32.xlu0 %v7807
    %v7809 = vpop.xlane.xlu0 %7808
    %v7810 = vmax.f32 %v7602, %v7715
    %7811 = vmax.xlane.f32.xlu0 %v7810
    %v7812 = vpop.xlane.xlu0 %7811
    %v7813 = vmax.f32 %v7605, %v7718
    %7814 = vmax.xlane.f32.xlu0 %v7813
    %v7815 = vpop.xlane.xlu0 %7814
    %v7816 = vmax.f32 %v7608, %v7721
    %7817 = vmax.xlane.f32.xlu0 %v7816
    %v7818 = vpop.xlane.xlu0 %7817
    %v7819 = vmax.f32 %v7611, %v7724
    %7820 = vmax.xlane.f32.xlu0 %v7819
    %v7821 = vpop.xlane.xlu0 %7820
    %v7822 = vmax.f32 %v7614, %v7727
    %7823 = vmax.xlane.f32.xlu0 %v7822
    %v7824 = vpop.xlane.xlu0 %7823
    %v7825 = vmax.f32 %v7617, %v7730
    %7826 = vmax.xlane.f32.xlu0 %v7825
    %v7827 = vpop.xlane.xlu0 %7826
    %v7828 = vmax.f32 %v7620, %v7733
    %7829 = vmax.xlane.f32.xlu0 %v7828
    %v7830 = vpop.xlane.xlu0 %7829
    %v7831 = vmax.f32 %v7623, %v7736
    %7832 = vmax.xlane.f32.xlu0 %v7831
    %v7833 = vpop.xlane.xlu0 %7832
    %v7834 = vmax.f32 %v7626, %v7739
    %7835 = vmax.xlane.f32.xlu0 %v7834
    %v7836 = vpop.xlane.xlu0 %7835
    %v7837 = vmax.f32 %v7629, %v7742
    %7838 = vmax.xlane.f32.xlu0 %v7837
    %v7839 = vpop.xlane.xlu0 %7838
    %v7840 = vmax.f32 %v7632, %v7745
    %7841 = vmax.xlane.f32.xlu0 %v7840
    %v7842 = vpop.xlane.xlu0 %7841
    %v7843 = vmax.f32 %v7635, %v7748
    %7844 = vmax.xlane.f32.xlu0 %v7843
    %v7845 = vpop.xlane.xlu0 %7844
    %v7846 = vmax.f32 %v7638, %v7751
    %7847 = vmax.xlane.f32.xlu0 %v7846
    %v7848 = vpop.xlane.xlu0 %7847
    %v7849 = vmax.f32 %v7641, %v7754
    %7850 = vmax.xlane.f32.xlu0 %v7849
    %v7851 = vpop.xlane.xlu0 %7850
    %v7852 = vmax.f32 %v7644, %v7757
    %7853 = vmax.xlane.f32.xlu0 %v7852
    %v7854 = vpop.xlane.xlu0 %7853
    %v7855 = vsub.f32 %v7551, %v7761
    %v7856 = vsub.f32 %v7664, %v7761
    %v7857 = vsub.f32 %v7554, %v7764
    %v7858 = vsub.f32 %v7667, %v7764
    %v7859 = vsub.f32 %v7557, %v7767
    %v7860 = vsub.f32 %v7670, %v7767
    %v7861 = vsub.f32 %v7560, %v7770
    %v7862 = vsub.f32 %v7673, %v7770
    %v7863 = vsub.f32 %v7563, %v7773
    %v7864 = vsub.f32 %v7676, %v7773
    %v7865 = vsub.f32 %v7566, %v7776
    %v7866 = vsub.f32 %v7679, %v7776
    %v7867 = vsub.f32 %v7569, %v7779
    %v7868 = vsub.f32 %v7682, %v7779
    %v7869 = vsub.f32 %v7572, %v7782
    %v7870 = vsub.f32 %v7685, %v7782
    %v7871 = vsub.f32 %v7575, %v7785
    %v7872 = vsub.f32 %v7688, %v7785
    %v7873 = vsub.f32 %v7578, %v7788
    %v7874 = vsub.f32 %v7691, %v7788
    %v7875 = vsub.f32 %v7581, %v7791
    %v7876 = vsub.f32 %v7694, %v7791
    %v7877 = vsub.f32 %v7584, %v7794
    %v7878 = vsub.f32 %v7697, %v7794
    %v7879 = vsub.f32 %v7587, %v7797
    %v7880 = vsub.f32 %v7700, %v7797
    %v7881 = vsub.f32 %v7590, %v7800
    %v7882 = vsub.f32 %v7703, %v7800
    %v7883 = vsub.f32 %v7593, %v7803
    %v7884 = vsub.f32 %v7706, %v7803
    %v7885 = vsub.f32 %v7596, %v7806
    %v7886 = vsub.f32 %v7709, %v7806
    %v7887 = vsub.f32 %v7599, %v7809
    %v7888 = vsub.f32 %v7712, %v7809
    %v7889 = vsub.f32 %v7602, %v7812
    %v7890 = vsub.f32 %v7715, %v7812
    %v7891 = vsub.f32 %v7605, %v7815
    %v7892 = vsub.f32 %v7718, %v7815
    %v7893 = vsub.f32 %v7608, %v7818
    %v7894 = vsub.f32 %v7721, %v7818
    %v7895 = vsub.f32 %v7611, %v7821
    %v7896 = vsub.f32 %v7724, %v7821
    %v7897 = vsub.f32 %v7614, %v7824
    %v7898 = vsub.f32 %v7727, %v7824
    %v7899 = vsub.f32 %v7617, %v7827
    %v7900 = vsub.f32 %v7730, %v7827
    %v7901 = vsub.f32 %v7620, %v7830
    %v7902 = vsub.f32 %v7733, %v7830
    %v7903 = vsub.f32 %v7623, %v7833
    %v7904 = vsub.f32 %v7736, %v7833
    %v7905 = vsub.f32 %v7626, %v7836
    %v7906 = vsub.f32 %v7739, %v7836
    %v7907 = vsub.f32 %v7629, %v7839
    %v7908 = vsub.f32 %v7742, %v7839
    %v7909 = vsub.f32 %v7632, %v7842
    %v7910 = vsub.f32 %v7745, %v7842
    %v7911 = vsub.f32 %v7635, %v7845
    %v7912 = vsub.f32 %v7748, %v7845
    %v7913 = vsub.f32 %v7638, %v7848
    %v7914 = vsub.f32 %v7751, %v7848
    %v7915 = vsub.f32 %v7641, %v7851
    %v7916 = vsub.f32 %v7754, %v7851
    %v7917 = vsub.f32 %v7644, %v7854
    %v7918 = vsub.f32 %v7757, %v7854
    %v7919 = vmul.f32 %v7855, 1.442695
    %v7920 = vpow.pop %v7919
    %v7921 = vmul.f32 %v7856, 1.442695
    %v7922 = vpow.pop %v7921
    %v7923 = vmul.f32 %v7857, 1.442695
    %v7924 = vpow.pop %v7923
    %v7925 = vmul.f32 %v7858, 1.442695
    %v7926 = vpow.pop %v7925
    %v7927 = vmul.f32 %v7859, 1.442695
    %v7928 = vpow.pop %v7927
    %v7929 = vmul.f32 %v7860, 1.442695
    %v7930 = vpow.pop %v7929
    %v7931 = vmul.f32 %v7861, 1.442695
    %v7932 = vpow.pop %v7931
    %v7933 = vmul.f32 %v7862, 1.442695
    %v7934 = vpow.pop %v7933
    %v7935 = vmul.f32 %v7863, 1.442695
    %v7936 = vpow.pop %v7935
    %v7937 = vmul.f32 %v7864, 1.442695
    %v7938 = vpow.pop %v7937
    %v7939 = vmul.f32 %v7865, 1.442695
    %v7940 = vpow.pop %v7939
    %v7941 = vmul.f32 %v7866, 1.442695
    %v7942 = vpow.pop %v7941
    %v7943 = vmul.f32 %v7867, 1.442695
    %v7944 = vpow.pop %v7943
    %v7945 = vmul.f32 %v7868, 1.442695
    %v7946 = vpow.pop %v7945
    %v7947 = vmul.f32 %v7869, 1.442695
    %v7948 = vpow.pop %v7947
    %v7949 = vmul.f32 %v7870, 1.442695
    %v7950 = vpow.pop %v7949
    %v7951 = vmul.f32 %v7871, 1.442695
    %v7952 = vpow.pop %v7951
    %v7953 = vmul.f32 %v7872, 1.442695
    %v7954 = vpow.pop %v7953
    %v7955 = vmul.f32 %v7873, 1.442695
    %v7956 = vpow.pop %v7955
    %v7957 = vmul.f32 %v7874, 1.442695
    %v7958 = vpow.pop %v7957
    %v7959 = vmul.f32 %v7875, 1.442695
    %v7960 = vpow.pop %v7959
    %v7961 = vmul.f32 %v7876, 1.442695
    %v7962 = vpow.pop %v7961
    %v7963 = vmul.f32 %v7877, 1.442695
    %v7964 = vpow.pop %v7963
    %v7965 = vmul.f32 %v7878, 1.442695
    %v7966 = vpow.pop %v7965
    %v7967 = vmul.f32 %v7879, 1.442695
    %v7968 = vpow.pop %v7967
    %v7969 = vmul.f32 %v7880, 1.442695
    %v7970 = vpow.pop %v7969
    %v7971 = vmul.f32 %v7881, 1.442695
    %v7972 = vpow.pop %v7971
    %v7973 = vmul.f32 %v7882, 1.442695
    %v7974 = vpow.pop %v7973
    %v7975 = vmul.f32 %v7883, 1.442695
    %v7976 = vpow.pop %v7975
    %v7977 = vmul.f32 %v7884, 1.442695
    %v7978 = vpow.pop %v7977
    %v7979 = vmul.f32 %v7885, 1.442695
    %v7980 = vpow.pop %v7979
    %v7981 = vmul.f32 %v7886, 1.442695
    %v7982 = vpow.pop %v7981
    %v7983 = vmul.f32 %v7887, 1.442695
    %v7984 = vpow.pop %v7983
    %v7985 = vmul.f32 %v7888, 1.442695
    %v7986 = vpow.pop %v7985
    %v7987 = vmul.f32 %v7889, 1.442695
    %v7988 = vpow.pop %v7987
    %v7989 = vmul.f32 %v7890, 1.442695
    %v7990 = vpow.pop %v7989
    %v7991 = vmul.f32 %v7891, 1.442695
    %v7992 = vpow.pop %v7991
    %v7993 = vmul.f32 %v7892, 1.442695
    %v7994 = vpow.pop %v7993
    %v7995 = vmul.f32 %v7893, 1.442695
    %v7996 = vpow.pop %v7995
    %v7997 = vmul.f32 %v7894, 1.442695
    %v7998 = vpow.pop %v7997
    %v7999 = vmul.f32 %v7895, 1.442695
    %v8000 = vpow.pop %v7999
    %v8001 = vmul.f32 %v7896, 1.442695
    %v8002 = vpow.pop %v8001
    %v8003 = vmul.f32 %v7897, 1.442695
    %v8004 = vpow.pop %v8003
    %v8005 = vmul.f32 %v7898, 1.442695
    %v8006 = vpow.pop %v8005
    %v8007 = vmul.f32 %v7899, 1.442695
    %v8008 = vpow.pop %v8007
    %v8009 = vmul.f32 %v7900, 1.442695
    %v8010 = vpow.pop %v8009
    %v8011 = vmul.f32 %v7901, 1.442695
    %v8012 = vpow.pop %v8011
    %v8013 = vmul.f32 %v7902, 1.442695
    %v8014 = vpow.pop %v8013
    %v8015 = vmul.f32 %v7903, 1.442695
    %v8016 = vpow.pop %v8015
    %v8017 = vmul.f32 %v7904, 1.442695
    %v8018 = vpow.pop %v8017
    %v8019 = vmul.f32 %v7905, 1.442695
    %v8020 = vpow.pop %v8019
    %v8021 = vmul.f32 %v7906, 1.442695
    %v8022 = vpow.pop %v8021
    %v8023 = vmul.f32 %v7907, 1.442695
    %v8024 = vpow.pop %v8023
    %v8025 = vmul.f32 %v7908, 1.442695
    %v8026 = vpow.pop %v8025
    %v8027 = vmul.f32 %v7909, 1.442695
    %v8028 = vpow.pop %v8027
    %v8029 = vmul.f32 %v7910, 1.442695
    %v8030 = vpow.pop %v8029
    %v8031 = vmul.f32 %v7911, 1.442695
    %v8032 = vpow.pop %v8031
    %v8033 = vmul.f32 %v7912, 1.442695
    %v8034 = vpow.pop %v8033
    %v8035 = vmul.f32 %v7913, 1.442695
    %v8036 = vpow.pop %v8035
    %v8037 = vmul.f32 %v7914, 1.442695
    %v8038 = vpow.pop %v8037
    %v8039 = vmul.f32 %v7915, 1.442695
    %v8040 = vpow.pop %v8039
    %v8041 = vmul.f32 %v7916, 1.442695
    %v8042 = vpow.pop %v8041
    %v8043 = vmul.f32 %v7917, 1.442695
    %v8044 = vpow.pop %v8043
    %v8045 = vmul.f32 %v7918, 1.442695
    %v8046 = vpow.pop %v8045
    %v8047 = vadd.f32 %v7920, %v7922
    %8048 = vadd.xlane.f32.xlu0 %v8047
    %v8049 = vpop.xlane.xlu0 %8048
    %v8050 = vadd.f32 %v7924, %v7926
    %8051 = vadd.xlane.f32.xlu0 %v8050
    %v8052 = vpop.xlane.xlu0 %8051
    %v8053 = vadd.f32 %v7928, %v7930
    %8054 = vadd.xlane.f32.xlu0 %v8053
    %v8055 = vpop.xlane.xlu0 %8054
    %v8056 = vadd.f32 %v7932, %v7934
    %8057 = vadd.xlane.f32.xlu0 %v8056
    %v8058 = vpop.xlane.xlu0 %8057
    %v8059 = vadd.f32 %v7936, %v7938
    %8060 = vadd.xlane.f32.xlu0 %v8059
    %v8061 = vpop.xlane.xlu0 %8060
    %v8062 = vadd.f32 %v7940, %v7942
    %8063 = vadd.xlane.f32.xlu0 %v8062
    %v8064 = vpop.xlane.xlu0 %8063
    %v8065 = vadd.f32 %v7944, %v7946
    %8066 = vadd.xlane.f32.xlu0 %v8065
    %v8067 = vpop.xlane.xlu0 %8066
    %v8068 = vadd.f32 %v7948, %v7950
    %8069 = vadd.xlane.f32.xlu0 %v8068
    %v8070 = vpop.xlane.xlu0 %8069
    %v8071 = vadd.f32 %v7952, %v7954
    %8072 = vadd.xlane.f32.xlu0 %v8071
    %v8073 = vpop.xlane.xlu0 %8072
    %v8074 = vadd.f32 %v7956, %v7958
    %8075 = vadd.xlane.f32.xlu0 %v8074
    %v8076 = vpop.xlane.xlu0 %8075
    %v8077 = vadd.f32 %v7960, %v7962
    %8078 = vadd.xlane.f32.xlu0 %v8077
    %v8079 = vpop.xlane.xlu0 %8078
    %v8080 = vadd.f32 %v7964, %v7966
    %8081 = vadd.xlane.f32.xlu0 %v8080
    %v8082 = vpop.xlane.xlu0 %8081
    %v8083 = vadd.f32 %v7968, %v7970
    %8084 = vadd.xlane.f32.xlu0 %v8083
    %v8085 = vpop.xlane.xlu0 %8084
    %v8086 = vadd.f32 %v7972, %v7974
    %8087 = vadd.xlane.f32.xlu0 %v8086
    %v8088 = vpop.xlane.xlu0 %8087
    %v8089 = vadd.f32 %v7976, %v7978
    %8090 = vadd.xlane.f32.xlu0 %v8089
    %v8091 = vpop.xlane.xlu0 %8090
    %v8092 = vadd.f32 %v7980, %v7982
    %8093 = vadd.xlane.f32.xlu0 %v8092
    %v8094 = vpop.xlane.xlu0 %8093
    %v8095 = vadd.f32 %v7984, %v7986
    %8096 = vadd.xlane.f32.xlu0 %v8095
    %v8097 = vpop.xlane.xlu0 %8096
    %v8098 = vadd.f32 %v7988, %v7990
    %8099 = vadd.xlane.f32.xlu0 %v8098
    %v8100 = vpop.xlane.xlu0 %8099
    %v8101 = vadd.f32 %v7992, %v7994
    %8102 = vadd.xlane.f32.xlu0 %v8101
    %v8103 = vpop.xlane.xlu0 %8102
    %v8104 = vadd.f32 %v7996, %v7998
    %8105 = vadd.xlane.f32.xlu0 %v8104
    %v8106 = vpop.xlane.xlu0 %8105
    %v8107 = vadd.f32 %v8000, %v8002
    %8108 = vadd.xlane.f32.xlu0 %v8107
    %v8109 = vpop.xlane.xlu0 %8108
    %v8110 = vadd.f32 %v8004, %v8006
    %8111 = vadd.xlane.f32.xlu0 %v8110
    %v8112 = vpop.xlane.xlu0 %8111
    %v8113 = vadd.f32 %v8008, %v8010
    %8114 = vadd.xlane.f32.xlu0 %v8113
    %v8115 = vpop.xlane.xlu0 %8114
    %v8116 = vadd.f32 %v8012, %v8014
    %8117 = vadd.xlane.f32.xlu0 %v8116
    %v8118 = vpop.xlane.xlu0 %8117
    %v8119 = vadd.f32 %v8016, %v8018
    %8120 = vadd.xlane.f32.xlu0 %v8119
    %v8121 = vpop.xlane.xlu0 %8120
    %v8122 = vadd.f32 %v8020, %v8022
    %8123 = vadd.xlane.f32.xlu0 %v8122
    %v8124 = vpop.xlane.xlu0 %8123
    %v8125 = vadd.f32 %v8024, %v8026
    %8126 = vadd.xlane.f32.xlu0 %v8125
    %v8127 = vpop.xlane.xlu0 %8126
    %v8128 = vadd.f32 %v8028, %v8030
    %8129 = vadd.xlane.f32.xlu0 %v8128
    %v8130 = vpop.xlane.xlu0 %8129
    %v8131 = vadd.f32 %v8032, %v8034
    %8132 = vadd.xlane.f32.xlu0 %v8131
    %v8133 = vpop.xlane.xlu0 %8132
    %v8134 = vadd.f32 %v8036, %v8038
    %8135 = vadd.xlane.f32.xlu0 %v8134
    %v8136 = vpop.xlane.xlu0 %8135
    %v8137 = vadd.f32 %v8040, %v8042
    %8138 = vadd.xlane.f32.xlu0 %v8137
    %v8139 = vpop.xlane.xlu0 %8138
    %v8140 = vadd.f32 %v8044, %v8046
    %8141 = vadd.xlane.f32.xlu0 %v8140
    %v8142 = vpop.xlane.xlu0 %8141
    %v8143 = vrcp.pop %v8049
    %v8144 = vrcp.pop %v8052
    %v8145 = vrcp.pop %v8055
    %v8146 = vrcp.pop %v8058
    %v8147 = vrcp.pop %v8061
    %v8148 = vrcp.pop %v8064
    %v8149 = vrcp.pop %v8067
    %v8150 = vrcp.pop %v8070
    %v8151 = vrcp.pop %v8073
    %v8152 = vrcp.pop %v8076
    %v8153 = vrcp.pop %v8079
    %v8154 = vrcp.pop %v8082
    %v8155 = vrcp.pop %v8085
    %v8156 = vrcp.pop %v8088
    %v8157 = vrcp.pop %v8091
    %v8158 = vrcp.pop %v8094
    %v8159 = vrcp.pop %v8097
    %v8160 = vrcp.pop %v8100
    %v8161 = vrcp.pop %v8103
    %v8162 = vrcp.pop %v8106
    %v8163 = vrcp.pop %v8109
    %v8164 = vrcp.pop %v8112
    %v8165 = vrcp.pop %v8115
    %v8166 = vrcp.pop %v8118
    %v8167 = vrcp.pop %v8121
    %v8168 = vrcp.pop %v8124
    %v8169 = vrcp.pop %v8127
    %v8170 = vrcp.pop %v8130
    %v8171 = vrcp.pop %v8133
    %v8172 = vrcp.pop %v8136
    %v8173 = vrcp.pop %v8139
    %v8174 = vrcp.pop %v8142
    %v8175 = vmul.f32 %v7920, %v8143
    %v8176 = vmul.f32 %v7922, %v8143
    %v8177 = vmul.f32 %v7924, %v8144
    %v8178 = vmul.f32 %v7926, %v8144
    %v8179 = vmul.f32 %v7928, %v8145
    %v8180 = vmul.f32 %v7930, %v8145
    %v8181 = vmul.f32 %v7932, %v8146
    %v8182 = vmul.f32 %v7934, %v8146
    %v8183 = vmul.f32 %v7936, %v8147
    %v8184 = vmul.f32 %v7938, %v8147
    %v8185 = vmul.f32 %v7940, %v8148
    %v8186 = vmul.f32 %v7942, %v8148
    %v8187 = vmul.f32 %v7944, %v8149
    %v8188 = vmul.f32 %v7946, %v8149
    %v8189 = vmul.f32 %v7948, %v8150
    %v8190 = vmul.f32 %v7950, %v8150
    %v8191 = vmul.f32 %v7952, %v8151
    %v8192 = vmul.f32 %v7954, %v8151
    %v8193 = vmul.f32 %v7956, %v8152
    %v8194 = vmul.f32 %v7958, %v8152
    %v8195 = vmul.f32 %v7960, %v8153
    %v8196 = vmul.f32 %v7962, %v8153
    %v8197 = vmul.f32 %v7964, %v8154
    %v8198 = vmul.f32 %v7966, %v8154
    %v8199 = vmul.f32 %v7968, %v8155
    %v8200 = vmul.f32 %v7970, %v8155
    %v8201 = vmul.f32 %v7972, %v8156
    %v8202 = vmul.f32 %v7974, %v8156
    %v8203 = vmul.f32 %v7976, %v8157
    %v8204 = vmul.f32 %v7978, %v8157
    %v8205 = vmul.f32 %v7980, %v8158
    %v8206 = vmul.f32 %v7982, %v8158
    %v8207 = vmul.f32 %v7984, %v8159
    %v8208 = vmul.f32 %v7986, %v8159
    %v8209 = vmul.f32 %v7988, %v8160
    %v8210 = vmul.f32 %v7990, %v8160
    %v8211 = vmul.f32 %v7992, %v8161
    %v8212 = vmul.f32 %v7994, %v8161
    %v8213 = vmul.f32 %v7996, %v8162
    %v8214 = vmul.f32 %v7998, %v8162
    %v8215 = vmul.f32 %v8000, %v8163
    %v8216 = vmul.f32 %v8002, %v8163
    %v8217 = vmul.f32 %v8004, %v8164
    %v8218 = vmul.f32 %v8006, %v8164
    %v8219 = vmul.f32 %v8008, %v8165
    %v8220 = vmul.f32 %v8010, %v8165
    %v8221 = vmul.f32 %v8012, %v8166
    %v8222 = vmul.f32 %v8014, %v8166
    %v8223 = vmul.f32 %v8016, %v8167
    %v8224 = vmul.f32 %v8018, %v8167
    %v8225 = vmul.f32 %v8020, %v8168
    %v8226 = vmul.f32 %v8022, %v8168
    %v8227 = vmul.f32 %v8024, %v8169
    %v8228 = vmul.f32 %v8026, %v8169
    %v8229 = vmul.f32 %v8028, %v8170
    %v8230 = vmul.f32 %v8030, %v8170
    %v8231 = vmul.f32 %v8032, %v8171
    %v8232 = vmul.f32 %v8034, %v8171
    %v8233 = vmul.f32 %v8036, %v8172
    %v8234 = vmul.f32 %v8038, %v8172
    %v8235 = vmul.f32 %v8040, %v8173
    %v8236 = vmul.f32 %v8042, %v8173
    %v8237 = vmul.f32 %v8044, %v8174
    %v8238 = vmul.f32 %v8046, %v8174
    %8239 = vmatpush.xpose.msra.mxu0 %v8205
    %8240 = vmatpush.xpose.msra.mxu0 %v8203
    %8241 = vmatpush.xpose.msra.mxu0 %v8201
    %8242 = vmatpush.xpose.msra.mxu0 %v8199
    %8243 = vmatpush.xpose.msra.mxu0 %v8197
    %8244 = vmatpush.xpose.msra.mxu0 %v8195
    %8245 = vmatpush.xpose.msra.mxu0 %v8193
    %8246 = vmatpush.xpose.msra.mxu0 %v8191
    %8247 = vmatpush.xpose.msra.mxu0 %v8189
    %8248 = vmatpush.xpose.msra.mxu0 %v8187
    %8249 = vmatpush.xpose.msra.mxu0 %v8185
    %8250 = vmatpush.xpose.msra.mxu0 %v8183
    %8251 = vmatpush.xpose.msra.mxu0 %v8181
    %8252 = vmatpush.xpose.msra.mxu0 %v8179
    %8253 = vmatpush.xpose.msra.mxu0 %v8177
    %8254 = vmatpush.xpose.msra.mxu0 %v8175
    %8255 = vmatmul.f32.gmra.mxu0 %v4480
    %v8256 = vpop.f32.mrf.mxu0
    %v8257 = vadd.f32 0.0, %v8256
    %8258 = vdwg.mxu0
    %8259 = vmatpush.xpose.msra.mxu0 %v8206
    %8260 = vmatpush.xpose.msra.mxu0 %v8204
    %8261 = vmatpush.xpose.msra.mxu0 %v8202
    %8262 = vmatpush.xpose.msra.mxu0 %v8200
    %8263 = vmatpush.xpose.msra.mxu0 %v8198
    %8264 = vmatpush.xpose.msra.mxu0 %v8196
    %8265 = vmatpush.xpose.msra.mxu0 %v8194
    %8266 = vmatpush.xpose.msra.mxu0 %v8192
    %8267 = vmatpush.xpose.msra.mxu0 %v8190
    %8268 = vmatpush.xpose.msra.mxu0 %v8188
    %8269 = vmatpush.xpose.msra.mxu0 %v8186
    %8270 = vmatpush.xpose.msra.mxu0 %v8184
    %8271 = vmatpush.xpose.msra.mxu0 %v8182
    %8272 = vmatpush.xpose.msra.mxu0 %v8180
    %8273 = vmatpush.xpose.msra.mxu0 %v8178
    %8274 = vmatpush.xpose.msra.mxu0 %v8176
    %8275 = vmatmul.f32.gmra.mxu0 %v4533
    %v8276 = vpop.f32.mrf.mxu0
    %v8277 = vadd.f32 %v8257, %v8276
    %8278 = vdwg.mxu0
    %8279 = vmatpush.xpose.msra.mxu0 %v8237
    %8280 = vmatpush.xpose.msra.mxu0 %v8235
    %8281 = vmatpush.xpose.msra.mxu0 %v8233
    %8282 = vmatpush.xpose.msra.mxu0 %v8231
    %8283 = vmatpush.xpose.msra.mxu0 %v8229
    %8284 = vmatpush.xpose.msra.mxu0 %v8227
    %8285 = vmatpush.xpose.msra.mxu0 %v8225
    %8286 = vmatpush.xpose.msra.mxu0 %v8223
    %8287 = vmatpush.xpose.msra.mxu0 %v8221
    %8288 = vmatpush.xpose.msra.mxu0 %v8219
    %8289 = vmatpush.xpose.msra.mxu0 %v8217
    %8290 = vmatpush.xpose.msra.mxu0 %v8215
    %8291 = vmatpush.xpose.msra.mxu0 %v8213
    %8292 = vmatpush.xpose.msra.mxu0 %v8211
    %8293 = vmatpush.xpose.msra.mxu0 %v8209
    %8294 = vmatpush.xpose.msra.mxu0 %v8207
    %8295 = vmatmul.f32.gmra.mxu0 %v4480
    %v8296 = vpop.f32.mrf.mxu0
    %v8297 = vadd.f32 0.0, %v8296
    %8298 = vdwg.mxu0
    %8299 = vmatpush.xpose.msra.mxu0 %v8238
    %8300 = vmatpush.xpose.msra.mxu0 %v8236
    %8301 = vmatpush.xpose.msra.mxu0 %v8234
    %8302 = vmatpush.xpose.msra.mxu0 %v8232
    %8303 = vmatpush.xpose.msra.mxu0 %v8230
    %8304 = vmatpush.xpose.msra.mxu0 %v8228
    %8305 = vmatpush.xpose.msra.mxu0 %v8226
    %8306 = vmatpush.xpose.msra.mxu0 %v8224
    %8307 = vmatpush.xpose.msra.mxu0 %v8222
    %8308 = vmatpush.xpose.msra.mxu0 %v8220
    %8309 = vmatpush.xpose.msra.mxu0 %v8218
    %8310 = vmatpush.xpose.msra.mxu0 %v8216
    %8311 = vmatpush.xpose.msra.mxu0 %v8214
    %8312 = vmatpush.xpose.msra.mxu0 %v8212
    %8313 = vmatpush.xpose.msra.mxu0 %v8210
    %8314 = vmatpush.xpose.msra.mxu0 %v8208
    %8315 = vmatmul.f32.gmra.mxu0 %v4533
    %v8316 = vpop.f32.mrf.mxu0
    %v8317 = vadd.f32 %v8297, %v8316
    %8318 = vdwg.mxu0
    %8319 = vmatpush.msra.mxu0 0.0
    %8320 = vmatpush.msra.mxu0 0.0
    %8321 = vmatpush.msra.mxu0 0.0
    %8322 = vmatpush.msra.mxu0 0.0
    %8323 = vmatpush.msra.mxu0 0.0
    %8324 = vmatpush.msra.mxu0 0.0
    %8325 = vmatpush.msra.mxu0 0.0
    %8326 = vmatpush.msra.mxu0 0.0
    %8327 = vmatpush.msra.mxu0 0.0
    %8328 = vmatpush.msra.mxu0 0.0
    %8329 = vmatpush.msra.mxu0 0.0
    %8330 = vmatpush.msra.mxu0 0.0
    %8331 = vmatpush.msra.mxu0 %v8277
    %8332 = vmatpush.msra.mxu0 %v7331
    %8333 = vmatpush.msra.mxu0 %v6385
    %8334 = vmatpush.msra.mxu0 %v5439
    %8335 = vmatmul.f32.gmra.mxu0 %v4233
    %v8336 = vpop.f32.mrf.mxu0
    %v8337 = vadd.f32 %v4215, %v8336
    %8338 = vmatmul.f32.gmra.mxu0 %v4236
    %v8339 = vpop.f32.mrf.mxu0
    %v8340 = vadd.f32 %v4220, %v8339
    %8341 = vmatmul.f32.gmra.mxu0 %v4239
    %v8342 = vpop.f32.mrf.mxu0
    %v8343 = vadd.f32 %v4225, %v8342
    %8344 = vmatmul.f32.gmra.mxu0 %v4242
    %v8345 = vpop.f32.mrf.mxu0
    %v8346 = vadd.f32 %v4230, %v8345
    %8347 = vdwg.mxu0
    %8348 = vmatpush.msra.mxu0 0.0
    %8349 = vmatpush.msra.mxu0 0.0
    %8350 = vmatpush.msra.mxu0 0.0
    %8351 = vmatpush.msra.mxu0 0.0
    %8352 = vmatpush.msra.mxu0 0.0
    %8353 = vmatpush.msra.mxu0 0.0
    %8354 = vmatpush.msra.mxu0 0.0
    %8355 = vmatpush.msra.mxu0 0.0
    %8356 = vmatpush.msra.mxu0 0.0
    %8357 = vmatpush.msra.mxu0 0.0
    %8358 = vmatpush.msra.mxu0 0.0
    %8359 = vmatpush.msra.mxu0 0.0
    %8360 = vmatpush.msra.mxu0 %v8317
    %8361 = vmatpush.msra.mxu0 %v7371
    %8362 = vmatpush.msra.mxu0 %v6425
    %8363 = vmatpush.msra.mxu0 %v5479
    %8364 = vmatmul.f32.gmra.mxu0 %v4233
    %v8365 = vpop.f32.mrf.mxu0
    %v8366 = vadd.f32 %v4215, %v8365
    %8367 = vmatmul.f32.gmra.mxu0 %v4236
    %v8368 = vpop.f32.mrf.mxu0
    %v8369 = vadd.f32 %v4220, %v8368
    %8370 = vmatmul.f32.gmra.mxu0 %v4239
    %v8371 = vpop.f32.mrf.mxu0
    %v8372 = vadd.f32 %v4225, %v8371
    %8373 = vmatmul.f32.gmra.mxu0 %v4242
    %v8374 = vpop.f32.mrf.mxu0
    %v8375 = vadd.f32 %v4230, %v8374
    %8376 = vdwg.mxu0
    %v8377 = vadd.f32 %v8337, %v4319
    %v8378 = vadd.f32 %v8366, %v4320
    %v8379 = vadd.f32 %v8340, %v4321
    %v8380 = vadd.f32 %v8369, %v4322
    %v8381 = vadd.f32 %v8343, %v4323
    %v8382 = vadd.f32 %v8372, %v4324
    %v8383 = vadd.f32 %v8346, %v4325
    %v8384 = vadd.f32 %v8375, %v4326
    %s8385 = scalar_lea.vmem [#allocation2], 64
    %8386 = vst [vmem:[%s8385] sm:$0xff] %v8377
    %8387 = vst [vmem:[%s8385 + $0x8] sm:$0xff] %v8378
    %8388 = vst [vmem:[%s8385 + $0x10] sm:$0xff] %v8379
    %8389 = vst [vmem:[%s8385 + $0x18] sm:$0xff] %v8380
    %8390 = vst [vmem:[%s8385 + $0x20] sm:$0xff] %v8381
    %8391 = vst [vmem:[%s8385 + $0x28] sm:$0xff] %v8382
    %8392 = vst [vmem:[%s8385 + $0x30] sm:$0xff] %v8383
    %8393 = vst [vmem:[%s8385 + $0x38] sm:$0xff] %v8384
    // Predicated region
    $region30: #{tpu_custom_call.1} parent=1 // pred_check
      _
    $region31: #{tpu_custom_call.1} parent=1 // pred_check_branch
      %8395 = sbr.rel (0) target = $region33
    $region32: #{tpu_custom_call.1} parent=1 // pred_region
      %8397 = vsyncadd [#allocation3], 0
      %s8398 = sshll.u32 [#allocation2], 4
      %s8399 = int_to_ptr.vmem [resolvable:$true] %s8398
      %s8400 = sshll.u32 %s7, 4
      %s8401 = int_to_ptr.hbm [resolvable:$true] %s8400
      %8406 = dma.vmem_to_hbm [thread:$0]  %s8399, 2048, %s8401, [#allocation3], 256, 256, 16
    $region33: #{tpu_custom_call.1} parent=1 // pred_fallthru
      _
    // Predicated region
    $region34: #{tpu_custom_call.1} parent=1 // pred_check
      _
    $region35: #{tpu_custom_call.1} parent=1 // pred_check_branch
      %8408 = sbr.rel (0) target = $region37
    $region36: #{tpu_custom_call.1} parent=1 // pred_region
      %8410 = dma.done [#allocation3], 2048
    $region37: #{tpu_custom_call.1} parent=1 // pred_fallthru
      _
    %8411 = vsyncpa [#allocation3], 1

</llo_original>
